<compile_context>
chip_gen: v7x
topology: tpu7x:2x2x1
jax: 0.10.0
libtpu: 0.0.40
codegen_flags: <defaults>
</compile_context>

<pallas_src>
import jax
import jax.numpy as jnp
import numpy as np
from jax.experimental import pallas as pl
from jax.experimental.pallas import tpu as pltpu

# ---- model hyper-parameters (match SinglePANNLSTM.__init__) ----------------
INPUT_DIM = 4       # input_dim
SEQ_LEN = 8         # seq_length
NUM_CLASSES = 3     # num_classes
TEMPERATURE = 0.1   # passed to SinglePermutationLayer
SINKHORN_ITERS = 5  # SinkhornNormalizer default
H1 = 128            # lstm1 hidden
H2 = 64             # lstm2 hidden
PG_DIM = 64         # perm_generator hidden / output dim
FC1_DIM = 32


def _round_up(x, m):
    return (x + m - 1) // m * m


def _lstm_step(gx, h, c, whh_bf16, hid):
    """One batched LSTM step.

    gx: (BB, 4*hid) f32 = x_t @ W_ih + (b_ih + b_hh), precomputed outside
        the time loop.  Gate order is PyTorch's (i, f, g, o).
    """
    gates = gx + jnp.dot(h.astype(jnp.bfloat16), whh_bf16,
                         preferred_element_type=jnp.float32)
    # sigmoid once on the contiguous (i, f) half, split after (lane-aligned).
    sig_if = jax.nn.sigmoid(gates[:, :2 * hid])
    i = sig_if[:, :hid]
    f = sig_if[:, hid:]
    g = jnp.tanh(gates[:, 2 * hid:3 * hid])
    o = jax.nn.sigmoid(gates[:, 3 * hid:])
    c_new = f * c + i * g
    h_new = o * jnp.tanh(c_new)
    return h_new, c_new


def _pann_lstm_kernel(x_ref,
                      wpg1_ref, bpg1_ref, wpg2_ref, bpg2_ref,
                      wih1_ref, whh1_ref, bl1_ref,
                      wih2_ref, whh2_ref, bl2_ref,
                      wf1_ref, bf1_ref, wf2_ref, bf2_ref,
                      out_ref, out1_ref):
    BB, S, D = x_ref.shape
    x_bm = x_ref[...]                                              # (BB, S, D)

    # ---- SinglePermutationLayer: perm-generator MLP (f32, tiny) ------------
    x_flat = x_bm.reshape(BB * S, D)                               # row b*S+s
    hid = jnp.maximum(
        jnp.dot(x_flat, wpg1_ref[...], preferred_element_type=jnp.float32)
        + bpg1_ref[...], 0.0)                                      # (BB*S, 64)
    feats = (jnp.dot(hid, wpg2_ref[...], preferred_element_type=jnp.float32)
             + bpg2_ref[...]).reshape(BB, S, PG_DIM)               # (BB, S, 64)

    # similarity = feats @ feats^T (batched over the block)
    sim = jnp.einsum("bsf,btf->bst", feats, feats,
                     preferred_element_type=jnp.float32)           # (BB, S, S)

    # ---- Sinkhorn normalization (log-space row/col normalization) ----------
    la = sim
    for _ in range(SINKHORN_ITERS):
        m = jnp.max(la, axis=2, keepdims=True)
        la = la - (m + jnp.log(jnp.sum(jnp.exp(la - m), axis=2, keepdims=True)))
        m = jnp.max(la, axis=1, keepdims=True)
        la = la - (m + jnp.log(jnp.sum(jnp.exp(la - m), axis=1, keepdims=True)))
    # Temperature is applied AFTER the iterations, exactly as in the PyTorch
    # SinkhornNormalizer: torch.exp(log_alpha / temperature).
    perm = jnp.exp(la * (1.0 / TEMPERATURE))                       # (BB, S, S)

    # permuted sequence (batch-major)
    x_perm = jnp.einsum("bst,btd->bsd", perm, x_bm,
                        preferred_element_type=jnp.float32)        # (BB, S, D)

    # time-major flat layout (row = s*BB + b); tiny (~S*BB*D*4 bytes) copy so
    # every per-step gate slab below is a contiguous (BB, ...) block.
    xp_tm = jnp.concatenate([x_perm[:, s, :] for s in range(S)], axis=0)

    # ---- LSTM 1 (D -> H1): hoisted input projection + recurrence -----------
    gx1 = (jnp.dot(xp_tm.astype(jnp.bfloat16), wih1_ref[...],
                   preferred_element_type=jnp.float32)
           + bl1_ref[...]).reshape(S, BB, 4 * H1)
    whh1 = whh1_ref[...]
    h1 = jnp.zeros((BB, H1), jnp.float32)
    c1 = jnp.zeros((BB, H1), jnp.float32)
    for s in range(S):
        h1, c1 = _lstm_step(gx1[s], h1, c1, whh1, H1)
        out1_ref[s] = h1                       # contiguous (BB, H1) store

    # ---- LSTM 2 (H1 -> H2): hoisted input projection + recurrence ----------
    out1 = out1_ref[...].reshape(S * BB, H1)
    gx2 = (jnp.dot(out1.astype(jnp.bfloat16), wih2_ref[...],
                   preferred_element_type=jnp.float32)
           + bl2_ref[...]).reshape(S, BB, 4 * H2)
    whh2 = whh2_ref[...]
    h2 = jnp.zeros((BB, H2), jnp.float32)
    c2 = jnp.zeros((BB, H2), jnp.float32)
    for s in range(S):
        h2, c2 = _lstm_step(gx2[s], h2, c2, whh2, H2)

    # ---- FC head ------------------------------------------------------------
    z = jnp.maximum(
        jnp.dot(h2.astype(jnp.bfloat16), wf1_ref[...],
                preferred_element_type=jnp.float32) + bf1_ref[...], 0.0)
    # TODO(synk): nn.Dropout(0.2) is identity in eval mode; no-op here.
    logits = (jnp.dot(z.astype(jnp.bfloat16), wf2_ref[...],
                      preferred_element_type=jnp.float32) + bf2_ref[...])
    out_ref[...] = logits                                          # (BB, C)


def single_pann_lstm_forward(x, params, block_b=256):
    """x: [B, input_dim, seq_len] (PyTorch layout). Returns [B, num_classes]."""
    B, D, S = x.shape
    assert D == INPUT_DIM and S == SEQ_LEN
    x_t = jnp.transpose(x, (0, 2, 1)).astype(jnp.float32)          # (B, S, D)

    # Batch block: full MXU rows for large B; >=8 sublanes for tiny B.
    # block_b=256 (~9 MiB VMEM working set) fits v5e/v6e/v7x scoped VMEM.
    BB = block_b if B >= block_b else _round_up(B, 8)
    Bp = _round_up(B, BB)
    if Bp != B:
        x_t = jnp.pad(x_t, ((0, Bp - B), (0, 0), (0, 0)))

    bf16 = jnp.bfloat16
    weight_list = [
        # perm-generator path stays f32 (temperature-amplified, tiny cost)
        params["wpg1"], params["bpg1"], params["wpg2"], params["bpg2"],
        # LSTM / FC weights pre-cast to bf16; biases stay f32
        params["wih1"].astype(bf16), params["whh1"].astype(bf16), params["bl1"],
        params["wih2"].astype(bf16), params["whh2"].astype(bf16), params["bl2"],
        params["wf1"].astype(bf16), params["bf1"],
        params["wf2"].astype(bf16), params["bf2"],
    ]

    def full_spec(arr):
        # whole (small) weight lives in VMEM, same block for every grid step
        return pl.BlockSpec(arr.shape, lambda b, n=arr.ndim: (0,) * n)

    in_specs = [pl.BlockSpec((BB, S, D), lambda b: (b, 0, 0))]
    in_specs += [full_spec(w) for w in weight_list]

    out = pl.pallas_call(
        _pann_lstm_kernel,
        out_shape=jax.ShapeDtypeStruct((Bp, NUM_CLASSES), jnp.float32),
        grid=(Bp // BB,),
        in_specs=in_specs,
        out_specs=pl.BlockSpec((BB, NUM_CLASSES), lambda b: (b, 0)),
        scratch_shapes=[pltpu.VMEM((S, BB, H1), jnp.float32)],
        compiler_params=pltpu.CompilerParams(
            dimension_semantics=("parallel",)),
    )(x_t, *weight_list)
    return out[:B]


# ---------------- pure-JAX reference (for correctness check) ----------------
def reference_forward(x, p):
    xt = jnp.transpose(x, (0, 2, 1)).astype(jnp.float32)            # (B, S, D)
    feats = jnp.maximum(xt @ p["wpg1"] + p["bpg1"], 0.0) @ p["wpg2"] + p["bpg2"]
    sim = jnp.einsum("bsf,btf->bst", feats, feats)
    la = sim
    for _ in range(SINKHORN_ITERS):
        la = la - jax.scipy.special.logsumexp(la, axis=2, keepdims=True)
        la = la - jax.scipy.special.logsumexp(la, axis=1, keepdims=True)
    perm = jnp.exp(la / TEMPERATURE)
    xperm = jnp.einsum("bst,btd->bsd", perm, xt)

    # mirror the kernel's bf16 matmul operands (f32 accumulation / gate math)
    def mm(a, w):
        return jnp.dot(a.astype(jnp.bfloat16), w.astype(jnp.bfloat16),
                       preferred_element_type=jnp.float32)

    def run_lstm(seq, wih, whh, b, hid):
        B = seq.shape[0]
        h = jnp.zeros((B, hid), jnp.float32)
        c = jnp.zeros((B, hid), jnp.float32)
        outs = []
        for s in range(seq.shape[1]):
            g = mm(seq[:, s], wih) + mm(h, whh) + b
            i = jax.nn.sigmoid(g[:, :hid])
            f = jax.nn.sigmoid(g[:, hid:2 * hid])
            gg = jnp.tanh(g[:, 2 * hid:3 * hid])
            o = jax.nn.sigmoid(g[:, 3 * hid:])
            c = f * c + i * gg
            h = o * jnp.tanh(c)
            outs.append(h)
        return jnp.stack(outs, axis=1), h

    o1, _ = run_lstm(xperm, p["wih1"], p["whh1"], p["bl1"], H1)
    _, h2 = run_lstm(o1, p["wih2"], p["whh2"], p["bl2"], H2)
    z = jnp.maximum(mm(h2, p["wf1"]) + p["bf1"], 0.0)
    return mm(z, p["wf2"]) + p["bf2"]


def make_params(key):
    """Deterministic synthetic parameters, stored pre-transposed as (in, out)."""
    ks = jax.random.split(key, 16)

    def init(k, shape, fan_in):
        return (jax.random.normal(k, shape, jnp.float32) / np.sqrt(fan_in)).astype(
            jnp.float32)

    p = {
        # perm_generator: Linear(D,64) -> ReLU -> Linear(64,64)
        "wpg1": init(ks[0], (INPUT_DIM, PG_DIM), INPUT_DIM),
        "bpg1": init(ks[1], (1, PG_DIM), INPUT_DIM),
        "wpg2": init(ks[2], (PG_DIM, PG_DIM), PG_DIM),
        "bpg2": init(ks[3], (1, PG_DIM), PG_DIM),
        # lstm1: input_dim -> 128   (weights as (in, 4H); bias = b_ih + b_hh)
        "wih1": init(ks[4], (INPUT_DIM, 4 * H1), H1),
        "whh1": init(ks[5], (H1, 4 * H1), H1),
        "bl1": init(ks[6], (1, 4 * H1), H1),
        # lstm2: 128 -> 64
        "wih2": init(ks[7], (H1, 4 * H2), H2),
        "whh2": init(ks[8], (H2, 4 * H2), H2),
        "bl2": init(ks[9], (1, 4 * H2), H2),
        # fc head
        "wf1": init(ks[10], (H2, FC1_DIM), H2),
        "bf1": init(ks[11], (1, FC1_DIM), H2),
        "wf2": init(ks[12], (FC1_DIM, NUM_CLASSES), FC1_DIM),
        "bf2": init(ks[13], (1, NUM_CLASSES), FC1_DIM),
    }
    return p


if __name__ == "__main__":
    key = jax.random.PRNGKey(0)
    k_x, k_p = jax.random.split(key)

    B = 2
    # PyTorch layout: [batch, input_dim, seq_len]
    x = jax.random.normal(k_x, (B, INPUT_DIM, SEQ_LEN), jnp.float32)
    params = make_params(k_p)

    out = jax.block_until_ready(single_pann_lstm_forward(x, params))
    ref = jax.block_until_ready(reference_forward(x, params))

    assert out.shape == (B, NUM_CLASSES)
    np.testing.assert_allclose(np.asarray(out), np.asarray(ref),
                               rtol=1e-2, atol=1e-2)
    print("KERNEL_OK")
</pallas_src>

<mosaic_0001>
module attributes {stable_mosaic.version = 11 : i64} {
  func.func @_pann_lstm_kernel(%arg0: i32, %arg1: memref<8x8x4xf32, #tpu.memory_space<vmem>>, %arg2: memref<4x64xf32, #tpu.memory_space<vmem>>, %arg3: memref<1x64xf32, #tpu.memory_space<vmem>>, %arg4: memref<64x64xf32, #tpu.memory_space<vmem>>, %arg5: memref<1x64xf32, #tpu.memory_space<vmem>>, %arg6: memref<4x512xbf16, #tpu.memory_space<vmem>>, %arg7: memref<128x512xbf16, #tpu.memory_space<vmem>>, %arg8: memref<1x512xf32, #tpu.memory_space<vmem>>, %arg9: memref<128x256xbf16, #tpu.memory_space<vmem>>, %arg10: memref<64x256xbf16, #tpu.memory_space<vmem>>, %arg11: memref<1x256xf32, #tpu.memory_space<vmem>>, %arg12: memref<64x32xbf16, #tpu.memory_space<vmem>>, %arg13: memref<1x32xf32, #tpu.memory_space<vmem>>, %arg14: memref<32x3xbf16, #tpu.memory_space<vmem>>, %arg15: memref<1x3xf32, #tpu.memory_space<vmem>>, %arg16: memref<8x3xf32, #tpu.memory_space<vmem>>, %arg17: memref<8x8x128xf32, #tpu.memory_space<vmem>>) attributes {dimension_semantics = [#tpu.dimension_semantics<parallel>], iteration_bounds = array<i64: 1>, scalar_prefetch = 0 : i64, scratch_operands = 1 : i64, tpu.core_type = #tpu.core_type<tc>, window_params = [{transform_indices = @transform_0, window_bounds = array<i64: 8, 8, 4>}, {pipeline_mode = #tpu.pipeline_mode<synchronous>, transform_indices = @transform_1, window_bounds = array<i64: 4, 64>}, {pipeline_mode = #tpu.pipeline_mode<synchronous>, transform_indices = @transform_2, window_bounds = array<i64: 1, 64>}, {pipeline_mode = #tpu.pipeline_mode<synchronous>, transform_indices = @transform_3, window_bounds = array<i64: 64, 64>}, {pipeline_mode = #tpu.pipeline_mode<synchronous>, transform_indices = @transform_4, window_bounds = array<i64: 1, 64>}, {pipeline_mode = #tpu.pipeline_mode<synchronous>, transform_indices = @transform_5, window_bounds = array<i64: 4, 512>}, {pipeline_mode = #tpu.pipeline_mode<synchronous>, transform_indices = @transform_6, window_bounds = array<i64: 128, 512>}, {pipeline_mode = #tpu.pipeline_mode<synchronous>, transform_indices = @transform_7, window_bounds = array<i64: 1, 512>}, {pipeline_mode = #tpu.pipeline_mode<synchronous>, transform_indices = @transform_8, window_bounds = array<i64: 128, 256>}, {pipeline_mode = #tpu.pipeline_mode<synchronous>, transform_indices = @transform_9, window_bounds = array<i64: 64, 256>}, {pipeline_mode = #tpu.pipeline_mode<synchronous>, transform_indices = @transform_10, window_bounds = array<i64: 1, 256>}, {pipeline_mode = #tpu.pipeline_mode<synchronous>, transform_indices = @transform_11, window_bounds = array<i64: 64, 32>}, {pipeline_mode = #tpu.pipeline_mode<synchronous>, transform_indices = @transform_12, window_bounds = array<i64: 1, 32>}, {pipeline_mode = #tpu.pipeline_mode<synchronous>, transform_indices = @transform_13, window_bounds = array<i64: 32, 3>}, {pipeline_mode = #tpu.pipeline_mode<synchronous>, transform_indices = @transform_14, window_bounds = array<i64: 1, 3>}, {transform_indices = @transform_15, window_bounds = array<i64: 8, 3>}]} {
    %c0 = arith.constant 0 : index
    %c0_0 = arith.constant 0 : index
    %c0_1 = arith.constant 0 : index
    %0 = vector.load %arg1[%c0, %c0_0, %c0_1] : memref<8x8x4xf32, #tpu.memory_space<vmem>>, vector<8x8x4xf32>
    %1 = vector.shape_cast %0 : vector<8x8x4xf32> to vector<64x4xf32>
    %c0_2 = arith.constant 0 : index
    %c0_3 = arith.constant 0 : index
    %2 = vector.load %arg2[%c0_2, %c0_3] : memref<4x64xf32, #tpu.memory_space<vmem>>, vector<4x64xf32>
    %cst = arith.constant dense<0.000000e+00> : vector<64x64xf32>
    %3 = tpu.matmul %1, %2, %cst {dimension_numbers = #tpu.dot_dimension_numbers<[1], [0], [0], [1], [0, 0, 1, 1], [], []>} : vector<64x4xf32>, vector<4x64xf32>, vector<64x64xf32> -> vector<64x64xf32>
    %c0_4 = arith.constant 0 : index
    %c0_5 = arith.constant 0 : index
    %4 = vector.load %arg3[%c0_4, %c0_5] : memref<1x64xf32, #tpu.memory_space<vmem>>, vector<1x64xf32>
    %5 = vector.broadcast %4 : vector<1x64xf32> to vector<64x64xf32>
    %6 = arith.addf %3, %5 : vector<64x64xf32>
    %cst_6 = arith.constant 0.000000e+00 : f32
    %7 = vector.broadcast %cst_6 : f32 to vector<64x64xf32>
    %8 = arith.maximumf %6, %7 : vector<64x64xf32>
    %c0_7 = arith.constant 0 : index
    %c0_8 = arith.constant 0 : index
    %9 = vector.load %arg4[%c0_7, %c0_8] : memref<64x64xf32, #tpu.memory_space<vmem>>, vector<64x64xf32>
    %cst_9 = arith.constant dense<0.000000e+00> : vector<64x64xf32>
    %10 = tpu.matmul %8, %9, %cst_9 {dimension_numbers = #tpu.dot_dimension_numbers<[1], [0], [0], [1], [0, 0, 1, 1], [], []>} : vector<64x64xf32>, vector<64x64xf32>, vector<64x64xf32> -> vector<64x64xf32>
    %c0_10 = arith.constant 0 : index
    %c0_11 = arith.constant 0 : index
    %11 = vector.load %arg5[%c0_10, %c0_11] : memref<1x64xf32, #tpu.memory_space<vmem>>, vector<1x64xf32>
    %12 = vector.broadcast %11 : vector<1x64xf32> to vector<64x64xf32>
    %13 = arith.addf %10, %12 : vector<64x64xf32>
    %14 = vector.shape_cast %13 : vector<64x64xf32> to vector<8x8x64xf32>
    "tpu.trace_start"() <{level = 10 : i32, message = "bsf,btf->bst"}> : () -> ()
    %cst_12 = arith.constant dense<0.000000e+00> : vector<8x8x8xf32>
    %15 = tpu.matmul %14, %14, %cst_12 {dimension_numbers = #tpu.dot_dimension_numbers<[2], [2], [1], [1], [0, 0, 0, 1, 1, 1], [0], [0]>} : vector<8x8x64xf32>, vector<8x8x64xf32>, vector<8x8x8xf32> -> vector<8x8x8xf32>
    "tpu.trace_stop"() : () -> ()
    %cst_13 = arith.constant dense<0xFF800000> : vector<8x8xf32>
    %16 = vector.multi_reduction <maximumf>, %15, %cst_13 [2] : vector<8x8x8xf32> to vector<8x8xf32>
    %17 = vector.shape_cast %16 : vector<8x8xf32> to vector<8x8x1xf32>
    %18 = vector.broadcast %17 : vector<8x8x1xf32> to vector<8x8x8xf32>
    %19 = arith.subf %15, %18 : vector<8x8x8xf32>
    %20 = math.exp %19 : vector<8x8x8xf32>
    %cst_14 = arith.constant dense<0.000000e+00> : vector<8x8xf32>
    %21 = vector.multi_reduction <add>, %20, %cst_14 [2] : vector<8x8x8xf32> to vector<8x8xf32>
    %22 = vector.shape_cast %21 : vector<8x8xf32> to vector<8x8x1xf32>
    %23 = math.log %22 : vector<8x8x1xf32>
    %24 = arith.addf %17, %23 : vector<8x8x1xf32>
    %25 = vector.broadcast %24 : vector<8x8x1xf32> to vector<8x8x8xf32>
    %26 = arith.subf %15, %25 : vector<8x8x8xf32>
    %cst_15 = arith.constant dense<0xFF800000> : vector<8x8xf32>
    %27 = vector.multi_reduction <maximumf>, %26, %cst_15 [1] : vector<8x8x8xf32> to vector<8x8xf32>
    %28 = vector.shape_cast %27 : vector<8x8xf32> to vector<8x1x8xf32>
    %29 = vector.broadcast %28 : vector<8x1x8xf32> to vector<8x8x8xf32>
    %30 = arith.subf %26, %29 : vector<8x8x8xf32>
    %31 = math.exp %30 : vector<8x8x8xf32>
    %cst_16 = arith.constant dense<0.000000e+00> : vector<8x8xf32>
    %32 = vector.multi_reduction <add>, %31, %cst_16 [1] : vector<8x8x8xf32> to vector<8x8xf32>
    %33 = vector.shape_cast %32 : vector<8x8xf32> to vector<8x1x8xf32>
    %34 = math.log %33 : vector<8x1x8xf32>
    %35 = arith.addf %28, %34 : vector<8x1x8xf32>
    %36 = vector.broadcast %35 : vector<8x1x8xf32> to vector<8x8x8xf32>
    %37 = arith.subf %26, %36 : vector<8x8x8xf32>
    %cst_17 = arith.constant dense<0xFF800000> : vector<8x8xf32>
    %38 = vector.multi_reduction <maximumf>, %37, %cst_17 [2] : vector<8x8x8xf32> to vector<8x8xf32>
    %39 = vector.shape_cast %38 : vector<8x8xf32> to vector<8x8x1xf32>
    %40 = vector.broadcast %39 : vector<8x8x1xf32> to vector<8x8x8xf32>
    %41 = arith.subf %37, %40 : vector<8x8x8xf32>
    %42 = math.exp %41 : vector<8x8x8xf32>
    %cst_18 = arith.constant dense<0.000000e+00> : vector<8x8xf32>
    %43 = vector.multi_reduction <add>, %42, %cst_18 [2] : vector<8x8x8xf32> to vector<8x8xf32>
    %44 = vector.shape_cast %43 : vector<8x8xf32> to vector<8x8x1xf32>
    %45 = math.log %44 : vector<8x8x1xf32>
    %46 = arith.addf %39, %45 : vector<8x8x1xf32>
    %47 = vector.broadcast %46 : vector<8x8x1xf32> to vector<8x8x8xf32>
    %48 = arith.subf %37, %47 : vector<8x8x8xf32>
    %cst_19 = arith.constant dense<0xFF800000> : vector<8x8xf32>
    %49 = vector.multi_reduction <maximumf>, %48, %cst_19 [1] : vector<8x8x8xf32> to vector<8x8xf32>
    %50 = vector.shape_cast %49 : vector<8x8xf32> to vector<8x1x8xf32>
    %51 = vector.broadcast %50 : vector<8x1x8xf32> to vector<8x8x8xf32>
    %52 = arith.subf %48, %51 : vector<8x8x8xf32>
    %53 = math.exp %52 : vector<8x8x8xf32>
    %cst_20 = arith.constant dense<0.000000e+00> : vector<8x8xf32>
    %54 = vector.multi_reduction <add>, %53, %cst_20 [1] : vector<8x8x8xf32> to vector<8x8xf32>
    %55 = vector.shape_cast %54 : vector<8x8xf32> to vector<8x1x8xf32>
    %56 = math.log %55 : vector<8x1x8xf32>
    %57 = arith.addf %50, %56 : vector<8x1x8xf32>
    %58 = vector.broadcast %57 : vector<8x1x8xf32> to vector<8x8x8xf32>
    %59 = arith.subf %48, %58 : vector<8x8x8xf32>
    %cst_21 = arith.constant dense<0xFF800000> : vector<8x8xf32>
    %60 = vector.multi_reduction <maximumf>, %59, %cst_21 [2] : vector<8x8x8xf32> to vector<8x8xf32>
    %61 = vector.shape_cast %60 : vector<8x8xf32> to vector<8x8x1xf32>
    %62 = vector.broadcast %61 : vector<8x8x1xf32> to vector<8x8x8xf32>
    %63 = arith.subf %59, %62 : vector<8x8x8xf32>
    %64 = math.exp %63 : vector<8x8x8xf32>
    %cst_22 = arith.constant dense<0.000000e+00> : vector<8x8xf32>
    %65 = vector.multi_reduction <add>, %64, %cst_22 [2] : vector<8x8x8xf32> to vector<8x8xf32>
    %66 = vector.shape_cast %65 : vector<8x8xf32> to vector<8x8x1xf32>
    %67 = math.log %66 : vector<8x8x1xf32>
    %68 = arith.addf %61, %67 : vector<8x8x1xf32>
    %69 = vector.broadcast %68 : vector<8x8x1xf32> to vector<8x8x8xf32>
    %70 = arith.subf %59, %69 : vector<8x8x8xf32>
    %cst_23 = arith.constant dense<0xFF800000> : vector<8x8xf32>
    %71 = vector.multi_reduction <maximumf>, %70, %cst_23 [1] : vector<8x8x8xf32> to vector<8x8xf32>
    %72 = vector.shape_cast %71 : vector<8x8xf32> to vector<8x1x8xf32>
    %73 = vector.broadcast %72 : vector<8x1x8xf32> to vector<8x8x8xf32>
    %74 = arith.subf %70, %73 : vector<8x8x8xf32>
    %75 = math.exp %74 : vector<8x8x8xf32>
    %cst_24 = arith.constant dense<0.000000e+00> : vector<8x8xf32>
    %76 = vector.multi_reduction <add>, %75, %cst_24 [1] : vector<8x8x8xf32> to vector<8x8xf32>
    %77 = vector.shape_cast %76 : vector<8x8xf32> to vector<8x1x8xf32>
    %78 = math.log %77 : vector<8x1x8xf32>
    %79 = arith.addf %72, %78 : vector<8x1x8xf32>
    %80 = vector.broadcast %79 : vector<8x1x8xf32> to vector<8x8x8xf32>
    %81 = arith.subf %70, %80 : vector<8x8x8xf32>
    %cst_25 = arith.constant dense<0xFF800000> : vector<8x8xf32>
    %82 = vector.multi_reduction <maximumf>, %81, %cst_25 [2] : vector<8x8x8xf32> to vector<8x8xf32>
    %83 = vector.shape_cast %82 : vector<8x8xf32> to vector<8x8x1xf32>
    %84 = vector.broadcast %83 : vector<8x8x1xf32> to vector<8x8x8xf32>
    %85 = arith.subf %81, %84 : vector<8x8x8xf32>
    %86 = math.exp %85 : vector<8x8x8xf32>
    %cst_26 = arith.constant dense<0.000000e+00> : vector<8x8xf32>
    %87 = vector.multi_reduction <add>, %86, %cst_26 [2] : vector<8x8x8xf32> to vector<8x8xf32>
    %88 = vector.shape_cast %87 : vector<8x8xf32> to vector<8x8x1xf32>
    %89 = math.log %88 : vector<8x8x1xf32>
    %90 = arith.addf %83, %89 : vector<8x8x1xf32>
    %91 = vector.broadcast %90 : vector<8x8x1xf32> to vector<8x8x8xf32>
    %92 = arith.subf %81, %91 : vector<8x8x8xf32>
    %cst_27 = arith.constant dense<0xFF800000> : vector<8x8xf32>
    %93 = vector.multi_reduction <maximumf>, %92, %cst_27 [1] : vector<8x8x8xf32> to vector<8x8xf32>
    %94 = vector.shape_cast %93 : vector<8x8xf32> to vector<8x1x8xf32>
    %95 = vector.broadcast %94 : vector<8x1x8xf32> to vector<8x8x8xf32>
    %96 = arith.subf %92, %95 : vector<8x8x8xf32>
    %97 = math.exp %96 : vector<8x8x8xf32>
    %cst_28 = arith.constant dense<0.000000e+00> : vector<8x8xf32>
    %98 = vector.multi_reduction <add>, %97, %cst_28 [1] : vector<8x8x8xf32> to vector<8x8xf32>
    %99 = vector.shape_cast %98 : vector<8x8xf32> to vector<8x1x8xf32>
    %100 = math.log %99 : vector<8x1x8xf32>
    %101 = arith.addf %94, %100 : vector<8x1x8xf32>
    %102 = vector.broadcast %101 : vector<8x1x8xf32> to vector<8x8x8xf32>
    %103 = arith.subf %92, %102 : vector<8x8x8xf32>
    %cst_29 = arith.constant dense<0xFF800000> : vector<8x8xf32>
    %104 = vector.multi_reduction <maximumf>, %103, %cst_29 [2] : vector<8x8x8xf32> to vector<8x8xf32>
    %105 = vector.shape_cast %104 : vector<8x8xf32> to vector<8x8x1xf32>
    %106 = vector.broadcast %105 : vector<8x8x1xf32> to vector<8x8x8xf32>
    %107 = arith.subf %103, %106 : vector<8x8x8xf32>
    %108 = math.exp %107 : vector<8x8x8xf32>
    %cst_30 = arith.constant dense<0.000000e+00> : vector<8x8xf32>
    %109 = vector.multi_reduction <add>, %108, %cst_30 [2] : vector<8x8x8xf32> to vector<8x8xf32>
    %110 = vector.shape_cast %109 : vector<8x8xf32> to vector<8x8x1xf32>
    %111 = math.log %110 : vector<8x8x1xf32>
    %112 = arith.addf %105, %111 : vector<8x8x1xf32>
    %113 = vector.broadcast %112 : vector<8x8x1xf32> to vector<8x8x8xf32>
    %114 = arith.subf %103, %113 : vector<8x8x8xf32>
    %cst_31 = arith.constant dense<0xFF800000> : vector<8x8xf32>
    %115 = vector.multi_reduction <maximumf>, %114, %cst_31 [1] : vector<8x8x8xf32> to vector<8x8xf32>
    %116 = vector.shape_cast %115 : vector<8x8xf32> to vector<8x1x8xf32>
    %117 = vector.broadcast %116 : vector<8x1x8xf32> to vector<8x8x8xf32>
    %118 = arith.subf %114, %117 : vector<8x8x8xf32>
    %119 = math.exp %118 : vector<8x8x8xf32>
    %cst_32 = arith.constant dense<0.000000e+00> : vector<8x8xf32>
    %120 = vector.multi_reduction <add>, %119, %cst_32 [1] : vector<8x8x8xf32> to vector<8x8xf32>
    %121 = vector.shape_cast %120 : vector<8x8xf32> to vector<8x1x8xf32>
    %122 = math.log %121 : vector<8x1x8xf32>
    %123 = arith.addf %116, %122 : vector<8x1x8xf32>
    %124 = vector.broadcast %123 : vector<8x1x8xf32> to vector<8x8x8xf32>
    %125 = arith.subf %114, %124 : vector<8x8x8xf32>
    %cst_33 = arith.constant 1.000000e+01 : f32
    %126 = vector.broadcast %cst_33 : f32 to vector<8x8x8xf32>
    %127 = arith.mulf %125, %126 : vector<8x8x8xf32>
    %128 = math.exp %127 : vector<8x8x8xf32>
    "tpu.trace_start"() <{level = 10 : i32, message = "bst,btd->bsd"}> : () -> ()
    %cst_34 = arith.constant dense<0.000000e+00> : vector<8x8x4xf32>
    %129 = tpu.matmul %128, %0, %cst_34 {dimension_numbers = #tpu.dot_dimension_numbers<[2], [1], [1], [2], [0, 0, 0, 1, 1, 2], [0], [0]>} : vector<8x8x8xf32>, vector<8x8x4xf32>, vector<8x8x4xf32> -> vector<8x8x4xf32>
    "tpu.trace_stop"() : () -> ()
    %130 = vector.extract_strided_slice %129 {offsets = [0, 0, 0], sizes = [8, 1, 4], strides = [1, 1, 1]} : vector<8x8x4xf32> to vector<8x1x4xf32>
    %131 = vector.shape_cast %130 : vector<8x1x4xf32> to vector<8x4xf32>
    %132 = vector.extract_strided_slice %129 {offsets = [0, 1, 0], sizes = [8, 1, 4], strides = [1, 1, 1]} : vector<8x8x4xf32> to vector<8x1x4xf32>
    %133 = vector.shape_cast %132 : vector<8x1x4xf32> to vector<8x4xf32>
    %134 = vector.extract_strided_slice %129 {offsets = [0, 2, 0], sizes = [8, 1, 4], strides = [1, 1, 1]} : vector<8x8x4xf32> to vector<8x1x4xf32>
    %135 = vector.shape_cast %134 : vector<8x1x4xf32> to vector<8x4xf32>
    %136 = vector.extract_strided_slice %129 {offsets = [0, 3, 0], sizes = [8, 1, 4], strides = [1, 1, 1]} : vector<8x8x4xf32> to vector<8x1x4xf32>
    %137 = vector.shape_cast %136 : vector<8x1x4xf32> to vector<8x4xf32>
    %138 = vector.extract_strided_slice %129 {offsets = [0, 4, 0], sizes = [8, 1, 4], strides = [1, 1, 1]} : vector<8x8x4xf32> to vector<8x1x4xf32>
    %139 = vector.shape_cast %138 : vector<8x1x4xf32> to vector<8x4xf32>
    %140 = vector.extract_strided_slice %129 {offsets = [0, 5, 0], sizes = [8, 1, 4], strides = [1, 1, 1]} : vector<8x8x4xf32> to vector<8x1x4xf32>
    %141 = vector.shape_cast %140 : vector<8x1x4xf32> to vector<8x4xf32>
    %142 = vector.extract_strided_slice %129 {offsets = [0, 6, 0], sizes = [8, 1, 4], strides = [1, 1, 1]} : vector<8x8x4xf32> to vector<8x1x4xf32>
    %143 = vector.shape_cast %142 : vector<8x1x4xf32> to vector<8x4xf32>
    %144 = vector.extract_strided_slice %129 {offsets = [0, 7, 0], sizes = [8, 1, 4], strides = [1, 1, 1]} : vector<8x8x4xf32> to vector<8x1x4xf32>
    %145 = vector.shape_cast %144 : vector<8x1x4xf32> to vector<8x4xf32>
    %146 = tpu.concatenate %131, %133, %135, %137, %139, %141, %143, %145 in 0 : vector<8x4xf32>, vector<8x4xf32>, vector<8x4xf32>, vector<8x4xf32>, vector<8x4xf32>, vector<8x4xf32>, vector<8x4xf32>, vector<8x4xf32> -> vector<64x4xf32>
    %147 = arith.truncf %146 : vector<64x4xf32> to vector<64x4xbf16>
    %c0_35 = arith.constant 0 : index
    %c0_36 = arith.constant 0 : index
    %148 = vector.load %arg6[%c0_35, %c0_36] : memref<4x512xbf16, #tpu.memory_space<vmem>>, vector<4x512xbf16>
    %cst_37 = arith.constant dense<0.000000e+00> : vector<64x512xf32>
    %149 = tpu.matmul %147, %148, %cst_37 {dimension_numbers = #tpu.dot_dimension_numbers<[1], [0], [0], [1], [0, 0, 1, 1], [], []>} : vector<64x4xbf16>, vector<4x512xbf16>, vector<64x512xf32> -> vector<64x512xf32>
    %c0_38 = arith.constant 0 : index
    %c0_39 = arith.constant 0 : index
    %150 = vector.load %arg8[%c0_38, %c0_39] : memref<1x512xf32, #tpu.memory_space<vmem>>, vector<1x512xf32>
    %151 = vector.broadcast %150 : vector<1x512xf32> to vector<64x512xf32>
    %152 = arith.addf %149, %151 : vector<64x512xf32>
    %153 = vector.shape_cast %152 : vector<64x512xf32> to vector<8x8x512xf32>
    %c0_40 = arith.constant 0 : index
    %c0_41 = arith.constant 0 : index
    %154 = vector.load %arg7[%c0_40, %c0_41] : memref<128x512xbf16, #tpu.memory_space<vmem>>, vector<128x512xbf16>
    %cst_42 = arith.constant 0.000000e+00 : f32
    %155 = vector.broadcast %cst_42 : f32 to vector<8x128xf32>
    %cst_43 = arith.constant 0.000000e+00 : f32
    %156 = vector.broadcast %cst_43 : f32 to vector<8x128xf32>
    %157 = vector.extract_strided_slice %153 {offsets = [0, 0, 0], sizes = [1, 8, 512], strides = [1, 1, 1]} : vector<8x8x512xf32> to vector<1x8x512xf32>
    %158 = vector.shape_cast %157 : vector<1x8x512xf32> to vector<8x512xf32>
    %159 = arith.truncf %155 : vector<8x128xf32> to vector<8x128xbf16>
    %cst_44 = arith.constant dense<0.000000e+00> : vector<8x512xf32>
    %160 = tpu.matmul %159, %154, %cst_44 {dimension_numbers = #tpu.dot_dimension_numbers<[1], [0], [0], [1], [0, 0, 1, 1], [], []>} : vector<8x128xbf16>, vector<128x512xbf16>, vector<8x512xf32> -> vector<8x512xf32>
    %161 = arith.addf %158, %160 : vector<8x512xf32>
    %162 = vector.extract_strided_slice %161 {offsets = [0, 0], sizes = [8, 256], strides = [1, 1]} : vector<8x512xf32> to vector<8x256xf32>
    %163 = arith.negf %162 : vector<8x256xf32>
    %164 = math.exp %163 : vector<8x256xf32>
    %cst_45 = arith.constant 1.000000e+00 : f32
    %165 = vector.broadcast %cst_45 : f32 to vector<8x256xf32>
    %166 = arith.addf %165, %164 : vector<8x256xf32>
    %167 = arith.divf %165, %166 : vector<8x256xf32>
    %168 = vector.extract_strided_slice %167 {offsets = [0, 0], sizes = [8, 128], strides = [1, 1]} : vector<8x256xf32> to vector<8x128xf32>
    %169 = vector.extract_strided_slice %167 {offsets = [0, 128], sizes = [8, 128], strides = [1, 1]} : vector<8x256xf32> to vector<8x128xf32>
    %170 = vector.extract_strided_slice %161 {offsets = [0, 256], sizes = [8, 128], strides = [1, 1]} : vector<8x512xf32> to vector<8x128xf32>
    %171 = math.tanh %170 : vector<8x128xf32>
    %172 = vector.extract_strided_slice %161 {offsets = [0, 384], sizes = [8, 128], strides = [1, 1]} : vector<8x512xf32> to vector<8x128xf32>
    %173 = arith.negf %172 : vector<8x128xf32>
    %174 = math.exp %173 : vector<8x128xf32>
    %cst_46 = arith.constant 1.000000e+00 : f32
    %175 = vector.broadcast %cst_46 : f32 to vector<8x128xf32>
    %176 = arith.addf %175, %174 : vector<8x128xf32>
    %177 = arith.divf %175, %176 : vector<8x128xf32>
    %178 = arith.mulf %169, %156 : vector<8x128xf32>
    %179 = arith.mulf %168, %171 : vector<8x128xf32>
    %180 = arith.addf %178, %179 : vector<8x128xf32>
    %181 = math.tanh %180 : vector<8x128xf32>
    %182 = arith.mulf %177, %181 : vector<8x128xf32>
    %c0_47 = arith.constant 0 : index
    %c0_48 = arith.constant 0 : index
    %c0_49 = arith.constant 0 : index
    %183 = vector.load %arg17[%c0_47, %c0_48, %c0_49] : memref<8x8x128xf32, #tpu.memory_space<vmem>>, vector<1x8x128xf32>
    %184 = vector.shape_cast %183 : vector<1x8x128xf32> to vector<8x128xf32>
    %185 = vector.shape_cast %182 : vector<8x128xf32> to vector<1x8x128xf32>
    tpu.vector_store %arg17[%c0_47, %c0_48, %c0_49], %185 {strides = array<i32>} : memref<8x8x128xf32, #tpu.memory_space<vmem>>, vector<1x8x128xf32>,
    %186 = vector.extract_strided_slice %153 {offsets = [1, 0, 0], sizes = [1, 8, 512], strides = [1, 1, 1]} : vector<8x8x512xf32> to vector<1x8x512xf32>
    %187 = vector.shape_cast %186 : vector<1x8x512xf32> to vector<8x512xf32>
    %188 = arith.truncf %182 : vector<8x128xf32> to vector<8x128xbf16>
    %cst_50 = arith.constant dense<0.000000e+00> : vector<8x512xf32>
    %189 = tpu.matmul %188, %154, %cst_50 {dimension_numbers = #tpu.dot_dimension_numbers<[1], [0], [0], [1], [0, 0, 1, 1], [], []>} : vector<8x128xbf16>, vector<128x512xbf16>, vector<8x512xf32> -> vector<8x512xf32>
    %190 = arith.addf %187, %189 : vector<8x512xf32>
    %191 = vector.extract_strided_slice %190 {offsets = [0, 0], sizes = [8, 256], strides = [1, 1]} : vector<8x512xf32> to vector<8x256xf32>
    %192 = arith.negf %191 : vector<8x256xf32>
    %193 = math.exp %192 : vector<8x256xf32>
    %cst_51 = arith.constant 1.000000e+00 : f32
    %194 = vector.broadcast %cst_51 : f32 to vector<8x256xf32>
    %195 = arith.addf %194, %193 : vector<8x256xf32>
    %196 = arith.divf %194, %195 : vector<8x256xf32>
    %197 = vector.extract_strided_slice %196 {offsets = [0, 0], sizes = [8, 128], strides = [1, 1]} : vector<8x256xf32> to vector<8x128xf32>
    %198 = vector.extract_strided_slice %196 {offsets = [0, 128], sizes = [8, 128], strides = [1, 1]} : vector<8x256xf32> to vector<8x128xf32>
    %199 = vector.extract_strided_slice %190 {offsets = [0, 256], sizes = [8, 128], strides = [1, 1]} : vector<8x512xf32> to vector<8x128xf32>
    %200 = math.tanh %199 : vector<8x128xf32>
    %201 = vector.extract_strided_slice %190 {offsets = [0, 384], sizes = [8, 128], strides = [1, 1]} : vector<8x512xf32> to vector<8x128xf32>
    %202 = arith.negf %201 : vector<8x128xf32>
    %203 = math.exp %202 : vector<8x128xf32>
    %cst_52 = arith.constant 1.000000e+00 : f32
    %204 = vector.broadcast %cst_52 : f32 to vector<8x128xf32>
    %205 = arith.addf %204, %203 : vector<8x128xf32>
    %206 = arith.divf %204, %205 : vector<8x128xf32>
    %207 = arith.mulf %198, %180 : vector<8x128xf32>
    %208 = arith.mulf %197, %200 : vector<8x128xf32>
    %209 = arith.addf %207, %208 : vector<8x128xf32>
    %210 = math.tanh %209 : vector<8x128xf32>
    %211 = arith.mulf %206, %210 : vector<8x128xf32>
    %c1 = arith.constant 1 : index
    %c0_53 = arith.constant 0 : index
    %c0_54 = arith.constant 0 : index
    %212 = vector.load %arg17[%c1, %c0_53, %c0_54] : memref<8x8x128xf32, #tpu.memory_space<vmem>>, vector<1x8x128xf32>
    %213 = vector.shape_cast %212 : vector<1x8x128xf32> to vector<8x128xf32>
    %214 = vector.shape_cast %211 : vector<8x128xf32> to vector<1x8x128xf32>
    tpu.vector_store %arg17[%c1, %c0_53, %c0_54], %214 {strides = array<i32>} : memref<8x8x128xf32, #tpu.memory_space<vmem>>, vector<1x8x128xf32>,
    %215 = vector.extract_strided_slice %153 {offsets = [2, 0, 0], sizes = [1, 8, 512], strides = [1, 1, 1]} : vector<8x8x512xf32> to vector<1x8x512xf32>
    %216 = vector.shape_cast %215 : vector<1x8x512xf32> to vector<8x512xf32>
    %217 = arith.truncf %211 : vector<8x128xf32> to vector<8x128xbf16>
    %cst_55 = arith.constant dense<0.000000e+00> : vector<8x512xf32>
    %218 = tpu.matmul %217, %154, %cst_55 {dimension_numbers = #tpu.dot_dimension_numbers<[1], [0], [0], [1], [0, 0, 1, 1], [], []>} : vector<8x128xbf16>, vector<128x512xbf16>, vector<8x512xf32> -> vector<8x512xf32>
    %219 = arith.addf %216, %218 : vector<8x512xf32>
    %220 = vector.extract_strided_slice %219 {offsets = [0, 0], sizes = [8, 256], strides = [1, 1]} : vector<8x512xf32> to vector<8x256xf32>
    %221 = arith.negf %220 : vector<8x256xf32>
    %222 = math.exp %221 : vector<8x256xf32>
    %cst_56 = arith.constant 1.000000e+00 : f32
    %223 = vector.broadcast %cst_56 : f32 to vector<8x256xf32>
    %224 = arith.addf %223, %222 : vector<8x256xf32>
    %225 = arith.divf %223, %224 : vector<8x256xf32>
    %226 = vector.extract_strided_slice %225 {offsets = [0, 0], sizes = [8, 128], strides = [1, 1]} : vector<8x256xf32> to vector<8x128xf32>
    %227 = vector.extract_strided_slice %225 {offsets = [0, 128], sizes = [8, 128], strides = [1, 1]} : vector<8x256xf32> to vector<8x128xf32>
    %228 = vector.extract_strided_slice %219 {offsets = [0, 256], sizes = [8, 128], strides = [1, 1]} : vector<8x512xf32> to vector<8x128xf32>
    %229 = math.tanh %228 : vector<8x128xf32>
    %230 = vector.extract_strided_slice %219 {offsets = [0, 384], sizes = [8, 128], strides = [1, 1]} : vector<8x512xf32> to vector<8x128xf32>
    %231 = arith.negf %230 : vector<8x128xf32>
    %232 = math.exp %231 : vector<8x128xf32>
    %cst_57 = arith.constant 1.000000e+00 : f32
    %233 = vector.broadcast %cst_57 : f32 to vector<8x128xf32>
    %234 = arith.addf %233, %232 : vector<8x128xf32>
    %235 = arith.divf %233, %234 : vector<8x128xf32>
    %236 = arith.mulf %227, %209 : vector<8x128xf32>
    %237 = arith.mulf %226, %229 : vector<8x128xf32>
    %238 = arith.addf %236, %237 : vector<8x128xf32>
    %239 = math.tanh %238 : vector<8x128xf32>
    %240 = arith.mulf %235, %239 : vector<8x128xf32>
    %c2 = arith.constant 2 : index
    %c0_58 = arith.constant 0 : index
    %c0_59 = arith.constant 0 : index
    %241 = vector.load %arg17[%c2, %c0_58, %c0_59] : memref<8x8x128xf32, #tpu.memory_space<vmem>>, vector<1x8x128xf32>
    %242 = vector.shape_cast %241 : vector<1x8x128xf32> to vector<8x128xf32>
    %243 = vector.shape_cast %240 : vector<8x128xf32> to vector<1x8x128xf32>
    tpu.vector_store %arg17[%c2, %c0_58, %c0_59], %243 {strides = array<i32>} : memref<8x8x128xf32, #tpu.memory_space<vmem>>, vector<1x8x128xf32>,
    %244 = vector.extract_strided_slice %153 {offsets = [3, 0, 0], sizes = [1, 8, 512], strides = [1, 1, 1]} : vector<8x8x512xf32> to vector<1x8x512xf32>
    %245 = vector.shape_cast %244 : vector<1x8x512xf32> to vector<8x512xf32>
    %246 = arith.truncf %240 : vector<8x128xf32> to vector<8x128xbf16>
    %cst_60 = arith.constant dense<0.000000e+00> : vector<8x512xf32>
    %247 = tpu.matmul %246, %154, %cst_60 {dimension_numbers = #tpu.dot_dimension_numbers<[1], [0], [0], [1], [0, 0, 1, 1], [], []>} : vector<8x128xbf16>, vector<128x512xbf16>, vector<8x512xf32> -> vector<8x512xf32>
    %248 = arith.addf %245, %247 : vector<8x512xf32>
    %249 = vector.extract_strided_slice %248 {offsets = [0, 0], sizes = [8, 256], strides = [1, 1]} : vector<8x512xf32> to vector<8x256xf32>
    %250 = arith.negf %249 : vector<8x256xf32>
    %251 = math.exp %250 : vector<8x256xf32>
    %cst_61 = arith.constant 1.000000e+00 : f32
    %252 = vector.broadcast %cst_61 : f32 to vector<8x256xf32>
    %253 = arith.addf %252, %251 : vector<8x256xf32>
    %254 = arith.divf %252, %253 : vector<8x256xf32>
    %255 = vector.extract_strided_slice %254 {offsets = [0, 0], sizes = [8, 128], strides = [1, 1]} : vector<8x256xf32> to vector<8x128xf32>
    %256 = vector.extract_strided_slice %254 {offsets = [0, 128], sizes = [8, 128], strides = [1, 1]} : vector<8x256xf32> to vector<8x128xf32>
    %257 = vector.extract_strided_slice %248 {offsets = [0, 256], sizes = [8, 128], strides = [1, 1]} : vector<8x512xf32> to vector<8x128xf32>
    %258 = math.tanh %257 : vector<8x128xf32>
    %259 = vector.extract_strided_slice %248 {offsets = [0, 384], sizes = [8, 128], strides = [1, 1]} : vector<8x512xf32> to vector<8x128xf32>
    %260 = arith.negf %259 : vector<8x128xf32>
    %261 = math.exp %260 : vector<8x128xf32>
    %cst_62 = arith.constant 1.000000e+00 : f32
    %262 = vector.broadcast %cst_62 : f32 to vector<8x128xf32>
    %263 = arith.addf %262, %261 : vector<8x128xf32>
    %264 = arith.divf %262, %263 : vector<8x128xf32>
    %265 = arith.mulf %256, %238 : vector<8x128xf32>
    %266 = arith.mulf %255, %258 : vector<8x128xf32>
    %267 = arith.addf %265, %266 : vector<8x128xf32>
    %268 = math.tanh %267 : vector<8x128xf32>
    %269 = arith.mulf %264, %268 : vector<8x128xf32>
    %c3 = arith.constant 3 : index
    %c0_63 = arith.constant 0 : index
    %c0_64 = arith.constant 0 : index
    %270 = vector.load %arg17[%c3, %c0_63, %c0_64] : memref<8x8x128xf32, #tpu.memory_space<vmem>>, vector<1x8x128xf32>
    %271 = vector.shape_cast %270 : vector<1x8x128xf32> to vector<8x128xf32>
    %272 = vector.shape_cast %269 : vector<8x128xf32> to vector<1x8x128xf32>
    tpu.vector_store %arg17[%c3, %c0_63, %c0_64], %272 {strides = array<i32>} : memref<8x8x128xf32, #tpu.memory_space<vmem>>, vector<1x8x128xf32>,
    %273 = vector.extract_strided_slice %153 {offsets = [4, 0, 0], sizes = [1, 8, 512], strides = [1, 1, 1]} : vector<8x8x512xf32> to vector<1x8x512xf32>
    %274 = vector.shape_cast %273 : vector<1x8x512xf32> to vector<8x512xf32>
    %275 = arith.truncf %269 : vector<8x128xf32> to vector<8x128xbf16>
    %cst_65 = arith.constant dense<0.000000e+00> : vector<8x512xf32>
    %276 = tpu.matmul %275, %154, %cst_65 {dimension_numbers = #tpu.dot_dimension_numbers<[1], [0], [0], [1], [0, 0, 1, 1], [], []>} : vector<8x128xbf16>, vector<128x512xbf16>, vector<8x512xf32> -> vector<8x512xf32>
    %277 = arith.addf %274, %276 : vector<8x512xf32>
    %278 = vector.extract_strided_slice %277 {offsets = [0, 0], sizes = [8, 256], strides = [1, 1]} : vector<8x512xf32> to vector<8x256xf32>
    %279 = arith.negf %278 : vector<8x256xf32>
    %280 = math.exp %279 : vector<8x256xf32>
    %cst_66 = arith.constant 1.000000e+00 : f32
    %281 = vector.broadcast %cst_66 : f32 to vector<8x256xf32>
    %282 = arith.addf %281, %280 : vector<8x256xf32>
    %283 = arith.divf %281, %282 : vector<8x256xf32>
    %284 = vector.extract_strided_slice %283 {offsets = [0, 0], sizes = [8, 128], strides = [1, 1]} : vector<8x256xf32> to vector<8x128xf32>
    %285 = vector.extract_strided_slice %283 {offsets = [0, 128], sizes = [8, 128], strides = [1, 1]} : vector<8x256xf32> to vector<8x128xf32>
    %286 = vector.extract_strided_slice %277 {offsets = [0, 256], sizes = [8, 128], strides = [1, 1]} : vector<8x512xf32> to vector<8x128xf32>
    %287 = math.tanh %286 : vector<8x128xf32>
    %288 = vector.extract_strided_slice %277 {offsets = [0, 384], sizes = [8, 128], strides = [1, 1]} : vector<8x512xf32> to vector<8x128xf32>
    %289 = arith.negf %288 : vector<8x128xf32>
    %290 = math.exp %289 : vector<8x128xf32>
    %cst_67 = arith.constant 1.000000e+00 : f32
    %291 = vector.broadcast %cst_67 : f32 to vector<8x128xf32>
    %292 = arith.addf %291, %290 : vector<8x128xf32>
    %293 = arith.divf %291, %292 : vector<8x128xf32>
    %294 = arith.mulf %285, %267 : vector<8x128xf32>
    %295 = arith.mulf %284, %287 : vector<8x128xf32>
    %296 = arith.addf %294, %295 : vector<8x128xf32>
    %297 = math.tanh %296 : vector<8x128xf32>
    %298 = arith.mulf %293, %297 : vector<8x128xf32>
    %c4 = arith.constant 4 : index
    %c0_68 = arith.constant 0 : index
    %c0_69 = arith.constant 0 : index
    %299 = vector.load %arg17[%c4, %c0_68, %c0_69] : memref<8x8x128xf32, #tpu.memory_space<vmem>>, vector<1x8x128xf32>
    %300 = vector.shape_cast %299 : vector<1x8x128xf32> to vector<8x128xf32>
    %301 = vector.shape_cast %298 : vector<8x128xf32> to vector<1x8x128xf32>
    tpu.vector_store %arg17[%c4, %c0_68, %c0_69], %301 {strides = array<i32>} : memref<8x8x128xf32, #tpu.memory_space<vmem>>, vector<1x8x128xf32>,
    %302 = vector.extract_strided_slice %153 {offsets = [5, 0, 0], sizes = [1, 8, 512], strides = [1, 1, 1]} : vector<8x8x512xf32> to vector<1x8x512xf32>
    %303 = vector.shape_cast %302 : vector<1x8x512xf32> to vector<8x512xf32>
    %304 = arith.truncf %298 : vector<8x128xf32> to vector<8x128xbf16>
    %cst_70 = arith.constant dense<0.000000e+00> : vector<8x512xf32>
    %305 = tpu.matmul %304, %154, %cst_70 {dimension_numbers = #tpu.dot_dimension_numbers<[1], [0], [0], [1], [0, 0, 1, 1], [], []>} : vector<8x128xbf16>, vector<128x512xbf16>, vector<8x512xf32> -> vector<8x512xf32>
    %306 = arith.addf %303, %305 : vector<8x512xf32>
    %307 = vector.extract_strided_slice %306 {offsets = [0, 0], sizes = [8, 256], strides = [1, 1]} : vector<8x512xf32> to vector<8x256xf32>
    %308 = arith.negf %307 : vector<8x256xf32>
    %309 = math.exp %308 : vector<8x256xf32>
    %cst_71 = arith.constant 1.000000e+00 : f32
    %310 = vector.broadcast %cst_71 : f32 to vector<8x256xf32>
    %311 = arith.addf %310, %309 : vector<8x256xf32>
    %312 = arith.divf %310, %311 : vector<8x256xf32>
    %313 = vector.extract_strided_slice %312 {offsets = [0, 0], sizes = [8, 128], strides = [1, 1]} : vector<8x256xf32> to vector<8x128xf32>
    %314 = vector.extract_strided_slice %312 {offsets = [0, 128], sizes = [8, 128], strides = [1, 1]} : vector<8x256xf32> to vector<8x128xf32>
    %315 = vector.extract_strided_slice %306 {offsets = [0, 256], sizes = [8, 128], strides = [1, 1]} : vector<8x512xf32> to vector<8x128xf32>
    %316 = math.tanh %315 : vector<8x128xf32>
    %317 = vector.extract_strided_slice %306 {offsets = [0, 384], sizes = [8, 128], strides = [1, 1]} : vector<8x512xf32> to vector<8x128xf32>
    %318 = arith.negf %317 : vector<8x128xf32>
    %319 = math.exp %318 : vector<8x128xf32>
    %cst_72 = arith.constant 1.000000e+00 : f32
    %320 = vector.broadcast %cst_72 : f32 to vector<8x128xf32>
    %321 = arith.addf %320, %319 : vector<8x128xf32>
    %322 = arith.divf %320, %321 : vector<8x128xf32>
    %323 = arith.mulf %314, %296 : vector<8x128xf32>
    %324 = arith.mulf %313, %316 : vector<8x128xf32>
    %325 = arith.addf %323, %324 : vector<8x128xf32>
    %326 = math.tanh %325 : vector<8x128xf32>
    %327 = arith.mulf %322, %326 : vector<8x128xf32>
    %c5 = arith.constant 5 : index
    %c0_73 = arith.constant 0 : index
    %c0_74 = arith.constant 0 : index
    %328 = vector.load %arg17[%c5, %c0_73, %c0_74] : memref<8x8x128xf32, #tpu.memory_space<vmem>>, vector<1x8x128xf32>
    %329 = vector.shape_cast %328 : vector<1x8x128xf32> to vector<8x128xf32>
    %330 = vector.shape_cast %327 : vector<8x128xf32> to vector<1x8x128xf32>
    tpu.vector_store %arg17[%c5, %c0_73, %c0_74], %330 {strides = array<i32>} : memref<8x8x128xf32, #tpu.memory_space<vmem>>, vector<1x8x128xf32>,
    %331 = vector.extract_strided_slice %153 {offsets = [6, 0, 0], sizes = [1, 8, 512], strides = [1, 1, 1]} : vector<8x8x512xf32> to vector<1x8x512xf32>
    %332 = vector.shape_cast %331 : vector<1x8x512xf32> to vector<8x512xf32>
    %333 = arith.truncf %327 : vector<8x128xf32> to vector<8x128xbf16>
    %cst_75 = arith.constant dense<0.000000e+00> : vector<8x512xf32>
    %334 = tpu.matmul %333, %154, %cst_75 {dimension_numbers = #tpu.dot_dimension_numbers<[1], [0], [0], [1], [0, 0, 1, 1], [], []>} : vector<8x128xbf16>, vector<128x512xbf16>, vector<8x512xf32> -> vector<8x512xf32>
    %335 = arith.addf %332, %334 : vector<8x512xf32>
    %336 = vector.extract_strided_slice %335 {offsets = [0, 0], sizes = [8, 256], strides = [1, 1]} : vector<8x512xf32> to vector<8x256xf32>
    %337 = arith.negf %336 : vector<8x256xf32>
    %338 = math.exp %337 : vector<8x256xf32>
    %cst_76 = arith.constant 1.000000e+00 : f32
    %339 = vector.broadcast %cst_76 : f32 to vector<8x256xf32>
    %340 = arith.addf %339, %338 : vector<8x256xf32>
    %341 = arith.divf %339, %340 : vector<8x256xf32>
    %342 = vector.extract_strided_slice %341 {offsets = [0, 0], sizes = [8, 128], strides = [1, 1]} : vector<8x256xf32> to vector<8x128xf32>
    %343 = vector.extract_strided_slice %341 {offsets = [0, 128], sizes = [8, 128], strides = [1, 1]} : vector<8x256xf32> to vector<8x128xf32>
    %344 = vector.extract_strided_slice %335 {offsets = [0, 256], sizes = [8, 128], strides = [1, 1]} : vector<8x512xf32> to vector<8x128xf32>
    %345 = math.tanh %344 : vector<8x128xf32>
    %346 = vector.extract_strided_slice %335 {offsets = [0, 384], sizes = [8, 128], strides = [1, 1]} : vector<8x512xf32> to vector<8x128xf32>
    %347 = arith.negf %346 : vector<8x128xf32>
    %348 = math.exp %347 : vector<8x128xf32>
    %cst_77 = arith.constant 1.000000e+00 : f32
    %349 = vector.broadcast %cst_77 : f32 to vector<8x128xf32>
    %350 = arith.addf %349, %348 : vector<8x128xf32>
    %351 = arith.divf %349, %350 : vector<8x128xf32>
    %352 = arith.mulf %343, %325 : vector<8x128xf32>
    %353 = arith.mulf %342, %345 : vector<8x128xf32>
    %354 = arith.addf %352, %353 : vector<8x128xf32>
    %355 = math.tanh %354 : vector<8x128xf32>
    %356 = arith.mulf %351, %355 : vector<8x128xf32>
    %c6 = arith.constant 6 : index
    %c0_78 = arith.constant 0 : index
    %c0_79 = arith.constant 0 : index
    %357 = vector.load %arg17[%c6, %c0_78, %c0_79] : memref<8x8x128xf32, #tpu.memory_space<vmem>>, vector<1x8x128xf32>
    %358 = vector.shape_cast %357 : vector<1x8x128xf32> to vector<8x128xf32>
    %359 = vector.shape_cast %356 : vector<8x128xf32> to vector<1x8x128xf32>
    tpu.vector_store %arg17[%c6, %c0_78, %c0_79], %359 {strides = array<i32>} : memref<8x8x128xf32, #tpu.memory_space<vmem>>, vector<1x8x128xf32>,
    %360 = vector.extract_strided_slice %153 {offsets = [7, 0, 0], sizes = [1, 8, 512], strides = [1, 1, 1]} : vector<8x8x512xf32> to vector<1x8x512xf32>
    %361 = vector.shape_cast %360 : vector<1x8x512xf32> to vector<8x512xf32>
    %362 = arith.truncf %356 : vector<8x128xf32> to vector<8x128xbf16>
    %cst_80 = arith.constant dense<0.000000e+00> : vector<8x512xf32>
    %363 = tpu.matmul %362, %154, %cst_80 {dimension_numbers = #tpu.dot_dimension_numbers<[1], [0], [0], [1], [0, 0, 1, 1], [], []>} : vector<8x128xbf16>, vector<128x512xbf16>, vector<8x512xf32> -> vector<8x512xf32>
    %364 = arith.addf %361, %363 : vector<8x512xf32>
    %365 = vector.extract_strided_slice %364 {offsets = [0, 0], sizes = [8, 256], strides = [1, 1]} : vector<8x512xf32> to vector<8x256xf32>
    %366 = arith.negf %365 : vector<8x256xf32>
    %367 = math.exp %366 : vector<8x256xf32>
    %cst_81 = arith.constant 1.000000e+00 : f32
    %368 = vector.broadcast %cst_81 : f32 to vector<8x256xf32>
    %369 = arith.addf %368, %367 : vector<8x256xf32>
    %370 = arith.divf %368, %369 : vector<8x256xf32>
    %371 = vector.extract_strided_slice %370 {offsets = [0, 0], sizes = [8, 128], strides = [1, 1]} : vector<8x256xf32> to vector<8x128xf32>
    %372 = vector.extract_strided_slice %370 {offsets = [0, 128], sizes = [8, 128], strides = [1, 1]} : vector<8x256xf32> to vector<8x128xf32>
    %373 = vector.extract_strided_slice %364 {offsets = [0, 256], sizes = [8, 128], strides = [1, 1]} : vector<8x512xf32> to vector<8x128xf32>
    %374 = math.tanh %373 : vector<8x128xf32>
    %375 = vector.extract_strided_slice %364 {offsets = [0, 384], sizes = [8, 128], strides = [1, 1]} : vector<8x512xf32> to vector<8x128xf32>
    %376 = arith.negf %375 : vector<8x128xf32>
    %377 = math.exp %376 : vector<8x128xf32>
    %cst_82 = arith.constant 1.000000e+00 : f32
    %378 = vector.broadcast %cst_82 : f32 to vector<8x128xf32>
    %379 = arith.addf %378, %377 : vector<8x128xf32>
    %380 = arith.divf %378, %379 : vector<8x128xf32>
    %381 = arith.mulf %372, %354 : vector<8x128xf32>
    %382 = arith.mulf %371, %374 : vector<8x128xf32>
    %383 = arith.addf %381, %382 : vector<8x128xf32>
    %384 = math.tanh %383 : vector<8x128xf32>
    %385 = arith.mulf %380, %384 : vector<8x128xf32>
    %c7 = arith.constant 7 : index
    %c0_83 = arith.constant 0 : index
    %c0_84 = arith.constant 0 : index
    %386 = vector.load %arg17[%c7, %c0_83, %c0_84] : memref<8x8x128xf32, #tpu.memory_space<vmem>>, vector<1x8x128xf32>
    %387 = vector.shape_cast %386 : vector<1x8x128xf32> to vector<8x128xf32>
    %388 = vector.shape_cast %385 : vector<8x128xf32> to vector<1x8x128xf32>
    tpu.vector_store %arg17[%c7, %c0_83, %c0_84], %388 {strides = array<i32>} : memref<8x8x128xf32, #tpu.memory_space<vmem>>, vector<1x8x128xf32>,
    %c0_85 = arith.constant 0 : index
    %c0_86 = arith.constant 0 : index
    %c0_87 = arith.constant 0 : index
    %389 = vector.load %arg17[%c0_85, %c0_86, %c0_87] : memref<8x8x128xf32, #tpu.memory_space<vmem>>, vector<8x8x128xf32>
    %390 = vector.shape_cast %389 : vector<8x8x128xf32> to vector<64x128xf32>
    %391 = arith.truncf %390 : vector<64x128xf32> to vector<64x128xbf16>
    %c0_88 = arith.constant 0 : index
    %c0_89 = arith.constant 0 : index
    %392 = vector.load %arg9[%c0_88, %c0_89] : memref<128x256xbf16, #tpu.memory_space<vmem>>, vector<128x256xbf16>
    %cst_90 = arith.constant dense<0.000000e+00> : vector<64x256xf32>
    %393 = tpu.matmul %391, %392, %cst_90 {dimension_numbers = #tpu.dot_dimension_numbers<[1], [0], [0], [1], [0, 0, 1, 1], [], []>} : vector<64x128xbf16>, vector<128x256xbf16>, vector<64x256xf32> -> vector<64x256xf32>
    %c0_91 = arith.constant 0 : index
    %c0_92 = arith.constant 0 : index
    %394 = vector.load %arg11[%c0_91, %c0_92] : memref<1x256xf32, #tpu.memory_space<vmem>>, vector<1x256xf32>
    %395 = vector.broadcast %394 : vector<1x256xf32> to vector<64x256xf32>
    %396 = arith.addf %393, %395 : vector<64x256xf32>
    %397 = vector.shape_cast %396 : vector<64x256xf32> to vector<8x8x256xf32>
    %c0_93 = arith.constant 0 : index
    %c0_94 = arith.constant 0 : index
    %398 = vector.load %arg10[%c0_93, %c0_94] : memref<64x256xbf16, #tpu.memory_space<vmem>>, vector<64x256xbf16>
    %cst_95 = arith.constant 0.000000e+00 : f32
    %399 = vector.broadcast %cst_95 : f32 to vector<8x64xf32>
    %cst_96 = arith.constant 0.000000e+00 : f32
    %400 = vector.broadcast %cst_96 : f32 to vector<8x64xf32>
    %401 = vector.extract_strided_slice %397 {offsets = [0, 0, 0], sizes = [1, 8, 256], strides = [1, 1, 1]} : vector<8x8x256xf32> to vector<1x8x256xf32>
    %402 = vector.shape_cast %401 : vector<1x8x256xf32> to vector<8x256xf32>
    %403 = arith.truncf %399 : vector<8x64xf32> to vector<8x64xbf16>
    %cst_97 = arith.constant dense<0.000000e+00> : vector<8x256xf32>
    %404 = tpu.matmul %403, %398, %cst_97 {dimension_numbers = #tpu.dot_dimension_numbers<[1], [0], [0], [1], [0, 0, 1, 1], [], []>} : vector<8x64xbf16>, vector<64x256xbf16>, vector<8x256xf32> -> vector<8x256xf32>
    %405 = arith.addf %402, %404 : vector<8x256xf32>
    %406 = vector.extract_strided_slice %405 {offsets = [0, 0], sizes = [8, 128], strides = [1, 1]} : vector<8x256xf32> to vector<8x128xf32>
    %407 = arith.negf %406 : vector<8x128xf32>
    %408 = math.exp %407 : vector<8x128xf32>
    %cst_98 = arith.constant 1.000000e+00 : f32
    %409 = vector.broadcast %cst_98 : f32 to vector<8x128xf32>
    %410 = arith.addf %409, %408 : vector<8x128xf32>
    %411 = arith.divf %409, %410 : vector<8x128xf32>
    %412 = vector.extract_strided_slice %411 {offsets = [0, 0], sizes = [8, 64], strides = [1, 1]} : vector<8x128xf32> to vector<8x64xf32>
    %413 = vector.extract_strided_slice %411 {offsets = [0, 64], sizes = [8, 64], strides = [1, 1]} : vector<8x128xf32> to vector<8x64xf32>
    %414 = vector.extract_strided_slice %405 {offsets = [0, 128], sizes = [8, 64], strides = [1, 1]} : vector<8x256xf32> to vector<8x64xf32>
    %415 = math.tanh %414 : vector<8x64xf32>
    %416 = vector.extract_strided_slice %405 {offsets = [0, 192], sizes = [8, 64], strides = [1, 1]} : vector<8x256xf32> to vector<8x64xf32>
    %417 = arith.negf %416 : vector<8x64xf32>
    %418 = math.exp %417 : vector<8x64xf32>
    %cst_99 = arith.constant 1.000000e+00 : f32
    %419 = vector.broadcast %cst_99 : f32 to vector<8x64xf32>
    %420 = arith.addf %419, %418 : vector<8x64xf32>
    %421 = arith.divf %419, %420 : vector<8x64xf32>
    %422 = arith.mulf %413, %400 : vector<8x64xf32>
    %423 = arith.mulf %412, %415 : vector<8x64xf32>
    %424 = arith.addf %422, %423 : vector<8x64xf32>
    %425 = math.tanh %424 : vector<8x64xf32>
    %426 = arith.mulf %421, %425 : vector<8x64xf32>
    %427 = vector.extract_strided_slice %397 {offsets = [1, 0, 0], sizes = [1, 8, 256], strides = [1, 1, 1]} : vector<8x8x256xf32> to vector<1x8x256xf32>
    %428 = vector.shape_cast %427 : vector<1x8x256xf32> to vector<8x256xf32>
    %429 = arith.truncf %426 : vector<8x64xf32> to vector<8x64xbf16>
    %cst_100 = arith.constant dense<0.000000e+00> : vector<8x256xf32>
    %430 = tpu.matmul %429, %398, %cst_100 {dimension_numbers = #tpu.dot_dimension_numbers<[1], [0], [0], [1], [0, 0, 1, 1], [], []>} : vector<8x64xbf16>, vector<64x256xbf16>, vector<8x256xf32> -> vector<8x256xf32>
    %431 = arith.addf %428, %430 : vector<8x256xf32>
    %432 = vector.extract_strided_slice %431 {offsets = [0, 0], sizes = [8, 128], strides = [1, 1]} : vector<8x256xf32> to vector<8x128xf32>
    %433 = arith.negf %432 : vector<8x128xf32>
    %434 = math.exp %433 : vector<8x128xf32>
    %cst_101 = arith.constant 1.000000e+00 : f32
    %435 = vector.broadcast %cst_101 : f32 to vector<8x128xf32>
    %436 = arith.addf %435, %434 : vector<8x128xf32>
    %437 = arith.divf %435, %436 : vector<8x128xf32>
    %438 = vector.extract_strided_slice %437 {offsets = [0, 0], sizes = [8, 64], strides = [1, 1]} : vector<8x128xf32> to vector<8x64xf32>
    %439 = vector.extract_strided_slice %437 {offsets = [0, 64], sizes = [8, 64], strides = [1, 1]} : vector<8x128xf32> to vector<8x64xf32>
    %440 = vector.extract_strided_slice %431 {offsets = [0, 128], sizes = [8, 64], strides = [1, 1]} : vector<8x256xf32> to vector<8x64xf32>
    %441 = math.tanh %440 : vector<8x64xf32>
    %442 = vector.extract_strided_slice %431 {offsets = [0, 192], sizes = [8, 64], strides = [1, 1]} : vector<8x256xf32> to vector<8x64xf32>
    %443 = arith.negf %442 : vector<8x64xf32>
    %444 = math.exp %443 : vector<8x64xf32>
    %cst_102 = arith.constant 1.000000e+00 : f32
    %445 = vector.broadcast %cst_102 : f32 to vector<8x64xf32>
    %446 = arith.addf %445, %444 : vector<8x64xf32>
    %447 = arith.divf %445, %446 : vector<8x64xf32>
    %448 = arith.mulf %439, %424 : vector<8x64xf32>
    %449 = arith.mulf %438, %441 : vector<8x64xf32>
    %450 = arith.addf %448, %449 : vector<8x64xf32>
    %451 = math.tanh %450 : vector<8x64xf32>
    %452 = arith.mulf %447, %451 : vector<8x64xf32>
    %453 = vector.extract_strided_slice %397 {offsets = [2, 0, 0], sizes = [1, 8, 256], strides = [1, 1, 1]} : vector<8x8x256xf32> to vector<1x8x256xf32>
    %454 = vector.shape_cast %453 : vector<1x8x256xf32> to vector<8x256xf32>
    %455 = arith.truncf %452 : vector<8x64xf32> to vector<8x64xbf16>
    %cst_103 = arith.constant dense<0.000000e+00> : vector<8x256xf32>
    %456 = tpu.matmul %455, %398, %cst_103 {dimension_numbers = #tpu.dot_dimension_numbers<[1], [0], [0], [1], [0, 0, 1, 1], [], []>} : vector<8x64xbf16>, vector<64x256xbf16>, vector<8x256xf32> -> vector<8x256xf32>
    %457 = arith.addf %454, %456 : vector<8x256xf32>
    %458 = vector.extract_strided_slice %457 {offsets = [0, 0], sizes = [8, 128], strides = [1, 1]} : vector<8x256xf32> to vector<8x128xf32>
    %459 = arith.negf %458 : vector<8x128xf32>
    %460 = math.exp %459 : vector<8x128xf32>
    %cst_104 = arith.constant 1.000000e+00 : f32
    %461 = vector.broadcast %cst_104 : f32 to vector<8x128xf32>
    %462 = arith.addf %461, %460 : vector<8x128xf32>
    %463 = arith.divf %461, %462 : vector<8x128xf32>
    %464 = vector.extract_strided_slice %463 {offsets = [0, 0], sizes = [8, 64], strides = [1, 1]} : vector<8x128xf32> to vector<8x64xf32>
    %465 = vector.extract_strided_slice %463 {offsets = [0, 64], sizes = [8, 64], strides = [1, 1]} : vector<8x128xf32> to vector<8x64xf32>
    %466 = vector.extract_strided_slice %457 {offsets = [0, 128], sizes = [8, 64], strides = [1, 1]} : vector<8x256xf32> to vector<8x64xf32>
    %467 = math.tanh %466 : vector<8x64xf32>
    %468 = vector.extract_strided_slice %457 {offsets = [0, 192], sizes = [8, 64], strides = [1, 1]} : vector<8x256xf32> to vector<8x64xf32>
    %469 = arith.negf %468 : vector<8x64xf32>
    %470 = math.exp %469 : vector<8x64xf32>
    %cst_105 = arith.constant 1.000000e+00 : f32
    %471 = vector.broadcast %cst_105 : f32 to vector<8x64xf32>
    %472 = arith.addf %471, %470 : vector<8x64xf32>
    %473 = arith.divf %471, %472 : vector<8x64xf32>
    %474 = arith.mulf %465, %450 : vector<8x64xf32>
    %475 = arith.mulf %464, %467 : vector<8x64xf32>
    %476 = arith.addf %474, %475 : vector<8x64xf32>
    %477 = math.tanh %476 : vector<8x64xf32>
    %478 = arith.mulf %473, %477 : vector<8x64xf32>
    %479 = vector.extract_strided_slice %397 {offsets = [3, 0, 0], sizes = [1, 8, 256], strides = [1, 1, 1]} : vector<8x8x256xf32> to vector<1x8x256xf32>
    %480 = vector.shape_cast %479 : vector<1x8x256xf32> to vector<8x256xf32>
    %481 = arith.truncf %478 : vector<8x64xf32> to vector<8x64xbf16>
    %cst_106 = arith.constant dense<0.000000e+00> : vector<8x256xf32>
    %482 = tpu.matmul %481, %398, %cst_106 {dimension_numbers = #tpu.dot_dimension_numbers<[1], [0], [0], [1], [0, 0, 1, 1], [], []>} : vector<8x64xbf16>, vector<64x256xbf16>, vector<8x256xf32> -> vector<8x256xf32>
    %483 = arith.addf %480, %482 : vector<8x256xf32>
    %484 = vector.extract_strided_slice %483 {offsets = [0, 0], sizes = [8, 128], strides = [1, 1]} : vector<8x256xf32> to vector<8x128xf32>
    %485 = arith.negf %484 : vector<8x128xf32>
    %486 = math.exp %485 : vector<8x128xf32>
    %cst_107 = arith.constant 1.000000e+00 : f32
    %487 = vector.broadcast %cst_107 : f32 to vector<8x128xf32>
    %488 = arith.addf %487, %486 : vector<8x128xf32>
    %489 = arith.divf %487, %488 : vector<8x128xf32>
    %490 = vector.extract_strided_slice %489 {offsets = [0, 0], sizes = [8, 64], strides = [1, 1]} : vector<8x128xf32> to vector<8x64xf32>
    %491 = vector.extract_strided_slice %489 {offsets = [0, 64], sizes = [8, 64], strides = [1, 1]} : vector<8x128xf32> to vector<8x64xf32>
    %492 = vector.extract_strided_slice %483 {offsets = [0, 128], sizes = [8, 64], strides = [1, 1]} : vector<8x256xf32> to vector<8x64xf32>
    %493 = math.tanh %492 : vector<8x64xf32>
    %494 = vector.extract_strided_slice %483 {offsets = [0, 192], sizes = [8, 64], strides = [1, 1]} : vector<8x256xf32> to vector<8x64xf32>
    %495 = arith.negf %494 : vector<8x64xf32>
    %496 = math.exp %495 : vector<8x64xf32>
    %cst_108 = arith.constant 1.000000e+00 : f32
    %497 = vector.broadcast %cst_108 : f32 to vector<8x64xf32>
    %498 = arith.addf %497, %496 : vector<8x64xf32>
    %499 = arith.divf %497, %498 : vector<8x64xf32>
    %500 = arith.mulf %491, %476 : vector<8x64xf32>
    %501 = arith.mulf %490, %493 : vector<8x64xf32>
    %502 = arith.addf %500, %501 : vector<8x64xf32>
    %503 = math.tanh %502 : vector<8x64xf32>
    %504 = arith.mulf %499, %503 : vector<8x64xf32>
    %505 = vector.extract_strided_slice %397 {offsets = [4, 0, 0], sizes = [1, 8, 256], strides = [1, 1, 1]} : vector<8x8x256xf32> to vector<1x8x256xf32>
    %506 = vector.shape_cast %505 : vector<1x8x256xf32> to vector<8x256xf32>
    %507 = arith.truncf %504 : vector<8x64xf32> to vector<8x64xbf16>
    %cst_109 = arith.constant dense<0.000000e+00> : vector<8x256xf32>
    %508 = tpu.matmul %507, %398, %cst_109 {dimension_numbers = #tpu.dot_dimension_numbers<[1], [0], [0], [1], [0, 0, 1, 1], [], []>} : vector<8x64xbf16>, vector<64x256xbf16>, vector<8x256xf32> -> vector<8x256xf32>
    %509 = arith.addf %506, %508 : vector<8x256xf32>
    %510 = vector.extract_strided_slice %509 {offsets = [0, 0], sizes = [8, 128], strides = [1, 1]} : vector<8x256xf32> to vector<8x128xf32>
    %511 = arith.negf %510 : vector<8x128xf32>
    %512 = math.exp %511 : vector<8x128xf32>
    %cst_110 = arith.constant 1.000000e+00 : f32
    %513 = vector.broadcast %cst_110 : f32 to vector<8x128xf32>
    %514 = arith.addf %513, %512 : vector<8x128xf32>
    %515 = arith.divf %513, %514 : vector<8x128xf32>
    %516 = vector.extract_strided_slice %515 {offsets = [0, 0], sizes = [8, 64], strides = [1, 1]} : vector<8x128xf32> to vector<8x64xf32>
    %517 = vector.extract_strided_slice %515 {offsets = [0, 64], sizes = [8, 64], strides = [1, 1]} : vector<8x128xf32> to vector<8x64xf32>
    %518 = vector.extract_strided_slice %509 {offsets = [0, 128], sizes = [8, 64], strides = [1, 1]} : vector<8x256xf32> to vector<8x64xf32>
    %519 = math.tanh %518 : vector<8x64xf32>
    %520 = vector.extract_strided_slice %509 {offsets = [0, 192], sizes = [8, 64], strides = [1, 1]} : vector<8x256xf32> to vector<8x64xf32>
    %521 = arith.negf %520 : vector<8x64xf32>
    %522 = math.exp %521 : vector<8x64xf32>
    %cst_111 = arith.constant 1.000000e+00 : f32
    %523 = vector.broadcast %cst_111 : f32 to vector<8x64xf32>
    %524 = arith.addf %523, %522 : vector<8x64xf32>
    %525 = arith.divf %523, %524 : vector<8x64xf32>
    %526 = arith.mulf %517, %502 : vector<8x64xf32>
    %527 = arith.mulf %516, %519 : vector<8x64xf32>
    %528 = arith.addf %526, %527 : vector<8x64xf32>
    %529 = math.tanh %528 : vector<8x64xf32>
    %530 = arith.mulf %525, %529 : vector<8x64xf32>
    %531 = vector.extract_strided_slice %397 {offsets = [5, 0, 0], sizes = [1, 8, 256], strides = [1, 1, 1]} : vector<8x8x256xf32> to vector<1x8x256xf32>
    %532 = vector.shape_cast %531 : vector<1x8x256xf32> to vector<8x256xf32>
    %533 = arith.truncf %530 : vector<8x64xf32> to vector<8x64xbf16>
    %cst_112 = arith.constant dense<0.000000e+00> : vector<8x256xf32>
    %534 = tpu.matmul %533, %398, %cst_112 {dimension_numbers = #tpu.dot_dimension_numbers<[1], [0], [0], [1], [0, 0, 1, 1], [], []>} : vector<8x64xbf16>, vector<64x256xbf16>, vector<8x256xf32> -> vector<8x256xf32>
    %535 = arith.addf %532, %534 : vector<8x256xf32>
    %536 = vector.extract_strided_slice %535 {offsets = [0, 0], sizes = [8, 128], strides = [1, 1]} : vector<8x256xf32> to vector<8x128xf32>
    %537 = arith.negf %536 : vector<8x128xf32>
    %538 = math.exp %537 : vector<8x128xf32>
    %cst_113 = arith.constant 1.000000e+00 : f32
    %539 = vector.broadcast %cst_113 : f32 to vector<8x128xf32>
    %540 = arith.addf %539, %538 : vector<8x128xf32>
    %541 = arith.divf %539, %540 : vector<8x128xf32>
    %542 = vector.extract_strided_slice %541 {offsets = [0, 0], sizes = [8, 64], strides = [1, 1]} : vector<8x128xf32> to vector<8x64xf32>
    %543 = vector.extract_strided_slice %541 {offsets = [0, 64], sizes = [8, 64], strides = [1, 1]} : vector<8x128xf32> to vector<8x64xf32>
    %544 = vector.extract_strided_slice %535 {offsets = [0, 128], sizes = [8, 64], strides = [1, 1]} : vector<8x256xf32> to vector<8x64xf32>
    %545 = math.tanh %544 : vector<8x64xf32>
    %546 = vector.extract_strided_slice %535 {offsets = [0, 192], sizes = [8, 64], strides = [1, 1]} : vector<8x256xf32> to vector<8x64xf32>
    %547 = arith.negf %546 : vector<8x64xf32>
    %548 = math.exp %547 : vector<8x64xf32>
    %cst_114 = arith.constant 1.000000e+00 : f32
    %549 = vector.broadcast %cst_114 : f32 to vector<8x64xf32>
    %550 = arith.addf %549, %548 : vector<8x64xf32>
    %551 = arith.divf %549, %550 : vector<8x64xf32>
    %552 = arith.mulf %543, %528 : vector<8x64xf32>
    %553 = arith.mulf %542, %545 : vector<8x64xf32>
    %554 = arith.addf %552, %553 : vector<8x64xf32>
    %555 = math.tanh %554 : vector<8x64xf32>
    %556 = arith.mulf %551, %555 : vector<8x64xf32>
    %557 = vector.extract_strided_slice %397 {offsets = [6, 0, 0], sizes = [1, 8, 256], strides = [1, 1, 1]} : vector<8x8x256xf32> to vector<1x8x256xf32>
    %558 = vector.shape_cast %557 : vector<1x8x256xf32> to vector<8x256xf32>
    %559 = arith.truncf %556 : vector<8x64xf32> to vector<8x64xbf16>
    %cst_115 = arith.constant dense<0.000000e+00> : vector<8x256xf32>
    %560 = tpu.matmul %559, %398, %cst_115 {dimension_numbers = #tpu.dot_dimension_numbers<[1], [0], [0], [1], [0, 0, 1, 1], [], []>} : vector<8x64xbf16>, vector<64x256xbf16>, vector<8x256xf32> -> vector<8x256xf32>
    %561 = arith.addf %558, %560 : vector<8x256xf32>
    %562 = vector.extract_strided_slice %561 {offsets = [0, 0], sizes = [8, 128], strides = [1, 1]} : vector<8x256xf32> to vector<8x128xf32>
    %563 = arith.negf %562 : vector<8x128xf32>
    %564 = math.exp %563 : vector<8x128xf32>
    %cst_116 = arith.constant 1.000000e+00 : f32
    %565 = vector.broadcast %cst_116 : f32 to vector<8x128xf32>
    %566 = arith.addf %565, %564 : vector<8x128xf32>
    %567 = arith.divf %565, %566 : vector<8x128xf32>
    %568 = vector.extract_strided_slice %567 {offsets = [0, 0], sizes = [8, 64], strides = [1, 1]} : vector<8x128xf32> to vector<8x64xf32>
    %569 = vector.extract_strided_slice %567 {offsets = [0, 64], sizes = [8, 64], strides = [1, 1]} : vector<8x128xf32> to vector<8x64xf32>
    %570 = vector.extract_strided_slice %561 {offsets = [0, 128], sizes = [8, 64], strides = [1, 1]} : vector<8x256xf32> to vector<8x64xf32>
    %571 = math.tanh %570 : vector<8x64xf32>
    %572 = vector.extract_strided_slice %561 {offsets = [0, 192], sizes = [8, 64], strides = [1, 1]} : vector<8x256xf32> to vector<8x64xf32>
    %573 = arith.negf %572 : vector<8x64xf32>
    %574 = math.exp %573 : vector<8x64xf32>
    %cst_117 = arith.constant 1.000000e+00 : f32
    %575 = vector.broadcast %cst_117 : f32 to vector<8x64xf32>
    %576 = arith.addf %575, %574 : vector<8x64xf32>
    %577 = arith.divf %575, %576 : vector<8x64xf32>
    %578 = arith.mulf %569, %554 : vector<8x64xf32>
    %579 = arith.mulf %568, %571 : vector<8x64xf32>
    %580 = arith.addf %578, %579 : vector<8x64xf32>
    %581 = math.tanh %580 : vector<8x64xf32>
    %582 = arith.mulf %577, %581 : vector<8x64xf32>
    %583 = vector.extract_strided_slice %397 {offsets = [7, 0, 0], sizes = [1, 8, 256], strides = [1, 1, 1]} : vector<8x8x256xf32> to vector<1x8x256xf32>
    %584 = vector.shape_cast %583 : vector<1x8x256xf32> to vector<8x256xf32>
    %585 = arith.truncf %582 : vector<8x64xf32> to vector<8x64xbf16>
    %cst_118 = arith.constant dense<0.000000e+00> : vector<8x256xf32>
    %586 = tpu.matmul %585, %398, %cst_118 {dimension_numbers = #tpu.dot_dimension_numbers<[1], [0], [0], [1], [0, 0, 1, 1], [], []>} : vector<8x64xbf16>, vector<64x256xbf16>, vector<8x256xf32> -> vector<8x256xf32>
    %587 = arith.addf %584, %586 : vector<8x256xf32>
    %588 = vector.extract_strided_slice %587 {offsets = [0, 0], sizes = [8, 128], strides = [1, 1]} : vector<8x256xf32> to vector<8x128xf32>
    %589 = arith.negf %588 : vector<8x128xf32>
    %590 = math.exp %589 : vector<8x128xf32>
    %cst_119 = arith.constant 1.000000e+00 : f32
    %591 = vector.broadcast %cst_119 : f32 to vector<8x128xf32>
    %592 = arith.addf %591, %590 : vector<8x128xf32>
    %593 = arith.divf %591, %592 : vector<8x128xf32>
    %594 = vector.extract_strided_slice %593 {offsets = [0, 0], sizes = [8, 64], strides = [1, 1]} : vector<8x128xf32> to vector<8x64xf32>
    %595 = vector.extract_strided_slice %593 {offsets = [0, 64], sizes = [8, 64], strides = [1, 1]} : vector<8x128xf32> to vector<8x64xf32>
    %596 = vector.extract_strided_slice %587 {offsets = [0, 128], sizes = [8, 64], strides = [1, 1]} : vector<8x256xf32> to vector<8x64xf32>
    %597 = math.tanh %596 : vector<8x64xf32>
    %598 = vector.extract_strided_slice %587 {offsets = [0, 192], sizes = [8, 64], strides = [1, 1]} : vector<8x256xf32> to vector<8x64xf32>
    %599 = arith.negf %598 : vector<8x64xf32>
    %600 = math.exp %599 : vector<8x64xf32>
    %cst_120 = arith.constant 1.000000e+00 : f32
    %601 = vector.broadcast %cst_120 : f32 to vector<8x64xf32>
    %602 = arith.addf %601, %600 : vector<8x64xf32>
    %603 = arith.divf %601, %602 : vector<8x64xf32>
    %604 = arith.mulf %595, %580 : vector<8x64xf32>
    %605 = arith.mulf %594, %597 : vector<8x64xf32>
    %606 = arith.addf %604, %605 : vector<8x64xf32>
    %607 = math.tanh %606 : vector<8x64xf32>
    %608 = arith.mulf %603, %607 : vector<8x64xf32>
    %609 = arith.truncf %608 : vector<8x64xf32> to vector<8x64xbf16>
    %c0_121 = arith.constant 0 : index
    %c0_122 = arith.constant 0 : index
    %610 = vector.load %arg12[%c0_121, %c0_122] : memref<64x32xbf16, #tpu.memory_space<vmem>>, vector<64x32xbf16>
    %cst_123 = arith.constant dense<0.000000e+00> : vector<8x32xf32>
    %611 = tpu.matmul %609, %610, %cst_123 {dimension_numbers = #tpu.dot_dimension_numbers<[1], [0], [0], [1], [0, 0, 1, 1], [], []>} : vector<8x64xbf16>, vector<64x32xbf16>, vector<8x32xf32> -> vector<8x32xf32>
    %c0_124 = arith.constant 0 : index
    %c0_125 = arith.constant 0 : index
    %612 = vector.load %arg13[%c0_124, %c0_125] : memref<1x32xf32, #tpu.memory_space<vmem>>, vector<1x32xf32>
    %613 = vector.broadcast %612 : vector<1x32xf32> to vector<8x32xf32>
    %614 = arith.addf %611, %613 : vector<8x32xf32>
    %cst_126 = arith.constant 0.000000e+00 : f32
    %615 = vector.broadcast %cst_126 : f32 to vector<8x32xf32>
    %616 = arith.maximumf %614, %615 : vector<8x32xf32>
    %617 = arith.truncf %616 : vector<8x32xf32> to vector<8x32xbf16>
    %c0_127 = arith.constant 0 : index
    %c0_128 = arith.constant 0 : index
    %618 = vector.load %arg14[%c0_127, %c0_128] : memref<32x3xbf16, #tpu.memory_space<vmem>>, vector<32x3xbf16>
    %cst_129 = arith.constant dense<0.000000e+00> : vector<8x3xf32>
    %619 = tpu.matmul %617, %618, %cst_129 {dimension_numbers = #tpu.dot_dimension_numbers<[1], [0], [0], [1], [0, 0, 1, 1], [], []>} : vector<8x32xbf16>, vector<32x3xbf16>, vector<8x3xf32> -> vector<8x3xf32>
    %c0_130 = arith.constant 0 : index
    %c0_131 = arith.constant 0 : index
    %620 = vector.load %arg15[%c0_130, %c0_131] : memref<1x3xf32, #tpu.memory_space<vmem>>, vector<1x3xf32>
    %621 = vector.broadcast %620 : vector<1x3xf32> to vector<8x3xf32>
    %622 = arith.addf %619, %621 : vector<8x3xf32>
    %c0_132 = arith.constant 0 : index
    %c0_133 = arith.constant 0 : index
    %623 = vector.load %arg16[%c0_132, %c0_133] : memref<8x3xf32, #tpu.memory_space<vmem>>, vector<8x3xf32>
    tpu.vector_store %arg16[%c0_132, %c0_133], %622 {strides = array<i32>} : memref<8x3xf32, #tpu.memory_space<vmem>>, vector<8x3xf32>,
    return
  }
  func.func @transform_0(%arg0: i32) -> (i32, i32, i32) {
    %c0_i32 = arith.constant 0 : i32
    %c0_i32_0 = arith.constant 0 : i32
    %c0_i32_1 = arith.constant 0 : i32
    return %arg0, %c0_i32, %c0_i32_0 : i32, i32, i32
  }
  func.func @transform_1(%arg0: i32) -> (i32, i32) {
    %c0_i32 = arith.constant 0 : i32
    %c0_i32_0 = arith.constant 0 : i32
    %c0_i32_1 = arith.constant 0 : i32
    return %c0_i32, %c0_i32_0 : i32, i32
  }
  func.func @transform_2(%arg0: i32) -> (i32, i32) {
    %c0_i32 = arith.constant 0 : i32
    %c0_i32_0 = arith.constant 0 : i32
    %c0_i32_1 = arith.constant 0 : i32
    return %c0_i32, %c0_i32_0 : i32, i32
  }
  func.func @transform_3(%arg0: i32) -> (i32, i32) {
    %c0_i32 = arith.constant 0 : i32
    %c0_i32_0 = arith.constant 0 : i32
    %c0_i32_1 = arith.constant 0 : i32
    return %c0_i32, %c0_i32_0 : i32, i32
  }
  func.func @transform_4(%arg0: i32) -> (i32, i32) {
    %c0_i32 = arith.constant 0 : i32
    %c0_i32_0 = arith.constant 0 : i32
    %c0_i32_1 = arith.constant 0 : i32
    return %c0_i32, %c0_i32_0 : i32, i32
  }
  func.func @transform_5(%arg0: i32) -> (i32, i32) {
    %c0_i32 = arith.constant 0 : i32
    %c0_i32_0 = arith.constant 0 : i32
    %c0_i32_1 = arith.constant 0 : i32
    return %c0_i32, %c0_i32_0 : i32, i32
  }
  func.func @transform_6(%arg0: i32) -> (i32, i32) {
    %c0_i32 = arith.constant 0 : i32
    %c0_i32_0 = arith.constant 0 : i32
    %c0_i32_1 = arith.constant 0 : i32
    return %c0_i32, %c0_i32_0 : i32, i32
  }
  func.func @transform_7(%arg0: i32) -> (i32, i32) {
    %c0_i32 = arith.constant 0 : i32
    %c0_i32_0 = arith.constant 0 : i32
    %c0_i32_1 = arith.constant 0 : i32
    return %c0_i32, %c0_i32_0 : i32, i32
  }
  func.func @transform_8(%arg0: i32) -> (i32, i32) {
    %c0_i32 = arith.constant 0 : i32
    %c0_i32_0 = arith.constant 0 : i32
    %c0_i32_1 = arith.constant 0 : i32
    return %c0_i32, %c0_i32_0 : i32, i32
  }
  func.func @transform_9(%arg0: i32) -> (i32, i32) {
    %c0_i32 = arith.constant 0 : i32
    %c0_i32_0 = arith.constant 0 : i32
    %c0_i32_1 = arith.constant 0 : i32
    return %c0_i32, %c0_i32_0 : i32, i32
  }
  func.func @transform_10(%arg0: i32) -> (i32, i32) {
    %c0_i32 = arith.constant 0 : i32
    %c0_i32_0 = arith.constant 0 : i32
    %c0_i32_1 = arith.constant 0 : i32
    return %c0_i32, %c0_i32_0 : i32, i32
  }
  func.func @transform_11(%arg0: i32) -> (i32, i32) {
    %c0_i32 = arith.constant 0 : i32
    %c0_i32_0 = arith.constant 0 : i32
    %c0_i32_1 = arith.constant 0 : i32
    return %c0_i32, %c0_i32_0 : i32, i32
  }
  func.func @transform_12(%arg0: i32) -> (i32, i32) {
    %c0_i32 = arith.constant 0 : i32
    %c0_i32_0 = arith.constant 0 : i32
    %c0_i32_1 = arith.constant 0 : i32
    return %c0_i32, %c0_i32_0 : i32, i32
  }
  func.func @transform_13(%arg0: i32) -> (i32, i32) {
    %c0_i32 = arith.constant 0 : i32
    %c0_i32_0 = arith.constant 0 : i32
    %c0_i32_1 = arith.constant 0 : i32
    return %c0_i32, %c0_i32_0 : i32, i32
  }
  func.func @transform_14(%arg0: i32) -> (i32, i32) {
    %c0_i32 = arith.constant 0 : i32
    %c0_i32_0 = arith.constant 0 : i32
    %c0_i32_1 = arith.constant 0 : i32
    return %c0_i32, %c0_i32_0 : i32, i32
  }
  func.func @transform_15(%arg0: i32) -> (i32, i32) {
    %c0_i32 = arith.constant 0 : i32
    %c0_i32_0 = arith.constant 0 : i32
    return %arg0, %c0_i32 : i32, i32
  }
}

</mosaic_0001>

<llo_original>
// kernel: tpu_custom_call.1
$region0: #{tpu_custom_call.1}
  #allocation0 [shape = 'u32[]', space=smem, size = 0x4, offset = 0x4, fixed_abs, tag = 'smem constant byte address 0x4 - core index']
  #allocation1 [shape = 'u32[144,128]{1,0:T(1,128)}', space=vmem, size = 0x12000, scoped, tag = 'internal scratch']
  #allocation2 [shape = 'f32[8,8,128]{2,1,0:T(8,128)}', space=vmem, size = 0x8000, scoped, tag = 'scratch operand']
  %s0 = inlined_call_operand.vmem [shape: f32[8,8,4], index: 0, kind: input, shape index: {}]
  %s1 = inlined_call_operand.hbm [shape: f32[4,64], index: 1, kind: input, shape index: {}]
  %s2 = inlined_call_operand.hbm [shape: f32[1,64], index: 2, kind: input, shape index: {}]
  %s3 = inlined_call_operand.vmem [shape: f32[64,64], index: 3, kind: input, shape index: {}]
  %s4 = inlined_call_operand.hbm [shape: f32[1,64], index: 4, kind: input, shape index: {}]
  %s5 = inlined_call_operand.hbm [shape: bf16[4,512], index: 5, kind: input, shape index: {}]
  %s6 = inlined_call_operand.hbm [shape: bf16[128,512], index: 6, kind: input, shape index: {}]
  %s7 = inlined_call_operand.hbm [shape: f32[1,512], index: 7, kind: input, shape index: {}]
  %s8 = inlined_call_operand.vmem [shape: bf16[128,256], index: 8, kind: input, shape index: {}]
  %s9 = inlined_call_operand.hbm [shape: bf16[64,256], index: 9, kind: input, shape index: {}]
  %s10 = inlined_call_operand.vmem [shape: f32[1,256], index: 10, kind: input, shape index: {}]
  %s11 = inlined_call_operand.vmem [shape: bf16[64,32], index: 11, kind: input, shape index: {}]
  %s12 = inlined_call_operand.vmem [shape: f32[1,32], index: 12, kind: input, shape index: {}]
  %s13 = inlined_call_operand.vmem [shape: bf16[32,3], index: 13, kind: input, shape index: {}]
  %s14 = inlined_call_operand.vmem [shape: f32[1,3], index: 14, kind: input, shape index: {}]
  %s15 = inlined_call_operand.vmem [shape: f32[8,3], index: 15, kind: output, shape index: {}]
  %s16 = sld [smem:[#allocation0]]
  $region98: #{tpu_custom_call.1} parent=0
    _
  %s18 = ssub.s32 1, %s16
  %s19 = scalar_select 0, %s18, %s16
  $region1: #{tpu_custom_call.1} parent=0
    #allocation3 [shape = 'u8[2048]{0}', space=vmem, size = 0x800, scoped, tag = 'input window, operand 1, single buffered']
    #allocation4 [shape = 's32[1]{0}', space=sflag, size = 0x4, scoped, tag = 'scoped memory for tpu_custom_call.1']
    #allocation5 [shape = 'u8[512]{0}', space=vmem, size = 0x400, scoped, tag = 'input window, operand 2, single buffered']
    #allocation6 [shape = 's32[1]{0}', space=sflag, size = 0x4, scoped, tag = 'scoped memory for tpu_custom_call.1']
    #allocation7 [shape = 'u8[512]{0}', space=vmem, size = 0x400, scoped, tag = 'input window, operand 4, single buffered']
    #allocation8 [shape = 'u8[4096]{0}', space=vmem, size = 0x1000, scoped, tag = 'input window, operand 5, single buffered']
    #allocation9 [shape = 's32[1]{0}', space=sflag, size = 0x4, scoped, tag = 'scoped memory for tpu_custom_call.1']
    #allocation10 [shape = 'u8[131072]{0}', space=vmem, size = 0x20000, scoped, tag = 'input window, operand 6, single buffered']
    #allocation11 [shape = 'u8[2048]{0}', space=vmem, size = 0x800, scoped, tag = 'input window, operand 7, single buffered']
    #allocation12 [shape = 's32[1]{0}', space=sflag, size = 0x4, scoped, tag = 'scoped memory for tpu_custom_call.1']
    #allocation13 [shape = 'u8[32768]{0}', space=vmem, size = 0x8000, scoped, tag = 'input window, operand 9, single buffered']
    %20 = vsyncpa [#allocation4], 0
    %21 = vsyncpa [#allocation6], 0
    %22 = vsyncpa [#allocation9], 0
    %23 = vsyncpa [#allocation12], 0
    // Predicated region
    $region2: #{tpu_custom_call.1} parent=1 // pred_check
      _
    $region3: #{tpu_custom_call.1} parent=1 // pred_check_branch
      %25 = sbr.rel (0) target = $region5
    $region4: #{tpu_custom_call.1} parent=1 // pred_region
      _
    $region5: #{tpu_custom_call.1} parent=1 // pred_fallthru
      _
    // Predicated region
    $region6: #{tpu_custom_call.1} parent=1 // pred_check
      _
    $region7: #{tpu_custom_call.1} parent=1 // pred_check_branch
      %27 = sbr.rel (0) target = $region9
    $region8: #{tpu_custom_call.1} parent=1 // pred_region
      %s29 = ssub.s32 64, 64
      %30 = vsyncadd [#allocation4], %s29
      %s32 = sshll.u32 [#allocation3], 4
      %s33 = int_to_ptr.vmem [resolvable:$true] %s32
      %35 = dma.hbm_to_vmem [thread:$0]  %s1, 64, %s33, [#allocation4]
    $region9: #{tpu_custom_call.1} parent=1 // pred_fallthru
      _
    // Predicated region
    $region10: #{tpu_custom_call.1} parent=1 // pred_check
      _
    $region11: #{tpu_custom_call.1} parent=1 // pred_check_branch
      %37 = sbr.rel (0) target = $region13
    $region12: #{tpu_custom_call.1} parent=1 // pred_region
      %s39 = ssub.s32 16, 16
      %40 = vsyncadd [#allocation6], %s39
      %s42 = sshll.u32 [#allocation5], 4
      %s43 = int_to_ptr.vmem [resolvable:$true] %s42
      %45 = dma.hbm_to_vmem [thread:$0]  %s2, 16, %s43, [#allocation6]
    $region13: #{tpu_custom_call.1} parent=1 // pred_fallthru
      _
    // Predicated region
    $region14: #{tpu_custom_call.1} parent=1 // pred_check
      _
    $region15: #{tpu_custom_call.1} parent=1 // pred_check_branch
      %47 = sbr.rel (0) target = $region17
    $region16: #{tpu_custom_call.1} parent=1 // pred_region
      _
    $region17: #{tpu_custom_call.1} parent=1 // pred_fallthru
      _
    // Predicated region
    $region18: #{tpu_custom_call.1} parent=1 // pred_check
      _
    $region19: #{tpu_custom_call.1} parent=1 // pred_check_branch
      %49 = sbr.rel (0) target = $region21
    $region20: #{tpu_custom_call.1} parent=1 // pred_region
      %s51 = ssub.s32 16, 16
      %52 = vsyncadd [#allocation6], %s51
      %s54 = sshll.u32 [#allocation7], 4
      %s55 = int_to_ptr.vmem [resolvable:$true] %s54
      %57 = dma.hbm_to_vmem [thread:$0]  %s4, 16, %s55, [#allocation6]
    $region21: #{tpu_custom_call.1} parent=1 // pred_fallthru
      _
    // Predicated region
    $region22: #{tpu_custom_call.1} parent=1 // pred_check
      _
    $region23: #{tpu_custom_call.1} parent=1 // pred_check_branch
      %59 = sbr.rel (0) target = $region25
    $region24: #{tpu_custom_call.1} parent=1 // pred_region
      %s61 = ssub.s32 128, 128
      %62 = vsyncadd [#allocation9], %s61
      %s64 = sshll.u32 [#allocation8], 4
      %s65 = int_to_ptr.vmem [resolvable:$true] %s64
      %67 = dma.hbm_to_vmem [thread:$0]  %s5, 128, %s65, [#allocation9]
    $region25: #{tpu_custom_call.1} parent=1 // pred_fallthru
      _
    // Predicated region
    $region26: #{tpu_custom_call.1} parent=1 // pred_check
      _
    $region27: #{tpu_custom_call.1} parent=1 // pred_check_branch
      %69 = sbr.rel (0) target = $region29
    $region28: #{tpu_custom_call.1} parent=1 // pred_region
      %s71 = ssub.s32 4096, 4096
      %72 = vsyncadd [#allocation9], %s71
      %s73 = sshll.u32 [#allocation10], 4
      %s74 = int_to_ptr.vmem [resolvable:$true] %s73
      %79 = dma.hbm_to_vmem [thread:$0]  %s6, 4096, %s74, [#allocation9], 256, 256, 16
    $region29: #{tpu_custom_call.1} parent=1 // pred_fallthru
      _
    // Predicated region
    $region30: #{tpu_custom_call.1} parent=1 // pred_check
      _
    $region31: #{tpu_custom_call.1} parent=1 // pred_check_branch
      %81 = sbr.rel (0) target = $region33
    $region32: #{tpu_custom_call.1} parent=1 // pred_region
      %s83 = ssub.s32 64, 64
      %84 = vsyncadd [#allocation12], %s83
      %s86 = sshll.u32 [#allocation11], 4
      %s87 = int_to_ptr.vmem [resolvable:$true] %s86
      %89 = dma.hbm_to_vmem [thread:$0]  %s7, 64, %s87, [#allocation12]
    $region33: #{tpu_custom_call.1} parent=1 // pred_fallthru
      _
    // Predicated region
    $region34: #{tpu_custom_call.1} parent=1 // pred_check
      _
    $region35: #{tpu_custom_call.1} parent=1 // pred_check_branch
      %91 = sbr.rel (0) target = $region37
    $region36: #{tpu_custom_call.1} parent=1 // pred_region
      _
    $region37: #{tpu_custom_call.1} parent=1 // pred_fallthru
      _
    // Predicated region
    $region38: #{tpu_custom_call.1} parent=1 // pred_check
      _
    $region39: #{tpu_custom_call.1} parent=1 // pred_check_branch
      %93 = sbr.rel (0) target = $region41
    $region40: #{tpu_custom_call.1} parent=1 // pred_region
      %s95 = ssub.s32 1024, 1024
      %96 = vsyncadd [#allocation12], %s95
      %s97 = sshll.u32 [#allocation13], 4
      %s98 = int_to_ptr.vmem [resolvable:$true] %s97
      %103 = dma.hbm_to_vmem [thread:$0]  %s9, 1024, %s98, [#allocation12], 128, 128, 8
    $region41: #{tpu_custom_call.1} parent=1 // pred_fallthru
      _
    // Predicated region
    $region42: #{tpu_custom_call.1} parent=1 // pred_check
      _
    $region43: #{tpu_custom_call.1} parent=1 // pred_check_branch
      %105 = sbr.rel (0) target = $region45
    $region44: #{tpu_custom_call.1} parent=1 // pred_region
      _
    $region45: #{tpu_custom_call.1} parent=1 // pred_fallthru
      _
    // Predicated region
    $region46: #{tpu_custom_call.1} parent=1 // pred_check
      _
    $region47: #{tpu_custom_call.1} parent=1 // pred_check_branch
      %107 = sbr.rel (0) target = $region49
    $region48: #{tpu_custom_call.1} parent=1 // pred_region
      _
    $region49: #{tpu_custom_call.1} parent=1 // pred_fallthru
      _
    // Predicated region
    $region50: #{tpu_custom_call.1} parent=1 // pred_check
      _
    $region51: #{tpu_custom_call.1} parent=1 // pred_check_branch
      %109 = sbr.rel (0) target = $region53
    $region52: #{tpu_custom_call.1} parent=1 // pred_region
      _
    $region53: #{tpu_custom_call.1} parent=1 // pred_fallthru
      _
    // Predicated region
    $region54: #{tpu_custom_call.1} parent=1 // pred_check
      _
    $region55: #{tpu_custom_call.1} parent=1 // pred_check_branch
      %111 = sbr.rel (0) target = $region57
    $region56: #{tpu_custom_call.1} parent=1 // pred_region
      _
    $region57: #{tpu_custom_call.1} parent=1 // pred_fallthru
      _
    // Predicated region
    $region58: #{tpu_custom_call.1} parent=1 // pred_check
      _
    $region59: #{tpu_custom_call.1} parent=1 // pred_check_branch
      %113 = sbr.rel (0) target = $region61
    $region60: #{tpu_custom_call.1} parent=1 // pred_region
      _
    $region61: #{tpu_custom_call.1} parent=1 // pred_fallthru
      _
    // Predicated region
    $region62: #{tpu_custom_call.1} parent=1 // pred_check
      _
    $region63: #{tpu_custom_call.1} parent=1 // pred_check_branch
      %115 = sbr.rel (0) target = $region65
    $region64: #{tpu_custom_call.1} parent=1 // pred_region
      %116 = dma.done [#allocation4], 64
    $region65: #{tpu_custom_call.1} parent=1 // pred_fallthru
      _
    // Predicated region
    $region66: #{tpu_custom_call.1} parent=1 // pred_check
      _
    $region67: #{tpu_custom_call.1} parent=1 // pred_check_branch
      %118 = sbr.rel (0) target = $region69
    $region68: #{tpu_custom_call.1} parent=1 // pred_region
      %119 = dma.done [#allocation6], 16
    $region69: #{tpu_custom_call.1} parent=1 // pred_fallthru
      _
    // Predicated region
    $region70: #{tpu_custom_call.1} parent=1 // pred_check
      _
    $region71: #{tpu_custom_call.1} parent=1 // pred_check_branch
      %121 = sbr.rel (0) target = $region73
    $region72: #{tpu_custom_call.1} parent=1 // pred_region
      %122 = dma.done [#allocation6], 16
    $region73: #{tpu_custom_call.1} parent=1 // pred_fallthru
      _
    // Predicated region
    $region74: #{tpu_custom_call.1} parent=1 // pred_check
      _
    $region75: #{tpu_custom_call.1} parent=1 // pred_check_branch
      %124 = sbr.rel (0) target = $region77
    $region76: #{tpu_custom_call.1} parent=1 // pred_region
      %125 = dma.done [#allocation9], 128
    $region77: #{tpu_custom_call.1} parent=1 // pred_fallthru
      _
    // Predicated region
    $region78: #{tpu_custom_call.1} parent=1 // pred_check
      _
    $region79: #{tpu_custom_call.1} parent=1 // pred_check_branch
      %127 = sbr.rel (0) target = $region81
    $region80: #{tpu_custom_call.1} parent=1 // pred_region
      %128 = dma.done [#allocation9], 4096
    $region81: #{tpu_custom_call.1} parent=1 // pred_fallthru
      _
    // Predicated region
    $region82: #{tpu_custom_call.1} parent=1 // pred_check
      _
    $region83: #{tpu_custom_call.1} parent=1 // pred_check_branch
      %130 = sbr.rel (0) target = $region85
    $region84: #{tpu_custom_call.1} parent=1 // pred_region
      %131 = dma.done [#allocation12], 64
    $region85: #{tpu_custom_call.1} parent=1 // pred_fallthru
      _
    // Predicated region
    $region86: #{tpu_custom_call.1} parent=1 // pred_check
      _
    $region87: #{tpu_custom_call.1} parent=1 // pred_check_branch
      %133 = sbr.rel (0) target = $region89
    $region88: #{tpu_custom_call.1} parent=1 // pred_region
      %134 = dma.done [#allocation12], 1024
    $region89: #{tpu_custom_call.1} parent=1 // pred_fallthru
      _
    %v136 = vld [vmem:[%s0] sm:$0xff]
    %v137 = vld [vmem:[%s0 + $0x8] sm:$0xff]
    %v138 = vld [vmem:[%s0 + $0x10] sm:$0xff]
    %v139 = vld [vmem:[%s0 + $0x18] sm:$0xff]
    %v140 = vld [vmem:[%s0 + $0x20] sm:$0xff]
    %v141 = vld [vmem:[%s0 + $0x28] sm:$0xff]
    %v142 = vld [vmem:[%s0 + $0x30] sm:$0xff]
    %v143 = vld [vmem:[%s0 + $0x38] sm:$0xff]
    %v144 = vld [vmem:[#allocation3] sm:$0xf]
    %v145 = vld [vmem:[#allocation5] sm:$0x1]
    %v147 = vlaneseq
    %v148 = vshrl.u32 %v147, 7
    %v149 = vsub.s32 0, %v148
    %v150 = vrot.slane %v145, %v149
    %vm152 = vcmask 31744
    %v154 = vsel %vm152, %v136, 0
    %v157 = vsel %vm152, %v137, 0
    %v160 = vsel %vm152, %v138, 0
    %v163 = vsel %vm152, %v139, 0
    %v166 = vsel %vm152, %v140, 0
    %v169 = vsel %vm152, %v141, 0
    %v172 = vsel %vm152, %v142, 0
    %v175 = vsel %vm152, %v143, 0
    %vm177 = vcmask 1043456
    %v179 = vsel %vm177, %v144, 0
    %181 = vmatprep.subr.mxu0 0.0
    %182 = vmatpush1.msra.mxu0 %v179
    %183 = vmatprep.subr.mxu0 0.0
    %184 = vmatpush1.msra.mxu0 0.0
    %185 = vmatprep.subr.mxu0 0.0
    %186 = vmatpush1.msra.mxu0 0.0
    %187 = vmatprep.subr.mxu0 0.0
    %188 = vmatpush1.msra.mxu0 0.0
    %189 = vmatprep.subr.mxu0 0.0
    %190 = vmatpush1.msra.mxu0 0.0
    %191 = vmatprep.subr.mxu0 0.0
    %192 = vmatpush1.msra.mxu0 0.0
    %193 = vmatprep.subr.mxu0 0.0
    %194 = vmatpush1.msra.mxu0 0.0
    %195 = vmatprep.subr.mxu0 0.0
    %196 = vmatpush1.msra.mxu0 0.0
    %197 = vmatprep.subr.mxu0 0.0
    %198 = vmatpush1.msra.mxu0 0.0
    %199 = vmatprep.subr.mxu0 0.0
    %200 = vmatpush1.msra.mxu0 0.0
    %201 = vmatprep.subr.mxu0 0.0
    %202 = vmatpush1.msra.mxu0 0.0
    %203 = vmatprep.subr.mxu0 0.0
    %204 = vmatpush1.msra.mxu0 0.0
    %205 = vmatprep.subr.mxu0 0.0
    %206 = vmatpush1.msra.mxu0 0.0
    %207 = vmatprep.subr.mxu0 0.0
    %208 = vmatpush1.msra.mxu0 0.0
    %209 = vmatprep.subr.mxu0 0.0
    %210 = vmatpush1.msra.mxu0 0.0
    %211 = vmatprep.subr.mxu0 0.0
    %212 = vmatpush1.msra.mxu0 0.0
    %213 = vmatprep.subr.mxu0 0.0
    %214 = vmatpush1.msra.mxu0 0.0
    %215 = vmatprep.subr.mxu0 0.0
    %216 = vmatpush1.msra.mxu0 0.0
    %217 = vmatprep.subr.mxu0 0.0
    %218 = vmatpush1.msra.mxu0 0.0
    %219 = vmatprep.subr.mxu0 0.0
    %220 = vmatpush1.msra.mxu0 0.0
    %221 = vmatprep.subr.mxu0 0.0
    %222 = vmatpush1.msra.mxu0 0.0
    %223 = vmatprep.subr.mxu0 0.0
    %224 = vmatpush1.msra.mxu0 0.0
    %225 = vmatprep.subr.mxu0 0.0
    %226 = vmatpush1.msra.mxu0 0.0
    %227 = vmatprep.subr.mxu0 0.0
    %228 = vmatpush1.msra.mxu0 0.0
    %229 = vmatprep.subr.mxu0 0.0
    %230 = vmatpush1.msra.mxu0 0.0
    %231 = vmatprep.subr.mxu0 0.0
    %232 = vmatpush1.msra.mxu0 0.0
    %233 = vmatprep.subr.mxu0 0.0
    %234 = vmatpush1.msra.mxu0 0.0
    %235 = vmatprep.subr.mxu0 0.0
    %236 = vmatpush1.msra.mxu0 0.0
    %237 = vmatprep.subr.mxu0 0.0
    %238 = vmatpush1.msra.mxu0 0.0
    %239 = vmatprep.subr.mxu0 0.0
    %240 = vmatpush1.msra.mxu0 0.0
    %241 = vmatprep.subr.mxu0 0.0
    %242 = vmatpush1.msra.mxu0 0.0
    %243 = vmatprep.subr.mxu0 0.0
    %244 = vmatpush1.msra.mxu0 0.0
    %245 = vmatprep.mubr.f32.mxu0 0.0
    %246 = vmatmul.mubr.f32.gmra.mrb[0].mxu0 %v154
    %v247 = vpop.f32.mrb[0].mxu0
    %v248 = vadd.f32 %v150, %v247
    %v249 = vpop.f32.mrb[0].mxu0
    %250 = vmatprep.mubr.f32.mxu0 0.0
    %251 = vmatmul.mubr.f32.gmra.mrb[0].mxu0 %v157
    %v252 = vpop.f32.mrb[0].mxu0
    %v253 = vadd.f32 %v150, %v252
    %v254 = vpop.f32.mrb[0].mxu0
    %255 = vmatprep.mubr.f32.mxu0 0.0
    %256 = vmatmul.mubr.f32.gmra.mrb[0].mxu0 %v160
    %v257 = vpop.f32.mrb[0].mxu0
    %v258 = vadd.f32 %v150, %v257
    %v259 = vpop.f32.mrb[0].mxu0
    %260 = vmatprep.mubr.f32.mxu0 0.0
    %261 = vmatmul.mubr.f32.gmra.mrb[0].mxu0 %v163
    %v262 = vpop.f32.mrb[0].mxu0
    %v263 = vadd.f32 %v150, %v262
    %v264 = vpop.f32.mrb[0].mxu0
    %265 = vmatprep.mubr.f32.mxu0 0.0
    %266 = vmatmul.mubr.f32.gmra.mrb[0].mxu0 %v166
    %v267 = vpop.f32.mrb[0].mxu0
    %v268 = vadd.f32 %v150, %v267
    %v269 = vpop.f32.mrb[0].mxu0
    %270 = vmatprep.mubr.f32.mxu0 0.0
    %271 = vmatmul.mubr.f32.gmra.mrb[0].mxu0 %v169
    %v272 = vpop.f32.mrb[0].mxu0
    %v273 = vadd.f32 %v150, %v272
    %v274 = vpop.f32.mrb[0].mxu0
    %275 = vmatprep.mubr.f32.mxu0 0.0
    %276 = vmatmul.mubr.f32.gmra.mrb[0].mxu0 %v172
    %v277 = vpop.f32.mrb[0].mxu0
    %v278 = vadd.f32 %v150, %v277
    %v279 = vpop.f32.mrb[0].mxu0
    %280 = vmatprep.mubr.f32.mxu0 0.0
    %281 = vmatmul.mubr.f32.gmra.mrb[0].mxu0 %v175
    %v282 = vpop.f32.mrb[0].mxu0
    %v283 = vadd.f32 %v150, %v282
    %v284 = vpop.f32.mrb[0].mxu0
    %285 = vdwg.mxu0
    %v286 = vmax.f32 %v248, 0.0
    %v287 = vmax.f32 %v253, 0.0
    %v288 = vmax.f32 %v258, 0.0
    %v289 = vmax.f32 %v263, 0.0
    %v290 = vmax.f32 %v268, 0.0
    %v291 = vmax.f32 %v273, 0.0
    %v292 = vmax.f32 %v278, 0.0
    %v293 = vmax.f32 %v283, 0.0
    %v294 = vld [vmem:[%s3] sm:$0xff]
    %v295 = vld [vmem:[%s3 + $0x8] sm:$0xff]
    %v296 = vld [vmem:[%s3 + $0x10] sm:$0xff]
    %v297 = vld [vmem:[%s3 + $0x18] sm:$0xff]
    %v298 = vld [vmem:[%s3 + $0x20] sm:$0xff]
    %v299 = vld [vmem:[%s3 + $0x28] sm:$0xff]
    %v300 = vld [vmem:[%s3 + $0x30] sm:$0xff]
    %v301 = vld [vmem:[%s3 + $0x38] sm:$0xff]
    %v302 = vld [vmem:[#allocation7] sm:$0x1]
    %v304 = vlaneseq
    %v305 = vshrl.u32 %v304, 7
    %v306 = vsub.s32 0, %v305
    %v307 = vrot.slane %v302, %v306
    %vm309 = vcmask 523264
    %v311 = vsel %vm309, %v286, 0
    %v314 = vsel %vm309, %v287, 0
    %v317 = vsel %vm309, %v288, 0
    %v320 = vsel %vm309, %v289, 0
    %v323 = vsel %vm309, %v290, 0
    %v326 = vsel %vm309, %v291, 0
    %v329 = vsel %vm309, %v292, 0
    %v332 = vsel %vm309, %v293, 0
    %334 = vmatprep.subr.mxu0 0.0
    %335 = vmatpush1.msra.mxu0 %v294
    %336 = vmatprep.subr.mxu0 0.0
    %337 = vmatpush1.msra.mxu0 %v295
    %338 = vmatprep.subr.mxu0 0.0
    %339 = vmatpush1.msra.mxu0 %v296
    %340 = vmatprep.subr.mxu0 0.0
    %341 = vmatpush1.msra.mxu0 %v297
    %342 = vmatprep.subr.mxu0 0.0
    %343 = vmatpush1.msra.mxu0 %v298
    %344 = vmatprep.subr.mxu0 0.0
    %345 = vmatpush1.msra.mxu0 %v299
    %346 = vmatprep.subr.mxu0 0.0
    %347 = vmatpush1.msra.mxu0 %v300
    %348 = vmatprep.subr.mxu0 0.0
    %349 = vmatpush1.msra.mxu0 %v301
    %350 = vmatprep.subr.mxu0 0.0
    %351 = vmatpush1.msra.mxu0 0.0
    %352 = vmatprep.subr.mxu0 0.0
    %353 = vmatpush1.msra.mxu0 0.0
    %354 = vmatprep.subr.mxu0 0.0
    %355 = vmatpush1.msra.mxu0 0.0
    %356 = vmatprep.subr.mxu0 0.0
    %357 = vmatpush1.msra.mxu0 0.0
    %358 = vmatprep.subr.mxu0 0.0
    %359 = vmatpush1.msra.mxu0 0.0
    %360 = vmatprep.subr.mxu0 0.0
    %361 = vmatpush1.msra.mxu0 0.0
    %362 = vmatprep.subr.mxu0 0.0
    %363 = vmatpush1.msra.mxu0 0.0
    %364 = vmatprep.subr.mxu0 0.0
    %365 = vmatpush1.msra.mxu0 0.0
    %366 = vmatprep.subr.mxu0 0.0
    %367 = vmatpush1.msra.mxu0 0.0
    %368 = vmatprep.subr.mxu0 0.0
    %369 = vmatpush1.msra.mxu0 0.0
    %370 = vmatprep.subr.mxu0 0.0
    %371 = vmatpush1.msra.mxu0 0.0
    %372 = vmatprep.subr.mxu0 0.0
    %373 = vmatpush1.msra.mxu0 0.0
    %374 = vmatprep.subr.mxu0 0.0
    %375 = vmatpush1.msra.mxu0 0.0
    %376 = vmatprep.subr.mxu0 0.0
    %377 = vmatpush1.msra.mxu0 0.0
    %378 = vmatprep.subr.mxu0 0.0
    %379 = vmatpush1.msra.mxu0 0.0
    %380 = vmatprep.subr.mxu0 0.0
    %381 = vmatpush1.msra.mxu0 0.0
    %382 = vmatprep.subr.mxu0 0.0
    %383 = vmatpush1.msra.mxu0 0.0
    %384 = vmatprep.subr.mxu0 0.0
    %385 = vmatpush1.msra.mxu0 0.0
    %386 = vmatprep.subr.mxu0 0.0
    %387 = vmatpush1.msra.mxu0 0.0
    %388 = vmatprep.subr.mxu0 0.0
    %389 = vmatpush1.msra.mxu0 0.0
    %390 = vmatprep.subr.mxu0 0.0
    %391 = vmatpush1.msra.mxu0 0.0
    %392 = vmatprep.subr.mxu0 0.0
    %393 = vmatpush1.msra.mxu0 0.0
    %394 = vmatprep.subr.mxu0 0.0
    %395 = vmatpush1.msra.mxu0 0.0
    %396 = vmatprep.subr.mxu0 0.0
    %397 = vmatpush1.msra.mxu0 0.0
    %398 = vmatprep.mubr.f32.mxu0 0.0
    %399 = vmatmul.mubr.f32.gmra.mrb[0].mxu0 %v311
    %v400 = vpop.f32.mrb[0].mxu0
    %v401 = vadd.f32 %v307, %v400
    %v402 = vpop.f32.mrb[0].mxu0
    %403 = vmatprep.mubr.f32.mxu0 0.0
    %404 = vmatmul.mubr.f32.gmra.mrb[0].mxu0 %v314
    %v405 = vpop.f32.mrb[0].mxu0
    %v406 = vadd.f32 %v307, %v405
    %v407 = vpop.f32.mrb[0].mxu0
    %408 = vmatprep.mubr.f32.mxu0 0.0
    %409 = vmatmul.mubr.f32.gmra.mrb[0].mxu0 %v317
    %v410 = vpop.f32.mrb[0].mxu0
    %v411 = vadd.f32 %v307, %v410
    %v412 = vpop.f32.mrb[0].mxu0
    %413 = vmatprep.mubr.f32.mxu0 0.0
    %414 = vmatmul.mubr.f32.gmra.mrb[0].mxu0 %v320
    %v415 = vpop.f32.mrb[0].mxu0
    %v416 = vadd.f32 %v307, %v415
    %v417 = vpop.f32.mrb[0].mxu0
    %418 = vmatprep.mubr.f32.mxu0 0.0
    %419 = vmatmul.mubr.f32.gmra.mrb[0].mxu0 %v323
    %v420 = vpop.f32.mrb[0].mxu0
    %v421 = vadd.f32 %v307, %v420
    %v422 = vpop.f32.mrb[0].mxu0
    %423 = vmatprep.mubr.f32.mxu0 0.0
    %424 = vmatmul.mubr.f32.gmra.mrb[0].mxu0 %v326
    %v425 = vpop.f32.mrb[0].mxu0
    %v426 = vadd.f32 %v307, %v425
    %v427 = vpop.f32.mrb[0].mxu0
    %428 = vmatprep.mubr.f32.mxu0 0.0
    %429 = vmatmul.mubr.f32.gmra.mrb[0].mxu0 %v329
    %v430 = vpop.f32.mrb[0].mxu0
    %v431 = vadd.f32 %v307, %v430
    %v432 = vpop.f32.mrb[0].mxu0
    %433 = vmatprep.mubr.f32.mxu0 0.0
    %434 = vmatmul.mubr.f32.gmra.mrb[0].mxu0 %v332
    %v435 = vpop.f32.mrb[0].mxu0
    %v436 = vadd.f32 %v307, %v435
    %v437 = vpop.f32.mrb[0].mxu0
    %438 = vdwg.mxu0
    %v440 = vsel %vm309, %v401, 0
    %442 = vmatprep.subr.mxu0 0.0
    %443 = vmatpush1.xpose.msra.mxu0 %v440
    %444 = vmatprep.subr.mxu0 0.0
    %445 = vmatpush1.xpose.msra.mxu0 0.0
    %446 = vmatprep.subr.mxu0 0.0
    %447 = vmatpush1.xpose.msra.mxu0 0.0
    %448 = vmatprep.subr.mxu0 0.0
    %449 = vmatpush1.xpose.msra.mxu0 0.0
    %450 = vmatprep.subr.mxu0 0.0
    %451 = vmatpush1.xpose.msra.mxu0 0.0
    %452 = vmatprep.subr.mxu0 0.0
    %453 = vmatpush1.xpose.msra.mxu0 0.0
    %454 = vmatprep.subr.mxu0 0.0
    %455 = vmatpush1.xpose.msra.mxu0 0.0
    %456 = vmatprep.subr.mxu0 0.0
    %457 = vmatpush1.xpose.msra.mxu0 0.0
    %458 = vmatprep.subr.mxu0 0.0
    %459 = vmatpush1.xpose.msra.mxu0 0.0
    %460 = vmatprep.subr.mxu0 0.0
    %461 = vmatpush1.xpose.msra.mxu0 0.0
    %462 = vmatprep.subr.mxu0 0.0
    %463 = vmatpush1.xpose.msra.mxu0 0.0
    %464 = vmatprep.subr.mxu0 0.0
    %465 = vmatpush1.xpose.msra.mxu0 0.0
    %466 = vmatprep.subr.mxu0 0.0
    %467 = vmatpush1.xpose.msra.mxu0 0.0
    %468 = vmatprep.subr.mxu0 0.0
    %469 = vmatpush1.xpose.msra.mxu0 0.0
    %470 = vmatprep.subr.mxu0 0.0
    %471 = vmatpush1.xpose.msra.mxu0 0.0
    %472 = vmatprep.subr.mxu0 0.0
    %473 = vmatpush1.xpose.msra.mxu0 0.0
    %474 = vmatprep.subr.mxu0 0.0
    %475 = vmatpush1.xpose.msra.mxu0 0.0
    %476 = vmatprep.subr.mxu0 0.0
    %477 = vmatpush1.xpose.msra.mxu0 0.0
    %478 = vmatprep.subr.mxu0 0.0
    %479 = vmatpush1.xpose.msra.mxu0 0.0
    %480 = vmatprep.subr.mxu0 0.0
    %481 = vmatpush1.xpose.msra.mxu0 0.0
    %482 = vmatprep.subr.mxu0 0.0
    %483 = vmatpush1.xpose.msra.mxu0 0.0
    %484 = vmatprep.subr.mxu0 0.0
    %485 = vmatpush1.xpose.msra.mxu0 0.0
    %486 = vmatprep.subr.mxu0 0.0
    %487 = vmatpush1.xpose.msra.mxu0 0.0
    %488 = vmatprep.subr.mxu0 0.0
    %489 = vmatpush1.xpose.msra.mxu0 0.0
    %490 = vmatprep.subr.mxu0 0.0
    %491 = vmatpush1.xpose.msra.mxu0 0.0
    %492 = vmatprep.subr.mxu0 0.0
    %493 = vmatpush1.xpose.msra.mxu0 0.0
    %494 = vmatprep.subr.mxu0 0.0
    %495 = vmatpush1.xpose.msra.mxu0 0.0
    %496 = vmatprep.subr.mxu0 0.0
    %497 = vmatpush1.xpose.msra.mxu0 0.0
    %498 = vmatprep.subr.mxu0 0.0
    %499 = vmatpush1.xpose.msra.mxu0 0.0
    %500 = vmatprep.subr.mxu0 0.0
    %501 = vmatpush1.xpose.msra.mxu0 0.0
    %502 = vmatprep.subr.mxu0 0.0
    %503 = vmatpush1.xpose.msra.mxu0 0.0
    %504 = vmatprep.subr.mxu0 0.0
    %505 = vmatpush1.xpose.msra.mxu0 0.0
    %506 = vmatprep.mubr.f32.mxu0 0.0
    %507 = vmatmul.mubr.f32.gmra.mrb[0].mxu0 %v440
    %v508 = vpop.f32.mrb[0].mxu0
    %v509 = vadd.f32 0.0, %v508
    %v510 = vpop.f32.mrb[0].mxu0
    %511 = vdwg.mxu0
    %v513 = vsel %vm309, %v406, 0
    %515 = vmatprep.subr.mxu0 0.0
    %516 = vmatpush1.xpose.msra.mxu0 %v513
    %517 = vmatprep.subr.mxu0 0.0
    %518 = vmatpush1.xpose.msra.mxu0 0.0
    %519 = vmatprep.subr.mxu0 0.0
    %520 = vmatpush1.xpose.msra.mxu0 0.0
    %521 = vmatprep.subr.mxu0 0.0
    %522 = vmatpush1.xpose.msra.mxu0 0.0
    %523 = vmatprep.subr.mxu0 0.0
    %524 = vmatpush1.xpose.msra.mxu0 0.0
    %525 = vmatprep.subr.mxu0 0.0
    %526 = vmatpush1.xpose.msra.mxu0 0.0
    %527 = vmatprep.subr.mxu0 0.0
    %528 = vmatpush1.xpose.msra.mxu0 0.0
    %529 = vmatprep.subr.mxu0 0.0
    %530 = vmatpush1.xpose.msra.mxu0 0.0
    %531 = vmatprep.subr.mxu0 0.0
    %532 = vmatpush1.xpose.msra.mxu0 0.0
    %533 = vmatprep.subr.mxu0 0.0
    %534 = vmatpush1.xpose.msra.mxu0 0.0
    %535 = vmatprep.subr.mxu0 0.0
    %536 = vmatpush1.xpose.msra.mxu0 0.0
    %537 = vmatprep.subr.mxu0 0.0
    %538 = vmatpush1.xpose.msra.mxu0 0.0
    %539 = vmatprep.subr.mxu0 0.0
    %540 = vmatpush1.xpose.msra.mxu0 0.0
    %541 = vmatprep.subr.mxu0 0.0
    %542 = vmatpush1.xpose.msra.mxu0 0.0
    %543 = vmatprep.subr.mxu0 0.0
    %544 = vmatpush1.xpose.msra.mxu0 0.0
    %545 = vmatprep.subr.mxu0 0.0
    %546 = vmatpush1.xpose.msra.mxu0 0.0
    %547 = vmatprep.subr.mxu0 0.0
    %548 = vmatpush1.xpose.msra.mxu0 0.0
    %549 = vmatprep.subr.mxu0 0.0
    %550 = vmatpush1.xpose.msra.mxu0 0.0
    %551 = vmatprep.subr.mxu0 0.0
    %552 = vmatpush1.xpose.msra.mxu0 0.0
    %553 = vmatprep.subr.mxu0 0.0
    %554 = vmatpush1.xpose.msra.mxu0 0.0
    %555 = vmatprep.subr.mxu0 0.0
    %556 = vmatpush1.xpose.msra.mxu0 0.0
    %557 = vmatprep.subr.mxu0 0.0
    %558 = vmatpush1.xpose.msra.mxu0 0.0
    %559 = vmatprep.subr.mxu0 0.0
    %560 = vmatpush1.xpose.msra.mxu0 0.0
    %561 = vmatprep.subr.mxu0 0.0
    %562 = vmatpush1.xpose.msra.mxu0 0.0
    %563 = vmatprep.subr.mxu0 0.0
    %564 = vmatpush1.xpose.msra.mxu0 0.0
    %565 = vmatprep.subr.mxu0 0.0
    %566 = vmatpush1.xpose.msra.mxu0 0.0
    %567 = vmatprep.subr.mxu0 0.0
    %568 = vmatpush1.xpose.msra.mxu0 0.0
    %569 = vmatprep.subr.mxu0 0.0
    %570 = vmatpush1.xpose.msra.mxu0 0.0
    %571 = vmatprep.subr.mxu0 0.0
    %572 = vmatpush1.xpose.msra.mxu0 0.0
    %573 = vmatprep.subr.mxu0 0.0
    %574 = vmatpush1.xpose.msra.mxu0 0.0
    %575 = vmatprep.subr.mxu0 0.0
    %576 = vmatpush1.xpose.msra.mxu0 0.0
    %577 = vmatprep.subr.mxu0 0.0
    %578 = vmatpush1.xpose.msra.mxu0 0.0
    %579 = vmatprep.mubr.f32.mxu0 0.0
    %580 = vmatmul.mubr.f32.gmra.mrb[0].mxu0 %v513
    %v581 = vpop.f32.mrb[0].mxu0
    %v582 = vadd.f32 0.0, %v581
    %v583 = vpop.f32.mrb[0].mxu0
    %584 = vdwg.mxu0
    %v586 = vsel %vm309, %v411, 0
    %588 = vmatprep.subr.mxu0 0.0
    %589 = vmatpush1.xpose.msra.mxu0 %v586
    %590 = vmatprep.subr.mxu0 0.0
    %591 = vmatpush1.xpose.msra.mxu0 0.0
    %592 = vmatprep.subr.mxu0 0.0
    %593 = vmatpush1.xpose.msra.mxu0 0.0
    %594 = vmatprep.subr.mxu0 0.0
    %595 = vmatpush1.xpose.msra.mxu0 0.0
    %596 = vmatprep.subr.mxu0 0.0
    %597 = vmatpush1.xpose.msra.mxu0 0.0
    %598 = vmatprep.subr.mxu0 0.0
    %599 = vmatpush1.xpose.msra.mxu0 0.0
    %600 = vmatprep.subr.mxu0 0.0
    %601 = vmatpush1.xpose.msra.mxu0 0.0
    %602 = vmatprep.subr.mxu0 0.0
    %603 = vmatpush1.xpose.msra.mxu0 0.0
    %604 = vmatprep.subr.mxu0 0.0
    %605 = vmatpush1.xpose.msra.mxu0 0.0
    %606 = vmatprep.subr.mxu0 0.0
    %607 = vmatpush1.xpose.msra.mxu0 0.0
    %608 = vmatprep.subr.mxu0 0.0
    %609 = vmatpush1.xpose.msra.mxu0 0.0
    %610 = vmatprep.subr.mxu0 0.0
    %611 = vmatpush1.xpose.msra.mxu0 0.0
    %612 = vmatprep.subr.mxu0 0.0
    %613 = vmatpush1.xpose.msra.mxu0 0.0
    %614 = vmatprep.subr.mxu0 0.0
    %615 = vmatpush1.xpose.msra.mxu0 0.0
    %616 = vmatprep.subr.mxu0 0.0
    %617 = vmatpush1.xpose.msra.mxu0 0.0
    %618 = vmatprep.subr.mxu0 0.0
    %619 = vmatpush1.xpose.msra.mxu0 0.0
    %620 = vmatprep.subr.mxu0 0.0
    %621 = vmatpush1.xpose.msra.mxu0 0.0
    %622 = vmatprep.subr.mxu0 0.0
    %623 = vmatpush1.xpose.msra.mxu0 0.0
    %624 = vmatprep.subr.mxu0 0.0
    %625 = vmatpush1.xpose.msra.mxu0 0.0
    %626 = vmatprep.subr.mxu0 0.0
    %627 = vmatpush1.xpose.msra.mxu0 0.0
    %628 = vmatprep.subr.mxu0 0.0
    %629 = vmatpush1.xpose.msra.mxu0 0.0
    %630 = vmatprep.subr.mxu0 0.0
    %631 = vmatpush1.xpose.msra.mxu0 0.0
    %632 = vmatprep.subr.mxu0 0.0
    %633 = vmatpush1.xpose.msra.mxu0 0.0
    %634 = vmatprep.subr.mxu0 0.0
    %635 = vmatpush1.xpose.msra.mxu0 0.0
    %636 = vmatprep.subr.mxu0 0.0
    %637 = vmatpush1.xpose.msra.mxu0 0.0
    %638 = vmatprep.subr.mxu0 0.0
    %639 = vmatpush1.xpose.msra.mxu0 0.0
    %640 = vmatprep.subr.mxu0 0.0
    %641 = vmatpush1.xpose.msra.mxu0 0.0
    %642 = vmatprep.subr.mxu0 0.0
    %643 = vmatpush1.xpose.msra.mxu0 0.0
    %644 = vmatprep.subr.mxu0 0.0
    %645 = vmatpush1.xpose.msra.mxu0 0.0
    %646 = vmatprep.subr.mxu0 0.0
    %647 = vmatpush1.xpose.msra.mxu0 0.0
    %648 = vmatprep.subr.mxu0 0.0
    %649 = vmatpush1.xpose.msra.mxu0 0.0
    %650 = vmatprep.subr.mxu0 0.0
    %651 = vmatpush1.xpose.msra.mxu0 0.0
    %652 = vmatprep.mubr.f32.mxu0 0.0
    %653 = vmatmul.mubr.f32.gmra.mrb[0].mxu0 %v586
    %v654 = vpop.f32.mrb[0].mxu0
    %v655 = vadd.f32 0.0, %v654
    %v656 = vpop.f32.mrb[0].mxu0
    %657 = vdwg.mxu0
    %v659 = vsel %vm309, %v416, 0
    %661 = vmatprep.subr.mxu0 0.0
    %662 = vmatpush1.xpose.msra.mxu0 %v659
    %663 = vmatprep.subr.mxu0 0.0
    %664 = vmatpush1.xpose.msra.mxu0 0.0
    %665 = vmatprep.subr.mxu0 0.0
    %666 = vmatpush1.xpose.msra.mxu0 0.0
    %667 = vmatprep.subr.mxu0 0.0
    %668 = vmatpush1.xpose.msra.mxu0 0.0
    %669 = vmatprep.subr.mxu0 0.0
    %670 = vmatpush1.xpose.msra.mxu0 0.0
    %671 = vmatprep.subr.mxu0 0.0
    %672 = vmatpush1.xpose.msra.mxu0 0.0
    %673 = vmatprep.subr.mxu0 0.0
    %674 = vmatpush1.xpose.msra.mxu0 0.0
    %675 = vmatprep.subr.mxu0 0.0
    %676 = vmatpush1.xpose.msra.mxu0 0.0
    %677 = vmatprep.subr.mxu0 0.0
    %678 = vmatpush1.xpose.msra.mxu0 0.0
    %679 = vmatprep.subr.mxu0 0.0
    %680 = vmatpush1.xpose.msra.mxu0 0.0
    %681 = vmatprep.subr.mxu0 0.0
    %682 = vmatpush1.xpose.msra.mxu0 0.0
    %683 = vmatprep.subr.mxu0 0.0
    %684 = vmatpush1.xpose.msra.mxu0 0.0
    %685 = vmatprep.subr.mxu0 0.0
    %686 = vmatpush1.xpose.msra.mxu0 0.0
    %687 = vmatprep.subr.mxu0 0.0
    %688 = vmatpush1.xpose.msra.mxu0 0.0
    %689 = vmatprep.subr.mxu0 0.0
    %690 = vmatpush1.xpose.msra.mxu0 0.0
    %691 = vmatprep.subr.mxu0 0.0
    %692 = vmatpush1.xpose.msra.mxu0 0.0
    %693 = vmatprep.subr.mxu0 0.0
    %694 = vmatpush1.xpose.msra.mxu0 0.0
    %695 = vmatprep.subr.mxu0 0.0
    %696 = vmatpush1.xpose.msra.mxu0 0.0
    %697 = vmatprep.subr.mxu0 0.0
    %698 = vmatpush1.xpose.msra.mxu0 0.0
    %699 = vmatprep.subr.mxu0 0.0
    %700 = vmatpush1.xpose.msra.mxu0 0.0
    %701 = vmatprep.subr.mxu0 0.0
    %702 = vmatpush1.xpose.msra.mxu0 0.0
    %703 = vmatprep.subr.mxu0 0.0
    %704 = vmatpush1.xpose.msra.mxu0 0.0
    %705 = vmatprep.subr.mxu0 0.0
    %706 = vmatpush1.xpose.msra.mxu0 0.0
    %707 = vmatprep.subr.mxu0 0.0
    %708 = vmatpush1.xpose.msra.mxu0 0.0
    %709 = vmatprep.subr.mxu0 0.0
    %710 = vmatpush1.xpose.msra.mxu0 0.0
    %711 = vmatprep.subr.mxu0 0.0
    %712 = vmatpush1.xpose.msra.mxu0 0.0
    %713 = vmatprep.subr.mxu0 0.0
    %714 = vmatpush1.xpose.msra.mxu0 0.0
    %715 = vmatprep.subr.mxu0 0.0
    %716 = vmatpush1.xpose.msra.mxu0 0.0
    %717 = vmatprep.subr.mxu0 0.0
    %718 = vmatpush1.xpose.msra.mxu0 0.0
    %719 = vmatprep.subr.mxu0 0.0
    %720 = vmatpush1.xpose.msra.mxu0 0.0
    %721 = vmatprep.subr.mxu0 0.0
    %722 = vmatpush1.xpose.msra.mxu0 0.0
    %723 = vmatprep.subr.mxu0 0.0
    %724 = vmatpush1.xpose.msra.mxu0 0.0
    %725 = vmatprep.mubr.f32.mxu0 0.0
    %726 = vmatmul.mubr.f32.gmra.mrb[0].mxu0 %v659
    %v727 = vpop.f32.mrb[0].mxu0
    %v728 = vadd.f32 0.0, %v727
    %v729 = vpop.f32.mrb[0].mxu0
    %730 = vdwg.mxu0
    %v732 = vsel %vm309, %v421, 0
    %734 = vmatprep.subr.mxu0 0.0
    %735 = vmatpush1.xpose.msra.mxu0 %v732
    %736 = vmatprep.subr.mxu0 0.0
    %737 = vmatpush1.xpose.msra.mxu0 0.0
    %738 = vmatprep.subr.mxu0 0.0
    %739 = vmatpush1.xpose.msra.mxu0 0.0
    %740 = vmatprep.subr.mxu0 0.0
    %741 = vmatpush1.xpose.msra.mxu0 0.0
    %742 = vmatprep.subr.mxu0 0.0
    %743 = vmatpush1.xpose.msra.mxu0 0.0
    %744 = vmatprep.subr.mxu0 0.0
    %745 = vmatpush1.xpose.msra.mxu0 0.0
    %746 = vmatprep.subr.mxu0 0.0
    %747 = vmatpush1.xpose.msra.mxu0 0.0
    %748 = vmatprep.subr.mxu0 0.0
    %749 = vmatpush1.xpose.msra.mxu0 0.0
    %750 = vmatprep.subr.mxu0 0.0
    %751 = vmatpush1.xpose.msra.mxu0 0.0
    %752 = vmatprep.subr.mxu0 0.0
    %753 = vmatpush1.xpose.msra.mxu0 0.0
    %754 = vmatprep.subr.mxu0 0.0
    %755 = vmatpush1.xpose.msra.mxu0 0.0
    %756 = vmatprep.subr.mxu0 0.0
    %757 = vmatpush1.xpose.msra.mxu0 0.0
    %758 = vmatprep.subr.mxu0 0.0
    %759 = vmatpush1.xpose.msra.mxu0 0.0
    %760 = vmatprep.subr.mxu0 0.0
    %761 = vmatpush1.xpose.msra.mxu0 0.0
    %762 = vmatprep.subr.mxu0 0.0
    %763 = vmatpush1.xpose.msra.mxu0 0.0
    %764 = vmatprep.subr.mxu0 0.0
    %765 = vmatpush1.xpose.msra.mxu0 0.0
    %766 = vmatprep.subr.mxu0 0.0
    %767 = vmatpush1.xpose.msra.mxu0 0.0
    %768 = vmatprep.subr.mxu0 0.0
    %769 = vmatpush1.xpose.msra.mxu0 0.0
    %770 = vmatprep.subr.mxu0 0.0
    %771 = vmatpush1.xpose.msra.mxu0 0.0
    %772 = vmatprep.subr.mxu0 0.0
    %773 = vmatpush1.xpose.msra.mxu0 0.0
    %774 = vmatprep.subr.mxu0 0.0
    %775 = vmatpush1.xpose.msra.mxu0 0.0
    %776 = vmatprep.subr.mxu0 0.0
    %777 = vmatpush1.xpose.msra.mxu0 0.0
    %778 = vmatprep.subr.mxu0 0.0
    %779 = vmatpush1.xpose.msra.mxu0 0.0
    %780 = vmatprep.subr.mxu0 0.0
    %781 = vmatpush1.xpose.msra.mxu0 0.0
    %782 = vmatprep.subr.mxu0 0.0
    %783 = vmatpush1.xpose.msra.mxu0 0.0
    %784 = vmatprep.subr.mxu0 0.0
    %785 = vmatpush1.xpose.msra.mxu0 0.0
    %786 = vmatprep.subr.mxu0 0.0
    %787 = vmatpush1.xpose.msra.mxu0 0.0
    %788 = vmatprep.subr.mxu0 0.0
    %789 = vmatpush1.xpose.msra.mxu0 0.0
    %790 = vmatprep.subr.mxu0 0.0
    %791 = vmatpush1.xpose.msra.mxu0 0.0
    %792 = vmatprep.subr.mxu0 0.0
    %793 = vmatpush1.xpose.msra.mxu0 0.0
    %794 = vmatprep.subr.mxu0 0.0
    %795 = vmatpush1.xpose.msra.mxu0 0.0
    %796 = vmatprep.subr.mxu0 0.0
    %797 = vmatpush1.xpose.msra.mxu0 0.0
    %798 = vmatprep.mubr.f32.mxu0 0.0
    %799 = vmatmul.mubr.f32.gmra.mrb[0].mxu0 %v732
    %v800 = vpop.f32.mrb[0].mxu0
    %v801 = vadd.f32 0.0, %v800
    %v802 = vpop.f32.mrb[0].mxu0
    %803 = vdwg.mxu0
    %v805 = vsel %vm309, %v426, 0
    %807 = vmatprep.subr.mxu0 0.0
    %808 = vmatpush1.xpose.msra.mxu0 %v805
    %809 = vmatprep.subr.mxu0 0.0
    %810 = vmatpush1.xpose.msra.mxu0 0.0
    %811 = vmatprep.subr.mxu0 0.0
    %812 = vmatpush1.xpose.msra.mxu0 0.0
    %813 = vmatprep.subr.mxu0 0.0
    %814 = vmatpush1.xpose.msra.mxu0 0.0
    %815 = vmatprep.subr.mxu0 0.0
    %816 = vmatpush1.xpose.msra.mxu0 0.0
    %817 = vmatprep.subr.mxu0 0.0
    %818 = vmatpush1.xpose.msra.mxu0 0.0
    %819 = vmatprep.subr.mxu0 0.0
    %820 = vmatpush1.xpose.msra.mxu0 0.0
    %821 = vmatprep.subr.mxu0 0.0
    %822 = vmatpush1.xpose.msra.mxu0 0.0
    %823 = vmatprep.subr.mxu0 0.0
    %824 = vmatpush1.xpose.msra.mxu0 0.0
    %825 = vmatprep.subr.mxu0 0.0
    %826 = vmatpush1.xpose.msra.mxu0 0.0
    %827 = vmatprep.subr.mxu0 0.0
    %828 = vmatpush1.xpose.msra.mxu0 0.0
    %829 = vmatprep.subr.mxu0 0.0
    %830 = vmatpush1.xpose.msra.mxu0 0.0
    %831 = vmatprep.subr.mxu0 0.0
    %832 = vmatpush1.xpose.msra.mxu0 0.0
    %833 = vmatprep.subr.mxu0 0.0
    %834 = vmatpush1.xpose.msra.mxu0 0.0
    %835 = vmatprep.subr.mxu0 0.0
    %836 = vmatpush1.xpose.msra.mxu0 0.0
    %837 = vmatprep.subr.mxu0 0.0
    %838 = vmatpush1.xpose.msra.mxu0 0.0
    %839 = vmatprep.subr.mxu0 0.0
    %840 = vmatpush1.xpose.msra.mxu0 0.0
    %841 = vmatprep.subr.mxu0 0.0
    %842 = vmatpush1.xpose.msra.mxu0 0.0
    %843 = vmatprep.subr.mxu0 0.0
    %844 = vmatpush1.xpose.msra.mxu0 0.0
    %845 = vmatprep.subr.mxu0 0.0
    %846 = vmatpush1.xpose.msra.mxu0 0.0
    %847 = vmatprep.subr.mxu0 0.0
    %848 = vmatpush1.xpose.msra.mxu0 0.0
    %849 = vmatprep.subr.mxu0 0.0
    %850 = vmatpush1.xpose.msra.mxu0 0.0
    %851 = vmatprep.subr.mxu0 0.0
    %852 = vmatpush1.xpose.msra.mxu0 0.0
    %853 = vmatprep.subr.mxu0 0.0
    %854 = vmatpush1.xpose.msra.mxu0 0.0
    %855 = vmatprep.subr.mxu0 0.0
    %856 = vmatpush1.xpose.msra.mxu0 0.0
    %857 = vmatprep.subr.mxu0 0.0
    %858 = vmatpush1.xpose.msra.mxu0 0.0
    %859 = vmatprep.subr.mxu0 0.0
    %860 = vmatpush1.xpose.msra.mxu0 0.0
    %861 = vmatprep.subr.mxu0 0.0
    %862 = vmatpush1.xpose.msra.mxu0 0.0
    %863 = vmatprep.subr.mxu0 0.0
    %864 = vmatpush1.xpose.msra.mxu0 0.0
    %865 = vmatprep.subr.mxu0 0.0
    %866 = vmatpush1.xpose.msra.mxu0 0.0
    %867 = vmatprep.subr.mxu0 0.0
    %868 = vmatpush1.xpose.msra.mxu0 0.0
    %869 = vmatprep.subr.mxu0 0.0
    %870 = vmatpush1.xpose.msra.mxu0 0.0
    %871 = vmatprep.mubr.f32.mxu0 0.0
    %872 = vmatmul.mubr.f32.gmra.mrb[0].mxu0 %v805
    %v873 = vpop.f32.mrb[0].mxu0
    %v874 = vadd.f32 0.0, %v873
    %v875 = vpop.f32.mrb[0].mxu0
    %876 = vdwg.mxu0
    %v878 = vsel %vm309, %v431, 0
    %880 = vmatprep.subr.mxu0 0.0
    %881 = vmatpush1.xpose.msra.mxu0 %v878
    %882 = vmatprep.subr.mxu0 0.0
    %883 = vmatpush1.xpose.msra.mxu0 0.0
    %884 = vmatprep.subr.mxu0 0.0
    %885 = vmatpush1.xpose.msra.mxu0 0.0
    %886 = vmatprep.subr.mxu0 0.0
    %887 = vmatpush1.xpose.msra.mxu0 0.0
    %888 = vmatprep.subr.mxu0 0.0
    %889 = vmatpush1.xpose.msra.mxu0 0.0
    %890 = vmatprep.subr.mxu0 0.0
    %891 = vmatpush1.xpose.msra.mxu0 0.0
    %892 = vmatprep.subr.mxu0 0.0
    %893 = vmatpush1.xpose.msra.mxu0 0.0
    %894 = vmatprep.subr.mxu0 0.0
    %895 = vmatpush1.xpose.msra.mxu0 0.0
    %896 = vmatprep.subr.mxu0 0.0
    %897 = vmatpush1.xpose.msra.mxu0 0.0
    %898 = vmatprep.subr.mxu0 0.0
    %899 = vmatpush1.xpose.msra.mxu0 0.0
    %900 = vmatprep.subr.mxu0 0.0
    %901 = vmatpush1.xpose.msra.mxu0 0.0
    %902 = vmatprep.subr.mxu0 0.0
    %903 = vmatpush1.xpose.msra.mxu0 0.0
    %904 = vmatprep.subr.mxu0 0.0
    %905 = vmatpush1.xpose.msra.mxu0 0.0
    %906 = vmatprep.subr.mxu0 0.0
    %907 = vmatpush1.xpose.msra.mxu0 0.0
    %908 = vmatprep.subr.mxu0 0.0
    %909 = vmatpush1.xpose.msra.mxu0 0.0
    %910 = vmatprep.subr.mxu0 0.0
    %911 = vmatpush1.xpose.msra.mxu0 0.0
    %912 = vmatprep.subr.mxu0 0.0
    %913 = vmatpush1.xpose.msra.mxu0 0.0
    %914 = vmatprep.subr.mxu0 0.0
    %915 = vmatpush1.xpose.msra.mxu0 0.0
    %916 = vmatprep.subr.mxu0 0.0
    %917 = vmatpush1.xpose.msra.mxu0 0.0
    %918 = vmatprep.subr.mxu0 0.0
    %919 = vmatpush1.xpose.msra.mxu0 0.0
    %920 = vmatprep.subr.mxu0 0.0
    %921 = vmatpush1.xpose.msra.mxu0 0.0
    %922 = vmatprep.subr.mxu0 0.0
    %923 = vmatpush1.xpose.msra.mxu0 0.0
    %924 = vmatprep.subr.mxu0 0.0
    %925 = vmatpush1.xpose.msra.mxu0 0.0
    %926 = vmatprep.subr.mxu0 0.0
    %927 = vmatpush1.xpose.msra.mxu0 0.0
    %928 = vmatprep.subr.mxu0 0.0
    %929 = vmatpush1.xpose.msra.mxu0 0.0
    %930 = vmatprep.subr.mxu0 0.0
    %931 = vmatpush1.xpose.msra.mxu0 0.0
    %932 = vmatprep.subr.mxu0 0.0
    %933 = vmatpush1.xpose.msra.mxu0 0.0
    %934 = vmatprep.subr.mxu0 0.0
    %935 = vmatpush1.xpose.msra.mxu0 0.0
    %936 = vmatprep.subr.mxu0 0.0
    %937 = vmatpush1.xpose.msra.mxu0 0.0
    %938 = vmatprep.subr.mxu0 0.0
    %939 = vmatpush1.xpose.msra.mxu0 0.0
    %940 = vmatprep.subr.mxu0 0.0
    %941 = vmatpush1.xpose.msra.mxu0 0.0
    %942 = vmatprep.subr.mxu0 0.0
    %943 = vmatpush1.xpose.msra.mxu0 0.0
    %944 = vmatprep.mubr.f32.mxu0 0.0
    %945 = vmatmul.mubr.f32.gmra.mrb[0].mxu0 %v878
    %v946 = vpop.f32.mrb[0].mxu0
    %v947 = vadd.f32 0.0, %v946
    %v948 = vpop.f32.mrb[0].mxu0
    %949 = vdwg.mxu0
    %v951 = vsel %vm309, %v436, 0
    %953 = vmatprep.subr.mxu0 0.0
    %954 = vmatpush1.xpose.msra.mxu0 %v951
    %955 = vmatprep.subr.mxu0 0.0
    %956 = vmatpush1.xpose.msra.mxu0 0.0
    %957 = vmatprep.subr.mxu0 0.0
    %958 = vmatpush1.xpose.msra.mxu0 0.0
    %959 = vmatprep.subr.mxu0 0.0
    %960 = vmatpush1.xpose.msra.mxu0 0.0
    %961 = vmatprep.subr.mxu0 0.0
    %962 = vmatpush1.xpose.msra.mxu0 0.0
    %963 = vmatprep.subr.mxu0 0.0
    %964 = vmatpush1.xpose.msra.mxu0 0.0
    %965 = vmatprep.subr.mxu0 0.0
    %966 = vmatpush1.xpose.msra.mxu0 0.0
    %967 = vmatprep.subr.mxu0 0.0
    %968 = vmatpush1.xpose.msra.mxu0 0.0
    %969 = vmatprep.subr.mxu0 0.0
    %970 = vmatpush1.xpose.msra.mxu0 0.0
    %971 = vmatprep.subr.mxu0 0.0
    %972 = vmatpush1.xpose.msra.mxu0 0.0
    %973 = vmatprep.subr.mxu0 0.0
    %974 = vmatpush1.xpose.msra.mxu0 0.0
    %975 = vmatprep.subr.mxu0 0.0
    %976 = vmatpush1.xpose.msra.mxu0 0.0
    %977 = vmatprep.subr.mxu0 0.0
    %978 = vmatpush1.xpose.msra.mxu0 0.0
    %979 = vmatprep.subr.mxu0 0.0
    %980 = vmatpush1.xpose.msra.mxu0 0.0
    %981 = vmatprep.subr.mxu0 0.0
    %982 = vmatpush1.xpose.msra.mxu0 0.0
    %983 = vmatprep.subr.mxu0 0.0
    %984 = vmatpush1.xpose.msra.mxu0 0.0
    %985 = vmatprep.subr.mxu0 0.0
    %986 = vmatpush1.xpose.msra.mxu0 0.0
    %987 = vmatprep.subr.mxu0 0.0
    %988 = vmatpush1.xpose.msra.mxu0 0.0
    %989 = vmatprep.subr.mxu0 0.0
    %990 = vmatpush1.xpose.msra.mxu0 0.0
    %991 = vmatprep.subr.mxu0 0.0
    %992 = vmatpush1.xpose.msra.mxu0 0.0
    %993 = vmatprep.subr.mxu0 0.0
    %994 = vmatpush1.xpose.msra.mxu0 0.0
    %995 = vmatprep.subr.mxu0 0.0
    %996 = vmatpush1.xpose.msra.mxu0 0.0
    %997 = vmatprep.subr.mxu0 0.0
    %998 = vmatpush1.xpose.msra.mxu0 0.0
    %999 = vmatprep.subr.mxu0 0.0
    %1000 = vmatpush1.xpose.msra.mxu0 0.0
    %1001 = vmatprep.subr.mxu0 0.0
    %1002 = vmatpush1.xpose.msra.mxu0 0.0
    %1003 = vmatprep.subr.mxu0 0.0
    %1004 = vmatpush1.xpose.msra.mxu0 0.0
    %1005 = vmatprep.subr.mxu0 0.0
    %1006 = vmatpush1.xpose.msra.mxu0 0.0
    %1007 = vmatprep.subr.mxu0 0.0
    %1008 = vmatpush1.xpose.msra.mxu0 0.0
    %1009 = vmatprep.subr.mxu0 0.0
    %1010 = vmatpush1.xpose.msra.mxu0 0.0
    %1011 = vmatprep.subr.mxu0 0.0
    %1012 = vmatpush1.xpose.msra.mxu0 0.0
    %1013 = vmatprep.subr.mxu0 0.0
    %1014 = vmatpush1.xpose.msra.mxu0 0.0
    %1015 = vmatprep.subr.mxu0 0.0
    %1016 = vmatpush1.xpose.msra.mxu0 0.0
    %1017 = vmatprep.mubr.f32.mxu0 0.0
    %1018 = vmatmul.mubr.f32.gmra.mrb[0].mxu0 %v951
    %v1019 = vpop.f32.mrb[0].mxu0
    %v1020 = vadd.f32 0.0, %v1019
    %v1021 = vpop.f32.mrb[0].mxu0
    %1022 = vdwg.mxu0
    %vm1023 = vcmask 64512
    %v1024 = vsel %vm1023, %v509, -inf
    %1025 = vmax.xlane.f32.xlu0 %v1024
    %v1026 = vpop.xlane.xlu0 %1025
    %v1027 = vsel %vm1023, %v582, -inf
    %1028 = vmax.xlane.f32.xlu0 %v1027
    %v1029 = vpop.xlane.xlu0 %1028
    %v1030 = vsel %vm1023, %v655, -inf
    %1031 = vmax.xlane.f32.xlu0 %v1030
    %v1032 = vpop.xlane.xlu0 %1031
    %v1033 = vsel %vm1023, %v728, -inf
    %1034 = vmax.xlane.f32.xlu0 %v1033
    %v1035 = vpop.xlane.xlu0 %1034
    %v1036 = vsel %vm1023, %v801, -inf
    %1037 = vmax.xlane.f32.xlu0 %v1036
    %v1038 = vpop.xlane.xlu0 %1037
    %v1039 = vsel %vm1023, %v874, -inf
    %1040 = vmax.xlane.f32.xlu0 %v1039
    %v1041 = vpop.xlane.xlu0 %1040
    %v1042 = vsel %vm1023, %v947, -inf
    %1043 = vmax.xlane.f32.xlu0 %v1042
    %v1044 = vpop.xlane.xlu0 %1043
    %v1045 = vsel %vm1023, %v1020, -inf
    %1046 = vmax.xlane.f32.xlu0 %v1045
    %v1047 = vpop.xlane.xlu0 %1046
    %v1048 = vsub.f32 %v509, %v1026
    %v1049 = vsub.f32 %v582, %v1029
    %v1050 = vsub.f32 %v655, %v1032
    %v1051 = vsub.f32 %v728, %v1035
    %v1052 = vsub.f32 %v801, %v1038
    %v1053 = vsub.f32 %v874, %v1041
    %v1054 = vsub.f32 %v947, %v1044
    %v1055 = vsub.f32 %v1020, %v1047
    %v1056 = vmul.f32 %v1048, 1.442695
    %v1057 = vpow.pop %v1056
    %v1058 = vmul.f32 %v1049, 1.442695
    %v1059 = vpow.pop %v1058
    %v1060 = vmul.f32 %v1050, 1.442695
    %v1061 = vpow.pop %v1060
    %v1062 = vmul.f32 %v1051, 1.442695
    %v1063 = vpow.pop %v1062
    %v1064 = vmul.f32 %v1052, 1.442695
    %v1065 = vpow.pop %v1064
    %v1066 = vmul.f32 %v1053, 1.442695
    %v1067 = vpow.pop %v1066
    %v1068 = vmul.f32 %v1054, 1.442695
    %v1069 = vpow.pop %v1068
    %v1070 = vmul.f32 %v1055, 1.442695
    %v1071 = vpow.pop %v1070
    %v1072 = vsel %vm1023, %v1057, 0.0
    %1073 = vadd.xlane.f32.xlu0 %v1072
    %v1074 = vpop.xlane.xlu0 %1073
    %v1075 = vsel %vm1023, %v1059, 0.0
    %1076 = vadd.xlane.f32.xlu0 %v1075
    %v1077 = vpop.xlane.xlu0 %1076
    %v1078 = vsel %vm1023, %v1061, 0.0
    %1079 = vadd.xlane.f32.xlu0 %v1078
    %v1080 = vpop.xlane.xlu0 %1079
    %v1081 = vsel %vm1023, %v1063, 0.0
    %1082 = vadd.xlane.f32.xlu0 %v1081
    %v1083 = vpop.xlane.xlu0 %1082
    %v1084 = vsel %vm1023, %v1065, 0.0
    %1085 = vadd.xlane.f32.xlu0 %v1084
    %v1086 = vpop.xlane.xlu0 %1085
    %v1087 = vsel %vm1023, %v1067, 0.0
    %1088 = vadd.xlane.f32.xlu0 %v1087
    %v1089 = vpop.xlane.xlu0 %1088
    %v1090 = vsel %vm1023, %v1069, 0.0
    %1091 = vadd.xlane.f32.xlu0 %v1090
    %v1092 = vpop.xlane.xlu0 %1091
    %v1093 = vsel %vm1023, %v1071, 0.0
    %1094 = vadd.xlane.f32.xlu0 %v1093
    %v1095 = vpop.xlane.xlu0 %1094
    %v1096 = vlog2.pop %v1074
    %v1097 = vmul.f32 %v1096, 0.6931472
    %v1098 = vlog2.pop %v1077
    %v1099 = vmul.f32 %v1098, 0.6931472
    %v1100 = vlog2.pop %v1080
    %v1101 = vmul.f32 %v1100, 0.6931472
    %v1102 = vlog2.pop %v1083
    %v1103 = vmul.f32 %v1102, 0.6931472
    %v1104 = vlog2.pop %v1086
    %v1105 = vmul.f32 %v1104, 0.6931472
    %v1106 = vlog2.pop %v1089
    %v1107 = vmul.f32 %v1106, 0.6931472
    %v1108 = vlog2.pop %v1092
    %v1109 = vmul.f32 %v1108, 0.6931472
    %v1110 = vlog2.pop %v1095
    %v1111 = vmul.f32 %v1110, 0.6931472
    %v1112 = vadd.f32 %v1026, %v1097
    %v1113 = vadd.f32 %v1029, %v1099
    %v1114 = vadd.f32 %v1032, %v1101
    %v1115 = vadd.f32 %v1035, %v1103
    %v1116 = vadd.f32 %v1038, %v1105
    %v1117 = vadd.f32 %v1041, %v1107
    %v1118 = vadd.f32 %v1044, %v1109
    %v1119 = vadd.f32 %v1047, %v1111
    %v1120 = vsub.f32 %v509, %v1112
    %v1121 = vsub.f32 %v582, %v1113
    %v1122 = vsub.f32 %v655, %v1114
    %v1123 = vsub.f32 %v728, %v1115
    %v1124 = vsub.f32 %v801, %v1116
    %v1125 = vsub.f32 %v874, %v1117
    %v1126 = vsub.f32 %v947, %v1118
    %v1127 = vsub.f32 %v1020, %v1119
    %v1128 = vsel %vm1023, %v1120, -inf
    %v1129 = vrot.slane %v1128, 4
    %v1130 = vmax.f32 %v1128, %v1129
    %v1131 = vrot.slane %v1130, 2
    %v1132 = vmax.f32 %v1130, %v1131
    %v1133 = vrot.slane %v1132, 1
    %v1134 = vmax.f32 %v1132, %v1133
    %v1135 = vsel %vm1023, %v1121, -inf
    %v1136 = vrot.slane %v1135, 4
    %v1137 = vmax.f32 %v1135, %v1136
    %v1138 = vrot.slane %v1137, 2
    %v1139 = vmax.f32 %v1137, %v1138
    %v1140 = vrot.slane %v1139, 1
    %v1141 = vmax.f32 %v1139, %v1140
    %v1142 = vsel %vm1023, %v1122, -inf
    %v1143 = vrot.slane %v1142, 4
    %v1144 = vmax.f32 %v1142, %v1143
    %v1145 = vrot.slane %v1144, 2
    %v1146 = vmax.f32 %v1144, %v1145
    %v1147 = vrot.slane %v1146, 1
    %v1148 = vmax.f32 %v1146, %v1147
    %v1149 = vsel %vm1023, %v1123, -inf
    %v1150 = vrot.slane %v1149, 4
    %v1151 = vmax.f32 %v1149, %v1150
    %v1152 = vrot.slane %v1151, 2
    %v1153 = vmax.f32 %v1151, %v1152
    %v1154 = vrot.slane %v1153, 1
    %v1155 = vmax.f32 %v1153, %v1154
    %v1156 = vsel %vm1023, %v1124, -inf
    %v1157 = vrot.slane %v1156, 4
    %v1158 = vmax.f32 %v1156, %v1157
    %v1159 = vrot.slane %v1158, 2
    %v1160 = vmax.f32 %v1158, %v1159
    %v1161 = vrot.slane %v1160, 1
    %v1162 = vmax.f32 %v1160, %v1161
    %v1163 = vsel %vm1023, %v1125, -inf
    %v1164 = vrot.slane %v1163, 4
    %v1165 = vmax.f32 %v1163, %v1164
    %v1166 = vrot.slane %v1165, 2
    %v1167 = vmax.f32 %v1165, %v1166
    %v1168 = vrot.slane %v1167, 1
    %v1169 = vmax.f32 %v1167, %v1168
    %v1170 = vsel %vm1023, %v1126, -inf
    %v1171 = vrot.slane %v1170, 4
    %v1172 = vmax.f32 %v1170, %v1171
    %v1173 = vrot.slane %v1172, 2
    %v1174 = vmax.f32 %v1172, %v1173
    %v1175 = vrot.slane %v1174, 1
    %v1176 = vmax.f32 %v1174, %v1175
    %v1177 = vsel %vm1023, %v1127, -inf
    %v1178 = vrot.slane %v1177, 4
    %v1179 = vmax.f32 %v1177, %v1178
    %v1180 = vrot.slane %v1179, 2
    %v1181 = vmax.f32 %v1179, %v1180
    %v1182 = vrot.slane %v1181, 1
    %v1183 = vmax.f32 %v1181, %v1182
    %v1184 = vsub.f32 %v1120, %v1134
    %v1185 = vsub.f32 %v1121, %v1141
    %v1186 = vsub.f32 %v1122, %v1148
    %v1187 = vsub.f32 %v1123, %v1155
    %v1188 = vsub.f32 %v1124, %v1162
    %v1189 = vsub.f32 %v1125, %v1169
    %v1190 = vsub.f32 %v1126, %v1176
    %v1191 = vsub.f32 %v1127, %v1183
    %v1192 = vmul.f32 %v1184, 1.442695
    %v1193 = vpow.pop %v1192
    %v1194 = vmul.f32 %v1185, 1.442695
    %v1195 = vpow.pop %v1194
    %v1196 = vmul.f32 %v1186, 1.442695
    %v1197 = vpow.pop %v1196
    %v1198 = vmul.f32 %v1187, 1.442695
    %v1199 = vpow.pop %v1198
    %v1200 = vmul.f32 %v1188, 1.442695
    %v1201 = vpow.pop %v1200
    %v1202 = vmul.f32 %v1189, 1.442695
    %v1203 = vpow.pop %v1202
    %v1204 = vmul.f32 %v1190, 1.442695
    %v1205 = vpow.pop %v1204
    %v1206 = vmul.f32 %v1191, 1.442695
    %v1207 = vpow.pop %v1206
    %v1208 = vsel %vm1023, %v1193, 0.0
    %v1209 = vrot.slane %v1208, 4
    %v1210 = vadd.f32 %v1208, %v1209
    %v1211 = vrot.slane %v1210, 2
    %v1212 = vadd.f32 %v1210, %v1211
    %v1213 = vrot.slane %v1212, 1
    %v1214 = vadd.f32 %v1212, %v1213
    %v1215 = vsel %vm1023, %v1195, 0.0
    %v1216 = vrot.slane %v1215, 4
    %v1217 = vadd.f32 %v1215, %v1216
    %v1218 = vrot.slane %v1217, 2
    %v1219 = vadd.f32 %v1217, %v1218
    %v1220 = vrot.slane %v1219, 1
    %v1221 = vadd.f32 %v1219, %v1220
    %v1222 = vsel %vm1023, %v1197, 0.0
    %v1223 = vrot.slane %v1222, 4
    %v1224 = vadd.f32 %v1222, %v1223
    %v1225 = vrot.slane %v1224, 2
    %v1226 = vadd.f32 %v1224, %v1225
    %v1227 = vrot.slane %v1226, 1
    %v1228 = vadd.f32 %v1226, %v1227
    %v1229 = vsel %vm1023, %v1199, 0.0
    %v1230 = vrot.slane %v1229, 4
    %v1231 = vadd.f32 %v1229, %v1230
    %v1232 = vrot.slane %v1231, 2
    %v1233 = vadd.f32 %v1231, %v1232
    %v1234 = vrot.slane %v1233, 1
    %v1235 = vadd.f32 %v1233, %v1234
    %v1236 = vsel %vm1023, %v1201, 0.0
    %v1237 = vrot.slane %v1236, 4
    %v1238 = vadd.f32 %v1236, %v1237
    %v1239 = vrot.slane %v1238, 2
    %v1240 = vadd.f32 %v1238, %v1239
    %v1241 = vrot.slane %v1240, 1
    %v1242 = vadd.f32 %v1240, %v1241
    %v1243 = vsel %vm1023, %v1203, 0.0
    %v1244 = vrot.slane %v1243, 4
    %v1245 = vadd.f32 %v1243, %v1244
    %v1246 = vrot.slane %v1245, 2
    %v1247 = vadd.f32 %v1245, %v1246
    %v1248 = vrot.slane %v1247, 1
    %v1249 = vadd.f32 %v1247, %v1248
    %v1250 = vsel %vm1023, %v1205, 0.0
    %v1251 = vrot.slane %v1250, 4
    %v1252 = vadd.f32 %v1250, %v1251
    %v1253 = vrot.slane %v1252, 2
    %v1254 = vadd.f32 %v1252, %v1253
    %v1255 = vrot.slane %v1254, 1
    %v1256 = vadd.f32 %v1254, %v1255
    %v1257 = vsel %vm1023, %v1207, 0.0
    %v1258 = vrot.slane %v1257, 4
    %v1259 = vadd.f32 %v1257, %v1258
    %v1260 = vrot.slane %v1259, 2
    %v1261 = vadd.f32 %v1259, %v1260
    %v1262 = vrot.slane %v1261, 1
    %v1263 = vadd.f32 %v1261, %v1262
    %v1264 = vlog2.pop %v1214
    %v1265 = vmul.f32 %v1264, 0.6931472
    %v1266 = vlog2.pop %v1221
    %v1267 = vmul.f32 %v1266, 0.6931472
    %v1268 = vlog2.pop %v1228
    %v1269 = vmul.f32 %v1268, 0.6931472
    %v1270 = vlog2.pop %v1235
    %v1271 = vmul.f32 %v1270, 0.6931472
    %v1272 = vlog2.pop %v1242
    %v1273 = vmul.f32 %v1272, 0.6931472
    %v1274 = vlog2.pop %v1249
    %v1275 = vmul.f32 %v1274, 0.6931472
    %v1276 = vlog2.pop %v1256
    %v1277 = vmul.f32 %v1276, 0.6931472
    %v1278 = vlog2.pop %v1263
    %v1279 = vmul.f32 %v1278, 0.6931472
    %v1280 = vadd.f32 %v1134, %v1265
    %v1281 = vadd.f32 %v1141, %v1267
    %v1282 = vadd.f32 %v1148, %v1269
    %v1283 = vadd.f32 %v1155, %v1271
    %v1284 = vadd.f32 %v1162, %v1273
    %v1285 = vadd.f32 %v1169, %v1275
    %v1286 = vadd.f32 %v1176, %v1277
    %v1287 = vadd.f32 %v1183, %v1279
    %v1288 = vsub.f32 %v1120, %v1280
    %v1289 = vsub.f32 %v1121, %v1281
    %v1290 = vsub.f32 %v1122, %v1282
    %v1291 = vsub.f32 %v1123, %v1283
    %v1292 = vsub.f32 %v1124, %v1284
    %v1293 = vsub.f32 %v1125, %v1285
    %v1294 = vsub.f32 %v1126, %v1286
    %v1295 = vsub.f32 %v1127, %v1287
    %v1296 = vsel %vm1023, %v1288, -inf
    %1297 = vmax.xlane.f32.xlu0 %v1296
    %v1298 = vpop.xlane.xlu0 %1297
    %v1299 = vsel %vm1023, %v1289, -inf
    %1300 = vmax.xlane.f32.xlu0 %v1299
    %v1301 = vpop.xlane.xlu0 %1300
    %v1302 = vsel %vm1023, %v1290, -inf
    %1303 = vmax.xlane.f32.xlu0 %v1302
    %v1304 = vpop.xlane.xlu0 %1303
    %v1305 = vsel %vm1023, %v1291, -inf
    %1306 = vmax.xlane.f32.xlu0 %v1305
    %v1307 = vpop.xlane.xlu0 %1306
    %v1308 = vsel %vm1023, %v1292, -inf
    %1309 = vmax.xlane.f32.xlu0 %v1308
    %v1310 = vpop.xlane.xlu0 %1309
    %v1311 = vsel %vm1023, %v1293, -inf
    %1312 = vmax.xlane.f32.xlu0 %v1311
    %v1313 = vpop.xlane.xlu0 %1312
    %v1314 = vsel %vm1023, %v1294, -inf
    %1315 = vmax.xlane.f32.xlu0 %v1314
    %v1316 = vpop.xlane.xlu0 %1315
    %v1317 = vsel %vm1023, %v1295, -inf
    %1318 = vmax.xlane.f32.xlu0 %v1317
    %v1319 = vpop.xlane.xlu0 %1318
    %v1320 = vsub.f32 %v1288, %v1298
    %v1321 = vsub.f32 %v1289, %v1301
    %v1322 = vsub.f32 %v1290, %v1304
    %v1323 = vsub.f32 %v1291, %v1307
    %v1324 = vsub.f32 %v1292, %v1310
    %v1325 = vsub.f32 %v1293, %v1313
    %v1326 = vsub.f32 %v1294, %v1316
    %v1327 = vsub.f32 %v1295, %v1319
    %v1328 = vmul.f32 %v1320, 1.442695
    %v1329 = vpow.pop %v1328
    %v1330 = vmul.f32 %v1321, 1.442695
    %v1331 = vpow.pop %v1330
    %v1332 = vmul.f32 %v1322, 1.442695
    %v1333 = vpow.pop %v1332
    %v1334 = vmul.f32 %v1323, 1.442695
    %v1335 = vpow.pop %v1334
    %v1336 = vmul.f32 %v1324, 1.442695
    %v1337 = vpow.pop %v1336
    %v1338 = vmul.f32 %v1325, 1.442695
    %v1339 = vpow.pop %v1338
    %v1340 = vmul.f32 %v1326, 1.442695
    %v1341 = vpow.pop %v1340
    %v1342 = vmul.f32 %v1327, 1.442695
    %v1343 = vpow.pop %v1342
    %v1344 = vsel %vm1023, %v1329, 0.0
    %1345 = vadd.xlane.f32.xlu0 %v1344
    %v1346 = vpop.xlane.xlu0 %1345
    %v1347 = vsel %vm1023, %v1331, 0.0
    %1348 = vadd.xlane.f32.xlu0 %v1347
    %v1349 = vpop.xlane.xlu0 %1348
    %v1350 = vsel %vm1023, %v1333, 0.0
    %1351 = vadd.xlane.f32.xlu0 %v1350
    %v1352 = vpop.xlane.xlu0 %1351
    %v1353 = vsel %vm1023, %v1335, 0.0
    %1354 = vadd.xlane.f32.xlu0 %v1353
    %v1355 = vpop.xlane.xlu0 %1354
    %v1356 = vsel %vm1023, %v1337, 0.0
    %1357 = vadd.xlane.f32.xlu0 %v1356
    %v1358 = vpop.xlane.xlu0 %1357
    %v1359 = vsel %vm1023, %v1339, 0.0
    %1360 = vadd.xlane.f32.xlu0 %v1359
    %v1361 = vpop.xlane.xlu0 %1360
    %v1362 = vsel %vm1023, %v1341, 0.0
    %1363 = vadd.xlane.f32.xlu0 %v1362
    %v1364 = vpop.xlane.xlu0 %1363
    %v1365 = vsel %vm1023, %v1343, 0.0
    %1366 = vadd.xlane.f32.xlu0 %v1365
    %v1367 = vpop.xlane.xlu0 %1366
    %v1368 = vlog2.pop %v1346
    %v1369 = vmul.f32 %v1368, 0.6931472
    %v1370 = vlog2.pop %v1349
    %v1371 = vmul.f32 %v1370, 0.6931472
    %v1372 = vlog2.pop %v1352
    %v1373 = vmul.f32 %v1372, 0.6931472
    %v1374 = vlog2.pop %v1355
    %v1375 = vmul.f32 %v1374, 0.6931472
    %v1376 = vlog2.pop %v1358
    %v1377 = vmul.f32 %v1376, 0.6931472
    %v1378 = vlog2.pop %v1361
    %v1379 = vmul.f32 %v1378, 0.6931472
    %v1380 = vlog2.pop %v1364
    %v1381 = vmul.f32 %v1380, 0.6931472
    %v1382 = vlog2.pop %v1367
    %v1383 = vmul.f32 %v1382, 0.6931472
    %v1384 = vadd.f32 %v1298, %v1369
    %v1385 = vadd.f32 %v1301, %v1371
    %v1386 = vadd.f32 %v1304, %v1373
    %v1387 = vadd.f32 %v1307, %v1375
    %v1388 = vadd.f32 %v1310, %v1377
    %v1389 = vadd.f32 %v1313, %v1379
    %v1390 = vadd.f32 %v1316, %v1381
    %v1391 = vadd.f32 %v1319, %v1383
    %v1392 = vsub.f32 %v1288, %v1384
    %v1393 = vsub.f32 %v1289, %v1385
    %v1394 = vsub.f32 %v1290, %v1386
    %v1395 = vsub.f32 %v1291, %v1387
    %v1396 = vsub.f32 %v1292, %v1388
    %v1397 = vsub.f32 %v1293, %v1389
    %v1398 = vsub.f32 %v1294, %v1390
    %v1399 = vsub.f32 %v1295, %v1391
    %v1400 = vsel %vm1023, %v1392, -inf
    %v1401 = vrot.slane %v1400, 4
    %v1402 = vmax.f32 %v1400, %v1401
    %v1403 = vrot.slane %v1402, 2
    %v1404 = vmax.f32 %v1402, %v1403
    %v1405 = vrot.slane %v1404, 1
    %v1406 = vmax.f32 %v1404, %v1405
    %v1407 = vsel %vm1023, %v1393, -inf
    %v1408 = vrot.slane %v1407, 4
    %v1409 = vmax.f32 %v1407, %v1408
    %v1410 = vrot.slane %v1409, 2
    %v1411 = vmax.f32 %v1409, %v1410
    %v1412 = vrot.slane %v1411, 1
    %v1413 = vmax.f32 %v1411, %v1412
    %v1414 = vsel %vm1023, %v1394, -inf
    %v1415 = vrot.slane %v1414, 4
    %v1416 = vmax.f32 %v1414, %v1415
    %v1417 = vrot.slane %v1416, 2
    %v1418 = vmax.f32 %v1416, %v1417
    %v1419 = vrot.slane %v1418, 1
    %v1420 = vmax.f32 %v1418, %v1419
    %v1421 = vsel %vm1023, %v1395, -inf
    %v1422 = vrot.slane %v1421, 4
    %v1423 = vmax.f32 %v1421, %v1422
    %v1424 = vrot.slane %v1423, 2
    %v1425 = vmax.f32 %v1423, %v1424
    %v1426 = vrot.slane %v1425, 1
    %v1427 = vmax.f32 %v1425, %v1426
    %v1428 = vsel %vm1023, %v1396, -inf
    %v1429 = vrot.slane %v1428, 4
    %v1430 = vmax.f32 %v1428, %v1429
    %v1431 = vrot.slane %v1430, 2
    %v1432 = vmax.f32 %v1430, %v1431
    %v1433 = vrot.slane %v1432, 1
    %v1434 = vmax.f32 %v1432, %v1433
    %v1435 = vsel %vm1023, %v1397, -inf
    %v1436 = vrot.slane %v1435, 4
    %v1437 = vmax.f32 %v1435, %v1436
    %v1438 = vrot.slane %v1437, 2
    %v1439 = vmax.f32 %v1437, %v1438
    %v1440 = vrot.slane %v1439, 1
    %v1441 = vmax.f32 %v1439, %v1440
    %v1442 = vsel %vm1023, %v1398, -inf
    %v1443 = vrot.slane %v1442, 4
    %v1444 = vmax.f32 %v1442, %v1443
    %v1445 = vrot.slane %v1444, 2
    %v1446 = vmax.f32 %v1444, %v1445
    %v1447 = vrot.slane %v1446, 1
    %v1448 = vmax.f32 %v1446, %v1447
    %v1449 = vsel %vm1023, %v1399, -inf
    %v1450 = vrot.slane %v1449, 4
    %v1451 = vmax.f32 %v1449, %v1450
    %v1452 = vrot.slane %v1451, 2
    %v1453 = vmax.f32 %v1451, %v1452
    %v1454 = vrot.slane %v1453, 1
    %v1455 = vmax.f32 %v1453, %v1454
    %v1456 = vsub.f32 %v1392, %v1406
    %v1457 = vsub.f32 %v1393, %v1413
    %v1458 = vsub.f32 %v1394, %v1420
    %v1459 = vsub.f32 %v1395, %v1427
    %v1460 = vsub.f32 %v1396, %v1434
    %v1461 = vsub.f32 %v1397, %v1441
    %v1462 = vsub.f32 %v1398, %v1448
    %v1463 = vsub.f32 %v1399, %v1455
    %v1464 = vmul.f32 %v1456, 1.442695
    %v1465 = vpow.pop %v1464
    %v1466 = vmul.f32 %v1457, 1.442695
    %v1467 = vpow.pop %v1466
    %v1468 = vmul.f32 %v1458, 1.442695
    %v1469 = vpow.pop %v1468
    %v1470 = vmul.f32 %v1459, 1.442695
    %v1471 = vpow.pop %v1470
    %v1472 = vmul.f32 %v1460, 1.442695
    %v1473 = vpow.pop %v1472
    %v1474 = vmul.f32 %v1461, 1.442695
    %v1475 = vpow.pop %v1474
    %v1476 = vmul.f32 %v1462, 1.442695
    %v1477 = vpow.pop %v1476
    %v1478 = vmul.f32 %v1463, 1.442695
    %v1479 = vpow.pop %v1478
    %v1480 = vsel %vm1023, %v1465, 0.0
    %v1481 = vrot.slane %v1480, 4
    %v1482 = vadd.f32 %v1480, %v1481
    %v1483 = vrot.slane %v1482, 2
    %v1484 = vadd.f32 %v1482, %v1483
    %v1485 = vrot.slane %v1484, 1
    %v1486 = vadd.f32 %v1484, %v1485
    %v1487 = vsel %vm1023, %v1467, 0.0
    %v1488 = vrot.slane %v1487, 4
    %v1489 = vadd.f32 %v1487, %v1488
    %v1490 = vrot.slane %v1489, 2
    %v1491 = vadd.f32 %v1489, %v1490
    %v1492 = vrot.slane %v1491, 1
    %v1493 = vadd.f32 %v1491, %v1492
    %v1494 = vsel %vm1023, %v1469, 0.0
    %v1495 = vrot.slane %v1494, 4
    %v1496 = vadd.f32 %v1494, %v1495
    %v1497 = vrot.slane %v1496, 2
    %v1498 = vadd.f32 %v1496, %v1497
    %v1499 = vrot.slane %v1498, 1
    %v1500 = vadd.f32 %v1498, %v1499
    %v1501 = vsel %vm1023, %v1471, 0.0
    %v1502 = vrot.slane %v1501, 4
    %v1503 = vadd.f32 %v1501, %v1502
    %v1504 = vrot.slane %v1503, 2
    %v1505 = vadd.f32 %v1503, %v1504
    %v1506 = vrot.slane %v1505, 1
    %v1507 = vadd.f32 %v1505, %v1506
    %v1508 = vsel %vm1023, %v1473, 0.0
    %v1509 = vrot.slane %v1508, 4
    %v1510 = vadd.f32 %v1508, %v1509
    %v1511 = vrot.slane %v1510, 2
    %v1512 = vadd.f32 %v1510, %v1511
    %v1513 = vrot.slane %v1512, 1
    %v1514 = vadd.f32 %v1512, %v1513
    %v1515 = vsel %vm1023, %v1475, 0.0
    %v1516 = vrot.slane %v1515, 4
    %v1517 = vadd.f32 %v1515, %v1516
    %v1518 = vrot.slane %v1517, 2
    %v1519 = vadd.f32 %v1517, %v1518
    %v1520 = vrot.slane %v1519, 1
    %v1521 = vadd.f32 %v1519, %v1520
    %v1522 = vsel %vm1023, %v1477, 0.0
    %v1523 = vrot.slane %v1522, 4
    %v1524 = vadd.f32 %v1522, %v1523
    %v1525 = vrot.slane %v1524, 2
    %v1526 = vadd.f32 %v1524, %v1525
    %v1527 = vrot.slane %v1526, 1
    %v1528 = vadd.f32 %v1526, %v1527
    %v1529 = vsel %vm1023, %v1479, 0.0
    %v1530 = vrot.slane %v1529, 4
    %v1531 = vadd.f32 %v1529, %v1530
    %v1532 = vrot.slane %v1531, 2
    %v1533 = vadd.f32 %v1531, %v1532
    %v1534 = vrot.slane %v1533, 1
    %v1535 = vadd.f32 %v1533, %v1534
    %v1536 = vlog2.pop %v1486
    %v1537 = vmul.f32 %v1536, 0.6931472
    %v1538 = vlog2.pop %v1493
    %v1539 = vmul.f32 %v1538, 0.6931472
    %v1540 = vlog2.pop %v1500
    %v1541 = vmul.f32 %v1540, 0.6931472
    %v1542 = vlog2.pop %v1507
    %v1543 = vmul.f32 %v1542, 0.6931472
    %v1544 = vlog2.pop %v1514
    %v1545 = vmul.f32 %v1544, 0.6931472
    %v1546 = vlog2.pop %v1521
    %v1547 = vmul.f32 %v1546, 0.6931472
    %v1548 = vlog2.pop %v1528
    %v1549 = vmul.f32 %v1548, 0.6931472
    %v1550 = vlog2.pop %v1535
    %v1551 = vmul.f32 %v1550, 0.6931472
    %v1552 = vadd.f32 %v1406, %v1537
    %v1553 = vadd.f32 %v1413, %v1539
    %v1554 = vadd.f32 %v1420, %v1541
    %v1555 = vadd.f32 %v1427, %v1543
    %v1556 = vadd.f32 %v1434, %v1545
    %v1557 = vadd.f32 %v1441, %v1547
    %v1558 = vadd.f32 %v1448, %v1549
    %v1559 = vadd.f32 %v1455, %v1551
    %v1560 = vsub.f32 %v1392, %v1552
    %v1561 = vsub.f32 %v1393, %v1553
    %v1562 = vsub.f32 %v1394, %v1554
    %v1563 = vsub.f32 %v1395, %v1555
    %v1564 = vsub.f32 %v1396, %v1556
    %v1565 = vsub.f32 %v1397, %v1557
    %v1566 = vsub.f32 %v1398, %v1558
    %v1567 = vsub.f32 %v1399, %v1559
    %v1568 = vsel %vm1023, %v1560, -inf
    %1569 = vmax.xlane.f32.xlu0 %v1568
    %v1570 = vpop.xlane.xlu0 %1569
    %v1571 = vsel %vm1023, %v1561, -inf
    %1572 = vmax.xlane.f32.xlu0 %v1571
    %v1573 = vpop.xlane.xlu0 %1572
    %v1574 = vsel %vm1023, %v1562, -inf
    %1575 = vmax.xlane.f32.xlu0 %v1574
    %v1576 = vpop.xlane.xlu0 %1575
    %v1577 = vsel %vm1023, %v1563, -inf
    %1578 = vmax.xlane.f32.xlu0 %v1577
    %v1579 = vpop.xlane.xlu0 %1578
    %v1580 = vsel %vm1023, %v1564, -inf
    %1581 = vmax.xlane.f32.xlu0 %v1580
    %v1582 = vpop.xlane.xlu0 %1581
    %v1583 = vsel %vm1023, %v1565, -inf
    %1584 = vmax.xlane.f32.xlu0 %v1583
    %v1585 = vpop.xlane.xlu0 %1584
    %v1586 = vsel %vm1023, %v1566, -inf
    %1587 = vmax.xlane.f32.xlu0 %v1586
    %v1588 = vpop.xlane.xlu0 %1587
    %v1589 = vsel %vm1023, %v1567, -inf
    %1590 = vmax.xlane.f32.xlu0 %v1589
    %v1591 = vpop.xlane.xlu0 %1590
    %v1592 = vsub.f32 %v1560, %v1570
    %v1593 = vsub.f32 %v1561, %v1573
    %v1594 = vsub.f32 %v1562, %v1576
    %v1595 = vsub.f32 %v1563, %v1579
    %v1596 = vsub.f32 %v1564, %v1582
    %v1597 = vsub.f32 %v1565, %v1585
    %v1598 = vsub.f32 %v1566, %v1588
    %v1599 = vsub.f32 %v1567, %v1591
    %v1600 = vmul.f32 %v1592, 1.442695
    %v1601 = vpow.pop %v1600
    %v1602 = vmul.f32 %v1593, 1.442695
    %v1603 = vpow.pop %v1602
    %v1604 = vmul.f32 %v1594, 1.442695
    %v1605 = vpow.pop %v1604
    %v1606 = vmul.f32 %v1595, 1.442695
    %v1607 = vpow.pop %v1606
    %v1608 = vmul.f32 %v1596, 1.442695
    %v1609 = vpow.pop %v1608
    %v1610 = vmul.f32 %v1597, 1.442695
    %v1611 = vpow.pop %v1610
    %v1612 = vmul.f32 %v1598, 1.442695
    %v1613 = vpow.pop %v1612
    %v1614 = vmul.f32 %v1599, 1.442695
    %v1615 = vpow.pop %v1614
    %v1616 = vsel %vm1023, %v1601, 0.0
    %1617 = vadd.xlane.f32.xlu0 %v1616
    %v1618 = vpop.xlane.xlu0 %1617
    %v1619 = vsel %vm1023, %v1603, 0.0
    %1620 = vadd.xlane.f32.xlu0 %v1619
    %v1621 = vpop.xlane.xlu0 %1620
    %v1622 = vsel %vm1023, %v1605, 0.0
    %1623 = vadd.xlane.f32.xlu0 %v1622
    %v1624 = vpop.xlane.xlu0 %1623
    %v1625 = vsel %vm1023, %v1607, 0.0
    %1626 = vadd.xlane.f32.xlu0 %v1625
    %v1627 = vpop.xlane.xlu0 %1626
    %v1628 = vsel %vm1023, %v1609, 0.0
    %1629 = vadd.xlane.f32.xlu0 %v1628
    %v1630 = vpop.xlane.xlu0 %1629
    %v1631 = vsel %vm1023, %v1611, 0.0
    %1632 = vadd.xlane.f32.xlu0 %v1631
    %v1633 = vpop.xlane.xlu0 %1632
    %v1634 = vsel %vm1023, %v1613, 0.0
    %1635 = vadd.xlane.f32.xlu0 %v1634
    %v1636 = vpop.xlane.xlu0 %1635
    %v1637 = vsel %vm1023, %v1615, 0.0
    %1638 = vadd.xlane.f32.xlu0 %v1637
    %v1639 = vpop.xlane.xlu0 %1638
    %v1640 = vlog2.pop %v1618
    %v1641 = vmul.f32 %v1640, 0.6931472
    %v1642 = vlog2.pop %v1621
    %v1643 = vmul.f32 %v1642, 0.6931472
    %v1644 = vlog2.pop %v1624
    %v1645 = vmul.f32 %v1644, 0.6931472
    %v1646 = vlog2.pop %v1627
    %v1647 = vmul.f32 %v1646, 0.6931472
    %v1648 = vlog2.pop %v1630
    %v1649 = vmul.f32 %v1648, 0.6931472
    %v1650 = vlog2.pop %v1633
    %v1651 = vmul.f32 %v1650, 0.6931472
    %v1652 = vlog2.pop %v1636
    %v1653 = vmul.f32 %v1652, 0.6931472
    %v1654 = vlog2.pop %v1639
    %v1655 = vmul.f32 %v1654, 0.6931472
    %v1656 = vadd.f32 %v1570, %v1641
    %v1657 = vadd.f32 %v1573, %v1643
    %v1658 = vadd.f32 %v1576, %v1645
    %v1659 = vadd.f32 %v1579, %v1647
    %v1660 = vadd.f32 %v1582, %v1649
    %v1661 = vadd.f32 %v1585, %v1651
    %v1662 = vadd.f32 %v1588, %v1653
    %v1663 = vadd.f32 %v1591, %v1655
    %v1664 = vsub.f32 %v1560, %v1656
    %v1665 = vsub.f32 %v1561, %v1657
    %v1666 = vsub.f32 %v1562, %v1658
    %v1667 = vsub.f32 %v1563, %v1659
    %v1668 = vsub.f32 %v1564, %v1660
    %v1669 = vsub.f32 %v1565, %v1661
    %v1670 = vsub.f32 %v1566, %v1662
    %v1671 = vsub.f32 %v1567, %v1663
    %v1672 = vsel %vm1023, %v1664, -inf
    %v1673 = vrot.slane %v1672, 4
    %v1674 = vmax.f32 %v1672, %v1673
    %v1675 = vrot.slane %v1674, 2
    %v1676 = vmax.f32 %v1674, %v1675
    %v1677 = vrot.slane %v1676, 1
    %v1678 = vmax.f32 %v1676, %v1677
    %v1679 = vsel %vm1023, %v1665, -inf
    %v1680 = vrot.slane %v1679, 4
    %v1681 = vmax.f32 %v1679, %v1680
    %v1682 = vrot.slane %v1681, 2
    %v1683 = vmax.f32 %v1681, %v1682
    %v1684 = vrot.slane %v1683, 1
    %v1685 = vmax.f32 %v1683, %v1684
    %v1686 = vsel %vm1023, %v1666, -inf
    %v1687 = vrot.slane %v1686, 4
    %v1688 = vmax.f32 %v1686, %v1687
    %v1689 = vrot.slane %v1688, 2
    %v1690 = vmax.f32 %v1688, %v1689
    %v1691 = vrot.slane %v1690, 1
    %v1692 = vmax.f32 %v1690, %v1691
    %v1693 = vsel %vm1023, %v1667, -inf
    %v1694 = vrot.slane %v1693, 4
    %v1695 = vmax.f32 %v1693, %v1694
    %v1696 = vrot.slane %v1695, 2
    %v1697 = vmax.f32 %v1695, %v1696
    %v1698 = vrot.slane %v1697, 1
    %v1699 = vmax.f32 %v1697, %v1698
    %v1700 = vsel %vm1023, %v1668, -inf
    %v1701 = vrot.slane %v1700, 4
    %v1702 = vmax.f32 %v1700, %v1701
    %v1703 = vrot.slane %v1702, 2
    %v1704 = vmax.f32 %v1702, %v1703
    %v1705 = vrot.slane %v1704, 1
    %v1706 = vmax.f32 %v1704, %v1705
    %v1707 = vsel %vm1023, %v1669, -inf
    %v1708 = vrot.slane %v1707, 4
    %v1709 = vmax.f32 %v1707, %v1708
    %v1710 = vrot.slane %v1709, 2
    %v1711 = vmax.f32 %v1709, %v1710
    %v1712 = vrot.slane %v1711, 1
    %v1713 = vmax.f32 %v1711, %v1712
    %v1714 = vsel %vm1023, %v1670, -inf
    %v1715 = vrot.slane %v1714, 4
    %v1716 = vmax.f32 %v1714, %v1715
    %v1717 = vrot.slane %v1716, 2
    %v1718 = vmax.f32 %v1716, %v1717
    %v1719 = vrot.slane %v1718, 1
    %v1720 = vmax.f32 %v1718, %v1719
    %v1721 = vsel %vm1023, %v1671, -inf
    %v1722 = vrot.slane %v1721, 4
    %v1723 = vmax.f32 %v1721, %v1722
    %v1724 = vrot.slane %v1723, 2
    %v1725 = vmax.f32 %v1723, %v1724
    %v1726 = vrot.slane %v1725, 1
    %v1727 = vmax.f32 %v1725, %v1726
    %v1728 = vsub.f32 %v1664, %v1678
    %v1729 = vsub.f32 %v1665, %v1685
    %v1730 = vsub.f32 %v1666, %v1692
    %v1731 = vsub.f32 %v1667, %v1699
    %v1732 = vsub.f32 %v1668, %v1706
    %v1733 = vsub.f32 %v1669, %v1713
    %v1734 = vsub.f32 %v1670, %v1720
    %v1735 = vsub.f32 %v1671, %v1727
    %v1736 = vmul.f32 %v1728, 1.442695
    %v1737 = vpow.pop %v1736
    %v1738 = vmul.f32 %v1729, 1.442695
    %v1739 = vpow.pop %v1738
    %v1740 = vmul.f32 %v1730, 1.442695
    %v1741 = vpow.pop %v1740
    %v1742 = vmul.f32 %v1731, 1.442695
    %v1743 = vpow.pop %v1742
    %v1744 = vmul.f32 %v1732, 1.442695
    %v1745 = vpow.pop %v1744
    %v1746 = vmul.f32 %v1733, 1.442695
    %v1747 = vpow.pop %v1746
    %v1748 = vmul.f32 %v1734, 1.442695
    %v1749 = vpow.pop %v1748
    %v1750 = vmul.f32 %v1735, 1.442695
    %v1751 = vpow.pop %v1750
    %v1752 = vsel %vm1023, %v1737, 0.0
    %v1753 = vrot.slane %v1752, 4
    %v1754 = vadd.f32 %v1752, %v1753
    %v1755 = vrot.slane %v1754, 2
    %v1756 = vadd.f32 %v1754, %v1755
    %v1757 = vrot.slane %v1756, 1
    %v1758 = vadd.f32 %v1756, %v1757
    %v1759 = vsel %vm1023, %v1739, 0.0
    %v1760 = vrot.slane %v1759, 4
    %v1761 = vadd.f32 %v1759, %v1760
    %v1762 = vrot.slane %v1761, 2
    %v1763 = vadd.f32 %v1761, %v1762
    %v1764 = vrot.slane %v1763, 1
    %v1765 = vadd.f32 %v1763, %v1764
    %v1766 = vsel %vm1023, %v1741, 0.0
    %v1767 = vrot.slane %v1766, 4
    %v1768 = vadd.f32 %v1766, %v1767
    %v1769 = vrot.slane %v1768, 2
    %v1770 = vadd.f32 %v1768, %v1769
    %v1771 = vrot.slane %v1770, 1
    %v1772 = vadd.f32 %v1770, %v1771
    %v1773 = vsel %vm1023, %v1743, 0.0
    %v1774 = vrot.slane %v1773, 4
    %v1775 = vadd.f32 %v1773, %v1774
    %v1776 = vrot.slane %v1775, 2
    %v1777 = vadd.f32 %v1775, %v1776
    %v1778 = vrot.slane %v1777, 1
    %v1779 = vadd.f32 %v1777, %v1778
    %v1780 = vsel %vm1023, %v1745, 0.0
    %v1781 = vrot.slane %v1780, 4
    %v1782 = vadd.f32 %v1780, %v1781
    %v1783 = vrot.slane %v1782, 2
    %v1784 = vadd.f32 %v1782, %v1783
    %v1785 = vrot.slane %v1784, 1
    %v1786 = vadd.f32 %v1784, %v1785
    %v1787 = vsel %vm1023, %v1747, 0.0
    %v1788 = vrot.slane %v1787, 4
    %v1789 = vadd.f32 %v1787, %v1788
    %v1790 = vrot.slane %v1789, 2
    %v1791 = vadd.f32 %v1789, %v1790
    %v1792 = vrot.slane %v1791, 1
    %v1793 = vadd.f32 %v1791, %v1792
    %v1794 = vsel %vm1023, %v1749, 0.0
    %v1795 = vrot.slane %v1794, 4
    %v1796 = vadd.f32 %v1794, %v1795
    %v1797 = vrot.slane %v1796, 2
    %v1798 = vadd.f32 %v1796, %v1797
    %v1799 = vrot.slane %v1798, 1
    %v1800 = vadd.f32 %v1798, %v1799
    %v1801 = vsel %vm1023, %v1751, 0.0
    %v1802 = vrot.slane %v1801, 4
    %v1803 = vadd.f32 %v1801, %v1802
    %v1804 = vrot.slane %v1803, 2
    %v1805 = vadd.f32 %v1803, %v1804
    %v1806 = vrot.slane %v1805, 1
    %v1807 = vadd.f32 %v1805, %v1806
    %v1808 = vlog2.pop %v1758
    %v1809 = vmul.f32 %v1808, 0.6931472
    %v1810 = vlog2.pop %v1765
    %v1811 = vmul.f32 %v1810, 0.6931472
    %v1812 = vlog2.pop %v1772
    %v1813 = vmul.f32 %v1812, 0.6931472
    %v1814 = vlog2.pop %v1779
    %v1815 = vmul.f32 %v1814, 0.6931472
    %v1816 = vlog2.pop %v1786
    %v1817 = vmul.f32 %v1816, 0.6931472
    %v1818 = vlog2.pop %v1793
    %v1819 = vmul.f32 %v1818, 0.6931472
    %v1820 = vlog2.pop %v1800
    %v1821 = vmul.f32 %v1820, 0.6931472
    %v1822 = vlog2.pop %v1807
    %v1823 = vmul.f32 %v1822, 0.6931472
    %v1824 = vadd.f32 %v1678, %v1809
    %v1825 = vadd.f32 %v1685, %v1811
    %v1826 = vadd.f32 %v1692, %v1813
    %v1827 = vadd.f32 %v1699, %v1815
    %v1828 = vadd.f32 %v1706, %v1817
    %v1829 = vadd.f32 %v1713, %v1819
    %v1830 = vadd.f32 %v1720, %v1821
    %v1831 = vadd.f32 %v1727, %v1823
    %v1832 = vsub.f32 %v1664, %v1824
    %v1833 = vsub.f32 %v1665, %v1825
    %v1834 = vsub.f32 %v1666, %v1826
    %v1835 = vsub.f32 %v1667, %v1827
    %v1836 = vsub.f32 %v1668, %v1828
    %v1837 = vsub.f32 %v1669, %v1829
    %v1838 = vsub.f32 %v1670, %v1830
    %v1839 = vsub.f32 %v1671, %v1831
    %v1840 = vsel %vm1023, %v1832, -inf
    %1841 = vmax.xlane.f32.xlu0 %v1840
    %v1842 = vpop.xlane.xlu0 %1841
    %v1843 = vsel %vm1023, %v1833, -inf
    %1844 = vmax.xlane.f32.xlu0 %v1843
    %v1845 = vpop.xlane.xlu0 %1844
    %v1846 = vsel %vm1023, %v1834, -inf
    %1847 = vmax.xlane.f32.xlu0 %v1846
    %v1848 = vpop.xlane.xlu0 %1847
    %v1849 = vsel %vm1023, %v1835, -inf
    %1850 = vmax.xlane.f32.xlu0 %v1849
    %v1851 = vpop.xlane.xlu0 %1850
    %v1852 = vsel %vm1023, %v1836, -inf
    %1853 = vmax.xlane.f32.xlu0 %v1852
    %v1854 = vpop.xlane.xlu0 %1853
    %v1855 = vsel %vm1023, %v1837, -inf
    %1856 = vmax.xlane.f32.xlu0 %v1855
    %v1857 = vpop.xlane.xlu0 %1856
    %v1858 = vsel %vm1023, %v1838, -inf
    %1859 = vmax.xlane.f32.xlu0 %v1858
    %v1860 = vpop.xlane.xlu0 %1859
    %v1861 = vsel %vm1023, %v1839, -inf
    %1862 = vmax.xlane.f32.xlu0 %v1861
    %v1863 = vpop.xlane.xlu0 %1862
    %v1864 = vsub.f32 %v1832, %v1842
    %v1865 = vsub.f32 %v1833, %v1845
    %v1866 = vsub.f32 %v1834, %v1848
    %v1867 = vsub.f32 %v1835, %v1851
    %v1868 = vsub.f32 %v1836, %v1854
    %v1869 = vsub.f32 %v1837, %v1857
    %v1870 = vsub.f32 %v1838, %v1860
    %v1871 = vsub.f32 %v1839, %v1863
    %v1872 = vmul.f32 %v1864, 1.442695
    %v1873 = vpow.pop %v1872
    %v1874 = vmul.f32 %v1865, 1.442695
    %v1875 = vpow.pop %v1874
    %v1876 = vmul.f32 %v1866, 1.442695
    %v1877 = vpow.pop %v1876
    %v1878 = vmul.f32 %v1867, 1.442695
    %v1879 = vpow.pop %v1878
    %v1880 = vmul.f32 %v1868, 1.442695
    %v1881 = vpow.pop %v1880
    %v1882 = vmul.f32 %v1869, 1.442695
    %v1883 = vpow.pop %v1882
    %v1884 = vmul.f32 %v1870, 1.442695
    %v1885 = vpow.pop %v1884
    %v1886 = vmul.f32 %v1871, 1.442695
    %v1887 = vpow.pop %v1886
    %v1888 = vsel %vm1023, %v1873, 0.0
    %1889 = vadd.xlane.f32.xlu0 %v1888
    %v1890 = vpop.xlane.xlu0 %1889
    %v1891 = vsel %vm1023, %v1875, 0.0
    %1892 = vadd.xlane.f32.xlu0 %v1891
    %v1893 = vpop.xlane.xlu0 %1892
    %v1894 = vsel %vm1023, %v1877, 0.0
    %1895 = vadd.xlane.f32.xlu0 %v1894
    %v1896 = vpop.xlane.xlu0 %1895
    %v1897 = vsel %vm1023, %v1879, 0.0
    %1898 = vadd.xlane.f32.xlu0 %v1897
    %v1899 = vpop.xlane.xlu0 %1898
    %v1900 = vsel %vm1023, %v1881, 0.0
    %1901 = vadd.xlane.f32.xlu0 %v1900
    %v1902 = vpop.xlane.xlu0 %1901
    %v1903 = vsel %vm1023, %v1883, 0.0
    %1904 = vadd.xlane.f32.xlu0 %v1903
    %v1905 = vpop.xlane.xlu0 %1904
    %v1906 = vsel %vm1023, %v1885, 0.0
    %1907 = vadd.xlane.f32.xlu0 %v1906
    %v1908 = vpop.xlane.xlu0 %1907
    %v1909 = vsel %vm1023, %v1887, 0.0
    %1910 = vadd.xlane.f32.xlu0 %v1909
    %v1911 = vpop.xlane.xlu0 %1910
    %v1912 = vlog2.pop %v1890
    %v1913 = vmul.f32 %v1912, 0.6931472
    %v1914 = vlog2.pop %v1893
    %v1915 = vmul.f32 %v1914, 0.6931472
    %v1916 = vlog2.pop %v1896
    %v1917 = vmul.f32 %v1916, 0.6931472
    %v1918 = vlog2.pop %v1899
    %v1919 = vmul.f32 %v1918, 0.6931472
    %v1920 = vlog2.pop %v1902
    %v1921 = vmul.f32 %v1920, 0.6931472
    %v1922 = vlog2.pop %v1905
    %v1923 = vmul.f32 %v1922, 0.6931472
    %v1924 = vlog2.pop %v1908
    %v1925 = vmul.f32 %v1924, 0.6931472
    %v1926 = vlog2.pop %v1911
    %v1927 = vmul.f32 %v1926, 0.6931472
    %v1928 = vadd.f32 %v1842, %v1913
    %v1929 = vadd.f32 %v1845, %v1915
    %v1930 = vadd.f32 %v1848, %v1917
    %v1931 = vadd.f32 %v1851, %v1919
    %v1932 = vadd.f32 %v1854, %v1921
    %v1933 = vadd.f32 %v1857, %v1923
    %v1934 = vadd.f32 %v1860, %v1925
    %v1935 = vadd.f32 %v1863, %v1927
    %v1936 = vsub.f32 %v1832, %v1928
    %v1937 = vsub.f32 %v1833, %v1929
    %v1938 = vsub.f32 %v1834, %v1930
    %v1939 = vsub.f32 %v1835, %v1931
    %v1940 = vsub.f32 %v1836, %v1932
    %v1941 = vsub.f32 %v1837, %v1933
    %v1942 = vsub.f32 %v1838, %v1934
    %v1943 = vsub.f32 %v1839, %v1935
    %v1944 = vsel %vm1023, %v1936, -inf
    %v1945 = vrot.slane %v1944, 4
    %v1946 = vmax.f32 %v1944, %v1945
    %v1947 = vrot.slane %v1946, 2
    %v1948 = vmax.f32 %v1946, %v1947
    %v1949 = vrot.slane %v1948, 1
    %v1950 = vmax.f32 %v1948, %v1949
    %v1951 = vsel %vm1023, %v1937, -inf
    %v1952 = vrot.slane %v1951, 4
    %v1953 = vmax.f32 %v1951, %v1952
    %v1954 = vrot.slane %v1953, 2
    %v1955 = vmax.f32 %v1953, %v1954
    %v1956 = vrot.slane %v1955, 1
    %v1957 = vmax.f32 %v1955, %v1956
    %v1958 = vsel %vm1023, %v1938, -inf
    %v1959 = vrot.slane %v1958, 4
    %v1960 = vmax.f32 %v1958, %v1959
    %v1961 = vrot.slane %v1960, 2
    %v1962 = vmax.f32 %v1960, %v1961
    %v1963 = vrot.slane %v1962, 1
    %v1964 = vmax.f32 %v1962, %v1963
    %v1965 = vsel %vm1023, %v1939, -inf
    %v1966 = vrot.slane %v1965, 4
    %v1967 = vmax.f32 %v1965, %v1966
    %v1968 = vrot.slane %v1967, 2
    %v1969 = vmax.f32 %v1967, %v1968
    %v1970 = vrot.slane %v1969, 1
    %v1971 = vmax.f32 %v1969, %v1970
    %v1972 = vsel %vm1023, %v1940, -inf
    %v1973 = vrot.slane %v1972, 4
    %v1974 = vmax.f32 %v1972, %v1973
    %v1975 = vrot.slane %v1974, 2
    %v1976 = vmax.f32 %v1974, %v1975
    %v1977 = vrot.slane %v1976, 1
    %v1978 = vmax.f32 %v1976, %v1977
    %v1979 = vsel %vm1023, %v1941, -inf
    %v1980 = vrot.slane %v1979, 4
    %v1981 = vmax.f32 %v1979, %v1980
    %v1982 = vrot.slane %v1981, 2
    %v1983 = vmax.f32 %v1981, %v1982
    %v1984 = vrot.slane %v1983, 1
    %v1985 = vmax.f32 %v1983, %v1984
    %v1986 = vsel %vm1023, %v1942, -inf
    %v1987 = vrot.slane %v1986, 4
    %v1988 = vmax.f32 %v1986, %v1987
    %v1989 = vrot.slane %v1988, 2
    %v1990 = vmax.f32 %v1988, %v1989
    %v1991 = vrot.slane %v1990, 1
    %v1992 = vmax.f32 %v1990, %v1991
    %v1993 = vsel %vm1023, %v1943, -inf
    %v1994 = vrot.slane %v1993, 4
    %v1995 = vmax.f32 %v1993, %v1994
    %v1996 = vrot.slane %v1995, 2
    %v1997 = vmax.f32 %v1995, %v1996
    %v1998 = vrot.slane %v1997, 1
    %v1999 = vmax.f32 %v1997, %v1998
    %v2000 = vsub.f32 %v1936, %v1950
    %v2001 = vsub.f32 %v1937, %v1957
    %v2002 = vsub.f32 %v1938, %v1964
    %v2003 = vsub.f32 %v1939, %v1971
    %v2004 = vsub.f32 %v1940, %v1978
    %v2005 = vsub.f32 %v1941, %v1985
    %v2006 = vsub.f32 %v1942, %v1992
    %v2007 = vsub.f32 %v1943, %v1999
    %v2008 = vmul.f32 %v2000, 1.442695
    %v2009 = vpow.pop %v2008
    %v2010 = vmul.f32 %v2001, 1.442695
    %v2011 = vpow.pop %v2010
    %v2012 = vmul.f32 %v2002, 1.442695
    %v2013 = vpow.pop %v2012
    %v2014 = vmul.f32 %v2003, 1.442695
    %v2015 = vpow.pop %v2014
    %v2016 = vmul.f32 %v2004, 1.442695
    %v2017 = vpow.pop %v2016
    %v2018 = vmul.f32 %v2005, 1.442695
    %v2019 = vpow.pop %v2018
    %v2020 = vmul.f32 %v2006, 1.442695
    %v2021 = vpow.pop %v2020
    %v2022 = vmul.f32 %v2007, 1.442695
    %v2023 = vpow.pop %v2022
    %v2024 = vsel %vm1023, %v2009, 0.0
    %v2025 = vrot.slane %v2024, 4
    %v2026 = vadd.f32 %v2024, %v2025
    %v2027 = vrot.slane %v2026, 2
    %v2028 = vadd.f32 %v2026, %v2027
    %v2029 = vrot.slane %v2028, 1
    %v2030 = vadd.f32 %v2028, %v2029
    %v2031 = vsel %vm1023, %v2011, 0.0
    %v2032 = vrot.slane %v2031, 4
    %v2033 = vadd.f32 %v2031, %v2032
    %v2034 = vrot.slane %v2033, 2
    %v2035 = vadd.f32 %v2033, %v2034
    %v2036 = vrot.slane %v2035, 1
    %v2037 = vadd.f32 %v2035, %v2036
    %v2038 = vsel %vm1023, %v2013, 0.0
    %v2039 = vrot.slane %v2038, 4
    %v2040 = vadd.f32 %v2038, %v2039
    %v2041 = vrot.slane %v2040, 2
    %v2042 = vadd.f32 %v2040, %v2041
    %v2043 = vrot.slane %v2042, 1
    %v2044 = vadd.f32 %v2042, %v2043
    %v2045 = vsel %vm1023, %v2015, 0.0
    %v2046 = vrot.slane %v2045, 4
    %v2047 = vadd.f32 %v2045, %v2046
    %v2048 = vrot.slane %v2047, 2
    %v2049 = vadd.f32 %v2047, %v2048
    %v2050 = vrot.slane %v2049, 1
    %v2051 = vadd.f32 %v2049, %v2050
    %v2052 = vsel %vm1023, %v2017, 0.0
    %v2053 = vrot.slane %v2052, 4
    %v2054 = vadd.f32 %v2052, %v2053
    %v2055 = vrot.slane %v2054, 2
    %v2056 = vadd.f32 %v2054, %v2055
    %v2057 = vrot.slane %v2056, 1
    %v2058 = vadd.f32 %v2056, %v2057
    %v2059 = vsel %vm1023, %v2019, 0.0
    %v2060 = vrot.slane %v2059, 4
    %v2061 = vadd.f32 %v2059, %v2060
    %v2062 = vrot.slane %v2061, 2
    %v2063 = vadd.f32 %v2061, %v2062
    %v2064 = vrot.slane %v2063, 1
    %v2065 = vadd.f32 %v2063, %v2064
    %v2066 = vsel %vm1023, %v2021, 0.0
    %v2067 = vrot.slane %v2066, 4
    %v2068 = vadd.f32 %v2066, %v2067
    %v2069 = vrot.slane %v2068, 2
    %v2070 = vadd.f32 %v2068, %v2069
    %v2071 = vrot.slane %v2070, 1
    %v2072 = vadd.f32 %v2070, %v2071
    %v2073 = vsel %vm1023, %v2023, 0.0
    %v2074 = vrot.slane %v2073, 4
    %v2075 = vadd.f32 %v2073, %v2074
    %v2076 = vrot.slane %v2075, 2
    %v2077 = vadd.f32 %v2075, %v2076
    %v2078 = vrot.slane %v2077, 1
    %v2079 = vadd.f32 %v2077, %v2078
    %v2080 = vlog2.pop %v2030
    %v2081 = vmul.f32 %v2080, 0.6931472
    %v2082 = vlog2.pop %v2037
    %v2083 = vmul.f32 %v2082, 0.6931472
    %v2084 = vlog2.pop %v2044
    %v2085 = vmul.f32 %v2084, 0.6931472
    %v2086 = vlog2.pop %v2051
    %v2087 = vmul.f32 %v2086, 0.6931472
    %v2088 = vlog2.pop %v2058
    %v2089 = vmul.f32 %v2088, 0.6931472
    %v2090 = vlog2.pop %v2065
    %v2091 = vmul.f32 %v2090, 0.6931472
    %v2092 = vlog2.pop %v2072
    %v2093 = vmul.f32 %v2092, 0.6931472
    %v2094 = vlog2.pop %v2079
    %v2095 = vmul.f32 %v2094, 0.6931472
    %v2096 = vadd.f32 %v1950, %v2081
    %v2097 = vadd.f32 %v1957, %v2083
    %v2098 = vadd.f32 %v1964, %v2085
    %v2099 = vadd.f32 %v1971, %v2087
    %v2100 = vadd.f32 %v1978, %v2089
    %v2101 = vadd.f32 %v1985, %v2091
    %v2102 = vadd.f32 %v1992, %v2093
    %v2103 = vadd.f32 %v1999, %v2095
    %v2104 = vsub.f32 %v1936, %v2096
    %v2105 = vsub.f32 %v1937, %v2097
    %v2106 = vsub.f32 %v1938, %v2098
    %v2107 = vsub.f32 %v1939, %v2099
    %v2108 = vsub.f32 %v1940, %v2100
    %v2109 = vsub.f32 %v1941, %v2101
    %v2110 = vsub.f32 %v1942, %v2102
    %v2111 = vsub.f32 %v1943, %v2103
    %v2112 = vsel %vm1023, %v2104, -inf
    %2113 = vmax.xlane.f32.xlu0 %v2112
    %v2114 = vpop.xlane.xlu0 %2113
    %v2115 = vsel %vm1023, %v2105, -inf
    %2116 = vmax.xlane.f32.xlu0 %v2115
    %v2117 = vpop.xlane.xlu0 %2116
    %v2118 = vsel %vm1023, %v2106, -inf
    %2119 = vmax.xlane.f32.xlu0 %v2118
    %v2120 = vpop.xlane.xlu0 %2119
    %v2121 = vsel %vm1023, %v2107, -inf
    %2122 = vmax.xlane.f32.xlu0 %v2121
    %v2123 = vpop.xlane.xlu0 %2122
    %v2124 = vsel %vm1023, %v2108, -inf
    %2125 = vmax.xlane.f32.xlu0 %v2124
    %v2126 = vpop.xlane.xlu0 %2125
    %v2127 = vsel %vm1023, %v2109, -inf
    %2128 = vmax.xlane.f32.xlu0 %v2127
    %v2129 = vpop.xlane.xlu0 %2128
    %v2130 = vsel %vm1023, %v2110, -inf
    %2131 = vmax.xlane.f32.xlu0 %v2130
    %v2132 = vpop.xlane.xlu0 %2131
    %v2133 = vsel %vm1023, %v2111, -inf
    %2134 = vmax.xlane.f32.xlu0 %v2133
    %v2135 = vpop.xlane.xlu0 %2134
    %v2136 = vsub.f32 %v2104, %v2114
    %v2137 = vsub.f32 %v2105, %v2117
    %v2138 = vsub.f32 %v2106, %v2120
    %v2139 = vsub.f32 %v2107, %v2123
    %v2140 = vsub.f32 %v2108, %v2126
    %v2141 = vsub.f32 %v2109, %v2129
    %v2142 = vsub.f32 %v2110, %v2132
    %v2143 = vsub.f32 %v2111, %v2135
    %v2144 = vmul.f32 %v2136, 1.442695
    %v2145 = vpow.pop %v2144
    %v2146 = vmul.f32 %v2137, 1.442695
    %v2147 = vpow.pop %v2146
    %v2148 = vmul.f32 %v2138, 1.442695
    %v2149 = vpow.pop %v2148
    %v2150 = vmul.f32 %v2139, 1.442695
    %v2151 = vpow.pop %v2150
    %v2152 = vmul.f32 %v2140, 1.442695
    %v2153 = vpow.pop %v2152
    %v2154 = vmul.f32 %v2141, 1.442695
    %v2155 = vpow.pop %v2154
    %v2156 = vmul.f32 %v2142, 1.442695
    %v2157 = vpow.pop %v2156
    %v2158 = vmul.f32 %v2143, 1.442695
    %v2159 = vpow.pop %v2158
    %v2160 = vsel %vm1023, %v2145, 0.0
    %2161 = vadd.xlane.f32.xlu0 %v2160
    %v2162 = vpop.xlane.xlu0 %2161
    %v2163 = vsel %vm1023, %v2147, 0.0
    %2164 = vadd.xlane.f32.xlu0 %v2163
    %v2165 = vpop.xlane.xlu0 %2164
    %v2166 = vsel %vm1023, %v2149, 0.0
    %2167 = vadd.xlane.f32.xlu0 %v2166
    %v2168 = vpop.xlane.xlu0 %2167
    %v2169 = vsel %vm1023, %v2151, 0.0
    %2170 = vadd.xlane.f32.xlu0 %v2169
    %v2171 = vpop.xlane.xlu0 %2170
    %v2172 = vsel %vm1023, %v2153, 0.0
    %2173 = vadd.xlane.f32.xlu0 %v2172
    %v2174 = vpop.xlane.xlu0 %2173
    %v2175 = vsel %vm1023, %v2155, 0.0
    %2176 = vadd.xlane.f32.xlu0 %v2175
    %v2177 = vpop.xlane.xlu0 %2176
    %v2178 = vsel %vm1023, %v2157, 0.0
    %2179 = vadd.xlane.f32.xlu0 %v2178
    %v2180 = vpop.xlane.xlu0 %2179
    %v2181 = vsel %vm1023, %v2159, 0.0
    %2182 = vadd.xlane.f32.xlu0 %v2181
    %v2183 = vpop.xlane.xlu0 %2182
    %v2184 = vlog2.pop %v2162
    %v2185 = vmul.f32 %v2184, 0.6931472
    %v2186 = vlog2.pop %v2165
    %v2187 = vmul.f32 %v2186, 0.6931472
    %v2188 = vlog2.pop %v2168
    %v2189 = vmul.f32 %v2188, 0.6931472
    %v2190 = vlog2.pop %v2171
    %v2191 = vmul.f32 %v2190, 0.6931472
    %v2192 = vlog2.pop %v2174
    %v2193 = vmul.f32 %v2192, 0.6931472
    %v2194 = vlog2.pop %v2177
    %v2195 = vmul.f32 %v2194, 0.6931472
    %v2196 = vlog2.pop %v2180
    %v2197 = vmul.f32 %v2196, 0.6931472
    %v2198 = vlog2.pop %v2183
    %v2199 = vmul.f32 %v2198, 0.6931472
    %v2200 = vadd.f32 %v2114, %v2185
    %v2201 = vadd.f32 %v2117, %v2187
    %v2202 = vadd.f32 %v2120, %v2189
    %v2203 = vadd.f32 %v2123, %v2191
    %v2204 = vadd.f32 %v2126, %v2193
    %v2205 = vadd.f32 %v2129, %v2195
    %v2206 = vadd.f32 %v2132, %v2197
    %v2207 = vadd.f32 %v2135, %v2199
    %v2208 = vsub.f32 %v2104, %v2200
    %v2209 = vsub.f32 %v2105, %v2201
    %v2210 = vsub.f32 %v2106, %v2202
    %v2211 = vsub.f32 %v2107, %v2203
    %v2212 = vsub.f32 %v2108, %v2204
    %v2213 = vsub.f32 %v2109, %v2205
    %v2214 = vsub.f32 %v2110, %v2206
    %v2215 = vsub.f32 %v2111, %v2207
    %v2216 = vsel %vm1023, %v2208, -inf
    %v2217 = vrot.slane %v2216, 4
    %v2218 = vmax.f32 %v2216, %v2217
    %v2219 = vrot.slane %v2218, 2
    %v2220 = vmax.f32 %v2218, %v2219
    %v2221 = vrot.slane %v2220, 1
    %v2222 = vmax.f32 %v2220, %v2221
    %v2223 = vsel %vm1023, %v2209, -inf
    %v2224 = vrot.slane %v2223, 4
    %v2225 = vmax.f32 %v2223, %v2224
    %v2226 = vrot.slane %v2225, 2
    %v2227 = vmax.f32 %v2225, %v2226
    %v2228 = vrot.slane %v2227, 1
    %v2229 = vmax.f32 %v2227, %v2228
    %v2230 = vsel %vm1023, %v2210, -inf
    %v2231 = vrot.slane %v2230, 4
    %v2232 = vmax.f32 %v2230, %v2231
    %v2233 = vrot.slane %v2232, 2
    %v2234 = vmax.f32 %v2232, %v2233
    %v2235 = vrot.slane %v2234, 1
    %v2236 = vmax.f32 %v2234, %v2235
    %v2237 = vsel %vm1023, %v2211, -inf
    %v2238 = vrot.slane %v2237, 4
    %v2239 = vmax.f32 %v2237, %v2238
    %v2240 = vrot.slane %v2239, 2
    %v2241 = vmax.f32 %v2239, %v2240
    %v2242 = vrot.slane %v2241, 1
    %v2243 = vmax.f32 %v2241, %v2242
    %v2244 = vsel %vm1023, %v2212, -inf
    %v2245 = vrot.slane %v2244, 4
    %v2246 = vmax.f32 %v2244, %v2245
    %v2247 = vrot.slane %v2246, 2
    %v2248 = vmax.f32 %v2246, %v2247
    %v2249 = vrot.slane %v2248, 1
    %v2250 = vmax.f32 %v2248, %v2249
    %v2251 = vsel %vm1023, %v2213, -inf
    %v2252 = vrot.slane %v2251, 4
    %v2253 = vmax.f32 %v2251, %v2252
    %v2254 = vrot.slane %v2253, 2
    %v2255 = vmax.f32 %v2253, %v2254
    %v2256 = vrot.slane %v2255, 1
    %v2257 = vmax.f32 %v2255, %v2256
    %v2258 = vsel %vm1023, %v2214, -inf
    %v2259 = vrot.slane %v2258, 4
    %v2260 = vmax.f32 %v2258, %v2259
    %v2261 = vrot.slane %v2260, 2
    %v2262 = vmax.f32 %v2260, %v2261
    %v2263 = vrot.slane %v2262, 1
    %v2264 = vmax.f32 %v2262, %v2263
    %v2265 = vsel %vm1023, %v2215, -inf
    %v2266 = vrot.slane %v2265, 4
    %v2267 = vmax.f32 %v2265, %v2266
    %v2268 = vrot.slane %v2267, 2
    %v2269 = vmax.f32 %v2267, %v2268
    %v2270 = vrot.slane %v2269, 1
    %v2271 = vmax.f32 %v2269, %v2270
    %v2272 = vsub.f32 %v2208, %v2222
    %v2273 = vsub.f32 %v2209, %v2229
    %v2274 = vsub.f32 %v2210, %v2236
    %v2275 = vsub.f32 %v2211, %v2243
    %v2276 = vsub.f32 %v2212, %v2250
    %v2277 = vsub.f32 %v2213, %v2257
    %v2278 = vsub.f32 %v2214, %v2264
    %v2279 = vsub.f32 %v2215, %v2271
    %v2280 = vmul.f32 %v2272, 1.442695
    %v2281 = vpow.pop %v2280
    %v2282 = vmul.f32 %v2273, 1.442695
    %v2283 = vpow.pop %v2282
    %v2284 = vmul.f32 %v2274, 1.442695
    %v2285 = vpow.pop %v2284
    %v2286 = vmul.f32 %v2275, 1.442695
    %v2287 = vpow.pop %v2286
    %v2288 = vmul.f32 %v2276, 1.442695
    %v2289 = vpow.pop %v2288
    %v2290 = vmul.f32 %v2277, 1.442695
    %v2291 = vpow.pop %v2290
    %v2292 = vmul.f32 %v2278, 1.442695
    %v2293 = vpow.pop %v2292
    %v2294 = vmul.f32 %v2279, 1.442695
    %v2295 = vpow.pop %v2294
    %v2296 = vsel %vm1023, %v2281, 0.0
    %v2297 = vrot.slane %v2296, 4
    %v2298 = vadd.f32 %v2296, %v2297
    %v2299 = vrot.slane %v2298, 2
    %v2300 = vadd.f32 %v2298, %v2299
    %v2301 = vrot.slane %v2300, 1
    %v2302 = vadd.f32 %v2300, %v2301
    %v2303 = vsel %vm1023, %v2283, 0.0
    %v2304 = vrot.slane %v2303, 4
    %v2305 = vadd.f32 %v2303, %v2304
    %v2306 = vrot.slane %v2305, 2
    %v2307 = vadd.f32 %v2305, %v2306
    %v2308 = vrot.slane %v2307, 1
    %v2309 = vadd.f32 %v2307, %v2308
    %v2310 = vsel %vm1023, %v2285, 0.0
    %v2311 = vrot.slane %v2310, 4
    %v2312 = vadd.f32 %v2310, %v2311
    %v2313 = vrot.slane %v2312, 2
    %v2314 = vadd.f32 %v2312, %v2313
    %v2315 = vrot.slane %v2314, 1
    %v2316 = vadd.f32 %v2314, %v2315
    %v2317 = vsel %vm1023, %v2287, 0.0
    %v2318 = vrot.slane %v2317, 4
    %v2319 = vadd.f32 %v2317, %v2318
    %v2320 = vrot.slane %v2319, 2
    %v2321 = vadd.f32 %v2319, %v2320
    %v2322 = vrot.slane %v2321, 1
    %v2323 = vadd.f32 %v2321, %v2322
    %v2324 = vsel %vm1023, %v2289, 0.0
    %v2325 = vrot.slane %v2324, 4
    %v2326 = vadd.f32 %v2324, %v2325
    %v2327 = vrot.slane %v2326, 2
    %v2328 = vadd.f32 %v2326, %v2327
    %v2329 = vrot.slane %v2328, 1
    %v2330 = vadd.f32 %v2328, %v2329
    %v2331 = vsel %vm1023, %v2291, 0.0
    %v2332 = vrot.slane %v2331, 4
    %v2333 = vadd.f32 %v2331, %v2332
    %v2334 = vrot.slane %v2333, 2
    %v2335 = vadd.f32 %v2333, %v2334
    %v2336 = vrot.slane %v2335, 1
    %v2337 = vadd.f32 %v2335, %v2336
    %v2338 = vsel %vm1023, %v2293, 0.0
    %v2339 = vrot.slane %v2338, 4
    %v2340 = vadd.f32 %v2338, %v2339
    %v2341 = vrot.slane %v2340, 2
    %v2342 = vadd.f32 %v2340, %v2341
    %v2343 = vrot.slane %v2342, 1
    %v2344 = vadd.f32 %v2342, %v2343
    %v2345 = vsel %vm1023, %v2295, 0.0
    %v2346 = vrot.slane %v2345, 4
    %v2347 = vadd.f32 %v2345, %v2346
    %v2348 = vrot.slane %v2347, 2
    %v2349 = vadd.f32 %v2347, %v2348
    %v2350 = vrot.slane %v2349, 1
    %v2351 = vadd.f32 %v2349, %v2350
    %v2352 = vlog2.pop %v2302
    %v2353 = vmul.f32 %v2352, 0.6931472
    %v2354 = vlog2.pop %v2309
    %v2355 = vmul.f32 %v2354, 0.6931472
    %v2356 = vlog2.pop %v2316
    %v2357 = vmul.f32 %v2356, 0.6931472
    %v2358 = vlog2.pop %v2323
    %v2359 = vmul.f32 %v2358, 0.6931472
    %v2360 = vlog2.pop %v2330
    %v2361 = vmul.f32 %v2360, 0.6931472
    %v2362 = vlog2.pop %v2337
    %v2363 = vmul.f32 %v2362, 0.6931472
    %v2364 = vlog2.pop %v2344
    %v2365 = vmul.f32 %v2364, 0.6931472
    %v2366 = vlog2.pop %v2351
    %v2367 = vmul.f32 %v2366, 0.6931472
    %v2368 = vadd.f32 %v2222, %v2353
    %v2369 = vadd.f32 %v2229, %v2355
    %v2370 = vadd.f32 %v2236, %v2357
    %v2371 = vadd.f32 %v2243, %v2359
    %v2372 = vadd.f32 %v2250, %v2361
    %v2373 = vadd.f32 %v2257, %v2363
    %v2374 = vadd.f32 %v2264, %v2365
    %v2375 = vadd.f32 %v2271, %v2367
    %v2376 = vsub.f32 %v2208, %v2368
    %v2377 = vsub.f32 %v2209, %v2369
    %v2378 = vsub.f32 %v2210, %v2370
    %v2379 = vsub.f32 %v2211, %v2371
    %v2380 = vsub.f32 %v2212, %v2372
    %v2381 = vsub.f32 %v2213, %v2373
    %v2382 = vsub.f32 %v2214, %v2374
    %v2383 = vsub.f32 %v2215, %v2375
    %v2384 = vmul.f32 %v2376, 10.0
    %v2385 = vmul.f32 %v2377, 10.0
    %v2386 = vmul.f32 %v2378, 10.0
    %v2387 = vmul.f32 %v2379, 10.0
    %v2388 = vmul.f32 %v2380, 10.0
    %v2389 = vmul.f32 %v2381, 10.0
    %v2390 = vmul.f32 %v2382, 10.0
    %v2391 = vmul.f32 %v2383, 10.0
    %v2392 = vmul.f32 %v2384, 1.442695
    %v2393 = vpow.pop %v2392
    %v2394 = vmul.f32 %v2385, 1.442695
    %v2395 = vpow.pop %v2394
    %v2396 = vmul.f32 %v2386, 1.442695
    %v2397 = vpow.pop %v2396
    %v2398 = vmul.f32 %v2387, 1.442695
    %v2399 = vpow.pop %v2398
    %v2400 = vmul.f32 %v2388, 1.442695
    %v2401 = vpow.pop %v2400
    %v2402 = vmul.f32 %v2389, 1.442695
    %v2403 = vpow.pop %v2402
    %v2404 = vmul.f32 %v2390, 1.442695
    %v2405 = vpow.pop %v2404
    %v2406 = vmul.f32 %v2391, 1.442695
    %v2407 = vpow.pop %v2406
    %v2409 = vsel %vm1023, %v2393, 0
    %2411 = vmatprep.subr.mxu0 0.0
    %2412 = vmatpush1.msra.mxu0 %v136
    %2413 = vmatprep.subr.mxu0 0.0
    %2414 = vmatpush1.msra.mxu0 0.0
    %2415 = vmatprep.subr.mxu0 0.0
    %2416 = vmatpush1.msra.mxu0 0.0
    %2417 = vmatprep.subr.mxu0 0.0
    %2418 = vmatpush1.msra.mxu0 0.0
    %2419 = vmatprep.subr.mxu0 0.0
    %2420 = vmatpush1.msra.mxu0 0.0
    %2421 = vmatprep.subr.mxu0 0.0
    %2422 = vmatpush1.msra.mxu0 0.0
    %2423 = vmatprep.subr.mxu0 0.0
    %2424 = vmatpush1.msra.mxu0 0.0
    %2425 = vmatprep.subr.mxu0 0.0
    %2426 = vmatpush1.msra.mxu0 0.0
    %2427 = vmatprep.subr.mxu0 0.0
    %2428 = vmatpush1.msra.mxu0 0.0
    %2429 = vmatprep.subr.mxu0 0.0
    %2430 = vmatpush1.msra.mxu0 0.0
    %2431 = vmatprep.subr.mxu0 0.0
    %2432 = vmatpush1.msra.mxu0 0.0
    %2433 = vmatprep.subr.mxu0 0.0
    %2434 = vmatpush1.msra.mxu0 0.0
    %2435 = vmatprep.subr.mxu0 0.0
    %2436 = vmatpush1.msra.mxu0 0.0
    %2437 = vmatprep.subr.mxu0 0.0
    %2438 = vmatpush1.msra.mxu0 0.0
    %2439 = vmatprep.subr.mxu0 0.0
    %2440 = vmatpush1.msra.mxu0 0.0
    %2441 = vmatprep.subr.mxu0 0.0
    %2442 = vmatpush1.msra.mxu0 0.0
    %2443 = vmatprep.subr.mxu0 0.0
    %2444 = vmatpush1.msra.mxu0 0.0
    %2445 = vmatprep.subr.mxu0 0.0
    %2446 = vmatpush1.msra.mxu0 0.0
    %2447 = vmatprep.subr.mxu0 0.0
    %2448 = vmatpush1.msra.mxu0 0.0
    %2449 = vmatprep.subr.mxu0 0.0
    %2450 = vmatpush1.msra.mxu0 0.0
    %2451 = vmatprep.subr.mxu0 0.0
    %2452 = vmatpush1.msra.mxu0 0.0
    %2453 = vmatprep.subr.mxu0 0.0
    %2454 = vmatpush1.msra.mxu0 0.0
    %2455 = vmatprep.subr.mxu0 0.0
    %2456 = vmatpush1.msra.mxu0 0.0
    %2457 = vmatprep.subr.mxu0 0.0
    %2458 = vmatpush1.msra.mxu0 0.0
    %2459 = vmatprep.subr.mxu0 0.0
    %2460 = vmatpush1.msra.mxu0 0.0
    %2461 = vmatprep.subr.mxu0 0.0
    %2462 = vmatpush1.msra.mxu0 0.0
    %2463 = vmatprep.subr.mxu0 0.0
    %2464 = vmatpush1.msra.mxu0 0.0
    %2465 = vmatprep.subr.mxu0 0.0
    %2466 = vmatpush1.msra.mxu0 0.0
    %2467 = vmatprep.subr.mxu0 0.0
    %2468 = vmatpush1.msra.mxu0 0.0
    %2469 = vmatprep.subr.mxu0 0.0
    %2470 = vmatpush1.msra.mxu0 0.0
    %2471 = vmatprep.subr.mxu0 0.0
    %2472 = vmatpush1.msra.mxu0 0.0
    %2473 = vmatprep.subr.mxu0 0.0
    %2474 = vmatpush1.msra.mxu0 0.0
    %2475 = vmatprep.mubr.f32.mxu0 0.0
    %2476 = vmatmul.mubr.f32.gmra.mrb[0].mxu0 %v2409
    %v2477 = vpop.f32.mrb[0].mxu0
    %v2478 = vadd.f32 0.0, %v2477
    %v2479 = vpop.f32.mrb[0].mxu0
    %2480 = vdwg.mxu0
    %v2482 = vsel %vm1023, %v2395, 0
    %2484 = vmatprep.subr.mxu0 0.0
    %2485 = vmatpush1.msra.mxu0 %v137
    %2486 = vmatprep.subr.mxu0 0.0
    %2487 = vmatpush1.msra.mxu0 0.0
    %2488 = vmatprep.subr.mxu0 0.0
    %2489 = vmatpush1.msra.mxu0 0.0
    %2490 = vmatprep.subr.mxu0 0.0
    %2491 = vmatpush1.msra.mxu0 0.0
    %2492 = vmatprep.subr.mxu0 0.0
    %2493 = vmatpush1.msra.mxu0 0.0
    %2494 = vmatprep.subr.mxu0 0.0
    %2495 = vmatpush1.msra.mxu0 0.0
    %2496 = vmatprep.subr.mxu0 0.0
    %2497 = vmatpush1.msra.mxu0 0.0
    %2498 = vmatprep.subr.mxu0 0.0
    %2499 = vmatpush1.msra.mxu0 0.0
    %2500 = vmatprep.subr.mxu0 0.0
    %2501 = vmatpush1.msra.mxu0 0.0
    %2502 = vmatprep.subr.mxu0 0.0
    %2503 = vmatpush1.msra.mxu0 0.0
    %2504 = vmatprep.subr.mxu0 0.0
    %2505 = vmatpush1.msra.mxu0 0.0
    %2506 = vmatprep.subr.mxu0 0.0
    %2507 = vmatpush1.msra.mxu0 0.0
    %2508 = vmatprep.subr.mxu0 0.0
    %2509 = vmatpush1.msra.mxu0 0.0
    %2510 = vmatprep.subr.mxu0 0.0
    %2511 = vmatpush1.msra.mxu0 0.0
    %2512 = vmatprep.subr.mxu0 0.0
    %2513 = vmatpush1.msra.mxu0 0.0
    %2514 = vmatprep.subr.mxu0 0.0
    %2515 = vmatpush1.msra.mxu0 0.0
    %2516 = vmatprep.subr.mxu0 0.0
    %2517 = vmatpush1.msra.mxu0 0.0
    %2518 = vmatprep.subr.mxu0 0.0
    %2519 = vmatpush1.msra.mxu0 0.0
    %2520 = vmatprep.subr.mxu0 0.0
    %2521 = vmatpush1.msra.mxu0 0.0
    %2522 = vmatprep.subr.mxu0 0.0
    %2523 = vmatpush1.msra.mxu0 0.0
    %2524 = vmatprep.subr.mxu0 0.0
    %2525 = vmatpush1.msra.mxu0 0.0
    %2526 = vmatprep.subr.mxu0 0.0
    %2527 = vmatpush1.msra.mxu0 0.0
    %2528 = vmatprep.subr.mxu0 0.0
    %2529 = vmatpush1.msra.mxu0 0.0
    %2530 = vmatprep.subr.mxu0 0.0
    %2531 = vmatpush1.msra.mxu0 0.0
    %2532 = vmatprep.subr.mxu0 0.0
    %2533 = vmatpush1.msra.mxu0 0.0
    %2534 = vmatprep.subr.mxu0 0.0
    %2535 = vmatpush1.msra.mxu0 0.0
    %2536 = vmatprep.subr.mxu0 0.0
    %2537 = vmatpush1.msra.mxu0 0.0
    %2538 = vmatprep.subr.mxu0 0.0
    %2539 = vmatpush1.msra.mxu0 0.0
    %2540 = vmatprep.subr.mxu0 0.0
    %2541 = vmatpush1.msra.mxu0 0.0
    %2542 = vmatprep.subr.mxu0 0.0
    %2543 = vmatpush1.msra.mxu0 0.0
    %2544 = vmatprep.subr.mxu0 0.0
    %2545 = vmatpush1.msra.mxu0 0.0
    %2546 = vmatprep.subr.mxu0 0.0
    %2547 = vmatpush1.msra.mxu0 0.0
    %2548 = vmatprep.mubr.f32.mxu0 0.0
    %2549 = vmatmul.mubr.f32.gmra.mrb[0].mxu0 %v2482
    %v2550 = vpop.f32.mrb[0].mxu0
    %v2551 = vadd.f32 0.0, %v2550
    %v2552 = vpop.f32.mrb[0].mxu0
    %2553 = vdwg.mxu0
    %v2555 = vsel %vm1023, %v2397, 0
    %2557 = vmatprep.subr.mxu0 0.0
    %2558 = vmatpush1.msra.mxu0 %v138
    %2559 = vmatprep.subr.mxu0 0.0
    %2560 = vmatpush1.msra.mxu0 0.0
    %2561 = vmatprep.subr.mxu0 0.0
    %2562 = vmatpush1.msra.mxu0 0.0
    %2563 = vmatprep.subr.mxu0 0.0
    %2564 = vmatpush1.msra.mxu0 0.0
    %2565 = vmatprep.subr.mxu0 0.0
    %2566 = vmatpush1.msra.mxu0 0.0
    %2567 = vmatprep.subr.mxu0 0.0
    %2568 = vmatpush1.msra.mxu0 0.0
    %2569 = vmatprep.subr.mxu0 0.0
    %2570 = vmatpush1.msra.mxu0 0.0
    %2571 = vmatprep.subr.mxu0 0.0
    %2572 = vmatpush1.msra.mxu0 0.0
    %2573 = vmatprep.subr.mxu0 0.0
    %2574 = vmatpush1.msra.mxu0 0.0
    %2575 = vmatprep.subr.mxu0 0.0
    %2576 = vmatpush1.msra.mxu0 0.0
    %2577 = vmatprep.subr.mxu0 0.0
    %2578 = vmatpush1.msra.mxu0 0.0
    %2579 = vmatprep.subr.mxu0 0.0
    %2580 = vmatpush1.msra.mxu0 0.0
    %2581 = vmatprep.subr.mxu0 0.0
    %2582 = vmatpush1.msra.mxu0 0.0
    %2583 = vmatprep.subr.mxu0 0.0
    %2584 = vmatpush1.msra.mxu0 0.0
    %2585 = vmatprep.subr.mxu0 0.0
    %2586 = vmatpush1.msra.mxu0 0.0
    %2587 = vmatprep.subr.mxu0 0.0
    %2588 = vmatpush1.msra.mxu0 0.0
    %2589 = vmatprep.subr.mxu0 0.0
    %2590 = vmatpush1.msra.mxu0 0.0
    %2591 = vmatprep.subr.mxu0 0.0
    %2592 = vmatpush1.msra.mxu0 0.0
    %2593 = vmatprep.subr.mxu0 0.0
    %2594 = vmatpush1.msra.mxu0 0.0
    %2595 = vmatprep.subr.mxu0 0.0
    %2596 = vmatpush1.msra.mxu0 0.0
    %2597 = vmatprep.subr.mxu0 0.0
    %2598 = vmatpush1.msra.mxu0 0.0
    %2599 = vmatprep.subr.mxu0 0.0
    %2600 = vmatpush1.msra.mxu0 0.0
    %2601 = vmatprep.subr.mxu0 0.0
    %2602 = vmatpush1.msra.mxu0 0.0
    %2603 = vmatprep.subr.mxu0 0.0
    %2604 = vmatpush1.msra.mxu0 0.0
    %2605 = vmatprep.subr.mxu0 0.0
    %2606 = vmatpush1.msra.mxu0 0.0
    %2607 = vmatprep.subr.mxu0 0.0
    %2608 = vmatpush1.msra.mxu0 0.0
    %2609 = vmatprep.subr.mxu0 0.0
    %2610 = vmatpush1.msra.mxu0 0.0
    %2611 = vmatprep.subr.mxu0 0.0
    %2612 = vmatpush1.msra.mxu0 0.0
    %2613 = vmatprep.subr.mxu0 0.0
    %2614 = vmatpush1.msra.mxu0 0.0
    %2615 = vmatprep.subr.mxu0 0.0
    %2616 = vmatpush1.msra.mxu0 0.0
    %2617 = vmatprep.subr.mxu0 0.0
    %2618 = vmatpush1.msra.mxu0 0.0
    %2619 = vmatprep.subr.mxu0 0.0
    %2620 = vmatpush1.msra.mxu0 0.0
    %2621 = vmatprep.mubr.f32.mxu0 0.0
    %2622 = vmatmul.mubr.f32.gmra.mrb[0].mxu0 %v2555
    %v2623 = vpop.f32.mrb[0].mxu0
    %v2624 = vadd.f32 0.0, %v2623
    %v2625 = vpop.f32.mrb[0].mxu0
    %2626 = vdwg.mxu0
    %v2628 = vsel %vm1023, %v2399, 0
    %2630 = vmatprep.subr.mxu0 0.0
    %2631 = vmatpush1.msra.mxu0 %v139
    %2632 = vmatprep.subr.mxu0 0.0
    %2633 = vmatpush1.msra.mxu0 0.0
    %2634 = vmatprep.subr.mxu0 0.0
    %2635 = vmatpush1.msra.mxu0 0.0
    %2636 = vmatprep.subr.mxu0 0.0
    %2637 = vmatpush1.msra.mxu0 0.0
    %2638 = vmatprep.subr.mxu0 0.0
    %2639 = vmatpush1.msra.mxu0 0.0
    %2640 = vmatprep.subr.mxu0 0.0
    %2641 = vmatpush1.msra.mxu0 0.0
    %2642 = vmatprep.subr.mxu0 0.0
    %2643 = vmatpush1.msra.mxu0 0.0
    %2644 = vmatprep.subr.mxu0 0.0
    %2645 = vmatpush1.msra.mxu0 0.0
    %2646 = vmatprep.subr.mxu0 0.0
    %2647 = vmatpush1.msra.mxu0 0.0
    %2648 = vmatprep.subr.mxu0 0.0
    %2649 = vmatpush1.msra.mxu0 0.0
    %2650 = vmatprep.subr.mxu0 0.0
    %2651 = vmatpush1.msra.mxu0 0.0
    %2652 = vmatprep.subr.mxu0 0.0
    %2653 = vmatpush1.msra.mxu0 0.0
    %2654 = vmatprep.subr.mxu0 0.0
    %2655 = vmatpush1.msra.mxu0 0.0
    %2656 = vmatprep.subr.mxu0 0.0
    %2657 = vmatpush1.msra.mxu0 0.0
    %2658 = vmatprep.subr.mxu0 0.0
    %2659 = vmatpush1.msra.mxu0 0.0
    %2660 = vmatprep.subr.mxu0 0.0
    %2661 = vmatpush1.msra.mxu0 0.0
    %2662 = vmatprep.subr.mxu0 0.0
    %2663 = vmatpush1.msra.mxu0 0.0
    %2664 = vmatprep.subr.mxu0 0.0
    %2665 = vmatpush1.msra.mxu0 0.0
    %2666 = vmatprep.subr.mxu0 0.0
    %2667 = vmatpush1.msra.mxu0 0.0
    %2668 = vmatprep.subr.mxu0 0.0
    %2669 = vmatpush1.msra.mxu0 0.0
    %2670 = vmatprep.subr.mxu0 0.0
    %2671 = vmatpush1.msra.mxu0 0.0
    %2672 = vmatprep.subr.mxu0 0.0
    %2673 = vmatpush1.msra.mxu0 0.0
    %2674 = vmatprep.subr.mxu0 0.0
    %2675 = vmatpush1.msra.mxu0 0.0
    %2676 = vmatprep.subr.mxu0 0.0
    %2677 = vmatpush1.msra.mxu0 0.0
    %2678 = vmatprep.subr.mxu0 0.0
    %2679 = vmatpush1.msra.mxu0 0.0
    %2680 = vmatprep.subr.mxu0 0.0
    %2681 = vmatpush1.msra.mxu0 0.0
    %2682 = vmatprep.subr.mxu0 0.0
    %2683 = vmatpush1.msra.mxu0 0.0
    %2684 = vmatprep.subr.mxu0 0.0
    %2685 = vmatpush1.msra.mxu0 0.0
    %2686 = vmatprep.subr.mxu0 0.0
    %2687 = vmatpush1.msra.mxu0 0.0
    %2688 = vmatprep.subr.mxu0 0.0
    %2689 = vmatpush1.msra.mxu0 0.0
    %2690 = vmatprep.subr.mxu0 0.0
    %2691 = vmatpush1.msra.mxu0 0.0
    %2692 = vmatprep.subr.mxu0 0.0
    %2693 = vmatpush1.msra.mxu0 0.0
    %2694 = vmatprep.mubr.f32.mxu0 0.0
    %2695 = vmatmul.mubr.f32.gmra.mrb[0].mxu0 %v2628
    %v2696 = vpop.f32.mrb[0].mxu0
    %v2697 = vadd.f32 0.0, %v2696
    %v2698 = vpop.f32.mrb[0].mxu0
    %2699 = vdwg.mxu0
    %v2701 = vsel %vm1023, %v2401, 0
    %2703 = vmatprep.subr.mxu0 0.0
    %2704 = vmatpush1.msra.mxu0 %v140
    %2705 = vmatprep.subr.mxu0 0.0
    %2706 = vmatpush1.msra.mxu0 0.0
    %2707 = vmatprep.subr.mxu0 0.0
    %2708 = vmatpush1.msra.mxu0 0.0
    %2709 = vmatprep.subr.mxu0 0.0
    %2710 = vmatpush1.msra.mxu0 0.0
    %2711 = vmatprep.subr.mxu0 0.0
    %2712 = vmatpush1.msra.mxu0 0.0
    %2713 = vmatprep.subr.mxu0 0.0
    %2714 = vmatpush1.msra.mxu0 0.0
    %2715 = vmatprep.subr.mxu0 0.0
    %2716 = vmatpush1.msra.mxu0 0.0
    %2717 = vmatprep.subr.mxu0 0.0
    %2718 = vmatpush1.msra.mxu0 0.0
    %2719 = vmatprep.subr.mxu0 0.0
    %2720 = vmatpush1.msra.mxu0 0.0
    %2721 = vmatprep.subr.mxu0 0.0
    %2722 = vmatpush1.msra.mxu0 0.0
    %2723 = vmatprep.subr.mxu0 0.0
    %2724 = vmatpush1.msra.mxu0 0.0
    %2725 = vmatprep.subr.mxu0 0.0
    %2726 = vmatpush1.msra.mxu0 0.0
    %2727 = vmatprep.subr.mxu0 0.0
    %2728 = vmatpush1.msra.mxu0 0.0
    %2729 = vmatprep.subr.mxu0 0.0
    %2730 = vmatpush1.msra.mxu0 0.0
    %2731 = vmatprep.subr.mxu0 0.0
    %2732 = vmatpush1.msra.mxu0 0.0
    %2733 = vmatprep.subr.mxu0 0.0
    %2734 = vmatpush1.msra.mxu0 0.0
    %2735 = vmatprep.subr.mxu0 0.0
    %2736 = vmatpush1.msra.mxu0 0.0
    %2737 = vmatprep.subr.mxu0 0.0
    %2738 = vmatpush1.msra.mxu0 0.0
    %2739 = vmatprep.subr.mxu0 0.0
    %2740 = vmatpush1.msra.mxu0 0.0
    %2741 = vmatprep.subr.mxu0 0.0
    %2742 = vmatpush1.msra.mxu0 0.0
    %2743 = vmatprep.subr.mxu0 0.0
    %2744 = vmatpush1.msra.mxu0 0.0
    %2745 = vmatprep.subr.mxu0 0.0
    %2746 = vmatpush1.msra.mxu0 0.0
    %2747 = vmatprep.subr.mxu0 0.0
    %2748 = vmatpush1.msra.mxu0 0.0
    %2749 = vmatprep.subr.mxu0 0.0
    %2750 = vmatpush1.msra.mxu0 0.0
    %2751 = vmatprep.subr.mxu0 0.0
    %2752 = vmatpush1.msra.mxu0 0.0
    %2753 = vmatprep.subr.mxu0 0.0
    %2754 = vmatpush1.msra.mxu0 0.0
    %2755 = vmatprep.subr.mxu0 0.0
    %2756 = vmatpush1.msra.mxu0 0.0
    %2757 = vmatprep.subr.mxu0 0.0
    %2758 = vmatpush1.msra.mxu0 0.0
    %2759 = vmatprep.subr.mxu0 0.0
    %2760 = vmatpush1.msra.mxu0 0.0
    %2761 = vmatprep.subr.mxu0 0.0
    %2762 = vmatpush1.msra.mxu0 0.0
    %2763 = vmatprep.subr.mxu0 0.0
    %2764 = vmatpush1.msra.mxu0 0.0
    %2765 = vmatprep.subr.mxu0 0.0
    %2766 = vmatpush1.msra.mxu0 0.0
    %2767 = vmatprep.mubr.f32.mxu0 0.0
    %2768 = vmatmul.mubr.f32.gmra.mrb[0].mxu0 %v2701
    %v2769 = vpop.f32.mrb[0].mxu0
    %v2770 = vadd.f32 0.0, %v2769
    %v2771 = vpop.f32.mrb[0].mxu0
    %2772 = vdwg.mxu0
    %v2774 = vsel %vm1023, %v2403, 0
    %2776 = vmatprep.subr.mxu0 0.0
    %2777 = vmatpush1.msra.mxu0 %v141
    %2778 = vmatprep.subr.mxu0 0.0
    %2779 = vmatpush1.msra.mxu0 0.0
    %2780 = vmatprep.subr.mxu0 0.0
    %2781 = vmatpush1.msra.mxu0 0.0
    %2782 = vmatprep.subr.mxu0 0.0
    %2783 = vmatpush1.msra.mxu0 0.0
    %2784 = vmatprep.subr.mxu0 0.0
    %2785 = vmatpush1.msra.mxu0 0.0
    %2786 = vmatprep.subr.mxu0 0.0
    %2787 = vmatpush1.msra.mxu0 0.0
    %2788 = vmatprep.subr.mxu0 0.0
    %2789 = vmatpush1.msra.mxu0 0.0
    %2790 = vmatprep.subr.mxu0 0.0
    %2791 = vmatpush1.msra.mxu0 0.0
    %2792 = vmatprep.subr.mxu0 0.0
    %2793 = vmatpush1.msra.mxu0 0.0
    %2794 = vmatprep.subr.mxu0 0.0
    %2795 = vmatpush1.msra.mxu0 0.0
    %2796 = vmatprep.subr.mxu0 0.0
    %2797 = vmatpush1.msra.mxu0 0.0
    %2798 = vmatprep.subr.mxu0 0.0
    %2799 = vmatpush1.msra.mxu0 0.0
    %2800 = vmatprep.subr.mxu0 0.0
    %2801 = vmatpush1.msra.mxu0 0.0
    %2802 = vmatprep.subr.mxu0 0.0
    %2803 = vmatpush1.msra.mxu0 0.0
    %2804 = vmatprep.subr.mxu0 0.0
    %2805 = vmatpush1.msra.mxu0 0.0
    %2806 = vmatprep.subr.mxu0 0.0
    %2807 = vmatpush1.msra.mxu0 0.0
    %2808 = vmatprep.subr.mxu0 0.0
    %2809 = vmatpush1.msra.mxu0 0.0
    %2810 = vmatprep.subr.mxu0 0.0
    %2811 = vmatpush1.msra.mxu0 0.0
    %2812 = vmatprep.subr.mxu0 0.0
    %2813 = vmatpush1.msra.mxu0 0.0
    %2814 = vmatprep.subr.mxu0 0.0
    %2815 = vmatpush1.msra.mxu0 0.0
    %2816 = vmatprep.subr.mxu0 0.0
    %2817 = vmatpush1.msra.mxu0 0.0
    %2818 = vmatprep.subr.mxu0 0.0
    %2819 = vmatpush1.msra.mxu0 0.0
    %2820 = vmatprep.subr.mxu0 0.0
    %2821 = vmatpush1.msra.mxu0 0.0
    %2822 = vmatprep.subr.mxu0 0.0
    %2823 = vmatpush1.msra.mxu0 0.0
    %2824 = vmatprep.subr.mxu0 0.0
    %2825 = vmatpush1.msra.mxu0 0.0
    %2826 = vmatprep.subr.mxu0 0.0
    %2827 = vmatpush1.msra.mxu0 0.0
    %2828 = vmatprep.subr.mxu0 0.0
    %2829 = vmatpush1.msra.mxu0 0.0
    %2830 = vmatprep.subr.mxu0 0.0
    %2831 = vmatpush1.msra.mxu0 0.0
    %2832 = vmatprep.subr.mxu0 0.0
    %2833 = vmatpush1.msra.mxu0 0.0
    %2834 = vmatprep.subr.mxu0 0.0
    %2835 = vmatpush1.msra.mxu0 0.0
    %2836 = vmatprep.subr.mxu0 0.0
    %2837 = vmatpush1.msra.mxu0 0.0
    %2838 = vmatprep.subr.mxu0 0.0
    %2839 = vmatpush1.msra.mxu0 0.0
    %2840 = vmatprep.mubr.f32.mxu0 0.0
    %2841 = vmatmul.mubr.f32.gmra.mrb[0].mxu0 %v2774
    %v2842 = vpop.f32.mrb[0].mxu0
    %v2843 = vadd.f32 0.0, %v2842
    %v2844 = vpop.f32.mrb[0].mxu0
    %2845 = vdwg.mxu0
    %v2847 = vsel %vm1023, %v2405, 0
    %2849 = vmatprep.subr.mxu0 0.0
    %2850 = vmatpush1.msra.mxu0 %v142
    %2851 = vmatprep.subr.mxu0 0.0
    %2852 = vmatpush1.msra.mxu0 0.0
    %2853 = vmatprep.subr.mxu0 0.0
    %2854 = vmatpush1.msra.mxu0 0.0
    %2855 = vmatprep.subr.mxu0 0.0
    %2856 = vmatpush1.msra.mxu0 0.0
    %2857 = vmatprep.subr.mxu0 0.0
    %2858 = vmatpush1.msra.mxu0 0.0
    %2859 = vmatprep.subr.mxu0 0.0
    %2860 = vmatpush1.msra.mxu0 0.0
    %2861 = vmatprep.subr.mxu0 0.0
    %2862 = vmatpush1.msra.mxu0 0.0
    %2863 = vmatprep.subr.mxu0 0.0
    %2864 = vmatpush1.msra.mxu0 0.0
    %2865 = vmatprep.subr.mxu0 0.0
    %2866 = vmatpush1.msra.mxu0 0.0
    %2867 = vmatprep.subr.mxu0 0.0
    %2868 = vmatpush1.msra.mxu0 0.0
    %2869 = vmatprep.subr.mxu0 0.0
    %2870 = vmatpush1.msra.mxu0 0.0
    %2871 = vmatprep.subr.mxu0 0.0
    %2872 = vmatpush1.msra.mxu0 0.0
    %2873 = vmatprep.subr.mxu0 0.0
    %2874 = vmatpush1.msra.mxu0 0.0
    %2875 = vmatprep.subr.mxu0 0.0
    %2876 = vmatpush1.msra.mxu0 0.0
    %2877 = vmatprep.subr.mxu0 0.0
    %2878 = vmatpush1.msra.mxu0 0.0
    %2879 = vmatprep.subr.mxu0 0.0
    %2880 = vmatpush1.msra.mxu0 0.0
    %2881 = vmatprep.subr.mxu0 0.0
    %2882 = vmatpush1.msra.mxu0 0.0
    %2883 = vmatprep.subr.mxu0 0.0
    %2884 = vmatpush1.msra.mxu0 0.0
    %2885 = vmatprep.subr.mxu0 0.0
    %2886 = vmatpush1.msra.mxu0 0.0
    %2887 = vmatprep.subr.mxu0 0.0
    %2888 = vmatpush1.msra.mxu0 0.0
    %2889 = vmatprep.subr.mxu0 0.0
    %2890 = vmatpush1.msra.mxu0 0.0
    %2891 = vmatprep.subr.mxu0 0.0
    %2892 = vmatpush1.msra.mxu0 0.0
    %2893 = vmatprep.subr.mxu0 0.0
    %2894 = vmatpush1.msra.mxu0 0.0
    %2895 = vmatprep.subr.mxu0 0.0
    %2896 = vmatpush1.msra.mxu0 0.0
    %2897 = vmatprep.subr.mxu0 0.0
    %2898 = vmatpush1.msra.mxu0 0.0
    %2899 = vmatprep.subr.mxu0 0.0
    %2900 = vmatpush1.msra.mxu0 0.0
    %2901 = vmatprep.subr.mxu0 0.0
    %2902 = vmatpush1.msra.mxu0 0.0
    %2903 = vmatprep.subr.mxu0 0.0
    %2904 = vmatpush1.msra.mxu0 0.0
    %2905 = vmatprep.subr.mxu0 0.0
    %2906 = vmatpush1.msra.mxu0 0.0
    %2907 = vmatprep.subr.mxu0 0.0
    %2908 = vmatpush1.msra.mxu0 0.0
    %2909 = vmatprep.subr.mxu0 0.0
    %2910 = vmatpush1.msra.mxu0 0.0
    %2911 = vmatprep.subr.mxu0 0.0
    %2912 = vmatpush1.msra.mxu0 0.0
    %2913 = vmatprep.mubr.f32.mxu0 0.0
    %2914 = vmatmul.mubr.f32.gmra.mrb[0].mxu0 %v2847
    %v2915 = vpop.f32.mrb[0].mxu0
    %v2916 = vadd.f32 0.0, %v2915
    %v2917 = vpop.f32.mrb[0].mxu0
    %2918 = vdwg.mxu0
    %v2920 = vsel %vm1023, %v2407, 0
    %2922 = vmatprep.subr.mxu0 0.0
    %2923 = vmatpush1.msra.mxu0 %v143
    %2924 = vmatprep.subr.mxu0 0.0
    %2925 = vmatpush1.msra.mxu0 0.0
    %2926 = vmatprep.subr.mxu0 0.0
    %2927 = vmatpush1.msra.mxu0 0.0
    %2928 = vmatprep.subr.mxu0 0.0
    %2929 = vmatpush1.msra.mxu0 0.0
    %2930 = vmatprep.subr.mxu0 0.0
    %2931 = vmatpush1.msra.mxu0 0.0
    %2932 = vmatprep.subr.mxu0 0.0
    %2933 = vmatpush1.msra.mxu0 0.0
    %2934 = vmatprep.subr.mxu0 0.0
    %2935 = vmatpush1.msra.mxu0 0.0
    %2936 = vmatprep.subr.mxu0 0.0
    %2937 = vmatpush1.msra.mxu0 0.0
    %2938 = vmatprep.subr.mxu0 0.0
    %2939 = vmatpush1.msra.mxu0 0.0
    %2940 = vmatprep.subr.mxu0 0.0
    %2941 = vmatpush1.msra.mxu0 0.0
    %2942 = vmatprep.subr.mxu0 0.0
    %2943 = vmatpush1.msra.mxu0 0.0
    %2944 = vmatprep.subr.mxu0 0.0
    %2945 = vmatpush1.msra.mxu0 0.0
    %2946 = vmatprep.subr.mxu0 0.0
    %2947 = vmatpush1.msra.mxu0 0.0
    %2948 = vmatprep.subr.mxu0 0.0
    %2949 = vmatpush1.msra.mxu0 0.0
    %2950 = vmatprep.subr.mxu0 0.0
    %2951 = vmatpush1.msra.mxu0 0.0
    %2952 = vmatprep.subr.mxu0 0.0
    %2953 = vmatpush1.msra.mxu0 0.0
    %2954 = vmatprep.subr.mxu0 0.0
    %2955 = vmatpush1.msra.mxu0 0.0
    %2956 = vmatprep.subr.mxu0 0.0
    %2957 = vmatpush1.msra.mxu0 0.0
    %2958 = vmatprep.subr.mxu0 0.0
    %2959 = vmatpush1.msra.mxu0 0.0
    %2960 = vmatprep.subr.mxu0 0.0
    %2961 = vmatpush1.msra.mxu0 0.0
    %2962 = vmatprep.subr.mxu0 0.0
    %2963 = vmatpush1.msra.mxu0 0.0
    %2964 = vmatprep.subr.mxu0 0.0
    %2965 = vmatpush1.msra.mxu0 0.0
    %2966 = vmatprep.subr.mxu0 0.0
    %2967 = vmatpush1.msra.mxu0 0.0
    %2968 = vmatprep.subr.mxu0 0.0
    %2969 = vmatpush1.msra.mxu0 0.0
    %2970 = vmatprep.subr.mxu0 0.0
    %2971 = vmatpush1.msra.mxu0 0.0
    %2972 = vmatprep.subr.mxu0 0.0
    %2973 = vmatpush1.msra.mxu0 0.0
    %2974 = vmatprep.subr.mxu0 0.0
    %2975 = vmatpush1.msra.mxu0 0.0
    %2976 = vmatprep.subr.mxu0 0.0
    %2977 = vmatpush1.msra.mxu0 0.0
    %2978 = vmatprep.subr.mxu0 0.0
    %2979 = vmatpush1.msra.mxu0 0.0
    %2980 = vmatprep.subr.mxu0 0.0
    %2981 = vmatpush1.msra.mxu0 0.0
    %2982 = vmatprep.subr.mxu0 0.0
    %2983 = vmatpush1.msra.mxu0 0.0
    %2984 = vmatprep.subr.mxu0 0.0
    %2985 = vmatpush1.msra.mxu0 0.0
    %2986 = vmatprep.mubr.f32.mxu0 0.0
    %2987 = vmatmul.mubr.f32.gmra.mrb[0].mxu0 %v2920
    %v2988 = vpop.f32.mrb[0].mxu0
    %v2989 = vadd.f32 0.0, %v2988
    %v2990 = vpop.f32.mrb[0].mxu0
    %2991 = vdwg.mxu0
    %v3000 = vrot.slane %v2551, 7
    %vm3001 = vcmask 1041409
    %v3002 = vsel %vm3001, %v3000, %v2478
    %v3003 = vrot.slane %v2624, 6
    %vm3004 = vcmask 1042434
    %v3005 = vsel %vm3004, %v3003, %v3002
    %v3006 = vrot.slane %v2697, 5
    %vm3007 = vcmask 1043459
    %v3008 = vsel %vm3007, %v3006, %v3005
    %v3009 = vrot.slane %v2770, 4
    %vm3010 = vcmask 1044484
    %v3011 = vsel %vm3010, %v3009, %v3008
    %v3012 = vrot.slane %v2843, 3
    %vm3013 = vcmask 1045509
    %v3014 = vsel %vm3013, %v3012, %v3011
    %v3015 = vrot.slane %v2916, 2
    %vm3016 = vcmask 1046534
    %v3017 = vsel %vm3016, %v3015, %v3014
    %v3018 = vrot.slane %v2989, 1
    %vm3019 = vcmask 1047559
    %v3020 = vsel %vm3019, %v3018, %v3017
    %v3022 = vrot.slane %v2478, 1
    %v3023 = vsel %vm3001, %v2551, %v3022
    %v3024 = vrot.slane %v2624, 7
    %v3025 = vsel %vm3004, %v3024, %v3023
    %v3026 = vrot.slane %v2697, 6
    %v3027 = vsel %vm3007, %v3026, %v3025
    %v3028 = vrot.slane %v2770, 5
    %v3029 = vsel %vm3010, %v3028, %v3027
    %v3030 = vrot.slane %v2843, 4
    %v3031 = vsel %vm3013, %v3030, %v3029
    %v3032 = vrot.slane %v2916, 3
    %v3033 = vsel %vm3016, %v3032, %v3031
    %v3034 = vrot.slane %v2989, 2
    %v3035 = vsel %vm3019, %v3034, %v3033
    %v3037 = vrot.slane %v2478, 2
    %v3038 = vrot.slane %v2551, 1
    %v3039 = vsel %vm3001, %v3038, %v3037
    %v3040 = vsel %vm3004, %v2624, %v3039
    %v3041 = vrot.slane %v2697, 7
    %v3042 = vsel %vm3007, %v3041, %v3040
    %v3043 = vrot.slane %v2770, 6
    %v3044 = vsel %vm3010, %v3043, %v3042
    %v3045 = vrot.slane %v2843, 5
    %v3046 = vsel %vm3013, %v3045, %v3044
    %v3047 = vrot.slane %v2916, 4
    %v3048 = vsel %vm3016, %v3047, %v3046
    %v3049 = vrot.slane %v2989, 3
    %v3050 = vsel %vm3019, %v3049, %v3048
    %v3052 = vrot.slane %v2478, 3
    %v3053 = vrot.slane %v2551, 2
    %v3054 = vsel %vm3001, %v3053, %v3052
    %v3055 = vrot.slane %v2624, 1
    %v3056 = vsel %vm3004, %v3055, %v3054
    %v3057 = vsel %vm3007, %v2697, %v3056
    %v3058 = vrot.slane %v2770, 7
    %v3059 = vsel %vm3010, %v3058, %v3057
    %v3060 = vrot.slane %v2843, 6
    %v3061 = vsel %vm3013, %v3060, %v3059
    %v3062 = vrot.slane %v2916, 5
    %v3063 = vsel %vm3016, %v3062, %v3061
    %v3064 = vrot.slane %v2989, 4
    %v3065 = vsel %vm3019, %v3064, %v3063
    %v3067 = vrot.slane %v2478, 4
    %v3068 = vrot.slane %v2551, 3
    %v3069 = vsel %vm3001, %v3068, %v3067
    %v3070 = vrot.slane %v2624, 2
    %v3071 = vsel %vm3004, %v3070, %v3069
    %v3072 = vrot.slane %v2697, 1
    %v3073 = vsel %vm3007, %v3072, %v3071
    %v3074 = vsel %vm3010, %v2770, %v3073
    %v3075 = vrot.slane %v2843, 7
    %v3076 = vsel %vm3013, %v3075, %v3074
    %v3077 = vrot.slane %v2916, 6
    %v3078 = vsel %vm3016, %v3077, %v3076
    %v3079 = vrot.slane %v2989, 5
    %v3080 = vsel %vm3019, %v3079, %v3078
    %v3082 = vrot.slane %v2478, 5
    %v3083 = vrot.slane %v2551, 4
    %v3084 = vsel %vm3001, %v3083, %v3082
    %v3085 = vrot.slane %v2624, 3
    %v3086 = vsel %vm3004, %v3085, %v3084
    %v3087 = vrot.slane %v2697, 2
    %v3088 = vsel %vm3007, %v3087, %v3086
    %v3089 = vrot.slane %v2770, 1
    %v3090 = vsel %vm3010, %v3089, %v3088
    %v3091 = vsel %vm3013, %v2843, %v3090
    %v3092 = vrot.slane %v2916, 7
    %v3093 = vsel %vm3016, %v3092, %v3091
    %v3094 = vrot.slane %v2989, 6
    %v3095 = vsel %vm3019, %v3094, %v3093
    %v3097 = vrot.slane %v2478, 6
    %v3098 = vrot.slane %v2551, 5
    %v3099 = vsel %vm3001, %v3098, %v3097
    %v3100 = vrot.slane %v2624, 4
    %v3101 = vsel %vm3004, %v3100, %v3099
    %v3102 = vrot.slane %v2697, 3
    %v3103 = vsel %vm3007, %v3102, %v3101
    %v3104 = vrot.slane %v2770, 2
    %v3105 = vsel %vm3010, %v3104, %v3103
    %v3106 = vrot.slane %v2843, 1
    %v3107 = vsel %vm3013, %v3106, %v3105
    %v3108 = vsel %vm3016, %v2916, %v3107
    %v3109 = vrot.slane %v2989, 7
    %v3110 = vsel %vm3019, %v3109, %v3108
    %v3112 = vrot.slane %v2478, 7
    %v3113 = vrot.slane %v2551, 6
    %v3114 = vsel %vm3001, %v3113, %v3112
    %v3115 = vrot.slane %v2624, 5
    %v3116 = vsel %vm3004, %v3115, %v3114
    %v3117 = vrot.slane %v2697, 4
    %v3118 = vsel %vm3007, %v3117, %v3116
    %v3119 = vrot.slane %v2770, 3
    %v3120 = vsel %vm3010, %v3119, %v3118
    %v3121 = vrot.slane %v2843, 2
    %v3122 = vsel %vm3013, %v3121, %v3120
    %v3123 = vrot.slane %v2916, 1
    %v3124 = vsel %vm3016, %v3123, %v3122
    %v3125 = vsel %vm3019, %v2989, %v3124
    %v3127 = vpack.c.bf16 %v3035, %v3020
    %v3128 = vpack.c.bf16 %v3065, %v3050
    %v3129 = vpack.c.bf16 %v3095, %v3080
    %v3130 = vpack.c.bf16 %v3125, %v3110
    %v3131 = vld [vmem:[#allocation8] sm:$0xff]
    %v3132 = vld [vmem:[#allocation11] sm:$0xf]
    %v3134 = vlaneseq
    %v3135 = vshrl.u32 %v3134, 7
    %v3136 = vsub.s32 0, %v3135
    %v3137 = vrot.slane %v3132, %v3136
    %v3138 = vlaneseq
    %v3139 = vshrl.u32 %v3138, 7
    %v3140 = vsub.s32 1, %v3139
    %v3141 = vrot.slane %v3132, %v3140
    %v3142 = vlaneseq
    %v3143 = vshrl.u32 %v3142, 7
    %v3144 = vsub.s32 2, %v3143
    %v3145 = vrot.slane %v3132, %v3144
    %v3146 = vlaneseq
    %v3147 = vshrl.u32 %v3146, 7
    %v3148 = vsub.s32 3, %v3147
    %v3149 = vrot.slane %v3132, %v3148
    %v3155 = vcombine.high %v3131, %v3131
    %v3157 = vunpack.c.l.s4 1983009808
    %v3158 = vunpack.c.0.s8 %v3157
    %v3159 = vlaneseq
    %v3160 = vshrl.u32 %v3159, 7
    %v3161 = vsub.s32 %v3158, %v3160
    %v3162 = vrot.slane %v3131, %v3161
    %v3164 = vunpack.c.l.s4 1983009808
    %v3165 = vunpack.c.0.s8 %v3164
    %v3166 = vlaneseq
    %v3167 = vshrl.u32 %v3166, 7
    %v3168 = vsub.s32 %v3165, %v3167
    %v3169 = vrot.slane %v3155, %v3168
    %v3170 = vcombine.high %v3162, %v3162
    %v3171 = vcombine.high %v3169, %v3169
    %v3173 = vsel %vm152, %v3127, 0
    %v3176 = vsel %vm152, %v3128, 0
    %v3179 = vsel %vm152, %v3129, 0
    %v3182 = vsel %vm152, %v3130, 0
    %vm3184 = vcmask 1041408
    %v3186 = vsel %vm3184, %v3162, 0
    %v3189 = vsel %vm3184, %v3170, 0
    %v3192 = vsel %vm3184, %v3169, 0
    %v3195 = vsel %vm3184, %v3171, 0
    %3197 = vmatprep.subr.bf16.mxu0 %v3189
    %3198 = vmatpush1.bf16.msra.mxu0 %v3186
    %3199 = vmatprep.subr.bf16.mxu0 0
    %3200 = vmatpush1.bf16.msra.mxu0 0
    %3201 = vmatprep.subr.bf16.mxu0 0
    %3202 = vmatpush1.bf16.msra.mxu0 0
    %3203 = vmatprep.subr.bf16.mxu0 0
    %3204 = vmatpush1.bf16.msra.mxu0 0
    %3205 = vmatprep.subr.bf16.mxu0 0
    %3206 = vmatpush1.bf16.msra.mxu0 0
    %3207 = vmatprep.subr.bf16.mxu0 0
    %3208 = vmatpush1.bf16.msra.mxu0 0
    %3209 = vmatprep.subr.bf16.mxu0 0
    %3210 = vmatpush1.bf16.msra.mxu0 0
    %3211 = vmatprep.subr.bf16.mxu0 0
    %3212 = vmatpush1.bf16.msra.mxu0 0
    %3213 = vmatprep.subr.bf16.mxu0 0
    %3214 = vmatpush1.bf16.msra.mxu0 0
    %3215 = vmatprep.subr.bf16.mxu0 0
    %3216 = vmatpush1.bf16.msra.mxu0 0
    %3217 = vmatprep.subr.bf16.mxu0 0
    %3218 = vmatpush1.bf16.msra.mxu0 0
    %3219 = vmatprep.subr.bf16.mxu0 0
    %3220 = vmatpush1.bf16.msra.mxu0 0
    %3221 = vmatprep.subr.bf16.mxu0 0
    %3222 = vmatpush1.bf16.msra.mxu0 0
    %3223 = vmatprep.subr.bf16.mxu0 0
    %3224 = vmatpush1.bf16.msra.mxu0 0
    %3225 = vmatprep.subr.bf16.mxu0 0
    %3226 = vmatpush1.bf16.msra.mxu0 0
    %3227 = vmatprep.subr.bf16.mxu0 0
    %3228 = vmatpush1.bf16.msra.mxu0 0
    %3229 = vmatprep.mubr.bf16.mxu0 0
    %3230 = vmatmul.mubr.bf16.gmra.mrb[0].mxu0 %v3173
    %v3231 = vpop.f32.mrb[0].mxu0
    %v3232 = vadd.f32 %v3137, %v3231
    %v3233 = vpop.f32.mrb[0].mxu0
    %v3234 = vadd.f32 %v3141, %v3233
    %v3235 = vpop.f32.mrb[0].mxu0
    %v3236 = vadd.f32 %v3137, %v3235
    %v3237 = vpop.f32.mrb[0].mxu0
    %v3238 = vadd.f32 %v3141, %v3237
    %3239 = vmatprep.mubr.bf16.mxu0 0
    %3240 = vmatmul.mubr.bf16.gmra.mrb[0].mxu0 %v3176
    %v3241 = vpop.f32.mrb[0].mxu0
    %v3242 = vadd.f32 %v3137, %v3241
    %v3243 = vpop.f32.mrb[0].mxu0
    %v3244 = vadd.f32 %v3141, %v3243
    %v3245 = vpop.f32.mrb[0].mxu0
    %v3246 = vadd.f32 %v3137, %v3245
    %v3247 = vpop.f32.mrb[0].mxu0
    %v3248 = vadd.f32 %v3141, %v3247
    %3249 = vmatprep.mubr.bf16.mxu0 0
    %3250 = vmatmul.mubr.bf16.gmra.mrb[0].mxu0 %v3179
    %v3251 = vpop.f32.mrb[0].mxu0
    %v3252 = vadd.f32 %v3137, %v3251
    %v3253 = vpop.f32.mrb[0].mxu0
    %v3254 = vadd.f32 %v3141, %v3253
    %v3255 = vpop.f32.mrb[0].mxu0
    %v3256 = vadd.f32 %v3137, %v3255
    %v3257 = vpop.f32.mrb[0].mxu0
    %v3258 = vadd.f32 %v3141, %v3257
    %3259 = vmatprep.mubr.bf16.mxu0 0
    %3260 = vmatmul.mubr.bf16.gmra.mrb[0].mxu0 %v3182
    %v3261 = vpop.f32.mrb[0].mxu0
    %v3262 = vadd.f32 %v3137, %v3261
    %v3263 = vpop.f32.mrb[0].mxu0
    %v3264 = vadd.f32 %v3141, %v3263
    %v3265 = vpop.f32.mrb[0].mxu0
    %v3266 = vadd.f32 %v3137, %v3265
    %v3267 = vpop.f32.mrb[0].mxu0
    %v3268 = vadd.f32 %v3141, %v3267
    %3269 = vdwg.mxu0
    %3270 = vmatprep.subr.bf16.mxu0 %v3195
    %3271 = vmatpush1.bf16.msra.mxu0 %v3192
    %3272 = vmatprep.subr.bf16.mxu0 0
    %3273 = vmatpush1.bf16.msra.mxu0 0
    %3274 = vmatprep.subr.bf16.mxu0 0
    %3275 = vmatpush1.bf16.msra.mxu0 0
    %3276 = vmatprep.subr.bf16.mxu0 0
    %3277 = vmatpush1.bf16.msra.mxu0 0
    %3278 = vmatprep.subr.bf16.mxu0 0
    %3279 = vmatpush1.bf16.msra.mxu0 0
    %3280 = vmatprep.subr.bf16.mxu0 0
    %3281 = vmatpush1.bf16.msra.mxu0 0
    %3282 = vmatprep.subr.bf16.mxu0 0
    %3283 = vmatpush1.bf16.msra.mxu0 0
    %3284 = vmatprep.subr.bf16.mxu0 0
    %3285 = vmatpush1.bf16.msra.mxu0 0
    %3286 = vmatprep.subr.bf16.mxu0 0
    %3287 = vmatpush1.bf16.msra.mxu0 0
    %3288 = vmatprep.subr.bf16.mxu0 0
    %3289 = vmatpush1.bf16.msra.mxu0 0
    %3290 = vmatprep.subr.bf16.mxu0 0
    %3291 = vmatpush1.bf16.msra.mxu0 0
    %3292 = vmatprep.subr.bf16.mxu0 0
    %3293 = vmatpush1.bf16.msra.mxu0 0
    %3294 = vmatprep.subr.bf16.mxu0 0
    %3295 = vmatpush1.bf16.msra.mxu0 0
    %3296 = vmatprep.subr.bf16.mxu0 0
    %3297 = vmatpush1.bf16.msra.mxu0 0
    %3298 = vmatprep.subr.bf16.mxu0 0
    %3299 = vmatpush1.bf16.msra.mxu0 0
    %3300 = vmatprep.subr.bf16.mxu0 0
    %3301 = vmatpush1.bf16.msra.mxu0 0
    %3302 = vmatprep.mubr.bf16.mxu0 0
    %3303 = vmatmul.mubr.bf16.gmra.mrb[0].mxu0 %v3173
    %v3304 = vpop.f32.mrb[0].mxu0
    %v3305 = vadd.f32 %v3145, %v3304
    %v3306 = vpop.f32.mrb[0].mxu0
    %v3307 = vadd.f32 %v3149, %v3306
    %v3308 = vpop.f32.mrb[0].mxu0
    %v3309 = vadd.f32 %v3145, %v3308
    %v3310 = vpop.f32.mrb[0].mxu0
    %v3311 = vadd.f32 %v3149, %v3310
    %3312 = vmatprep.mubr.bf16.mxu0 0
    %3313 = vmatmul.mubr.bf16.gmra.mrb[0].mxu0 %v3176
    %v3314 = vpop.f32.mrb[0].mxu0
    %v3315 = vadd.f32 %v3145, %v3314
    %v3316 = vpop.f32.mrb[0].mxu0
    %v3317 = vadd.f32 %v3149, %v3316
    %v3318 = vpop.f32.mrb[0].mxu0
    %v3319 = vadd.f32 %v3145, %v3318
    %v3320 = vpop.f32.mrb[0].mxu0
    %v3321 = vadd.f32 %v3149, %v3320
    %3322 = vmatprep.mubr.bf16.mxu0 0
    %3323 = vmatmul.mubr.bf16.gmra.mrb[0].mxu0 %v3179
    %v3324 = vpop.f32.mrb[0].mxu0
    %v3325 = vadd.f32 %v3145, %v3324
    %v3326 = vpop.f32.mrb[0].mxu0
    %v3327 = vadd.f32 %v3149, %v3326
    %v3328 = vpop.f32.mrb[0].mxu0
    %v3329 = vadd.f32 %v3145, %v3328
    %v3330 = vpop.f32.mrb[0].mxu0
    %v3331 = vadd.f32 %v3149, %v3330
    %3332 = vmatprep.mubr.bf16.mxu0 0
    %3333 = vmatmul.mubr.bf16.gmra.mrb[0].mxu0 %v3182
    %v3334 = vpop.f32.mrb[0].mxu0
    %v3335 = vadd.f32 %v3145, %v3334
    %v3336 = vpop.f32.mrb[0].mxu0
    %v3337 = vadd.f32 %v3149, %v3336
    %v3338 = vpop.f32.mrb[0].mxu0
    %v3339 = vadd.f32 %v3145, %v3338
    %v3340 = vpop.f32.mrb[0].mxu0
    %v3341 = vadd.f32 %v3149, %v3340
    %3342 = vdwg.mxu0
    %v3343 = vld [vmem:[#allocation10] sm:$0xff]
    %v3344 = vld [vmem:[#allocation10 + $0x8] sm:$0xff]
    %v3345 = vld [vmem:[#allocation10 + $0x10] sm:$0xff]
    %v3346 = vld [vmem:[#allocation10 + $0x18] sm:$0xff]
    %v3347 = vld [vmem:[#allocation10 + $0x20] sm:$0xff]
    %v3348 = vld [vmem:[#allocation10 + $0x28] sm:$0xff]
    %v3349 = vld [vmem:[#allocation10 + $0x30] sm:$0xff]
    %v3350 = vld [vmem:[#allocation10 + $0x38] sm:$0xff]
    %v3351 = vld [vmem:[#allocation10 + $0x40] sm:$0xff]
    %v3352 = vld [vmem:[#allocation10 + $0x48] sm:$0xff]
    %v3353 = vld [vmem:[#allocation10 + $0x50] sm:$0xff]
    %v3354 = vld [vmem:[#allocation10 + $0x58] sm:$0xff]
    %v3355 = vld [vmem:[#allocation10 + $0x60] sm:$0xff]
    %v3356 = vld [vmem:[#allocation10 + $0x68] sm:$0xff]
    %v3357 = vld [vmem:[#allocation10 + $0x70] sm:$0xff]
    %v3358 = vld [vmem:[#allocation10 + $0x78] sm:$0xff]
    %v3359 = vld [vmem:[#allocation10 + $0x80] sm:$0xff]
    %v3360 = vld [vmem:[#allocation10 + $0x88] sm:$0xff]
    %v3361 = vld [vmem:[#allocation10 + $0x90] sm:$0xff]
    %v3362 = vld [vmem:[#allocation10 + $0x98] sm:$0xff]
    %v3363 = vld [vmem:[#allocation10 + $0xa0] sm:$0xff]
    %v3364 = vld [vmem:[#allocation10 + $0xa8] sm:$0xff]
    %v3365 = vld [vmem:[#allocation10 + $0xb0] sm:$0xff]
    %v3366 = vld [vmem:[#allocation10 + $0xb8] sm:$0xff]
    %v3367 = vld [vmem:[#allocation10 + $0xc0] sm:$0xff]
    %v3368 = vld [vmem:[#allocation10 + $0xc8] sm:$0xff]
    %v3369 = vld [vmem:[#allocation10 + $0xd0] sm:$0xff]
    %v3370 = vld [vmem:[#allocation10 + $0xd8] sm:$0xff]
    %v3371 = vld [vmem:[#allocation10 + $0xe0] sm:$0xff]
    %v3372 = vld [vmem:[#allocation10 + $0xe8] sm:$0xff]
    %v3373 = vld [vmem:[#allocation10 + $0xf0] sm:$0xff]
    %v3374 = vld [vmem:[#allocation10 + $0xf8] sm:$0xff]
    %v3407 = vunpack.c.l.b16 %v3343
    %v3408 = vunpack.c.h.b16 %v3343
    %v3409 = vunpack.c.l.b16 %v3344
    %v3410 = vunpack.c.h.b16 %v3344
    %v3411 = vunpack.c.l.b16 %v3345
    %v3412 = vunpack.c.h.b16 %v3345
    %v3413 = vunpack.c.l.b16 %v3346
    %v3414 = vunpack.c.h.b16 %v3346
    %v3415 = vunpack.c.l.b16 %v3347
    %v3416 = vunpack.c.h.b16 %v3347
    %v3417 = vunpack.c.l.b16 %v3348
    %v3418 = vunpack.c.h.b16 %v3348
    %v3419 = vunpack.c.l.b16 %v3349
    %v3420 = vunpack.c.h.b16 %v3349
    %v3421 = vunpack.c.l.b16 %v3350
    %v3422 = vunpack.c.h.b16 %v3350
    %v3423 = vunpack.c.l.b16 %v3351
    %v3424 = vunpack.c.h.b16 %v3351
    %v3425 = vunpack.c.l.b16 %v3352
    %v3426 = vunpack.c.h.b16 %v3352
    %v3427 = vunpack.c.l.b16 %v3353
    %v3428 = vunpack.c.h.b16 %v3353
    %v3429 = vunpack.c.l.b16 %v3354
    %v3430 = vunpack.c.h.b16 %v3354
    %v3431 = vunpack.c.l.b16 %v3355
    %v3432 = vunpack.c.h.b16 %v3355
    %v3433 = vunpack.c.l.b16 %v3356
    %v3434 = vunpack.c.h.b16 %v3356
    %v3435 = vunpack.c.l.b16 %v3357
    %v3436 = vunpack.c.h.b16 %v3357
    %v3437 = vunpack.c.l.b16 %v3358
    %v3438 = vunpack.c.h.b16 %v3358
    %v3439 = vunpack.c.l.b16 %v3359
    %v3440 = vunpack.c.h.b16 %v3359
    %v3441 = vunpack.c.l.b16 %v3360
    %v3442 = vunpack.c.h.b16 %v3360
    %v3443 = vunpack.c.l.b16 %v3361
    %v3444 = vunpack.c.h.b16 %v3361
    %v3445 = vunpack.c.l.b16 %v3362
    %v3446 = vunpack.c.h.b16 %v3362
    %v3447 = vunpack.c.l.b16 %v3363
    %v3448 = vunpack.c.h.b16 %v3363
    %v3449 = vunpack.c.l.b16 %v3364
    %v3450 = vunpack.c.h.b16 %v3364
    %v3451 = vunpack.c.l.b16 %v3365
    %v3452 = vunpack.c.h.b16 %v3365
    %v3453 = vunpack.c.l.b16 %v3366
    %v3454 = vunpack.c.h.b16 %v3366
    %v3455 = vunpack.c.l.b16 %v3367
    %v3456 = vunpack.c.h.b16 %v3367
    %v3457 = vunpack.c.l.b16 %v3368
    %v3458 = vunpack.c.h.b16 %v3368
    %v3459 = vunpack.c.l.b16 %v3369
    %v3460 = vunpack.c.h.b16 %v3369
    %v3461 = vunpack.c.l.b16 %v3370
    %v3462 = vunpack.c.h.b16 %v3370
    %v3463 = vunpack.c.l.b16 %v3371
    %v3464 = vunpack.c.h.b16 %v3371
    %v3465 = vunpack.c.l.b16 %v3372
    %v3466 = vunpack.c.h.b16 %v3372
    %v3467 = vunpack.c.l.b16 %v3373
    %v3468 = vunpack.c.h.b16 %v3373
    %v3469 = vunpack.c.l.b16 %v3374
    %v3470 = vunpack.c.h.b16 %v3374
    %v3471 = vpack.c.b16 %v3411, %v3407
    %v3472 = vpack.c.b16 %v3412, %v3408
    %v3473 = vpack.c.b16 %v3413, %v3409
    %v3474 = vpack.c.b16 %v3414, %v3410
    %v3475 = vpack.c.b16 %v3419, %v3415
    %v3476 = vpack.c.b16 %v3420, %v3416
    %v3477 = vpack.c.b16 %v3421, %v3417
    %v3478 = vpack.c.b16 %v3422, %v3418
    %v3479 = vpack.c.b16 %v3427, %v3423
    %v3480 = vpack.c.b16 %v3428, %v3424
    %v3481 = vpack.c.b16 %v3429, %v3425
    %v3482 = vpack.c.b16 %v3430, %v3426
    %v3483 = vpack.c.b16 %v3435, %v3431
    %v3484 = vpack.c.b16 %v3436, %v3432
    %v3485 = vpack.c.b16 %v3437, %v3433
    %v3486 = vpack.c.b16 %v3438, %v3434
    %v3487 = vpack.c.b16 %v3443, %v3439
    %v3488 = vpack.c.b16 %v3444, %v3440
    %v3489 = vpack.c.b16 %v3445, %v3441
    %v3490 = vpack.c.b16 %v3446, %v3442
    %v3491 = vpack.c.b16 %v3451, %v3447
    %v3492 = vpack.c.b16 %v3452, %v3448
    %v3493 = vpack.c.b16 %v3453, %v3449
    %v3494 = vpack.c.b16 %v3454, %v3450
    %v3495 = vpack.c.b16 %v3459, %v3455
    %v3496 = vpack.c.b16 %v3460, %v3456
    %v3497 = vpack.c.b16 %v3461, %v3457
    %v3498 = vpack.c.b16 %v3462, %v3458
    %v3499 = vpack.c.b16 %v3467, %v3463
    %v3500 = vpack.c.b16 %v3468, %v3464
    %v3501 = vpack.c.b16 %v3469, %v3465
    %v3502 = vpack.c.b16 %v3470, %v3466
    %3535 = vmatprep.subr.bf16.mxu0 %v3472
    %3536 = vmatpush1.bf16.msra.mxu0 %v3471
    %3537 = vmatprep.subr.bf16.mxu0 %v3476
    %3538 = vmatpush1.bf16.msra.mxu0 %v3475
    %3539 = vmatprep.subr.bf16.mxu0 %v3480
    %3540 = vmatpush1.bf16.msra.mxu0 %v3479
    %3541 = vmatprep.subr.bf16.mxu0 %v3484
    %3542 = vmatpush1.bf16.msra.mxu0 %v3483
    %3543 = vmatprep.subr.bf16.mxu0 %v3488
    %3544 = vmatpush1.bf16.msra.mxu0 %v3487
    %3545 = vmatprep.subr.bf16.mxu0 %v3492
    %3546 = vmatpush1.bf16.msra.mxu0 %v3491
    %3547 = vmatprep.subr.bf16.mxu0 %v3496
    %3548 = vmatpush1.bf16.msra.mxu0 %v3495
    %3549 = vmatprep.subr.bf16.mxu0 %v3500
    %3550 = vmatpush1.bf16.msra.mxu0 %v3499
    %3551 = vmatprep.subr.bf16.mxu0 0
    %3552 = vmatpush1.bf16.msra.mxu0 0
    %3553 = vmatprep.subr.bf16.mxu0 0
    %3554 = vmatpush1.bf16.msra.mxu0 0
    %3555 = vmatprep.subr.bf16.mxu0 0
    %3556 = vmatpush1.bf16.msra.mxu0 0
    %3557 = vmatprep.subr.bf16.mxu0 0
    %3558 = vmatpush1.bf16.msra.mxu0 0
    %3559 = vmatprep.subr.bf16.mxu0 0
    %3560 = vmatpush1.bf16.msra.mxu0 0
    %3561 = vmatprep.subr.bf16.mxu0 0
    %3562 = vmatpush1.bf16.msra.mxu0 0
    %3563 = vmatprep.subr.bf16.mxu0 0
    %3564 = vmatpush1.bf16.msra.mxu0 0
    %3565 = vmatprep.subr.bf16.mxu0 0
    %3566 = vmatpush1.bf16.msra.mxu0 0
    %3567 = vmatprep.mubr.bf16.mxu0 0
    %3568 = vmatmul.mubr.bf16.gmra.mrb[0].mxu0 0
    %v3569 = vpop.f32.mrb[0].mxu0
    %v3570 = vadd.f32 0.0, %v3569
    %v3571 = vpop.f32.mrb[0].mxu0
    %v3572 = vadd.f32 0.0, %v3571
    %v3573 = vpop.f32.mrb[0].mxu0
    %v3574 = vpop.f32.mrb[0].mxu0
    %3575 = vdwg.mxu0
    %3576 = vmatprep.subr.bf16.mxu0 %v3474
    %3577 = vmatpush1.bf16.msra.mxu0 %v3473
    %3578 = vmatprep.subr.bf16.mxu0 %v3478
    %3579 = vmatpush1.bf16.msra.mxu0 %v3477
    %3580 = vmatprep.subr.bf16.mxu0 %v3482
    %3581 = vmatpush1.bf16.msra.mxu0 %v3481
    %3582 = vmatprep.subr.bf16.mxu0 %v3486
    %3583 = vmatpush1.bf16.msra.mxu0 %v3485
    %3584 = vmatprep.subr.bf16.mxu0 %v3490
    %3585 = vmatpush1.bf16.msra.mxu0 %v3489
    %3586 = vmatprep.subr.bf16.mxu0 %v3494
    %3587 = vmatpush1.bf16.msra.mxu0 %v3493
    %3588 = vmatprep.subr.bf16.mxu0 %v3498
    %3589 = vmatpush1.bf16.msra.mxu0 %v3497
    %3590 = vmatprep.subr.bf16.mxu0 %v3502
    %3591 = vmatpush1.bf16.msra.mxu0 %v3501
    %3592 = vmatprep.subr.bf16.mxu0 0
    %3593 = vmatpush1.bf16.msra.mxu0 0
    %3594 = vmatprep.subr.bf16.mxu0 0
    %3595 = vmatpush1.bf16.msra.mxu0 0
    %3596 = vmatprep.subr.bf16.mxu0 0
    %3597 = vmatpush1.bf16.msra.mxu0 0
    %3598 = vmatprep.subr.bf16.mxu0 0
    %3599 = vmatpush1.bf16.msra.mxu0 0
    %3600 = vmatprep.subr.bf16.mxu0 0
    %3601 = vmatpush1.bf16.msra.mxu0 0
    %3602 = vmatprep.subr.bf16.mxu0 0
    %3603 = vmatpush1.bf16.msra.mxu0 0
    %3604 = vmatprep.subr.bf16.mxu0 0
    %3605 = vmatpush1.bf16.msra.mxu0 0
    %3606 = vmatprep.subr.bf16.mxu0 0
    %3607 = vmatpush1.bf16.msra.mxu0 0
    %3608 = vmatprep.mubr.bf16.mxu0 0
    %3609 = vmatmul.mubr.bf16.gmra.mrb[0].mxu0 0
    %v3610 = vpop.f32.mrb[0].mxu0
    %v3611 = vadd.f32 0.0, %v3610
    %v3612 = vpop.f32.mrb[0].mxu0
    %v3613 = vadd.f32 0.0, %v3612
    %v3614 = vpop.f32.mrb[0].mxu0
    %v3615 = vpop.f32.mrb[0].mxu0
    %3616 = vdwg.mxu0
    %v3617 = vadd.f32 %v3232, %v3570
    %v3618 = vadd.f32 %v3234, %v3572
    %v3619 = vadd.f32 %v3305, %v3611
    %v3620 = vadd.f32 %v3307, %v3613
    %v3621 = vxor.u32 %v3617, 2147483648
    %v3622 = vxor.u32 %v3618, 2147483648
    %v3623 = vmul.f32 %v3621, 1.442695
    %v3624 = vpow.pop %v3623
    %v3625 = vmul.f32 %v3622, 1.442695
    %v3626 = vpow.pop %v3625
    %v3627 = vadd.f32 %v3624, 1.0
    %v3628 = vadd.f32 %v3626, 1.0
    %v3629 = vrcp.pop %v3627
    %v3630 = vmul.f32 1.0, %v3629
    %v3631 = vrcp.pop %v3628
    %v3632 = vmul.f32 1.0, %v3631
    %v3633 = vtanh.pop %v3619
    %v3634 = vxor.u32 %v3620, 2147483648
    %v3635 = vmul.f32 %v3634, 1.442695
    %v3636 = vpow.pop %v3635
    %v3637 = vadd.f32 %v3636, 1.0
    %v3638 = vrcp.pop %v3637
    %v3639 = vmul.f32 1.0, %v3638
    %v3640 = vmul.f32 %v3632, 0.0
    %v3641 = vmul.f32 %v3630, %v3633
    %v3642 = vadd.f32 %v3640, %v3641
    %v3643 = vtanh.pop %v3642
    %v3644 = vmul.f32 %v3639, %v3643
    %3645 = vst [vmem:[#allocation2] sm:$0xff] %v3644
    %v3646 = vpack.c.bf16 %v3644, %v3644
    %3647 = vmatprep.subr.bf16.mxu0 %v3472
    %3648 = vmatpush1.bf16.msra.mxu0 %v3471
    %3649 = vmatprep.subr.bf16.mxu0 %v3476
    %3650 = vmatpush1.bf16.msra.mxu0 %v3475
    %3651 = vmatprep.subr.bf16.mxu0 %v3480
    %3652 = vmatpush1.bf16.msra.mxu0 %v3479
    %3653 = vmatprep.subr.bf16.mxu0 %v3484
    %3654 = vmatpush1.bf16.msra.mxu0 %v3483
    %3655 = vmatprep.subr.bf16.mxu0 %v3488
    %3656 = vmatpush1.bf16.msra.mxu0 %v3487
    %3657 = vmatprep.subr.bf16.mxu0 %v3492
    %3658 = vmatpush1.bf16.msra.mxu0 %v3491
    %3659 = vmatprep.subr.bf16.mxu0 %v3496
    %3660 = vmatpush1.bf16.msra.mxu0 %v3495
    %3661 = vmatprep.subr.bf16.mxu0 %v3500
    %3662 = vmatpush1.bf16.msra.mxu0 %v3499
    %3663 = vmatprep.subr.bf16.mxu0 0
    %3664 = vmatpush1.bf16.msra.mxu0 0
    %3665 = vmatprep.subr.bf16.mxu0 0
    %3666 = vmatpush1.bf16.msra.mxu0 0
    %3667 = vmatprep.subr.bf16.mxu0 0
    %3668 = vmatpush1.bf16.msra.mxu0 0
    %3669 = vmatprep.subr.bf16.mxu0 0
    %3670 = vmatpush1.bf16.msra.mxu0 0
    %3671 = vmatprep.subr.bf16.mxu0 0
    %3672 = vmatpush1.bf16.msra.mxu0 0
    %3673 = vmatprep.subr.bf16.mxu0 0
    %3674 = vmatpush1.bf16.msra.mxu0 0
    %3675 = vmatprep.subr.bf16.mxu0 0
    %3676 = vmatpush1.bf16.msra.mxu0 0
    %3677 = vmatprep.subr.bf16.mxu0 0
    %3678 = vmatpush1.bf16.msra.mxu0 0
    %3679 = vmatprep.mubr.bf16.mxu0 0
    %3680 = vmatmul.mubr.bf16.gmra.mrb[0].mxu0 %v3646
    %v3681 = vpop.f32.mrb[0].mxu0
    %v3682 = vadd.f32 0.0, %v3681
    %v3683 = vpop.f32.mrb[0].mxu0
    %v3684 = vadd.f32 0.0, %v3683
    %v3685 = vpop.f32.mrb[0].mxu0
    %v3686 = vpop.f32.mrb[0].mxu0
    %3687 = vdwg.mxu0
    %3688 = vmatprep.subr.bf16.mxu0 %v3474
    %3689 = vmatpush1.bf16.msra.mxu0 %v3473
    %3690 = vmatprep.subr.bf16.mxu0 %v3478
    %3691 = vmatpush1.bf16.msra.mxu0 %v3477
    %3692 = vmatprep.subr.bf16.mxu0 %v3482
    %3693 = vmatpush1.bf16.msra.mxu0 %v3481
    %3694 = vmatprep.subr.bf16.mxu0 %v3486
    %3695 = vmatpush1.bf16.msra.mxu0 %v3485
    %3696 = vmatprep.subr.bf16.mxu0 %v3490
    %3697 = vmatpush1.bf16.msra.mxu0 %v3489
    %3698 = vmatprep.subr.bf16.mxu0 %v3494
    %3699 = vmatpush1.bf16.msra.mxu0 %v3493
    %3700 = vmatprep.subr.bf16.mxu0 %v3498
    %3701 = vmatpush1.bf16.msra.mxu0 %v3497
    %3702 = vmatprep.subr.bf16.mxu0 %v3502
    %3703 = vmatpush1.bf16.msra.mxu0 %v3501
    %3704 = vmatprep.subr.bf16.mxu0 0
    %3705 = vmatpush1.bf16.msra.mxu0 0
    %3706 = vmatprep.subr.bf16.mxu0 0
    %3707 = vmatpush1.bf16.msra.mxu0 0
    %3708 = vmatprep.subr.bf16.mxu0 0
    %3709 = vmatpush1.bf16.msra.mxu0 0
    %3710 = vmatprep.subr.bf16.mxu0 0
    %3711 = vmatpush1.bf16.msra.mxu0 0
    %3712 = vmatprep.subr.bf16.mxu0 0
    %3713 = vmatpush1.bf16.msra.mxu0 0
    %3714 = vmatprep.subr.bf16.mxu0 0
    %3715 = vmatpush1.bf16.msra.mxu0 0
    %3716 = vmatprep.subr.bf16.mxu0 0
    %3717 = vmatpush1.bf16.msra.mxu0 0
    %3718 = vmatprep.subr.bf16.mxu0 0
    %3719 = vmatpush1.bf16.msra.mxu0 0
    %3720 = vmatprep.mubr.bf16.mxu0 0
    %3721 = vmatmul.mubr.bf16.gmra.mrb[0].mxu0 %v3646
    %v3722 = vpop.f32.mrb[0].mxu0
    %v3723 = vadd.f32 0.0, %v3722
    %v3724 = vpop.f32.mrb[0].mxu0
    %v3725 = vadd.f32 0.0, %v3724
    %v3726 = vpop.f32.mrb[0].mxu0
    %v3727 = vpop.f32.mrb[0].mxu0
    %3728 = vdwg.mxu0
    %v3729 = vadd.f32 %v3236, %v3682
    %v3730 = vadd.f32 %v3238, %v3684
    %v3731 = vadd.f32 %v3309, %v3723
    %v3732 = vadd.f32 %v3311, %v3725
    %v3733 = vxor.u32 %v3729, 2147483648
    %v3734 = vxor.u32 %v3730, 2147483648
    %v3735 = vmul.f32 %v3733, 1.442695
    %v3736 = vpow.pop %v3735
    %v3737 = vmul.f32 %v3734, 1.442695
    %v3738 = vpow.pop %v3737
    %v3739 = vadd.f32 %v3736, 1.0
    %v3740 = vadd.f32 %v3738, 1.0
    %v3741 = vrcp.pop %v3739
    %v3742 = vmul.f32 1.0, %v3741
    %v3743 = vrcp.pop %v3740
    %v3744 = vmul.f32 1.0, %v3743
    %v3745 = vtanh.pop %v3731
    %v3746 = vxor.u32 %v3732, 2147483648
    %v3747 = vmul.f32 %v3746, 1.442695
    %v3748 = vpow.pop %v3747
    %v3749 = vadd.f32 %v3748, 1.0
    %v3750 = vrcp.pop %v3749
    %v3751 = vmul.f32 1.0, %v3750
    %v3752 = vmul.f32 %v3744, %v3642
    %v3753 = vmul.f32 %v3742, %v3745
    %v3754 = vadd.f32 %v3752, %v3753
    %v3755 = vtanh.pop %v3754
    %v3756 = vmul.f32 %v3751, %v3755
    %s3757 = scalar_lea.vmem [#allocation2], 8
    %3758 = vst [vmem:[%s3757] sm:$0xff] %v3756
    %v3759 = vpack.c.bf16 %v3756, %v3756
    %3760 = vmatprep.subr.bf16.mxu0 %v3472
    %3761 = vmatpush1.bf16.msra.mxu0 %v3471
    %3762 = vmatprep.subr.bf16.mxu0 %v3476
    %3763 = vmatpush1.bf16.msra.mxu0 %v3475
    %3764 = vmatprep.subr.bf16.mxu0 %v3480
    %3765 = vmatpush1.bf16.msra.mxu0 %v3479
    %3766 = vmatprep.subr.bf16.mxu0 %v3484
    %3767 = vmatpush1.bf16.msra.mxu0 %v3483
    %3768 = vmatprep.subr.bf16.mxu0 %v3488
    %3769 = vmatpush1.bf16.msra.mxu0 %v3487
    %3770 = vmatprep.subr.bf16.mxu0 %v3492
    %3771 = vmatpush1.bf16.msra.mxu0 %v3491
    %3772 = vmatprep.subr.bf16.mxu0 %v3496
    %3773 = vmatpush1.bf16.msra.mxu0 %v3495
    %3774 = vmatprep.subr.bf16.mxu0 %v3500
    %3775 = vmatpush1.bf16.msra.mxu0 %v3499
    %3776 = vmatprep.subr.bf16.mxu0 0
    %3777 = vmatpush1.bf16.msra.mxu0 0
    %3778 = vmatprep.subr.bf16.mxu0 0
    %3779 = vmatpush1.bf16.msra.mxu0 0
    %3780 = vmatprep.subr.bf16.mxu0 0
    %3781 = vmatpush1.bf16.msra.mxu0 0
    %3782 = vmatprep.subr.bf16.mxu0 0
    %3783 = vmatpush1.bf16.msra.mxu0 0
    %3784 = vmatprep.subr.bf16.mxu0 0
    %3785 = vmatpush1.bf16.msra.mxu0 0
    %3786 = vmatprep.subr.bf16.mxu0 0
    %3787 = vmatpush1.bf16.msra.mxu0 0
    %3788 = vmatprep.subr.bf16.mxu0 0
    %3789 = vmatpush1.bf16.msra.mxu0 0
    %3790 = vmatprep.subr.bf16.mxu0 0
    %3791 = vmatpush1.bf16.msra.mxu0 0
    %3792 = vmatprep.mubr.bf16.mxu0 0
    %3793 = vmatmul.mubr.bf16.gmra.mrb[0].mxu0 %v3759
    %v3794 = vpop.f32.mrb[0].mxu0
    %v3795 = vadd.f32 0.0, %v3794
    %v3796 = vpop.f32.mrb[0].mxu0
    %v3797 = vadd.f32 0.0, %v3796
    %v3798 = vpop.f32.mrb[0].mxu0
    %v3799 = vpop.f32.mrb[0].mxu0
    %3800 = vdwg.mxu0
    %3801 = vmatprep.subr.bf16.mxu0 %v3474
    %3802 = vmatpush1.bf16.msra.mxu0 %v3473
    %3803 = vmatprep.subr.bf16.mxu0 %v3478
    %3804 = vmatpush1.bf16.msra.mxu0 %v3477
    %3805 = vmatprep.subr.bf16.mxu0 %v3482
    %3806 = vmatpush1.bf16.msra.mxu0 %v3481
    %3807 = vmatprep.subr.bf16.mxu0 %v3486
    %3808 = vmatpush1.bf16.msra.mxu0 %v3485
    %3809 = vmatprep.subr.bf16.mxu0 %v3490
    %3810 = vmatpush1.bf16.msra.mxu0 %v3489
    %3811 = vmatprep.subr.bf16.mxu0 %v3494
    %3812 = vmatpush1.bf16.msra.mxu0 %v3493
    %3813 = vmatprep.subr.bf16.mxu0 %v3498
    %3814 = vmatpush1.bf16.msra.mxu0 %v3497
    %3815 = vmatprep.subr.bf16.mxu0 %v3502
    %3816 = vmatpush1.bf16.msra.mxu0 %v3501
    %3817 = vmatprep.subr.bf16.mxu0 0
    %3818 = vmatpush1.bf16.msra.mxu0 0
    %3819 = vmatprep.subr.bf16.mxu0 0
    %3820 = vmatpush1.bf16.msra.mxu0 0
    %3821 = vmatprep.subr.bf16.mxu0 0
    %3822 = vmatpush1.bf16.msra.mxu0 0
    %3823 = vmatprep.subr.bf16.mxu0 0
    %3824 = vmatpush1.bf16.msra.mxu0 0
    %3825 = vmatprep.subr.bf16.mxu0 0
    %3826 = vmatpush1.bf16.msra.mxu0 0
    %3827 = vmatprep.subr.bf16.mxu0 0
    %3828 = vmatpush1.bf16.msra.mxu0 0
    %3829 = vmatprep.subr.bf16.mxu0 0
    %3830 = vmatpush1.bf16.msra.mxu0 0
    %3831 = vmatprep.subr.bf16.mxu0 0
    %3832 = vmatpush1.bf16.msra.mxu0 0
    %3833 = vmatprep.mubr.bf16.mxu0 0
    %3834 = vmatmul.mubr.bf16.gmra.mrb[0].mxu0 %v3759
    %v3835 = vpop.f32.mrb[0].mxu0
    %v3836 = vadd.f32 0.0, %v3835
    %v3837 = vpop.f32.mrb[0].mxu0
    %v3838 = vadd.f32 0.0, %v3837
    %v3839 = vpop.f32.mrb[0].mxu0
    %v3840 = vpop.f32.mrb[0].mxu0
    %3841 = vdwg.mxu0
    %v3842 = vadd.f32 %v3242, %v3795
    %v3843 = vadd.f32 %v3244, %v3797
    %v3844 = vadd.f32 %v3315, %v3836
    %v3845 = vadd.f32 %v3317, %v3838
    %v3846 = vxor.u32 %v3842, 2147483648
    %v3847 = vxor.u32 %v3843, 2147483648
    %v3848 = vmul.f32 %v3846, 1.442695
    %v3849 = vpow.pop %v3848
    %v3850 = vmul.f32 %v3847, 1.442695
    %v3851 = vpow.pop %v3850
    %v3852 = vadd.f32 %v3849, 1.0
    %v3853 = vadd.f32 %v3851, 1.0
    %v3854 = vrcp.pop %v3852
    %v3855 = vmul.f32 1.0, %v3854
    %v3856 = vrcp.pop %v3853
    %v3857 = vmul.f32 1.0, %v3856
    %v3858 = vtanh.pop %v3844
    %v3859 = vxor.u32 %v3845, 2147483648
    %v3860 = vmul.f32 %v3859, 1.442695
    %v3861 = vpow.pop %v3860
    %v3862 = vadd.f32 %v3861, 1.0
    %v3863 = vrcp.pop %v3862
    %v3864 = vmul.f32 1.0, %v3863
    %v3865 = vmul.f32 %v3857, %v3754
    %v3866 = vmul.f32 %v3855, %v3858
    %v3867 = vadd.f32 %v3865, %v3866
    %v3868 = vtanh.pop %v3867
    %v3869 = vmul.f32 %v3864, %v3868
    %s3870 = scalar_lea.vmem [#allocation2], 16
    %3871 = vst [vmem:[%s3870] sm:$0xff] %v3869
    %v3872 = vpack.c.bf16 %v3869, %v3869
    %3873 = vmatprep.subr.bf16.mxu0 %v3472
    %3874 = vmatpush1.bf16.msra.mxu0 %v3471
    %3875 = vmatprep.subr.bf16.mxu0 %v3476
    %3876 = vmatpush1.bf16.msra.mxu0 %v3475
    %3877 = vmatprep.subr.bf16.mxu0 %v3480
    %3878 = vmatpush1.bf16.msra.mxu0 %v3479
    %3879 = vmatprep.subr.bf16.mxu0 %v3484
    %3880 = vmatpush1.bf16.msra.mxu0 %v3483
    %3881 = vmatprep.subr.bf16.mxu0 %v3488
    %3882 = vmatpush1.bf16.msra.mxu0 %v3487
    %3883 = vmatprep.subr.bf16.mxu0 %v3492
    %3884 = vmatpush1.bf16.msra.mxu0 %v3491
    %3885 = vmatprep.subr.bf16.mxu0 %v3496
    %3886 = vmatpush1.bf16.msra.mxu0 %v3495
    %3887 = vmatprep.subr.bf16.mxu0 %v3500
    %3888 = vmatpush1.bf16.msra.mxu0 %v3499
    %3889 = vmatprep.subr.bf16.mxu0 0
    %3890 = vmatpush1.bf16.msra.mxu0 0
    %3891 = vmatprep.subr.bf16.mxu0 0
    %3892 = vmatpush1.bf16.msra.mxu0 0
    %3893 = vmatprep.subr.bf16.mxu0 0
    %3894 = vmatpush1.bf16.msra.mxu0 0
    %3895 = vmatprep.subr.bf16.mxu0 0
    %3896 = vmatpush1.bf16.msra.mxu0 0
    %3897 = vmatprep.subr.bf16.mxu0 0
    %3898 = vmatpush1.bf16.msra.mxu0 0
    %3899 = vmatprep.subr.bf16.mxu0 0
    %3900 = vmatpush1.bf16.msra.mxu0 0
    %3901 = vmatprep.subr.bf16.mxu0 0
    %3902 = vmatpush1.bf16.msra.mxu0 0
    %3903 = vmatprep.subr.bf16.mxu0 0
    %3904 = vmatpush1.bf16.msra.mxu0 0
    %3905 = vmatprep.mubr.bf16.mxu0 0
    %3906 = vmatmul.mubr.bf16.gmra.mrb[0].mxu0 %v3872
    %v3907 = vpop.f32.mrb[0].mxu0
    %v3908 = vadd.f32 0.0, %v3907
    %v3909 = vpop.f32.mrb[0].mxu0
    %v3910 = vadd.f32 0.0, %v3909
    %v3911 = vpop.f32.mrb[0].mxu0
    %v3912 = vpop.f32.mrb[0].mxu0
    %3913 = vdwg.mxu0
    %3914 = vmatprep.subr.bf16.mxu0 %v3474
    %3915 = vmatpush1.bf16.msra.mxu0 %v3473
    %3916 = vmatprep.subr.bf16.mxu0 %v3478
    %3917 = vmatpush1.bf16.msra.mxu0 %v3477
    %3918 = vmatprep.subr.bf16.mxu0 %v3482
    %3919 = vmatpush1.bf16.msra.mxu0 %v3481
    %3920 = vmatprep.subr.bf16.mxu0 %v3486
    %3921 = vmatpush1.bf16.msra.mxu0 %v3485
    %3922 = vmatprep.subr.bf16.mxu0 %v3490
    %3923 = vmatpush1.bf16.msra.mxu0 %v3489
    %3924 = vmatprep.subr.bf16.mxu0 %v3494
    %3925 = vmatpush1.bf16.msra.mxu0 %v3493
    %3926 = vmatprep.subr.bf16.mxu0 %v3498
    %3927 = vmatpush1.bf16.msra.mxu0 %v3497
    %3928 = vmatprep.subr.bf16.mxu0 %v3502
    %3929 = vmatpush1.bf16.msra.mxu0 %v3501
    %3930 = vmatprep.subr.bf16.mxu0 0
    %3931 = vmatpush1.bf16.msra.mxu0 0
    %3932 = vmatprep.subr.bf16.mxu0 0
    %3933 = vmatpush1.bf16.msra.mxu0 0
    %3934 = vmatprep.subr.bf16.mxu0 0
    %3935 = vmatpush1.bf16.msra.mxu0 0
    %3936 = vmatprep.subr.bf16.mxu0 0
    %3937 = vmatpush1.bf16.msra.mxu0 0
    %3938 = vmatprep.subr.bf16.mxu0 0
    %3939 = vmatpush1.bf16.msra.mxu0 0
    %3940 = vmatprep.subr.bf16.mxu0 0
    %3941 = vmatpush1.bf16.msra.mxu0 0
    %3942 = vmatprep.subr.bf16.mxu0 0
    %3943 = vmatpush1.bf16.msra.mxu0 0
    %3944 = vmatprep.subr.bf16.mxu0 0
    %3945 = vmatpush1.bf16.msra.mxu0 0
    %3946 = vmatprep.mubr.bf16.mxu0 0
    %3947 = vmatmul.mubr.bf16.gmra.mrb[0].mxu0 %v3872
    %v3948 = vpop.f32.mrb[0].mxu0
    %v3949 = vadd.f32 0.0, %v3948
    %v3950 = vpop.f32.mrb[0].mxu0
    %v3951 = vadd.f32 0.0, %v3950
    %v3952 = vpop.f32.mrb[0].mxu0
    %v3953 = vpop.f32.mrb[0].mxu0
    %3954 = vdwg.mxu0
    %v3955 = vadd.f32 %v3246, %v3908
    %v3956 = vadd.f32 %v3248, %v3910
    %v3957 = vadd.f32 %v3319, %v3949
    %v3958 = vadd.f32 %v3321, %v3951
    %v3959 = vxor.u32 %v3955, 2147483648
    %v3960 = vxor.u32 %v3956, 2147483648
    %v3961 = vmul.f32 %v3959, 1.442695
    %v3962 = vpow.pop %v3961
    %v3963 = vmul.f32 %v3960, 1.442695
    %v3964 = vpow.pop %v3963
    %v3965 = vadd.f32 %v3962, 1.0
    %v3966 = vadd.f32 %v3964, 1.0
    %v3967 = vrcp.pop %v3965
    %v3968 = vmul.f32 1.0, %v3967
    %v3969 = vrcp.pop %v3966
    %v3970 = vmul.f32 1.0, %v3969
    %v3971 = vtanh.pop %v3957
    %v3972 = vxor.u32 %v3958, 2147483648
    %v3973 = vmul.f32 %v3972, 1.442695
    %v3974 = vpow.pop %v3973
    %v3975 = vadd.f32 %v3974, 1.0
    %v3976 = vrcp.pop %v3975
    %v3977 = vmul.f32 1.0, %v3976
    %v3978 = vmul.f32 %v3970, %v3867
    %v3979 = vmul.f32 %v3968, %v3971
    %v3980 = vadd.f32 %v3978, %v3979
    %v3981 = vtanh.pop %v3980
    %v3982 = vmul.f32 %v3977, %v3981
    %s3983 = scalar_lea.vmem [#allocation2], 24
    %3984 = vst [vmem:[%s3983] sm:$0xff] %v3982
    %v3985 = vpack.c.bf16 %v3982, %v3982
    %3986 = vmatprep.subr.bf16.mxu0 %v3472
    %3987 = vmatpush1.bf16.msra.mxu0 %v3471
    %3988 = vmatprep.subr.bf16.mxu0 %v3476
    %3989 = vmatpush1.bf16.msra.mxu0 %v3475
    %3990 = vmatprep.subr.bf16.mxu0 %v3480
    %3991 = vmatpush1.bf16.msra.mxu0 %v3479
    %3992 = vmatprep.subr.bf16.mxu0 %v3484
    %3993 = vmatpush1.bf16.msra.mxu0 %v3483
    %3994 = vmatprep.subr.bf16.mxu0 %v3488
    %3995 = vmatpush1.bf16.msra.mxu0 %v3487
    %3996 = vmatprep.subr.bf16.mxu0 %v3492
    %3997 = vmatpush1.bf16.msra.mxu0 %v3491
    %3998 = vmatprep.subr.bf16.mxu0 %v3496
    %3999 = vmatpush1.bf16.msra.mxu0 %v3495
    %4000 = vmatprep.subr.bf16.mxu0 %v3500
    %4001 = vmatpush1.bf16.msra.mxu0 %v3499
    %4002 = vmatprep.subr.bf16.mxu0 0
    %4003 = vmatpush1.bf16.msra.mxu0 0
    %4004 = vmatprep.subr.bf16.mxu0 0
    %4005 = vmatpush1.bf16.msra.mxu0 0
    %4006 = vmatprep.subr.bf16.mxu0 0
    %4007 = vmatpush1.bf16.msra.mxu0 0
    %4008 = vmatprep.subr.bf16.mxu0 0
    %4009 = vmatpush1.bf16.msra.mxu0 0
    %4010 = vmatprep.subr.bf16.mxu0 0
    %4011 = vmatpush1.bf16.msra.mxu0 0
    %4012 = vmatprep.subr.bf16.mxu0 0
    %4013 = vmatpush1.bf16.msra.mxu0 0
    %4014 = vmatprep.subr.bf16.mxu0 0
    %4015 = vmatpush1.bf16.msra.mxu0 0
    %4016 = vmatprep.subr.bf16.mxu0 0
    %4017 = vmatpush1.bf16.msra.mxu0 0
    %4018 = vmatprep.mubr.bf16.mxu0 0
    %4019 = vmatmul.mubr.bf16.gmra.mrb[0].mxu0 %v3985
    %v4020 = vpop.f32.mrb[0].mxu0
    %v4021 = vadd.f32 0.0, %v4020
    %v4022 = vpop.f32.mrb[0].mxu0
    %v4023 = vadd.f32 0.0, %v4022
    %v4024 = vpop.f32.mrb[0].mxu0
    %v4025 = vpop.f32.mrb[0].mxu0
    %4026 = vdwg.mxu0
    %4027 = vmatprep.subr.bf16.mxu0 %v3474
    %4028 = vmatpush1.bf16.msra.mxu0 %v3473
    %4029 = vmatprep.subr.bf16.mxu0 %v3478
    %4030 = vmatpush1.bf16.msra.mxu0 %v3477
    %4031 = vmatprep.subr.bf16.mxu0 %v3482
    %4032 = vmatpush1.bf16.msra.mxu0 %v3481
    %4033 = vmatprep.subr.bf16.mxu0 %v3486
    %4034 = vmatpush1.bf16.msra.mxu0 %v3485
    %4035 = vmatprep.subr.bf16.mxu0 %v3490
    %4036 = vmatpush1.bf16.msra.mxu0 %v3489
    %4037 = vmatprep.subr.bf16.mxu0 %v3494
    %4038 = vmatpush1.bf16.msra.mxu0 %v3493
    %4039 = vmatprep.subr.bf16.mxu0 %v3498
    %4040 = vmatpush1.bf16.msra.mxu0 %v3497
    %4041 = vmatprep.subr.bf16.mxu0 %v3502
    %4042 = vmatpush1.bf16.msra.mxu0 %v3501
    %4043 = vmatprep.subr.bf16.mxu0 0
    %4044 = vmatpush1.bf16.msra.mxu0 0
    %4045 = vmatprep.subr.bf16.mxu0 0
    %4046 = vmatpush1.bf16.msra.mxu0 0
    %4047 = vmatprep.subr.bf16.mxu0 0
    %4048 = vmatpush1.bf16.msra.mxu0 0
    %4049 = vmatprep.subr.bf16.mxu0 0
    %4050 = vmatpush1.bf16.msra.mxu0 0
    %4051 = vmatprep.subr.bf16.mxu0 0
    %4052 = vmatpush1.bf16.msra.mxu0 0
    %4053 = vmatprep.subr.bf16.mxu0 0
    %4054 = vmatpush1.bf16.msra.mxu0 0
    %4055 = vmatprep.subr.bf16.mxu0 0
    %4056 = vmatpush1.bf16.msra.mxu0 0
    %4057 = vmatprep.subr.bf16.mxu0 0
    %4058 = vmatpush1.bf16.msra.mxu0 0
    %4059 = vmatprep.mubr.bf16.mxu0 0
    %4060 = vmatmul.mubr.bf16.gmra.mrb[0].mxu0 %v3985
    %v4061 = vpop.f32.mrb[0].mxu0
    %v4062 = vadd.f32 0.0, %v4061
    %v4063 = vpop.f32.mrb[0].mxu0
    %v4064 = vadd.f32 0.0, %v4063
    %v4065 = vpop.f32.mrb[0].mxu0
    %v4066 = vpop.f32.mrb[0].mxu0
    %4067 = vdwg.mxu0
    %v4068 = vadd.f32 %v3252, %v4021
    %v4069 = vadd.f32 %v3254, %v4023
    %v4070 = vadd.f32 %v3325, %v4062
    %v4071 = vadd.f32 %v3327, %v4064
    %v4072 = vxor.u32 %v4068, 2147483648
    %v4073 = vxor.u32 %v4069, 2147483648
    %v4074 = vmul.f32 %v4072, 1.442695
    %v4075 = vpow.pop %v4074
    %v4076 = vmul.f32 %v4073, 1.442695
    %v4077 = vpow.pop %v4076
    %v4078 = vadd.f32 %v4075, 1.0
    %v4079 = vadd.f32 %v4077, 1.0
    %v4080 = vrcp.pop %v4078
    %v4081 = vmul.f32 1.0, %v4080
    %v4082 = vrcp.pop %v4079
    %v4083 = vmul.f32 1.0, %v4082
    %v4084 = vtanh.pop %v4070
    %v4085 = vxor.u32 %v4071, 2147483648
    %v4086 = vmul.f32 %v4085, 1.442695
    %v4087 = vpow.pop %v4086
    %v4088 = vadd.f32 %v4087, 1.0
    %v4089 = vrcp.pop %v4088
    %v4090 = vmul.f32 1.0, %v4089
    %v4091 = vmul.f32 %v4083, %v3980
    %v4092 = vmul.f32 %v4081, %v4084
    %v4093 = vadd.f32 %v4091, %v4092
    %v4094 = vtanh.pop %v4093
    %v4095 = vmul.f32 %v4090, %v4094
    %s4096 = scalar_lea.vmem [#allocation2], 32
    %4097 = vst [vmem:[%s4096] sm:$0xff] %v4095
    %v4098 = vpack.c.bf16 %v4095, %v4095
    %4099 = vmatprep.subr.bf16.mxu0 %v3472
    %4100 = vmatpush1.bf16.msra.mxu0 %v3471
    %4101 = vmatprep.subr.bf16.mxu0 %v3476
    %4102 = vmatpush1.bf16.msra.mxu0 %v3475
    %4103 = vmatprep.subr.bf16.mxu0 %v3480
    %4104 = vmatpush1.bf16.msra.mxu0 %v3479
    %4105 = vmatprep.subr.bf16.mxu0 %v3484
    %4106 = vmatpush1.bf16.msra.mxu0 %v3483
    %4107 = vmatprep.subr.bf16.mxu0 %v3488
    %4108 = vmatpush1.bf16.msra.mxu0 %v3487
    %4109 = vmatprep.subr.bf16.mxu0 %v3492
    %4110 = vmatpush1.bf16.msra.mxu0 %v3491
    %4111 = vmatprep.subr.bf16.mxu0 %v3496
    %4112 = vmatpush1.bf16.msra.mxu0 %v3495
    %4113 = vmatprep.subr.bf16.mxu0 %v3500
    %4114 = vmatpush1.bf16.msra.mxu0 %v3499
    %4115 = vmatprep.subr.bf16.mxu0 0
    %4116 = vmatpush1.bf16.msra.mxu0 0
    %4117 = vmatprep.subr.bf16.mxu0 0
    %4118 = vmatpush1.bf16.msra.mxu0 0
    %4119 = vmatprep.subr.bf16.mxu0 0
    %4120 = vmatpush1.bf16.msra.mxu0 0
    %4121 = vmatprep.subr.bf16.mxu0 0
    %4122 = vmatpush1.bf16.msra.mxu0 0
    %4123 = vmatprep.subr.bf16.mxu0 0
    %4124 = vmatpush1.bf16.msra.mxu0 0
    %4125 = vmatprep.subr.bf16.mxu0 0
    %4126 = vmatpush1.bf16.msra.mxu0 0
    %4127 = vmatprep.subr.bf16.mxu0 0
    %4128 = vmatpush1.bf16.msra.mxu0 0
    %4129 = vmatprep.subr.bf16.mxu0 0
    %4130 = vmatpush1.bf16.msra.mxu0 0
    %4131 = vmatprep.mubr.bf16.mxu0 0
    %4132 = vmatmul.mubr.bf16.gmra.mrb[0].mxu0 %v4098
    %v4133 = vpop.f32.mrb[0].mxu0
    %v4134 = vadd.f32 0.0, %v4133
    %v4135 = vpop.f32.mrb[0].mxu0
    %v4136 = vadd.f32 0.0, %v4135
    %v4137 = vpop.f32.mrb[0].mxu0
    %v4138 = vpop.f32.mrb[0].mxu0
    %4139 = vdwg.mxu0
    %4140 = vmatprep.subr.bf16.mxu0 %v3474
    %4141 = vmatpush1.bf16.msra.mxu0 %v3473
    %4142 = vmatprep.subr.bf16.mxu0 %v3478
    %4143 = vmatpush1.bf16.msra.mxu0 %v3477
    %4144 = vmatprep.subr.bf16.mxu0 %v3482
    %4145 = vmatpush1.bf16.msra.mxu0 %v3481
    %4146 = vmatprep.subr.bf16.mxu0 %v3486
    %4147 = vmatpush1.bf16.msra.mxu0 %v3485
    %4148 = vmatprep.subr.bf16.mxu0 %v3490
    %4149 = vmatpush1.bf16.msra.mxu0 %v3489
    %4150 = vmatprep.subr.bf16.mxu0 %v3494
    %4151 = vmatpush1.bf16.msra.mxu0 %v3493
    %4152 = vmatprep.subr.bf16.mxu0 %v3498
    %4153 = vmatpush1.bf16.msra.mxu0 %v3497
    %4154 = vmatprep.subr.bf16.mxu0 %v3502
    %4155 = vmatpush1.bf16.msra.mxu0 %v3501
    %4156 = vmatprep.subr.bf16.mxu0 0
    %4157 = vmatpush1.bf16.msra.mxu0 0
    %4158 = vmatprep.subr.bf16.mxu0 0
    %4159 = vmatpush1.bf16.msra.mxu0 0
    %4160 = vmatprep.subr.bf16.mxu0 0
    %4161 = vmatpush1.bf16.msra.mxu0 0
    %4162 = vmatprep.subr.bf16.mxu0 0
    %4163 = vmatpush1.bf16.msra.mxu0 0
    %4164 = vmatprep.subr.bf16.mxu0 0
    %4165 = vmatpush1.bf16.msra.mxu0 0
    %4166 = vmatprep.subr.bf16.mxu0 0
    %4167 = vmatpush1.bf16.msra.mxu0 0
    %4168 = vmatprep.subr.bf16.mxu0 0
    %4169 = vmatpush1.bf16.msra.mxu0 0
    %4170 = vmatprep.subr.bf16.mxu0 0
    %4171 = vmatpush1.bf16.msra.mxu0 0
    %4172 = vmatprep.mubr.bf16.mxu0 0
    %4173 = vmatmul.mubr.bf16.gmra.mrb[0].mxu0 %v4098
    %v4174 = vpop.f32.mrb[0].mxu0
    %v4175 = vadd.f32 0.0, %v4174
    %v4176 = vpop.f32.mrb[0].mxu0
    %v4177 = vadd.f32 0.0, %v4176
    %v4178 = vpop.f32.mrb[0].mxu0
    %v4179 = vpop.f32.mrb[0].mxu0
    %4180 = vdwg.mxu0
    %v4181 = vadd.f32 %v3256, %v4134
    %v4182 = vadd.f32 %v3258, %v4136
    %v4183 = vadd.f32 %v3329, %v4175
    %v4184 = vadd.f32 %v3331, %v4177
    %v4185 = vxor.u32 %v4181, 2147483648
    %v4186 = vxor.u32 %v4182, 2147483648
    %v4187 = vmul.f32 %v4185, 1.442695
    %v4188 = vpow.pop %v4187
    %v4189 = vmul.f32 %v4186, 1.442695
    %v4190 = vpow.pop %v4189
    %v4191 = vadd.f32 %v4188, 1.0
    %v4192 = vadd.f32 %v4190, 1.0
    %v4193 = vrcp.pop %v4191
    %v4194 = vmul.f32 1.0, %v4193
    %v4195 = vrcp.pop %v4192
    %v4196 = vmul.f32 1.0, %v4195
    %v4197 = vtanh.pop %v4183
    %v4198 = vxor.u32 %v4184, 2147483648
    %v4199 = vmul.f32 %v4198, 1.442695
    %v4200 = vpow.pop %v4199
    %v4201 = vadd.f32 %v4200, 1.0
    %v4202 = vrcp.pop %v4201
    %v4203 = vmul.f32 1.0, %v4202
    %v4204 = vmul.f32 %v4196, %v4093
    %v4205 = vmul.f32 %v4194, %v4197
    %v4206 = vadd.f32 %v4204, %v4205
    %v4207 = vtanh.pop %v4206
    %v4208 = vmul.f32 %v4203, %v4207
    %s4209 = scalar_lea.vmem [#allocation2], 40
    %4210 = vst [vmem:[%s4209] sm:$0xff] %v4208
    %v4211 = vpack.c.bf16 %v4208, %v4208
    %4212 = vmatprep.subr.bf16.mxu0 %v3472
    %4213 = vmatpush1.bf16.msra.mxu0 %v3471
    %4214 = vmatprep.subr.bf16.mxu0 %v3476
    %4215 = vmatpush1.bf16.msra.mxu0 %v3475
    %4216 = vmatprep.subr.bf16.mxu0 %v3480
    %4217 = vmatpush1.bf16.msra.mxu0 %v3479
    %4218 = vmatprep.subr.bf16.mxu0 %v3484
    %4219 = vmatpush1.bf16.msra.mxu0 %v3483
    %4220 = vmatprep.subr.bf16.mxu0 %v3488
    %4221 = vmatpush1.bf16.msra.mxu0 %v3487
    %4222 = vmatprep.subr.bf16.mxu0 %v3492
    %4223 = vmatpush1.bf16.msra.mxu0 %v3491
    %4224 = vmatprep.subr.bf16.mxu0 %v3496
    %4225 = vmatpush1.bf16.msra.mxu0 %v3495
    %4226 = vmatprep.subr.bf16.mxu0 %v3500
    %4227 = vmatpush1.bf16.msra.mxu0 %v3499
    %4228 = vmatprep.subr.bf16.mxu0 0
    %4229 = vmatpush1.bf16.msra.mxu0 0
    %4230 = vmatprep.subr.bf16.mxu0 0
    %4231 = vmatpush1.bf16.msra.mxu0 0
    %4232 = vmatprep.subr.bf16.mxu0 0
    %4233 = vmatpush1.bf16.msra.mxu0 0
    %4234 = vmatprep.subr.bf16.mxu0 0
    %4235 = vmatpush1.bf16.msra.mxu0 0
    %4236 = vmatprep.subr.bf16.mxu0 0
    %4237 = vmatpush1.bf16.msra.mxu0 0
    %4238 = vmatprep.subr.bf16.mxu0 0
    %4239 = vmatpush1.bf16.msra.mxu0 0
    %4240 = vmatprep.subr.bf16.mxu0 0
    %4241 = vmatpush1.bf16.msra.mxu0 0
    %4242 = vmatprep.subr.bf16.mxu0 0
    %4243 = vmatpush1.bf16.msra.mxu0 0
    %4244 = vmatprep.mubr.bf16.mxu0 0
    %4245 = vmatmul.mubr.bf16.gmra.mrb[0].mxu0 %v4211
    %v4246 = vpop.f32.mrb[0].mxu0
    %v4247 = vadd.f32 0.0, %v4246
    %v4248 = vpop.f32.mrb[0].mxu0
    %v4249 = vadd.f32 0.0, %v4248
    %v4250 = vpop.f32.mrb[0].mxu0
    %v4251 = vpop.f32.mrb[0].mxu0
    %4252 = vdwg.mxu0
    %4253 = vmatprep.subr.bf16.mxu0 %v3474
    %4254 = vmatpush1.bf16.msra.mxu0 %v3473
    %4255 = vmatprep.subr.bf16.mxu0 %v3478
    %4256 = vmatpush1.bf16.msra.mxu0 %v3477
    %4257 = vmatprep.subr.bf16.mxu0 %v3482
    %4258 = vmatpush1.bf16.msra.mxu0 %v3481
    %4259 = vmatprep.subr.bf16.mxu0 %v3486
    %4260 = vmatpush1.bf16.msra.mxu0 %v3485
    %4261 = vmatprep.subr.bf16.mxu0 %v3490
    %4262 = vmatpush1.bf16.msra.mxu0 %v3489
    %4263 = vmatprep.subr.bf16.mxu0 %v3494
    %4264 = vmatpush1.bf16.msra.mxu0 %v3493
    %4265 = vmatprep.subr.bf16.mxu0 %v3498
    %4266 = vmatpush1.bf16.msra.mxu0 %v3497
    %4267 = vmatprep.subr.bf16.mxu0 %v3502
    %4268 = vmatpush1.bf16.msra.mxu0 %v3501
    %4269 = vmatprep.subr.bf16.mxu0 0
    %4270 = vmatpush1.bf16.msra.mxu0 0
    %4271 = vmatprep.subr.bf16.mxu0 0
    %4272 = vmatpush1.bf16.msra.mxu0 0
    %4273 = vmatprep.subr.bf16.mxu0 0
    %4274 = vmatpush1.bf16.msra.mxu0 0
    %4275 = vmatprep.subr.bf16.mxu0 0
    %4276 = vmatpush1.bf16.msra.mxu0 0
    %4277 = vmatprep.subr.bf16.mxu0 0
    %4278 = vmatpush1.bf16.msra.mxu0 0
    %4279 = vmatprep.subr.bf16.mxu0 0
    %4280 = vmatpush1.bf16.msra.mxu0 0
    %4281 = vmatprep.subr.bf16.mxu0 0
    %4282 = vmatpush1.bf16.msra.mxu0 0
    %4283 = vmatprep.subr.bf16.mxu0 0
    %4284 = vmatpush1.bf16.msra.mxu0 0
    %4285 = vmatprep.mubr.bf16.mxu0 0
    %4286 = vmatmul.mubr.bf16.gmra.mrb[0].mxu0 %v4211
    %v4287 = vpop.f32.mrb[0].mxu0
    %v4288 = vadd.f32 0.0, %v4287
    %v4289 = vpop.f32.mrb[0].mxu0
    %v4290 = vadd.f32 0.0, %v4289
    %v4291 = vpop.f32.mrb[0].mxu0
    %v4292 = vpop.f32.mrb[0].mxu0
    %4293 = vdwg.mxu0
    %v4294 = vadd.f32 %v3262, %v4247
    %v4295 = vadd.f32 %v3264, %v4249
    %v4296 = vadd.f32 %v3335, %v4288
    %v4297 = vadd.f32 %v3337, %v4290
    %v4298 = vxor.u32 %v4294, 2147483648
    %v4299 = vxor.u32 %v4295, 2147483648
    %v4300 = vmul.f32 %v4298, 1.442695
    %v4301 = vpow.pop %v4300
    %v4302 = vmul.f32 %v4299, 1.442695
    %v4303 = vpow.pop %v4302
    %v4304 = vadd.f32 %v4301, 1.0
    %v4305 = vadd.f32 %v4303, 1.0
    %v4306 = vrcp.pop %v4304
    %v4307 = vmul.f32 1.0, %v4306
    %v4308 = vrcp.pop %v4305
    %v4309 = vmul.f32 1.0, %v4308
    %v4310 = vtanh.pop %v4296
    %v4311 = vxor.u32 %v4297, 2147483648
    %v4312 = vmul.f32 %v4311, 1.442695
    %v4313 = vpow.pop %v4312
    %v4314 = vadd.f32 %v4313, 1.0
    %v4315 = vrcp.pop %v4314
    %v4316 = vmul.f32 1.0, %v4315
    %v4317 = vmul.f32 %v4309, %v4206
    %v4318 = vmul.f32 %v4307, %v4310
    %v4319 = vadd.f32 %v4317, %v4318
    %v4320 = vtanh.pop %v4319
    %v4321 = vmul.f32 %v4316, %v4320
    %s4322 = scalar_lea.vmem [#allocation2], 48
    %4323 = vst [vmem:[%s4322] sm:$0xff] %v4321
    %v4324 = vpack.c.bf16 %v4321, %v4321
    %4325 = vmatprep.subr.bf16.mxu0 %v3472
    %4326 = vmatpush1.bf16.msra.mxu0 %v3471
    %4327 = vmatprep.subr.bf16.mxu0 %v3476
    %4328 = vmatpush1.bf16.msra.mxu0 %v3475
    %4329 = vmatprep.subr.bf16.mxu0 %v3480
    %4330 = vmatpush1.bf16.msra.mxu0 %v3479
    %4331 = vmatprep.subr.bf16.mxu0 %v3484
    %4332 = vmatpush1.bf16.msra.mxu0 %v3483
    %4333 = vmatprep.subr.bf16.mxu0 %v3488
    %4334 = vmatpush1.bf16.msra.mxu0 %v3487
    %4335 = vmatprep.subr.bf16.mxu0 %v3492
    %4336 = vmatpush1.bf16.msra.mxu0 %v3491
    %4337 = vmatprep.subr.bf16.mxu0 %v3496
    %4338 = vmatpush1.bf16.msra.mxu0 %v3495
    %4339 = vmatprep.subr.bf16.mxu0 %v3500
    %4340 = vmatpush1.bf16.msra.mxu0 %v3499
    %4341 = vmatprep.subr.bf16.mxu0 0
    %4342 = vmatpush1.bf16.msra.mxu0 0
    %4343 = vmatprep.subr.bf16.mxu0 0
    %4344 = vmatpush1.bf16.msra.mxu0 0
    %4345 = vmatprep.subr.bf16.mxu0 0
    %4346 = vmatpush1.bf16.msra.mxu0 0
    %4347 = vmatprep.subr.bf16.mxu0 0
    %4348 = vmatpush1.bf16.msra.mxu0 0
    %4349 = vmatprep.subr.bf16.mxu0 0
    %4350 = vmatpush1.bf16.msra.mxu0 0
    %4351 = vmatprep.subr.bf16.mxu0 0
    %4352 = vmatpush1.bf16.msra.mxu0 0
    %4353 = vmatprep.subr.bf16.mxu0 0
    %4354 = vmatpush1.bf16.msra.mxu0 0
    %4355 = vmatprep.subr.bf16.mxu0 0
    %4356 = vmatpush1.bf16.msra.mxu0 0
    %4357 = vmatprep.mubr.bf16.mxu0 0
    %4358 = vmatmul.mubr.bf16.gmra.mrb[0].mxu0 %v4324
    %v4359 = vpop.f32.mrb[0].mxu0
    %v4360 = vadd.f32 0.0, %v4359
    %v4361 = vpop.f32.mrb[0].mxu0
    %v4362 = vadd.f32 0.0, %v4361
    %v4363 = vpop.f32.mrb[0].mxu0
    %v4364 = vpop.f32.mrb[0].mxu0
    %4365 = vdwg.mxu0
    %4366 = vmatprep.subr.bf16.mxu0 %v3474
    %4367 = vmatpush1.bf16.msra.mxu0 %v3473
    %4368 = vmatprep.subr.bf16.mxu0 %v3478
    %4369 = vmatpush1.bf16.msra.mxu0 %v3477
    %4370 = vmatprep.subr.bf16.mxu0 %v3482
    %4371 = vmatpush1.bf16.msra.mxu0 %v3481
    %4372 = vmatprep.subr.bf16.mxu0 %v3486
    %4373 = vmatpush1.bf16.msra.mxu0 %v3485
    %4374 = vmatprep.subr.bf16.mxu0 %v3490
    %4375 = vmatpush1.bf16.msra.mxu0 %v3489
    %4376 = vmatprep.subr.bf16.mxu0 %v3494
    %4377 = vmatpush1.bf16.msra.mxu0 %v3493
    %4378 = vmatprep.subr.bf16.mxu0 %v3498
    %4379 = vmatpush1.bf16.msra.mxu0 %v3497
    %4380 = vmatprep.subr.bf16.mxu0 %v3502
    %4381 = vmatpush1.bf16.msra.mxu0 %v3501
    %4382 = vmatprep.subr.bf16.mxu0 0
    %4383 = vmatpush1.bf16.msra.mxu0 0
    %4384 = vmatprep.subr.bf16.mxu0 0
    %4385 = vmatpush1.bf16.msra.mxu0 0
    %4386 = vmatprep.subr.bf16.mxu0 0
    %4387 = vmatpush1.bf16.msra.mxu0 0
    %4388 = vmatprep.subr.bf16.mxu0 0
    %4389 = vmatpush1.bf16.msra.mxu0 0
    %4390 = vmatprep.subr.bf16.mxu0 0
    %4391 = vmatpush1.bf16.msra.mxu0 0
    %4392 = vmatprep.subr.bf16.mxu0 0
    %4393 = vmatpush1.bf16.msra.mxu0 0
    %4394 = vmatprep.subr.bf16.mxu0 0
    %4395 = vmatpush1.bf16.msra.mxu0 0
    %4396 = vmatprep.subr.bf16.mxu0 0
    %4397 = vmatpush1.bf16.msra.mxu0 0
    %4398 = vmatprep.mubr.bf16.mxu0 0
    %4399 = vmatmul.mubr.bf16.gmra.mrb[0].mxu0 %v4324
    %v4400 = vpop.f32.mrb[0].mxu0
    %v4401 = vadd.f32 0.0, %v4400
    %v4402 = vpop.f32.mrb[0].mxu0
    %v4403 = vadd.f32 0.0, %v4402
    %v4404 = vpop.f32.mrb[0].mxu0
    %v4405 = vpop.f32.mrb[0].mxu0
    %4406 = vdwg.mxu0
    %v4407 = vadd.f32 %v3266, %v4360
    %v4408 = vadd.f32 %v3268, %v4362
    %v4409 = vadd.f32 %v3339, %v4401
    %v4410 = vadd.f32 %v3341, %v4403
    %v4411 = vxor.u32 %v4407, 2147483648
    %v4412 = vxor.u32 %v4408, 2147483648
    %v4413 = vmul.f32 %v4411, 1.442695
    %v4414 = vpow.pop %v4413
    %v4415 = vmul.f32 %v4412, 1.442695
    %v4416 = vpow.pop %v4415
    %v4417 = vadd.f32 %v4414, 1.0
    %v4418 = vadd.f32 %v4416, 1.0
    %v4419 = vrcp.pop %v4417
    %v4420 = vmul.f32 1.0, %v4419
    %v4421 = vrcp.pop %v4418
    %v4422 = vmul.f32 1.0, %v4421
    %v4423 = vtanh.pop %v4409
    %v4424 = vxor.u32 %v4410, 2147483648
    %v4425 = vmul.f32 %v4424, 1.442695
    %v4426 = vpow.pop %v4425
    %v4427 = vadd.f32 %v4426, 1.0
    %v4428 = vrcp.pop %v4427
    %v4429 = vmul.f32 1.0, %v4428
    %v4430 = vmul.f32 %v4422, %v4319
    %v4431 = vmul.f32 %v4420, %v4423
    %v4432 = vadd.f32 %v4430, %v4431
    %v4433 = vtanh.pop %v4432
    %v4434 = vmul.f32 %v4429, %v4433
    %s4435 = scalar_lea.vmem [#allocation2], 56
    %4436 = vst [vmem:[%s4435] sm:$0xff] %v4434
    %v4437 = vld [vmem:[#allocation2] sm:$0xff]
    %v4438 = vld [vmem:[#allocation2 + $0x8] sm:$0xff]
    %v4439 = vld [vmem:[#allocation2 + $0x10] sm:$0xff]
    %v4440 = vld [vmem:[#allocation2 + $0x18] sm:$0xff]
    %v4441 = vld [vmem:[#allocation2 + $0x20] sm:$0xff]
    %v4442 = vld [vmem:[#allocation2 + $0x28] sm:$0xff]
    %v4443 = vld [vmem:[#allocation2 + $0x30] sm:$0xff]
    %v4444 = vld [vmem:[#allocation2 + $0x38] sm:$0xff]
    %v4445 = vpack.c.bf16 %v4438, %v4437
    %v4446 = vpack.c.bf16 %v4440, %v4439
    %v4447 = vpack.c.bf16 %v4442, %v4441
    %v4448 = vpack.c.bf16 %v4444, %v4443
    %v4449 = vld [vmem:[%s8] sm:$0xff]
    %v4450 = vld [vmem:[%s8 + $0x8] sm:$0xff]
    %v4451 = vld [vmem:[%s8 + $0x10] sm:$0xff]
    %v4452 = vld [vmem:[%s8 + $0x18] sm:$0xff]
    %v4453 = vld [vmem:[%s8 + $0x20] sm:$0xff]
    %v4454 = vld [vmem:[%s8 + $0x28] sm:$0xff]
    %v4455 = vld [vmem:[%s8 + $0x30] sm:$0xff]
    %v4456 = vld [vmem:[%s8 + $0x38] sm:$0xff]
    %v4457 = vld [vmem:[%s8 + $0x40] sm:$0xff]
    %v4458 = vld [vmem:[%s8 + $0x48] sm:$0xff]
    %v4459 = vld [vmem:[%s8 + $0x50] sm:$0xff]
    %v4460 = vld [vmem:[%s8 + $0x58] sm:$0xff]
    %v4461 = vld [vmem:[%s8 + $0x60] sm:$0xff]
    %v4462 = vld [vmem:[%s8 + $0x68] sm:$0xff]
    %v4463 = vld [vmem:[%s8 + $0x70] sm:$0xff]
    %v4464 = vld [vmem:[%s8 + $0x78] sm:$0xff]
    %v4465 = vld [vmem:[%s10] sm:$0x3]
    %v4467 = vlaneseq
    %v4468 = vshrl.u32 %v4467, 7
    %v4469 = vsub.s32 0, %v4468
    %v4470 = vrot.slane %v4465, %v4469
    %v4471 = vlaneseq
    %v4472 = vshrl.u32 %v4471, 7
    %v4473 = vsub.s32 1, %v4472
    %v4474 = vrot.slane %v4465, %v4473
    %v4493 = vunpack.c.l.b16 %v4449
    %v4494 = vunpack.c.h.b16 %v4449
    %v4495 = vunpack.c.l.b16 %v4450
    %v4496 = vunpack.c.h.b16 %v4450
    %v4497 = vunpack.c.l.b16 %v4451
    %v4498 = vunpack.c.h.b16 %v4451
    %v4499 = vunpack.c.l.b16 %v4452
    %v4500 = vunpack.c.h.b16 %v4452
    %v4501 = vunpack.c.l.b16 %v4453
    %v4502 = vunpack.c.h.b16 %v4453
    %v4503 = vunpack.c.l.b16 %v4454
    %v4504 = vunpack.c.h.b16 %v4454
    %v4505 = vunpack.c.l.b16 %v4455
    %v4506 = vunpack.c.h.b16 %v4455
    %v4507 = vunpack.c.l.b16 %v4456
    %v4508 = vunpack.c.h.b16 %v4456
    %v4509 = vunpack.c.l.b16 %v4457
    %v4510 = vunpack.c.h.b16 %v4457
    %v4511 = vunpack.c.l.b16 %v4458
    %v4512 = vunpack.c.h.b16 %v4458
    %v4513 = vunpack.c.l.b16 %v4459
    %v4514 = vunpack.c.h.b16 %v4459
    %v4515 = vunpack.c.l.b16 %v4460
    %v4516 = vunpack.c.h.b16 %v4460
    %v4517 = vunpack.c.l.b16 %v4461
    %v4518 = vunpack.c.h.b16 %v4461
    %v4519 = vunpack.c.l.b16 %v4462
    %v4520 = vunpack.c.h.b16 %v4462
    %v4521 = vunpack.c.l.b16 %v4463
    %v4522 = vunpack.c.h.b16 %v4463
    %v4523 = vunpack.c.l.b16 %v4464
    %v4524 = vunpack.c.h.b16 %v4464
    %v4525 = vpack.c.b16 %v4495, %v4493
    %v4526 = vpack.c.b16 %v4496, %v4494
    %v4527 = vpack.c.b16 %v4499, %v4497
    %v4528 = vpack.c.b16 %v4500, %v4498
    %v4529 = vpack.c.b16 %v4503, %v4501
    %v4530 = vpack.c.b16 %v4504, %v4502
    %v4531 = vpack.c.b16 %v4507, %v4505
    %v4532 = vpack.c.b16 %v4508, %v4506
    %v4533 = vpack.c.b16 %v4511, %v4509
    %v4534 = vpack.c.b16 %v4512, %v4510
    %v4535 = vpack.c.b16 %v4515, %v4513
    %v4536 = vpack.c.b16 %v4516, %v4514
    %v4537 = vpack.c.b16 %v4519, %v4517
    %v4538 = vpack.c.b16 %v4520, %v4518
    %v4539 = vpack.c.b16 %v4523, %v4521
    %v4540 = vpack.c.b16 %v4524, %v4522
    %4557 = vmatprep.subr.bf16.mxu0 %v4526
    %4558 = vmatpush1.bf16.msra.mxu0 %v4525
    %4559 = vmatprep.subr.bf16.mxu0 %v4528
    %4560 = vmatpush1.bf16.msra.mxu0 %v4527
    %4561 = vmatprep.subr.bf16.mxu0 %v4530
    %4562 = vmatpush1.bf16.msra.mxu0 %v4529
    %4563 = vmatprep.subr.bf16.mxu0 %v4532
    %4564 = vmatpush1.bf16.msra.mxu0 %v4531
    %4565 = vmatprep.subr.bf16.mxu0 %v4534
    %4566 = vmatpush1.bf16.msra.mxu0 %v4533
    %4567 = vmatprep.subr.bf16.mxu0 %v4536
    %4568 = vmatpush1.bf16.msra.mxu0 %v4535
    %4569 = vmatprep.subr.bf16.mxu0 %v4538
    %4570 = vmatpush1.bf16.msra.mxu0 %v4537
    %4571 = vmatprep.subr.bf16.mxu0 %v4540
    %4572 = vmatpush1.bf16.msra.mxu0 %v4539
    %4573 = vmatprep.subr.bf16.mxu0 0
    %4574 = vmatpush1.bf16.msra.mxu0 0
    %4575 = vmatprep.subr.bf16.mxu0 0
    %4576 = vmatpush1.bf16.msra.mxu0 0
    %4577 = vmatprep.subr.bf16.mxu0 0
    %4578 = vmatpush1.bf16.msra.mxu0 0
    %4579 = vmatprep.subr.bf16.mxu0 0
    %4580 = vmatpush1.bf16.msra.mxu0 0
    %4581 = vmatprep.subr.bf16.mxu0 0
    %4582 = vmatpush1.bf16.msra.mxu0 0
    %4583 = vmatprep.subr.bf16.mxu0 0
    %4584 = vmatpush1.bf16.msra.mxu0 0
    %4585 = vmatprep.subr.bf16.mxu0 0
    %4586 = vmatpush1.bf16.msra.mxu0 0
    %4587 = vmatprep.subr.bf16.mxu0 0
    %4588 = vmatpush1.bf16.msra.mxu0 0
    %4589 = vmatprep.mubr.bf16.mxu0 0
    %4590 = vmatmul.mubr.bf16.gmra.mrb[0].mxu0 %v4445
    %v4591 = vpop.f32.mrb[0].mxu0
    %v4592 = vadd.f32 %v4470, %v4591
    %v4593 = vpop.f32.mrb[0].mxu0
    %v4594 = vadd.f32 %v4474, %v4593
    %v4595 = vpop.f32.mrb[0].mxu0
    %v4596 = vadd.f32 %v4470, %v4595
    %v4597 = vpop.f32.mrb[0].mxu0
    %v4598 = vadd.f32 %v4474, %v4597
    %4599 = vmatprep.mubr.bf16.mxu0 0
    %4600 = vmatmul.mubr.bf16.gmra.mrb[0].mxu0 %v4446
    %v4601 = vpop.f32.mrb[0].mxu0
    %v4602 = vadd.f32 %v4470, %v4601
    %v4603 = vpop.f32.mrb[0].mxu0
    %v4604 = vadd.f32 %v4474, %v4603
    %v4605 = vpop.f32.mrb[0].mxu0
    %v4606 = vadd.f32 %v4470, %v4605
    %v4607 = vpop.f32.mrb[0].mxu0
    %v4608 = vadd.f32 %v4474, %v4607
    %4609 = vmatprep.mubr.bf16.mxu0 0
    %4610 = vmatmul.mubr.bf16.gmra.mrb[0].mxu0 %v4447
    %v4611 = vpop.f32.mrb[0].mxu0
    %v4612 = vadd.f32 %v4470, %v4611
    %v4613 = vpop.f32.mrb[0].mxu0
    %v4614 = vadd.f32 %v4474, %v4613
    %v4615 = vpop.f32.mrb[0].mxu0
    %v4616 = vadd.f32 %v4470, %v4615
    %v4617 = vpop.f32.mrb[0].mxu0
    %v4618 = vadd.f32 %v4474, %v4617
    %4619 = vmatprep.mubr.bf16.mxu0 0
    %4620 = vmatmul.mubr.bf16.gmra.mrb[0].mxu0 %v4448
    %v4621 = vpop.f32.mrb[0].mxu0
    %v4622 = vadd.f32 %v4470, %v4621
    %v4623 = vpop.f32.mrb[0].mxu0
    %v4624 = vadd.f32 %v4474, %v4623
    %v4625 = vpop.f32.mrb[0].mxu0
    %v4626 = vadd.f32 %v4470, %v4625
    %v4627 = vpop.f32.mrb[0].mxu0
    %v4628 = vadd.f32 %v4474, %v4627
    %4629 = vdwg.mxu0
    %v4630 = vld [vmem:[#allocation13] sm:$0xff]
    %v4631 = vld [vmem:[#allocation13 + $0x8] sm:$0xff]
    %v4632 = vld [vmem:[#allocation13 + $0x10] sm:$0xff]
    %v4633 = vld [vmem:[#allocation13 + $0x18] sm:$0xff]
    %v4634 = vld [vmem:[#allocation13 + $0x20] sm:$0xff]
    %v4635 = vld [vmem:[#allocation13 + $0x28] sm:$0xff]
    %v4636 = vld [vmem:[#allocation13 + $0x30] sm:$0xff]
    %v4637 = vld [vmem:[#allocation13 + $0x38] sm:$0xff]
    %v4646 = vunpack.c.l.b16 %v4630
    %v4647 = vunpack.c.h.b16 %v4630
    %v4648 = vunpack.c.l.b16 %v4631
    %v4649 = vunpack.c.h.b16 %v4631
    %v4650 = vunpack.c.l.b16 %v4632
    %v4651 = vunpack.c.h.b16 %v4632
    %v4652 = vunpack.c.l.b16 %v4633
    %v4653 = vunpack.c.h.b16 %v4633
    %v4654 = vunpack.c.l.b16 %v4634
    %v4655 = vunpack.c.h.b16 %v4634
    %v4656 = vunpack.c.l.b16 %v4635
    %v4657 = vunpack.c.h.b16 %v4635
    %v4658 = vunpack.c.l.b16 %v4636
    %v4659 = vunpack.c.h.b16 %v4636
    %v4660 = vunpack.c.l.b16 %v4637
    %v4661 = vunpack.c.h.b16 %v4637
    %v4662 = vpack.c.b16 %v4648, %v4646
    %v4663 = vpack.c.b16 %v4649, %v4647
    %v4664 = vpack.c.b16 %v4652, %v4650
    %v4665 = vpack.c.b16 %v4653, %v4651
    %v4666 = vpack.c.b16 %v4656, %v4654
    %v4667 = vpack.c.b16 %v4657, %v4655
    %v4668 = vpack.c.b16 %v4660, %v4658
    %v4669 = vpack.c.b16 %v4661, %v4659
    %v4679 = vsel %vm309, 0, 0
    %4681 = vmatprep.subr.bf16.mxu0 %v4663
    %4682 = vmatpush1.bf16.msra.mxu0 %v4662
    %4683 = vmatprep.subr.bf16.mxu0 %v4665
    %4684 = vmatpush1.bf16.msra.mxu0 %v4664
    %4685 = vmatprep.subr.bf16.mxu0 %v4667
    %4686 = vmatpush1.bf16.msra.mxu0 %v4666
    %4687 = vmatprep.subr.bf16.mxu0 %v4669
    %4688 = vmatpush1.bf16.msra.mxu0 %v4668
    %4689 = vmatprep.subr.bf16.mxu0 0
    %4690 = vmatpush1.bf16.msra.mxu0 0
    %4691 = vmatprep.subr.bf16.mxu0 0
    %4692 = vmatpush1.bf16.msra.mxu0 0
    %4693 = vmatprep.subr.bf16.mxu0 0
    %4694 = vmatpush1.bf16.msra.mxu0 0
    %4695 = vmatprep.subr.bf16.mxu0 0
    %4696 = vmatpush1.bf16.msra.mxu0 0
    %4697 = vmatprep.subr.bf16.mxu0 0
    %4698 = vmatpush1.bf16.msra.mxu0 0
    %4699 = vmatprep.subr.bf16.mxu0 0
    %4700 = vmatpush1.bf16.msra.mxu0 0
    %4701 = vmatprep.subr.bf16.mxu0 0
    %4702 = vmatpush1.bf16.msra.mxu0 0
    %4703 = vmatprep.subr.bf16.mxu0 0
    %4704 = vmatpush1.bf16.msra.mxu0 0
    %4705 = vmatprep.subr.bf16.mxu0 0
    %4706 = vmatpush1.bf16.msra.mxu0 0
    %4707 = vmatprep.subr.bf16.mxu0 0
    %4708 = vmatpush1.bf16.msra.mxu0 0
    %4709 = vmatprep.subr.bf16.mxu0 0
    %4710 = vmatpush1.bf16.msra.mxu0 0
    %4711 = vmatprep.subr.bf16.mxu0 0
    %4712 = vmatpush1.bf16.msra.mxu0 0
    %4713 = vmatprep.mubr.bf16.mxu0 0
    %4714 = vmatmul.mubr.bf16.gmra.mrb[0].mxu0 %v4679
    %v4715 = vpop.f32.mrb[0].mxu0
    %v4716 = vadd.f32 0.0, %v4715
    %v4717 = vpop.f32.mrb[0].mxu0
    %v4718 = vadd.f32 0.0, %v4717
    %v4719 = vpop.f32.mrb[0].mxu0
    %v4720 = vpop.f32.mrb[0].mxu0
    %4721 = vdwg.mxu0
    %v4722 = vadd.f32 %v4592, %v4716
    %v4723 = vadd.f32 %v4594, %v4718
    %v4724 = vxor.u32 %v4722, 2147483648
    %v4725 = vmul.f32 %v4724, 1.442695
    %v4726 = vpow.pop %v4725
    %v4727 = vadd.f32 %v4726, 1.0
    %v4728 = vrcp.pop %v4727
    %v4729 = vmul.f32 1.0, %v4728
    %v4730 = vtanh.pop %v4723
    %v4731 = vxor.u32 %v4723, 2147483648
    %v4732 = vmul.f32 %v4731, 1.442695
    %v4733 = vpow.pop %v4732
    %v4734 = vadd.f32 %v4733, 1.0
    %v4735 = vrcp.pop %v4734
    %v4736 = vmul.f32 1.0, %v4735
    %v4737 = vmul.f32 %v4729, 0.0
    %v4738 = vmul.f32 %v4729, %v4730
    %4740 = vrot.lane.b32.xlu0 %v4738, 64
    %v4741 = vpop.permute.xlu0 %4740
    %v4743 = vadd.f32 %v4737, %v4741
    %v4744 = vtanh.pop %v4743
    %v4745 = vmul.f32 %v4736, %v4744
    %v4746 = vpack.c.bf16 %v4745, %v4745
    %4748 = vrot.lane.b32.xlu0 %v4746, 64
    %v4749 = vpop.permute.xlu0 %4748
    %v4751 = vsel %vm309, %v4749, 0
    %4753 = vmatprep.subr.bf16.mxu0 %v4663
    %4754 = vmatpush1.bf16.msra.mxu0 %v4662
    %4755 = vmatprep.subr.bf16.mxu0 %v4665
    %4756 = vmatpush1.bf16.msra.mxu0 %v4664
    %4757 = vmatprep.subr.bf16.mxu0 %v4667
    %4758 = vmatpush1.bf16.msra.mxu0 %v4666
    %4759 = vmatprep.subr.bf16.mxu0 %v4669
    %4760 = vmatpush1.bf16.msra.mxu0 %v4668
    %4761 = vmatprep.subr.bf16.mxu0 0
    %4762 = vmatpush1.bf16.msra.mxu0 0
    %4763 = vmatprep.subr.bf16.mxu0 0
    %4764 = vmatpush1.bf16.msra.mxu0 0
    %4765 = vmatprep.subr.bf16.mxu0 0
    %4766 = vmatpush1.bf16.msra.mxu0 0
    %4767 = vmatprep.subr.bf16.mxu0 0
    %4768 = vmatpush1.bf16.msra.mxu0 0
    %4769 = vmatprep.subr.bf16.mxu0 0
    %4770 = vmatpush1.bf16.msra.mxu0 0
    %4771 = vmatprep.subr.bf16.mxu0 0
    %4772 = vmatpush1.bf16.msra.mxu0 0
    %4773 = vmatprep.subr.bf16.mxu0 0
    %4774 = vmatpush1.bf16.msra.mxu0 0
    %4775 = vmatprep.subr.bf16.mxu0 0
    %4776 = vmatpush1.bf16.msra.mxu0 0
    %4777 = vmatprep.subr.bf16.mxu0 0
    %4778 = vmatpush1.bf16.msra.mxu0 0
    %4779 = vmatprep.subr.bf16.mxu0 0
    %4780 = vmatpush1.bf16.msra.mxu0 0
    %4781 = vmatprep.subr.bf16.mxu0 0
    %4782 = vmatpush1.bf16.msra.mxu0 0
    %4783 = vmatprep.subr.bf16.mxu0 0
    %4784 = vmatpush1.bf16.msra.mxu0 0
    %4785 = vmatprep.mubr.bf16.mxu0 0
    %4786 = vmatmul.mubr.bf16.gmra.mrb[0].mxu0 %v4751
    %v4787 = vpop.f32.mrb[0].mxu0
    %v4788 = vadd.f32 0.0, %v4787
    %v4789 = vpop.f32.mrb[0].mxu0
    %v4790 = vadd.f32 0.0, %v4789
    %v4791 = vpop.f32.mrb[0].mxu0
    %v4792 = vpop.f32.mrb[0].mxu0
    %4793 = vdwg.mxu0
    %v4794 = vadd.f32 %v4596, %v4788
    %v4795 = vadd.f32 %v4598, %v4790
    %v4796 = vxor.u32 %v4794, 2147483648
    %v4797 = vmul.f32 %v4796, 1.442695
    %v4798 = vpow.pop %v4797
    %v4799 = vadd.f32 %v4798, 1.0
    %v4800 = vrcp.pop %v4799
    %v4801 = vmul.f32 1.0, %v4800
    %v4802 = vtanh.pop %v4795
    %v4803 = vxor.u32 %v4795, 2147483648
    %v4804 = vmul.f32 %v4803, 1.442695
    %v4805 = vpow.pop %v4804
    %v4806 = vadd.f32 %v4805, 1.0
    %v4807 = vrcp.pop %v4806
    %v4808 = vmul.f32 1.0, %v4807
    %v4809 = vmul.f32 %v4801, %v4743
    %v4810 = vmul.f32 %v4801, %v4802
    %4812 = vrot.lane.b32.xlu0 %v4810, 64
    %v4813 = vpop.permute.xlu0 %4812
    %v4815 = vadd.f32 %v4809, %v4813
    %v4816 = vtanh.pop %v4815
    %v4817 = vmul.f32 %v4808, %v4816
    %v4818 = vpack.c.bf16 %v4817, %v4817
    %4820 = vrot.lane.b32.xlu0 %v4818, 64
    %v4821 = vpop.permute.xlu0 %4820
    %v4823 = vsel %vm309, %v4821, 0
    %4825 = vmatprep.subr.bf16.mxu0 %v4663
    %4826 = vmatpush1.bf16.msra.mxu0 %v4662
    %4827 = vmatprep.subr.bf16.mxu0 %v4665
    %4828 = vmatpush1.bf16.msra.mxu0 %v4664
    %4829 = vmatprep.subr.bf16.mxu0 %v4667
    %4830 = vmatpush1.bf16.msra.mxu0 %v4666
    %4831 = vmatprep.subr.bf16.mxu0 %v4669
    %4832 = vmatpush1.bf16.msra.mxu0 %v4668
    %4833 = vmatprep.subr.bf16.mxu0 0
    %4834 = vmatpush1.bf16.msra.mxu0 0
    %4835 = vmatprep.subr.bf16.mxu0 0
    %4836 = vmatpush1.bf16.msra.mxu0 0
    %4837 = vmatprep.subr.bf16.mxu0 0
    %4838 = vmatpush1.bf16.msra.mxu0 0
    %4839 = vmatprep.subr.bf16.mxu0 0
    %4840 = vmatpush1.bf16.msra.mxu0 0
    %4841 = vmatprep.subr.bf16.mxu0 0
    %4842 = vmatpush1.bf16.msra.mxu0 0
    %4843 = vmatprep.subr.bf16.mxu0 0
    %4844 = vmatpush1.bf16.msra.mxu0 0
    %4845 = vmatprep.subr.bf16.mxu0 0
    %4846 = vmatpush1.bf16.msra.mxu0 0
    %4847 = vmatprep.subr.bf16.mxu0 0
    %4848 = vmatpush1.bf16.msra.mxu0 0
    %4849 = vmatprep.subr.bf16.mxu0 0
    %4850 = vmatpush1.bf16.msra.mxu0 0
    %4851 = vmatprep.subr.bf16.mxu0 0
    %4852 = vmatpush1.bf16.msra.mxu0 0
    %4853 = vmatprep.subr.bf16.mxu0 0
    %4854 = vmatpush1.bf16.msra.mxu0 0
    %4855 = vmatprep.subr.bf16.mxu0 0
    %4856 = vmatpush1.bf16.msra.mxu0 0
    %4857 = vmatprep.mubr.bf16.mxu0 0
    %4858 = vmatmul.mubr.bf16.gmra.mrb[0].mxu0 %v4823
    %v4859 = vpop.f32.mrb[0].mxu0
    %v4860 = vadd.f32 0.0, %v4859
    %v4861 = vpop.f32.mrb[0].mxu0
    %v4862 = vadd.f32 0.0, %v4861
    %v4863 = vpop.f32.mrb[0].mxu0
    %v4864 = vpop.f32.mrb[0].mxu0
    %4865 = vdwg.mxu0
    %v4866 = vadd.f32 %v4602, %v4860
    %v4867 = vadd.f32 %v4604, %v4862
    %v4868 = vxor.u32 %v4866, 2147483648
    %v4869 = vmul.f32 %v4868, 1.442695
    %v4870 = vpow.pop %v4869
    %v4871 = vadd.f32 %v4870, 1.0
    %v4872 = vrcp.pop %v4871
    %v4873 = vmul.f32 1.0, %v4872
    %v4874 = vtanh.pop %v4867
    %v4875 = vxor.u32 %v4867, 2147483648
    %v4876 = vmul.f32 %v4875, 1.442695
    %v4877 = vpow.pop %v4876
    %v4878 = vadd.f32 %v4877, 1.0
    %v4879 = vrcp.pop %v4878
    %v4880 = vmul.f32 1.0, %v4879
    %v4881 = vmul.f32 %v4873, %v4815
    %v4882 = vmul.f32 %v4873, %v4874
    %4884 = vrot.lane.b32.xlu0 %v4882, 64
    %v4885 = vpop.permute.xlu0 %4884
    %v4887 = vadd.f32 %v4881, %v4885
    %v4888 = vtanh.pop %v4887
    %v4889 = vmul.f32 %v4880, %v4888
    %v4890 = vpack.c.bf16 %v4889, %v4889
    %4892 = vrot.lane.b32.xlu0 %v4890, 64
    %v4893 = vpop.permute.xlu0 %4892
    %v4895 = vsel %vm309, %v4893, 0
    %4897 = vmatprep.subr.bf16.mxu0 %v4663
    %4898 = vmatpush1.bf16.msra.mxu0 %v4662
    %4899 = vmatprep.subr.bf16.mxu0 %v4665
    %4900 = vmatpush1.bf16.msra.mxu0 %v4664
    %4901 = vmatprep.subr.bf16.mxu0 %v4667
    %4902 = vmatpush1.bf16.msra.mxu0 %v4666
    %4903 = vmatprep.subr.bf16.mxu0 %v4669
    %4904 = vmatpush1.bf16.msra.mxu0 %v4668
    %4905 = vmatprep.subr.bf16.mxu0 0
    %4906 = vmatpush1.bf16.msra.mxu0 0
    %4907 = vmatprep.subr.bf16.mxu0 0
    %4908 = vmatpush1.bf16.msra.mxu0 0
    %4909 = vmatprep.subr.bf16.mxu0 0
    %4910 = vmatpush1.bf16.msra.mxu0 0
    %4911 = vmatprep.subr.bf16.mxu0 0
    %4912 = vmatpush1.bf16.msra.mxu0 0
    %4913 = vmatprep.subr.bf16.mxu0 0
    %4914 = vmatpush1.bf16.msra.mxu0 0
    %4915 = vmatprep.subr.bf16.mxu0 0
    %4916 = vmatpush1.bf16.msra.mxu0 0
    %4917 = vmatprep.subr.bf16.mxu0 0
    %4918 = vmatpush1.bf16.msra.mxu0 0
    %4919 = vmatprep.subr.bf16.mxu0 0
    %4920 = vmatpush1.bf16.msra.mxu0 0
    %4921 = vmatprep.subr.bf16.mxu0 0
    %4922 = vmatpush1.bf16.msra.mxu0 0
    %4923 = vmatprep.subr.bf16.mxu0 0
    %4924 = vmatpush1.bf16.msra.mxu0 0
    %4925 = vmatprep.subr.bf16.mxu0 0
    %4926 = vmatpush1.bf16.msra.mxu0 0
    %4927 = vmatprep.subr.bf16.mxu0 0
    %4928 = vmatpush1.bf16.msra.mxu0 0
    %4929 = vmatprep.mubr.bf16.mxu0 0
    %4930 = vmatmul.mubr.bf16.gmra.mrb[0].mxu0 %v4895
    %v4931 = vpop.f32.mrb[0].mxu0
    %v4932 = vadd.f32 0.0, %v4931
    %v4933 = vpop.f32.mrb[0].mxu0
    %v4934 = vadd.f32 0.0, %v4933
    %v4935 = vpop.f32.mrb[0].mxu0
    %v4936 = vpop.f32.mrb[0].mxu0
    %4937 = vdwg.mxu0
    %v4938 = vadd.f32 %v4606, %v4932
    %v4939 = vadd.f32 %v4608, %v4934
    %v4940 = vxor.u32 %v4938, 2147483648
    %v4941 = vmul.f32 %v4940, 1.442695
    %v4942 = vpow.pop %v4941
    %v4943 = vadd.f32 %v4942, 1.0
    %v4944 = vrcp.pop %v4943
    %v4945 = vmul.f32 1.0, %v4944
    %v4946 = vtanh.pop %v4939
    %v4947 = vxor.u32 %v4939, 2147483648
    %v4948 = vmul.f32 %v4947, 1.442695
    %v4949 = vpow.pop %v4948
    %v4950 = vadd.f32 %v4949, 1.0
    %v4951 = vrcp.pop %v4950
    %v4952 = vmul.f32 1.0, %v4951
    %v4953 = vmul.f32 %v4945, %v4887
    %v4954 = vmul.f32 %v4945, %v4946
    %4956 = vrot.lane.b32.xlu0 %v4954, 64
    %v4957 = vpop.permute.xlu0 %4956
    %v4959 = vadd.f32 %v4953, %v4957
    %v4960 = vtanh.pop %v4959
    %v4961 = vmul.f32 %v4952, %v4960
    %v4962 = vpack.c.bf16 %v4961, %v4961
    %4964 = vrot.lane.b32.xlu0 %v4962, 64
    %v4965 = vpop.permute.xlu0 %4964
    %v4967 = vsel %vm309, %v4965, 0
    %4969 = vmatprep.subr.bf16.mxu0 %v4663
    %4970 = vmatpush1.bf16.msra.mxu0 %v4662
    %4971 = vmatprep.subr.bf16.mxu0 %v4665
    %4972 = vmatpush1.bf16.msra.mxu0 %v4664
    %4973 = vmatprep.subr.bf16.mxu0 %v4667
    %4974 = vmatpush1.bf16.msra.mxu0 %v4666
    %4975 = vmatprep.subr.bf16.mxu0 %v4669
    %4976 = vmatpush1.bf16.msra.mxu0 %v4668
    %4977 = vmatprep.subr.bf16.mxu0 0
    %4978 = vmatpush1.bf16.msra.mxu0 0
    %4979 = vmatprep.subr.bf16.mxu0 0
    %4980 = vmatpush1.bf16.msra.mxu0 0
    %4981 = vmatprep.subr.bf16.mxu0 0
    %4982 = vmatpush1.bf16.msra.mxu0 0
    %4983 = vmatprep.subr.bf16.mxu0 0
    %4984 = vmatpush1.bf16.msra.mxu0 0
    %4985 = vmatprep.subr.bf16.mxu0 0
    %4986 = vmatpush1.bf16.msra.mxu0 0
    %4987 = vmatprep.subr.bf16.mxu0 0
    %4988 = vmatpush1.bf16.msra.mxu0 0
    %4989 = vmatprep.subr.bf16.mxu0 0
    %4990 = vmatpush1.bf16.msra.mxu0 0
    %4991 = vmatprep.subr.bf16.mxu0 0
    %4992 = vmatpush1.bf16.msra.mxu0 0
    %4993 = vmatprep.subr.bf16.mxu0 0
    %4994 = vmatpush1.bf16.msra.mxu0 0
    %4995 = vmatprep.subr.bf16.mxu0 0
    %4996 = vmatpush1.bf16.msra.mxu0 0
    %4997 = vmatprep.subr.bf16.mxu0 0
    %4998 = vmatpush1.bf16.msra.mxu0 0
    %4999 = vmatprep.subr.bf16.mxu0 0
    %5000 = vmatpush1.bf16.msra.mxu0 0
    %5001 = vmatprep.mubr.bf16.mxu0 0
    %5002 = vmatmul.mubr.bf16.gmra.mrb[0].mxu0 %v4967
    %v5003 = vpop.f32.mrb[0].mxu0
    %v5004 = vadd.f32 0.0, %v5003
    %v5005 = vpop.f32.mrb[0].mxu0
    %v5006 = vadd.f32 0.0, %v5005
    %v5007 = vpop.f32.mrb[0].mxu0
    %v5008 = vpop.f32.mrb[0].mxu0
    %5009 = vdwg.mxu0
    %v5010 = vadd.f32 %v4612, %v5004
    %v5011 = vadd.f32 %v4614, %v5006
    %v5012 = vxor.u32 %v5010, 2147483648
    %v5013 = vmul.f32 %v5012, 1.442695
    %v5014 = vpow.pop %v5013
    %v5015 = vadd.f32 %v5014, 1.0
    %v5016 = vrcp.pop %v5015
    %v5017 = vmul.f32 1.0, %v5016
    %v5018 = vtanh.pop %v5011
    %v5019 = vxor.u32 %v5011, 2147483648
    %v5020 = vmul.f32 %v5019, 1.442695
    %v5021 = vpow.pop %v5020
    %v5022 = vadd.f32 %v5021, 1.0
    %v5023 = vrcp.pop %v5022
    %v5024 = vmul.f32 1.0, %v5023
    %v5025 = vmul.f32 %v5017, %v4959
    %v5026 = vmul.f32 %v5017, %v5018
    %5028 = vrot.lane.b32.xlu0 %v5026, 64
    %v5029 = vpop.permute.xlu0 %5028
    %v5031 = vadd.f32 %v5025, %v5029
    %v5032 = vtanh.pop %v5031
    %v5033 = vmul.f32 %v5024, %v5032
    %v5034 = vpack.c.bf16 %v5033, %v5033
    %5036 = vrot.lane.b32.xlu0 %v5034, 64
    %v5037 = vpop.permute.xlu0 %5036
    %v5039 = vsel %vm309, %v5037, 0
    %5041 = vmatprep.subr.bf16.mxu0 %v4663
    %5042 = vmatpush1.bf16.msra.mxu0 %v4662
    %5043 = vmatprep.subr.bf16.mxu0 %v4665
    %5044 = vmatpush1.bf16.msra.mxu0 %v4664
    %5045 = vmatprep.subr.bf16.mxu0 %v4667
    %5046 = vmatpush1.bf16.msra.mxu0 %v4666
    %5047 = vmatprep.subr.bf16.mxu0 %v4669
    %5048 = vmatpush1.bf16.msra.mxu0 %v4668
    %5049 = vmatprep.subr.bf16.mxu0 0
    %5050 = vmatpush1.bf16.msra.mxu0 0
    %5051 = vmatprep.subr.bf16.mxu0 0
    %5052 = vmatpush1.bf16.msra.mxu0 0
    %5053 = vmatprep.subr.bf16.mxu0 0
    %5054 = vmatpush1.bf16.msra.mxu0 0
    %5055 = vmatprep.subr.bf16.mxu0 0
    %5056 = vmatpush1.bf16.msra.mxu0 0
    %5057 = vmatprep.subr.bf16.mxu0 0
    %5058 = vmatpush1.bf16.msra.mxu0 0
    %5059 = vmatprep.subr.bf16.mxu0 0
    %5060 = vmatpush1.bf16.msra.mxu0 0
    %5061 = vmatprep.subr.bf16.mxu0 0
    %5062 = vmatpush1.bf16.msra.mxu0 0
    %5063 = vmatprep.subr.bf16.mxu0 0
    %5064 = vmatpush1.bf16.msra.mxu0 0
    %5065 = vmatprep.subr.bf16.mxu0 0
    %5066 = vmatpush1.bf16.msra.mxu0 0
    %5067 = vmatprep.subr.bf16.mxu0 0
    %5068 = vmatpush1.bf16.msra.mxu0 0
    %5069 = vmatprep.subr.bf16.mxu0 0
    %5070 = vmatpush1.bf16.msra.mxu0 0
    %5071 = vmatprep.subr.bf16.mxu0 0
    %5072 = vmatpush1.bf16.msra.mxu0 0
    %5073 = vmatprep.mubr.bf16.mxu0 0
    %5074 = vmatmul.mubr.bf16.gmra.mrb[0].mxu0 %v5039
    %v5075 = vpop.f32.mrb[0].mxu0
    %v5076 = vadd.f32 0.0, %v5075
    %v5077 = vpop.f32.mrb[0].mxu0
    %v5078 = vadd.f32 0.0, %v5077
    %v5079 = vpop.f32.mrb[0].mxu0
    %v5080 = vpop.f32.mrb[0].mxu0
    %5081 = vdwg.mxu0
    %v5082 = vadd.f32 %v4616, %v5076
    %v5083 = vadd.f32 %v4618, %v5078
    %v5084 = vxor.u32 %v5082, 2147483648
    %v5085 = vmul.f32 %v5084, 1.442695
    %v5086 = vpow.pop %v5085
    %v5087 = vadd.f32 %v5086, 1.0
    %v5088 = vrcp.pop %v5087
    %v5089 = vmul.f32 1.0, %v5088
    %v5090 = vtanh.pop %v5083
    %v5091 = vxor.u32 %v5083, 2147483648
    %v5092 = vmul.f32 %v5091, 1.442695
    %v5093 = vpow.pop %v5092
    %v5094 = vadd.f32 %v5093, 1.0
    %v5095 = vrcp.pop %v5094
    %v5096 = vmul.f32 1.0, %v5095
    %v5097 = vmul.f32 %v5089, %v5031
    %v5098 = vmul.f32 %v5089, %v5090
    %5100 = vrot.lane.b32.xlu0 %v5098, 64
    %v5101 = vpop.permute.xlu0 %5100
    %v5103 = vadd.f32 %v5097, %v5101
    %v5104 = vtanh.pop %v5103
    %v5105 = vmul.f32 %v5096, %v5104
    %v5106 = vpack.c.bf16 %v5105, %v5105
    %5108 = vrot.lane.b32.xlu0 %v5106, 64
    %v5109 = vpop.permute.xlu0 %5108
    %v5111 = vsel %vm309, %v5109, 0
    %5113 = vmatprep.subr.bf16.mxu0 %v4663
    %5114 = vmatpush1.bf16.msra.mxu0 %v4662
    %5115 = vmatprep.subr.bf16.mxu0 %v4665
    %5116 = vmatpush1.bf16.msra.mxu0 %v4664
    %5117 = vmatprep.subr.bf16.mxu0 %v4667
    %5118 = vmatpush1.bf16.msra.mxu0 %v4666
    %5119 = vmatprep.subr.bf16.mxu0 %v4669
    %5120 = vmatpush1.bf16.msra.mxu0 %v4668
    %5121 = vmatprep.subr.bf16.mxu0 0
    %5122 = vmatpush1.bf16.msra.mxu0 0
    %5123 = vmatprep.subr.bf16.mxu0 0
    %5124 = vmatpush1.bf16.msra.mxu0 0
    %5125 = vmatprep.subr.bf16.mxu0 0
    %5126 = vmatpush1.bf16.msra.mxu0 0
    %5127 = vmatprep.subr.bf16.mxu0 0
    %5128 = vmatpush1.bf16.msra.mxu0 0
    %5129 = vmatprep.subr.bf16.mxu0 0
    %5130 = vmatpush1.bf16.msra.mxu0 0
    %5131 = vmatprep.subr.bf16.mxu0 0
    %5132 = vmatpush1.bf16.msra.mxu0 0
    %5133 = vmatprep.subr.bf16.mxu0 0
    %5134 = vmatpush1.bf16.msra.mxu0 0
    %5135 = vmatprep.subr.bf16.mxu0 0
    %5136 = vmatpush1.bf16.msra.mxu0 0
    %5137 = vmatprep.subr.bf16.mxu0 0
    %5138 = vmatpush1.bf16.msra.mxu0 0
    %5139 = vmatprep.subr.bf16.mxu0 0
    %5140 = vmatpush1.bf16.msra.mxu0 0
    %5141 = vmatprep.subr.bf16.mxu0 0
    %5142 = vmatpush1.bf16.msra.mxu0 0
    %5143 = vmatprep.subr.bf16.mxu0 0
    %5144 = vmatpush1.bf16.msra.mxu0 0
    %5145 = vmatprep.mubr.bf16.mxu0 0
    %5146 = vmatmul.mubr.bf16.gmra.mrb[0].mxu0 %v5111
    %v5147 = vpop.f32.mrb[0].mxu0
    %v5148 = vadd.f32 0.0, %v5147
    %v5149 = vpop.f32.mrb[0].mxu0
    %v5150 = vadd.f32 0.0, %v5149
    %v5151 = vpop.f32.mrb[0].mxu0
    %v5152 = vpop.f32.mrb[0].mxu0
    %5153 = vdwg.mxu0
    %v5154 = vadd.f32 %v4622, %v5148
    %v5155 = vadd.f32 %v4624, %v5150
    %v5156 = vxor.u32 %v5154, 2147483648
    %v5157 = vmul.f32 %v5156, 1.442695
    %v5158 = vpow.pop %v5157
    %v5159 = vadd.f32 %v5158, 1.0
    %v5160 = vrcp.pop %v5159
    %v5161 = vmul.f32 1.0, %v5160
    %v5162 = vtanh.pop %v5155
    %v5163 = vxor.u32 %v5155, 2147483648
    %v5164 = vmul.f32 %v5163, 1.442695
    %v5165 = vpow.pop %v5164
    %v5166 = vadd.f32 %v5165, 1.0
    %v5167 = vrcp.pop %v5166
    %v5168 = vmul.f32 1.0, %v5167
    %v5169 = vmul.f32 %v5161, %v5103
    %v5170 = vmul.f32 %v5161, %v5162
    %5172 = vrot.lane.b32.xlu0 %v5170, 64
    %v5173 = vpop.permute.xlu0 %5172
    %v5175 = vadd.f32 %v5169, %v5173
    %v5176 = vtanh.pop %v5175
    %v5177 = vmul.f32 %v5168, %v5176
    %v5178 = vpack.c.bf16 %v5177, %v5177
    %5180 = vrot.lane.b32.xlu0 %v5178, 64
    %v5181 = vpop.permute.xlu0 %5180
    %v5183 = vsel %vm309, %v5181, 0
    %5185 = vmatprep.subr.bf16.mxu0 %v4663
    %5186 = vmatpush1.bf16.msra.mxu0 %v4662
    %5187 = vmatprep.subr.bf16.mxu0 %v4665
    %5188 = vmatpush1.bf16.msra.mxu0 %v4664
    %5189 = vmatprep.subr.bf16.mxu0 %v4667
    %5190 = vmatpush1.bf16.msra.mxu0 %v4666
    %5191 = vmatprep.subr.bf16.mxu0 %v4669
    %5192 = vmatpush1.bf16.msra.mxu0 %v4668
    %5193 = vmatprep.subr.bf16.mxu0 0
    %5194 = vmatpush1.bf16.msra.mxu0 0
    %5195 = vmatprep.subr.bf16.mxu0 0
    %5196 = vmatpush1.bf16.msra.mxu0 0
    %5197 = vmatprep.subr.bf16.mxu0 0
    %5198 = vmatpush1.bf16.msra.mxu0 0
    %5199 = vmatprep.subr.bf16.mxu0 0
    %5200 = vmatpush1.bf16.msra.mxu0 0
    %5201 = vmatprep.subr.bf16.mxu0 0
    %5202 = vmatpush1.bf16.msra.mxu0 0
    %5203 = vmatprep.subr.bf16.mxu0 0
    %5204 = vmatpush1.bf16.msra.mxu0 0
    %5205 = vmatprep.subr.bf16.mxu0 0
    %5206 = vmatpush1.bf16.msra.mxu0 0
    %5207 = vmatprep.subr.bf16.mxu0 0
    %5208 = vmatpush1.bf16.msra.mxu0 0
    %5209 = vmatprep.subr.bf16.mxu0 0
    %5210 = vmatpush1.bf16.msra.mxu0 0
    %5211 = vmatprep.subr.bf16.mxu0 0
    %5212 = vmatpush1.bf16.msra.mxu0 0
    %5213 = vmatprep.subr.bf16.mxu0 0
    %5214 = vmatpush1.bf16.msra.mxu0 0
    %5215 = vmatprep.subr.bf16.mxu0 0
    %5216 = vmatpush1.bf16.msra.mxu0 0
    %5217 = vmatprep.mubr.bf16.mxu0 0
    %5218 = vmatmul.mubr.bf16.gmra.mrb[0].mxu0 %v5183
    %v5219 = vpop.f32.mrb[0].mxu0
    %v5220 = vadd.f32 0.0, %v5219
    %v5221 = vpop.f32.mrb[0].mxu0
    %v5222 = vadd.f32 0.0, %v5221
    %v5223 = vpop.f32.mrb[0].mxu0
    %v5224 = vpop.f32.mrb[0].mxu0
    %5225 = vdwg.mxu0
    %v5226 = vadd.f32 %v4626, %v5220
    %v5227 = vadd.f32 %v4628, %v5222
    %v5228 = vxor.u32 %v5226, 2147483648
    %v5229 = vmul.f32 %v5228, 1.442695
    %v5230 = vpow.pop %v5229
    %v5231 = vadd.f32 %v5230, 1.0
    %v5232 = vrcp.pop %v5231
    %v5233 = vmul.f32 1.0, %v5232
    %v5234 = vtanh.pop %v5227
    %v5235 = vxor.u32 %v5227, 2147483648
    %v5236 = vmul.f32 %v5235, 1.442695
    %v5237 = vpow.pop %v5236
    %v5238 = vadd.f32 %v5237, 1.0
    %v5239 = vrcp.pop %v5238
    %v5240 = vmul.f32 1.0, %v5239
    %v5241 = vmul.f32 %v5233, %v5175
    %v5242 = vmul.f32 %v5233, %v5234
    %5244 = vrot.lane.b32.xlu0 %v5242, 64
    %v5245 = vpop.permute.xlu0 %5244
    %v5247 = vadd.f32 %v5241, %v5245
    %v5248 = vtanh.pop %v5247
    %v5249 = vmul.f32 %v5240, %v5248
    %v5250 = vpack.c.bf16 %v5249, %v5249
    %v5251 = vld [vmem:[%s11] sm:$0xf]
    %v5252 = vld [vmem:[%s11 + $0x4] sm:$0xf]
    %v5253 = vld [vmem:[%s11 + $0x8] sm:$0xf]
    %v5254 = vld [vmem:[%s11 + $0xc] sm:$0xf]
    %v5255 = vld [vmem:[%s11 + $0x10] sm:$0xf]
    %v5256 = vld [vmem:[%s11 + $0x14] sm:$0xf]
    %v5257 = vld [vmem:[%s11 + $0x18] sm:$0xf]
    %v5258 = vld [vmem:[%s11 + $0x1c] sm:$0xf]
    %v5259 = vld [vmem:[%s12] sm:$0x1]
    %v5261 = vlaneseq
    %v5262 = vshrl.u32 %v5261, 7
    %v5263 = vsub.s32 0, %v5262
    %v5264 = vrot.slane %v5259, %v5263
    %5267 = vrot.lane.b32.xlu0 %v5250, 64
    %v5268 = vpop.permute.xlu0 %5267
    %v5277 = vunpack.c.l.b16 %v5251
    %v5278 = vunpack.c.l.b16 %v5252
    %v5279 = vunpack.c.l.b16 %v5253
    %v5280 = vunpack.c.l.b16 %v5254
    %v5281 = vunpack.c.l.b16 %v5255
    %v5282 = vunpack.c.l.b16 %v5256
    %v5283 = vunpack.c.l.b16 %v5257
    %v5284 = vunpack.c.l.b16 %v5258
    %v5285 = vpack.c.b16 %v5278, %v5277
    %v5286 = vpack.c.b16 %v5280, %v5279
    %v5287 = vpack.c.b16 %v5282, %v5281
    %v5288 = vpack.c.b16 %v5284, %v5283
    %v5294 = vsel %vm309, %v5268, 0
    %5296 = vmatprep.subr.bf16.mxu0 0
    %5297 = vmatpush1.bf16.msra.mxu0 %v5285
    %5298 = vmatprep.subr.bf16.mxu0 0
    %5299 = vmatpush1.bf16.msra.mxu0 %v5286
    %5300 = vmatprep.subr.bf16.mxu0 0
    %5301 = vmatpush1.bf16.msra.mxu0 %v5287
    %5302 = vmatprep.subr.bf16.mxu0 0
    %5303 = vmatpush1.bf16.msra.mxu0 %v5288
    %5304 = vmatprep.subr.bf16.mxu0 0
    %5305 = vmatpush1.bf16.msra.mxu0 0
    %5306 = vmatprep.subr.bf16.mxu0 0
    %5307 = vmatpush1.bf16.msra.mxu0 0
    %5308 = vmatprep.subr.bf16.mxu0 0
    %5309 = vmatpush1.bf16.msra.mxu0 0
    %5310 = vmatprep.subr.bf16.mxu0 0
    %5311 = vmatpush1.bf16.msra.mxu0 0
    %5312 = vmatprep.subr.bf16.mxu0 0
    %5313 = vmatpush1.bf16.msra.mxu0 0
    %5314 = vmatprep.subr.bf16.mxu0 0
    %5315 = vmatpush1.bf16.msra.mxu0 0
    %5316 = vmatprep.subr.bf16.mxu0 0
    %5317 = vmatpush1.bf16.msra.mxu0 0
    %5318 = vmatprep.subr.bf16.mxu0 0
    %5319 = vmatpush1.bf16.msra.mxu0 0
    %5320 = vmatprep.subr.bf16.mxu0 0
    %5321 = vmatpush1.bf16.msra.mxu0 0
    %5322 = vmatprep.subr.bf16.mxu0 0
    %5323 = vmatpush1.bf16.msra.mxu0 0
    %5324 = vmatprep.subr.bf16.mxu0 0
    %5325 = vmatpush1.bf16.msra.mxu0 0
    %5326 = vmatprep.subr.bf16.mxu0 0
    %5327 = vmatpush1.bf16.msra.mxu0 0
    %5328 = vmatprep.mubr.bf16.mxu0 0
    %5329 = vmatmul.mubr.bf16.gmra.mrb[0].mxu0 %v5294
    %v5330 = vpop.f32.mrb[0].mxu0
    %v5331 = vadd.f32 %v5264, %v5330
    %v5332 = vpop.f32.mrb[0].mxu0
    %v5333 = vpop.f32.mrb[0].mxu0
    %v5334 = vpop.f32.mrb[0].mxu0
    %5335 = vdwg.mxu0
    %v5336 = vmax.f32 %v5331, 0.0
    %v5337 = vpack.c.bf16 %v5336, %v5336
    %v5338 = vld [vmem:[%s13] sm:$0xf]
    %v5339 = vld [vmem:[%s13 + $0x4] sm:$0xf]
    %v5340 = vld [vmem:[%s13 + $0x8] sm:$0xf]
    %v5341 = vld [vmem:[%s13 + $0xc] sm:$0xf]
    %v5342 = vld [vmem:[%s14] sm:$0x1]
    %v5344 = vlaneseq
    %v5345 = vshrl.u32 %v5344, 7
    %v5346 = vsub.s32 0, %v5345
    %v5347 = vrot.slane %v5342, %v5346
    %v5353 = vunpack.c.l.b16 %v5338
    %v5354 = vunpack.c.l.b16 %v5339
    %v5355 = vunpack.c.l.b16 %v5340
    %v5356 = vunpack.c.l.b16 %v5341
    %v5357 = vpack.c.b16 %v5354, %v5353
    %v5358 = vpack.c.b16 %v5356, %v5355
    %vm5361 = vcmask 261120
    %v5363 = vsel %vm5361, %v5337, 0
    %5365 = vmatprep.subr.bf16.mxu0 0
    %5366 = vmatpush1.bf16.msra.mxu0 %v5357
    %5367 = vmatprep.subr.bf16.mxu0 0
    %5368 = vmatpush1.bf16.msra.mxu0 %v5358
    %5369 = vmatprep.subr.bf16.mxu0 0
    %5370 = vmatpush1.bf16.msra.mxu0 0
    %5371 = vmatprep.subr.bf16.mxu0 0
    %5372 = vmatpush1.bf16.msra.mxu0 0
    %5373 = vmatprep.subr.bf16.mxu0 0
    %5374 = vmatpush1.bf16.msra.mxu0 0
    %5375 = vmatprep.subr.bf16.mxu0 0
    %5376 = vmatpush1.bf16.msra.mxu0 0
    %5377 = vmatprep.subr.bf16.mxu0 0
    %5378 = vmatpush1.bf16.msra.mxu0 0
    %5379 = vmatprep.subr.bf16.mxu0 0
    %5380 = vmatpush1.bf16.msra.mxu0 0
    %5381 = vmatprep.subr.bf16.mxu0 0
    %5382 = vmatpush1.bf16.msra.mxu0 0
    %5383 = vmatprep.subr.bf16.mxu0 0
    %5384 = vmatpush1.bf16.msra.mxu0 0
    %5385 = vmatprep.subr.bf16.mxu0 0
    %5386 = vmatpush1.bf16.msra.mxu0 0
    %5387 = vmatprep.subr.bf16.mxu0 0
    %5388 = vmatpush1.bf16.msra.mxu0 0
    %5389 = vmatprep.subr.bf16.mxu0 0
    %5390 = vmatpush1.bf16.msra.mxu0 0
    %5391 = vmatprep.subr.bf16.mxu0 0
    %5392 = vmatpush1.bf16.msra.mxu0 0
    %5393 = vmatprep.subr.bf16.mxu0 0
    %5394 = vmatpush1.bf16.msra.mxu0 0
    %5395 = vmatprep.subr.bf16.mxu0 0
    %5396 = vmatpush1.bf16.msra.mxu0 0
    %5397 = vmatprep.mubr.bf16.mxu0 0
    %5398 = vmatmul.mubr.bf16.gmra.mrb[0].mxu0 %v5363
    %v5399 = vpop.f32.mrb[0].mxu0
    %v5400 = vadd.f32 %v5347, %v5399
    %v5401 = vpop.f32.mrb[0].mxu0
    %v5402 = vpop.f32.mrb[0].mxu0
    %v5403 = vpop.f32.mrb[0].mxu0
    %5404 = vdwg.mxu0
    %vm5405 = vcmask 23552
    %5406 = vst.msk [vmem:[%s15] sm:$0xff] %vm5405, %v5400
    // Predicated region
    $region90: #{tpu_custom_call.1} parent=1 // pred_check
      _
    $region91: #{tpu_custom_call.1} parent=1 // pred_check_branch
      %5408 = sbr.rel (0) target = $region93
    $region92: #{tpu_custom_call.1} parent=1 // pred_region
      _
    $region93: #{tpu_custom_call.1} parent=1 // pred_fallthru
      _
    // Predicated region
    $region94: #{tpu_custom_call.1} parent=1 // pred_check
      _
    $region95: #{tpu_custom_call.1} parent=1 // pred_check_branch
      %5410 = sbr.rel (0) target = $region97
    $region96: #{tpu_custom_call.1} parent=1 // pred_region
      _
    $region97: #{tpu_custom_call.1} parent=1 // pred_fallthru
      _
    %5411 = vsyncpa [#allocation4], 1
    %5412 = vsyncpa [#allocation6], 1
    %5413 = vsyncpa [#allocation9], 1
    %5414 = vsyncpa [#allocation12], 1

</llo_original>
